<compile_context>
chip_gen: v7x
topology: tpu7x:2x2x1
jax: 0.10.0
libtpu: 0.0.40
codegen_flags: <defaults>
</compile_context>

<pallas_src>
import functools

import jax
import jax.numpy as jnp
from jax.experimental import pallas as pl
from jax.experimental.pallas import tpu as pltpu


def _leaky_relu(x, slope=0.2):          # nn.LeakyReLU(0.2)
    return jnp.where(x >= 0, x, slope * x)


# ------------------------------------------------------------------
# Kernel A: L2-normalize + lin_in + LeakyReLU + lin_im + LeakyReLU,
# tiled over the dim_im output axis.  VMEM use is O(TILE_N), not
# O(dim_im), so it fits comfortably even at large sz.
# ------------------------------------------------------------------
def _mlp_kernel(z_ref, w1_ref, w2_ref, out_ref):
    z = z_ref[...]                                               # (B, nz) f32
    # z / ||z||_2 (rsqrt -> EUP; no eps, matching torch z.div(z.norm(2,1)))
    zn = z * jax.lax.rsqrt(jnp.sum(z * z, axis=1, keepdims=True))
    # Recomputed per tile: (B, nz) @ (nz, 1024) is tiny vs. the streamed
    # (B,1024)@(1024,TILE_N); recompute keeps the grid axis fully "parallel".
    h = jnp.dot(zn.astype(jnp.bfloat16), w1_ref[...],
                preferred_element_type=jnp.float32)
    h = _leaky_relu(h)
    y = jnp.dot(h.astype(jnp.bfloat16), w2_ref[...],
                preferred_element_type=jnp.float32)
    out_ref[...] = _leaky_relu(y).astype(out_ref.dtype)


def _pick_tile_n(f2):
    for t in (1024, 512, 256, 128):
        if f2 % t == 0:
            return t
    return f2


def mlp_forward(z, w1, w2):
    """z: (B, nz) f32; w1: (nz, 1024) bf16; w2: (1024, dim_im) bf16.

    Returns (B, dim_im) bf16 (the next stage consumes bf16 anyway).
    """
    B, nz = z.shape
    F1 = w1.shape[1]
    F2 = w2.shape[1]
    tn = _pick_tile_n(F2)
    return pl.pallas_call(
        _mlp_kernel,
        out_shape=jax.ShapeDtypeStruct((B, F2), jnp.bfloat16),
        grid_spec=pl.GridSpec(
            grid=(F2 // tn,),
            in_specs=[
                pl.BlockSpec((B, nz), lambda n: (0, 0)),
                pl.BlockSpec((nz, F1), lambda n: (0, 0)),
                pl.BlockSpec((F1, tn), lambda n: (0, n)),     # stream w2 tiles
            ],
            out_specs=pl.BlockSpec((B, tn), lambda n: (0, n)),
        ),
        compiler_params=pltpu.CompilerParams(
            dimension_semantics=("parallel",),
        ),
    )(z, w1, w2)


# ------------------------------------------------------------------
# Kernel B: transposed conv (k=4, s=2, p=1).  For output parity (py, px):
#   out[b, 2i+py, 2j+px, :] =
#     sum_{a,c in {0,1}} xpad[b, i+py+a, j+px+c, :] @ W[3-py-2a, 3-px-2c]
# (zero padding supplies the boundary taps).  The 9 distinct tap slices are
# hoisted once; 4 parities x 4 taps are unrolled as bf16 matmuls with f32
# accumulation; results are written lane-dense to blocks [blk*Cp,(blk+1)*Cp).
# ------------------------------------------------------------------
def _make_deconv_kernel(activation):
    def kernel(x_ref, w_ref, b_ref, o_ref):
        Bb, Hp, Wp, Cin = x_ref.shape          # padded input block
        H, W = Hp - 2, Wp - 2
        Cp = o_ref.shape[-1] // 4              # lane-padded Cout
        M = Bb * H * W
        bias = b_ref[...]                      # (1, Cp) f32
        # Hoist the 9 distinct (ro, co) tap matrices; each is reused by up to
        # 4 of the 16 (parity, tap) matmuls below.
        taps = {}
        for ro in range(3):
            for co in range(3):
                taps[(ro, co)] = (
                    x_ref[:, ro:ro + H, co:co + W, :]
                    .reshape(M, Cin).astype(jnp.bfloat16))
        for py in range(2):
            for px in range(2):
                acc = jnp.zeros((M, Cp), jnp.float32)
                for a in range(2):
                    for c in range(2):
                        kh, kw = 3 - py - 2 * a, 3 - px - 2 * c  # kernel taps
                        acc = acc + jnp.dot(taps[(py + a, px + c)],
                                            w_ref[kh, kw],
                                            preferred_element_type=jnp.float32)
                blk = py * 2 + px
                o_ref[:, blk * Cp:(blk + 1) * Cp] = (
                    activation(acc + bias).astype(o_ref.dtype))
    return kernel


def conv_transpose_2x(x_nhwc, w, b, activation, out_dtype=jnp.float32):
    """PyTorch ConvTranspose2d(Cin, Cout, 4, stride=2, padding=1) + activation.

    x_nhwc: (B, H, W, Cin); w: (Cin, Cout, 4, 4) (PyTorch layout); b: (Cout,).
    Returns (B, 2H, 2W, Cout) in out_dtype.
    """
    B, H, W, Cin = x_nhwc.shape
    Cout = w.shape[1]
    Cp = ((Cout + 127) // 128) * 128           # lane-dense, unmasked stores
    HW = H * W

    # bf16 input: the kernel casts to bf16 before the MXU dot anyway, so this
    # is numerically identical but halves DMA / VMEM.  Only +1 halo, no im2col.
    xp = jnp.pad(x_nhwc.astype(jnp.bfloat16), ((0, 0), (1, 1), (1, 1), (0, 0)))
    wt = jnp.transpose(w, (2, 3, 0, 1))                      # (kh, kw, Cin, Cout)
    wt = jnp.pad(wt, ((0, 0), (0, 0), (0, 0), (0, Cp - Cout))).astype(jnp.bfloat16)
    bias = jnp.pad(b, (0, Cp - Cout)).reshape(1, Cp).astype(jnp.float32)

    # Tile over batch when the per-batch output slab stays sublane-aligned
    # (keeps VMEM bounded and lets megacore split the grid).
    if B > 1 and HW % 16 == 0:
        bb, gsz = 1, B
    else:
        bb, gsz = B, 1
    M = B * HW

    out = pl.pallas_call(
        _make_deconv_kernel(activation),
        out_shape=jax.ShapeDtypeStruct((M, 4 * Cp), out_dtype),
        grid_spec=pl.GridSpec(
            grid=(gsz,),
            in_specs=[
                pl.BlockSpec((bb, H + 2, W + 2, Cin), lambda i: (i, 0, 0, 0)),
                pl.BlockSpec((4, 4, Cin, Cp), lambda i: (0, 0, 0, 0)),
                pl.BlockSpec((1, Cp), lambda i: (0, 0)),
            ],
            out_specs=pl.BlockSpec((bb * HW, 4 * Cp), lambda i: (i, 0)),
        ),
        compiler_params=pltpu.CompilerParams(
            dimension_semantics=("parallel",),
        ),
    )(xp, wt, bias)

    # (M, 4*Cp) -> (B, H, W, py, px, Cp) -> interleave parities -> drop lane pad
    out = out.reshape(B, H, W, 2, 2, Cp)
    out = jnp.transpose(out, (0, 1, 3, 2, 4, 5)).reshape(B, 2 * H, 2 * W, Cp)
    return out[..., :Cout]


# ------------------------------------------------------------------
# Full _netG forward (do_bn=False path; BatchNorm modules unused).
# ------------------------------------------------------------------
def netg_forward(z, params, sz, nc):
    B = z.shape[0]
    h0 = sz // 4
    # bf16 weights feed the MXU at native rate (f32 accumulate). In production
    # the params would simply be stored bf16 to avoid the per-call convert.
    w1 = params["w1"].astype(jnp.bfloat16)
    w2 = params["w2"].astype(jnp.bfloat16)
    y = mlp_forward(z, w1, w2)                       # (B, 128*h0*h0) bf16
    x = y.reshape(B, 128, h0, h0)                    # mirrors torch .view (NCHW)
    x = jnp.transpose(x, (0, 2, 3, 1))               # NHWC
    x = conv_transpose_2x(x, params["wc1"], params["bc1"], _leaky_relu,
                          out_dtype=jnp.bfloat16)    # intermediate stays bf16
    x = conv_transpose_2x(x, params["wc2"], params["bc2"], jax.nn.sigmoid,
                          out_dtype=jnp.float32)
    return jnp.transpose(x, (0, 3, 1, 2))            # NCHW (B, nc, sz, sz)


def init_params(key, nz, sz, nc):
    dim_im = 128 * (sz // 4) * (sz // 4)
    k1, k2, k3, k4, k5, k6 = jax.random.split(key, 6)
    return {
        # nn.Linear(nz, 1024, bias=False): weight (1024, nz); stored transposed.
        "w1": jax.random.normal(k1, (nz, 1024), jnp.float32) * 0.05,
        # nn.Linear(1024, dim_im, bias=False)
        "w2": jax.random.normal(k2, (1024, dim_im), jnp.float32) * 0.05,
        # nn.ConvTranspose2d(128, 64, 4, 2, 1, bias=True)
        "wc1": jax.random.normal(k3, (128, 64, 4, 4), jnp.float32) * 0.05,
        "bc1": jax.random.normal(k4, (64,), jnp.float32) * 0.05,
        # nn.ConvTranspose2d(64, nc, 4, 2, 1, bias=True)
        "wc2": jax.random.normal(k5, (64, nc, 4, 4), jnp.float32) * 0.05,
        "bc2": jax.random.normal(k6, (nc,), jnp.float32) * 0.05,
    }
    # TODO(synk): BatchNorm1d/2d params exist in __init__ but are unused when
    # do_bn=False (the constructor default), so they are not materialized.


# ------------------------------------------------------------------
# Pure-JAX reference (validates tap/parity arithmetic numerically).
# ------------------------------------------------------------------
def _ref_conv_transpose(x_nchw, w, b):
    # ConvTranspose2d(k=4,s=2,p=1) == conv(lhs_dilation=2, pad=k-1-p=2,
    # kernel spatially flipped, (Cin,Cout)->(Cout,Cin)).
    k = jnp.transpose(w, (1, 0, 2, 3))[:, :, ::-1, ::-1]
    out = jax.lax.conv_general_dilated(
        x_nchw, k, window_strides=(1, 1), padding=((2, 2), (2, 2)),
        lhs_dilation=(2, 2), dimension_numbers=("NCHW", "OIHW", "NCHW"))
    return out + b.reshape(1, -1, 1, 1)


def netg_forward_ref(z, params, sz, nc):
    B = z.shape[0]
    zn = z / jnp.linalg.norm(z, axis=1, keepdims=True)
    h = _leaky_relu(zn @ params["w1"])
    y = _leaky_relu(h @ params["w2"])
    x = y.reshape(B, 128, sz // 4, sz // 4)
    x = _leaky_relu(_ref_conv_transpose(x, params["wc1"], params["bc1"]))
    x = jax.nn.sigmoid(_ref_conv_transpose(x, params["wc2"], params["bc2"]))
    return x


if __name__ == "__main__":
    nz, sz, nc, B = 32, 16, 3, 2
    key = jax.random.PRNGKey(0)
    kz, kp = jax.random.split(key)
    z = jax.random.normal(kz, (B, nz), jnp.float32)
    params = init_params(kp, nz, sz, nc)

    fwd = jax.jit(functools.partial(netg_forward, sz=sz, nc=nc))
    out = fwd(z, params)
    jax.block_until_ready(out)

    assert out.shape == (B, nc, sz, sz), out.shape
    assert bool(jnp.all(jnp.isfinite(out)))
    assert bool(jnp.all((out >= 0.0) & (out <= 1.0)))   # sigmoid output range

    ref = netg_forward_ref(z, params, sz, nc)
    err = float(jnp.max(jnp.abs(out - ref)))
    assert bool(jnp.allclose(out, ref, atol=2e-2, rtol=2e-2)), err

    print("KERNEL_OK")
</pallas_src>

<mosaic_0001>
module attributes {stable_mosaic.version = 11 : i64} {
  func.func @_mlp_kernel(%arg0: i32, %arg1: memref<2x32xf32, #tpu.memory_space<vmem>>, %arg2: memref<32x1024xbf16, #tpu.memory_space<vmem>>, %arg3: memref<1024x1024xbf16, #tpu.memory_space<vmem>>, %arg4: memref<2x1024xbf16, #tpu.memory_space<vmem>>) attributes {dimension_semantics = [#tpu.dimension_semantics<parallel>], iteration_bounds = array<i64: 2>, scalar_prefetch = 0 : i64, scratch_operands = 0 : i64, tpu.core_type = #tpu.core_type<tc>, window_params = [{pipeline_mode = #tpu.pipeline_mode<synchronous>, transform_indices = @transform_0, window_bounds = array<i64: 2, 32>}, {pipeline_mode = #tpu.pipeline_mode<synchronous>, transform_indices = @transform_1, window_bounds = array<i64: 32, 1024>}, {transform_indices = @transform_2, window_bounds = array<i64: 1024, 1024>}, {transform_indices = @transform_3, window_bounds = array<i64: 2, 1024>}]} {
    %c0 = arith.constant 0 : index
    %c0_0 = arith.constant 0 : index
    %0 = vector.load %arg1[%c0, %c0_0] : memref<2x32xf32, #tpu.memory_space<vmem>>, vector<2x32xf32>
    %1 = arith.mulf %0, %0 : vector<2x32xf32>
    %cst = arith.constant dense<0.000000e+00> : vector<2xf32>
    %2 = vector.multi_reduction <add>, %1, %cst [1] : vector<2x32xf32> to vector<2xf32>
    %3 = vector.shape_cast %2 : vector<2xf32> to vector<2x1xf32>
    %4 = math.rsqrt %3 : vector<2x1xf32>
    %5 = vector.broadcast %4 : vector<2x1xf32> to vector<2x32xf32>
    %6 = arith.mulf %0, %5 : vector<2x32xf32>
    %7 = arith.truncf %6 : vector<2x32xf32> to vector<2x32xbf16>
    %c0_1 = arith.constant 0 : index
    %c0_2 = arith.constant 0 : index
    %8 = vector.load %arg2[%c0_1, %c0_2] : memref<32x1024xbf16, #tpu.memory_space<vmem>>, vector<32x1024xbf16>
    %cst_3 = arith.constant dense<0.000000e+00> : vector<2x1024xf32>
    %9 = tpu.matmul %7, %8, %cst_3 {dimension_numbers = #tpu.dot_dimension_numbers<[1], [0], [0], [1], [0, 0, 1, 1], [], []>} : vector<2x32xbf16>, vector<32x1024xbf16>, vector<2x1024xf32> -> vector<2x1024xf32>
    %cst_4 = arith.constant 0.000000e+00 : f32
    %10 = vector.broadcast %cst_4 : f32 to vector<2x1024xf32>
    %11 = arith.cmpf oge, %9, %10 : vector<2x1024xf32>
    %cst_5 = arith.constant 2.000000e-01 : f32
    %12 = vector.broadcast %cst_5 : f32 to vector<2x1024xf32>
    %13 = arith.mulf %12, %9 : vector<2x1024xf32>
    %14 = arith.select %11, %9, %13 : vector<2x1024xi1>, vector<2x1024xf32>
    %15 = arith.truncf %14 : vector<2x1024xf32> to vector<2x1024xbf16>
    %c0_6 = arith.constant 0 : index
    %c0_7 = arith.constant 0 : index
    %16 = vector.load %arg3[%c0_6, %c0_7] : memref<1024x1024xbf16, #tpu.memory_space<vmem>>, vector<1024x1024xbf16>
    %cst_8 = arith.constant dense<0.000000e+00> : vector<2x1024xf32>
    %17 = tpu.matmul %15, %16, %cst_8 {dimension_numbers = #tpu.dot_dimension_numbers<[1], [0], [0], [1], [0, 0, 1, 1], [], []>} : vector<2x1024xbf16>, vector<1024x1024xbf16>, vector<2x1024xf32> -> vector<2x1024xf32>
    %cst_9 = arith.constant 0.000000e+00 : f32
    %18 = vector.broadcast %cst_9 : f32 to vector<2x1024xf32>
    %19 = arith.cmpf oge, %17, %18 : vector<2x1024xf32>
    %cst_10 = arith.constant 2.000000e-01 : f32
    %20 = vector.broadcast %cst_10 : f32 to vector<2x1024xf32>
    %21 = arith.mulf %20, %17 : vector<2x1024xf32>
    %22 = arith.select %19, %17, %21 : vector<2x1024xi1>, vector<2x1024xf32>
    %23 = arith.truncf %22 : vector<2x1024xf32> to vector<2x1024xbf16>
    %c0_11 = arith.constant 0 : index
    %c0_12 = arith.constant 0 : index
    %24 = vector.load %arg4[%c0_11, %c0_12] : memref<2x1024xbf16, #tpu.memory_space<vmem>>, vector<2x1024xbf16>
    tpu.vector_store %arg4[%c0_11, %c0_12], %23 {strides = array<i32>} : memref<2x1024xbf16, #tpu.memory_space<vmem>>, vector<2x1024xbf16>,
    return
  }
  func.func @transform_0(%arg0: i32) -> (i32, i32) {
    %c0_i32 = arith.constant 0 : i32
    %c0_i32_0 = arith.constant 0 : i32
    %c0_i32_1 = arith.constant 0 : i32
    return %c0_i32, %c0_i32_0 : i32, i32
  }
  func.func @transform_1(%arg0: i32) -> (i32, i32) {
    %c0_i32 = arith.constant 0 : i32
    %c0_i32_0 = arith.constant 0 : i32
    %c0_i32_1 = arith.constant 0 : i32
    return %c0_i32, %c0_i32_0 : i32, i32
  }
  func.func @transform_2(%arg0: i32) -> (i32, i32) {
    %c0_i32 = arith.constant 0 : i32
    %c0_i32_0 = arith.constant 0 : i32
    return %c0_i32, %arg0 : i32, i32
  }
  func.func @transform_3(%arg0: i32) -> (i32, i32) {
    %c0_i32 = arith.constant 0 : i32
    %c0_i32_0 = arith.constant 0 : i32
    return %c0_i32, %arg0 : i32, i32
  }
}

module attributes {stable_mosaic.version = 11 : i64} {
  func.func @kernel(%arg0: i32, %arg1: memref<1x6x6x128xbf16, #tpu.memory_space<vmem>>, %arg2: memref<4x4x128x128xbf16, #tpu.memory_space<vmem>>, %arg3: memref<1x128xf32, #tpu.memory_space<vmem>>, %arg4: memref<16x512xbf16, #tpu.memory_space<vmem>>) attributes {dimension_semantics = [#tpu.dimension_semantics<parallel>], iteration_bounds = array<i64: 2>, scalar_prefetch = 0 : i64, scratch_operands = 0 : i64, tpu.core_type = #tpu.core_type<tc>, window_params = [{transform_indices = @transform_0, window_bounds = array<i64: 1, 6, 6, 128>}, {pipeline_mode = #tpu.pipeline_mode<synchronous>, transform_indices = @transform_1, window_bounds = array<i64: 4, 4, 128, 128>}, {pipeline_mode = #tpu.pipeline_mode<synchronous>, transform_indices = @transform_2, window_bounds = array<i64: 1, 128>}, {transform_indices = @transform_3, window_bounds = array<i64: 16, 512>}]} {
    %c0 = arith.constant 0 : index
    %c0_0 = arith.constant 0 : index
    %0 = vector.load %arg3[%c0, %c0_0] : memref<1x128xf32, #tpu.memory_space<vmem>>, vector<1x128xf32>
    %c0_1 = arith.constant 0 : index
    %c0_2 = arith.constant 0 : index
    %c0_3 = arith.constant 0 : index
    %c0_4 = arith.constant 0 : index
    %1 = vector.load %arg1[%c0_1, %c0_2, %c0_3, %c0_4] : memref<1x6x6x128xbf16, #tpu.memory_space<vmem>>, vector<1x4x4x128xbf16>
    %2 = vector.shape_cast %1 : vector<1x4x4x128xbf16> to vector<16x128xbf16>
    %c0_5 = arith.constant 0 : index
    %c0_6 = arith.constant 0 : index
    %c1 = arith.constant 1 : index
    %c0_7 = arith.constant 0 : index
    %3 = vector.load %arg1[%c0_5, %c0_6, %c1, %c0_7] : memref<1x6x6x128xbf16, #tpu.memory_space<vmem>>, vector<1x4x4x128xbf16>
    %4 = vector.shape_cast %3 : vector<1x4x4x128xbf16> to vector<16x128xbf16>
    %c0_8 = arith.constant 0 : index
    %c0_9 = arith.constant 0 : index
    %c2 = arith.constant 2 : index
    %c0_10 = arith.constant 0 : index
    %5 = vector.load %arg1[%c0_8, %c0_9, %c2, %c0_10] : memref<1x6x6x128xbf16, #tpu.memory_space<vmem>>, vector<1x4x4x128xbf16>
    %6 = vector.shape_cast %5 : vector<1x4x4x128xbf16> to vector<16x128xbf16>
    %c0_11 = arith.constant 0 : index
    %c1_12 = arith.constant 1 : index
    %c0_13 = arith.constant 0 : index
    %c0_14 = arith.constant 0 : index
    %7 = vector.load %arg1[%c0_11, %c1_12, %c0_13, %c0_14] : memref<1x6x6x128xbf16, #tpu.memory_space<vmem>>, vector<1x4x4x128xbf16>
    %8 = vector.shape_cast %7 : vector<1x4x4x128xbf16> to vector<16x128xbf16>
    %c0_15 = arith.constant 0 : index
    %c1_16 = arith.constant 1 : index
    %c1_17 = arith.constant 1 : index
    %c0_18 = arith.constant 0 : index
    %9 = vector.load %arg1[%c0_15, %c1_16, %c1_17, %c0_18] : memref<1x6x6x128xbf16, #tpu.memory_space<vmem>>, vector<1x4x4x128xbf16>
    %10 = vector.shape_cast %9 : vector<1x4x4x128xbf16> to vector<16x128xbf16>
    %c0_19 = arith.constant 0 : index
    %c1_20 = arith.constant 1 : index
    %c2_21 = arith.constant 2 : index
    %c0_22 = arith.constant 0 : index
    %11 = vector.load %arg1[%c0_19, %c1_20, %c2_21, %c0_22] : memref<1x6x6x128xbf16, #tpu.memory_space<vmem>>, vector<1x4x4x128xbf16>
    %12 = vector.shape_cast %11 : vector<1x4x4x128xbf16> to vector<16x128xbf16>
    %c0_23 = arith.constant 0 : index
    %c2_24 = arith.constant 2 : index
    %c0_25 = arith.constant 0 : index
    %c0_26 = arith.constant 0 : index
    %13 = vector.load %arg1[%c0_23, %c2_24, %c0_25, %c0_26] : memref<1x6x6x128xbf16, #tpu.memory_space<vmem>>, vector<1x4x4x128xbf16>
    %14 = vector.shape_cast %13 : vector<1x4x4x128xbf16> to vector<16x128xbf16>
    %c0_27 = arith.constant 0 : index
    %c2_28 = arith.constant 2 : index
    %c1_29 = arith.constant 1 : index
    %c0_30 = arith.constant 0 : index
    %15 = vector.load %arg1[%c0_27, %c2_28, %c1_29, %c0_30] : memref<1x6x6x128xbf16, #tpu.memory_space<vmem>>, vector<1x4x4x128xbf16>
    %16 = vector.shape_cast %15 : vector<1x4x4x128xbf16> to vector<16x128xbf16>
    %c0_31 = arith.constant 0 : index
    %c2_32 = arith.constant 2 : index
    %c2_33 = arith.constant 2 : index
    %c0_34 = arith.constant 0 : index
    %17 = vector.load %arg1[%c0_31, %c2_32, %c2_33, %c0_34] : memref<1x6x6x128xbf16, #tpu.memory_space<vmem>>, vector<1x4x4x128xbf16>
    %18 = vector.shape_cast %17 : vector<1x4x4x128xbf16> to vector<16x128xbf16>
    %cst = arith.constant 0.000000e+00 : f32
    %19 = vector.broadcast %cst : f32 to vector<16x128xf32>
    %c3 = arith.constant 3 : index
    %c3_35 = arith.constant 3 : index
    %c0_36 = arith.constant 0 : index
    %c0_37 = arith.constant 0 : index
    %20 = vector.load %arg2[%c3, %c3_35, %c0_36, %c0_37] : memref<4x4x128x128xbf16, #tpu.memory_space<vmem>>, vector<1x1x128x128xbf16>
    %21 = vector.shape_cast %20 : vector<1x1x128x128xbf16> to vector<128x128xbf16>
    %cst_38 = arith.constant dense<0.000000e+00> : vector<16x128xf32>
    %22 = tpu.matmul %2, %21, %cst_38 {dimension_numbers = #tpu.dot_dimension_numbers<[1], [0], [0], [1], [0, 0, 1, 1], [], []>} : vector<16x128xbf16>, vector<128x128xbf16>, vector<16x128xf32> -> vector<16x128xf32>
    %23 = arith.addf %19, %22 : vector<16x128xf32>
    %c3_39 = arith.constant 3 : index
    %c1_40 = arith.constant 1 : index
    %c0_41 = arith.constant 0 : index
    %c0_42 = arith.constant 0 : index
    %24 = vector.load %arg2[%c3_39, %c1_40, %c0_41, %c0_42] : memref<4x4x128x128xbf16, #tpu.memory_space<vmem>>, vector<1x1x128x128xbf16>
    %25 = vector.shape_cast %24 : vector<1x1x128x128xbf16> to vector<128x128xbf16>
    %cst_43 = arith.constant dense<0.000000e+00> : vector<16x128xf32>
    %26 = tpu.matmul %4, %25, %cst_43 {dimension_numbers = #tpu.dot_dimension_numbers<[1], [0], [0], [1], [0, 0, 1, 1], [], []>} : vector<16x128xbf16>, vector<128x128xbf16>, vector<16x128xf32> -> vector<16x128xf32>
    %27 = arith.addf %23, %26 : vector<16x128xf32>
    %c1_44 = arith.constant 1 : index
    %c3_45 = arith.constant 3 : index
    %c0_46 = arith.constant 0 : index
    %c0_47 = arith.constant 0 : index
    %28 = vector.load %arg2[%c1_44, %c3_45, %c0_46, %c0_47] : memref<4x4x128x128xbf16, #tpu.memory_space<vmem>>, vector<1x1x128x128xbf16>
    %29 = vector.shape_cast %28 : vector<1x1x128x128xbf16> to vector<128x128xbf16>
    %cst_48 = arith.constant dense<0.000000e+00> : vector<16x128xf32>
    %30 = tpu.matmul %8, %29, %cst_48 {dimension_numbers = #tpu.dot_dimension_numbers<[1], [0], [0], [1], [0, 0, 1, 1], [], []>} : vector<16x128xbf16>, vector<128x128xbf16>, vector<16x128xf32> -> vector<16x128xf32>
    %31 = arith.addf %27, %30 : vector<16x128xf32>
    %c1_49 = arith.constant 1 : index
    %c1_50 = arith.constant 1 : index
    %c0_51 = arith.constant 0 : index
    %c0_52 = arith.constant 0 : index
    %32 = vector.load %arg2[%c1_49, %c1_50, %c0_51, %c0_52] : memref<4x4x128x128xbf16, #tpu.memory_space<vmem>>, vector<1x1x128x128xbf16>
    %33 = vector.shape_cast %32 : vector<1x1x128x128xbf16> to vector<128x128xbf16>
    %cst_53 = arith.constant dense<0.000000e+00> : vector<16x128xf32>
    %34 = tpu.matmul %10, %33, %cst_53 {dimension_numbers = #tpu.dot_dimension_numbers<[1], [0], [0], [1], [0, 0, 1, 1], [], []>} : vector<16x128xbf16>, vector<128x128xbf16>, vector<16x128xf32> -> vector<16x128xf32>
    %35 = arith.addf %31, %34 : vector<16x128xf32>
    %36 = vector.broadcast %0 : vector<1x128xf32> to vector<16x128xf32>
    %37 = arith.addf %35, %36 : vector<16x128xf32>
    %cst_54 = arith.constant 0.000000e+00 : f32
    %38 = vector.broadcast %cst_54 : f32 to vector<16x128xf32>
    %39 = arith.cmpf oge, %37, %38 : vector<16x128xf32>
    %cst_55 = arith.constant 2.000000e-01 : f32
    %40 = vector.broadcast %cst_55 : f32 to vector<16x128xf32>
    %41 = arith.mulf %40, %37 : vector<16x128xf32>
    %42 = arith.select %39, %37, %41 : vector<16x128xi1>, vector<16x128xf32>
    %43 = arith.truncf %42 : vector<16x128xf32> to vector<16x128xbf16>
    %c0_56 = arith.constant 0 : index
    %c0_57 = arith.constant 0 : index
    %44 = vector.load %arg4[%c0_56, %c0_57] : memref<16x512xbf16, #tpu.memory_space<vmem>>, vector<16x128xbf16>
    tpu.vector_store %arg4[%c0_56, %c0_57], %43 {strides = array<i32>} : memref<16x512xbf16, #tpu.memory_space<vmem>>, vector<16x128xbf16>,
    %cst_58 = arith.constant 0.000000e+00 : f32
    %45 = vector.broadcast %cst_58 : f32 to vector<16x128xf32>
    %c3_59 = arith.constant 3 : index
    %c2_60 = arith.constant 2 : index
    %c0_61 = arith.constant 0 : index
    %c0_62 = arith.constant 0 : index
    %46 = vector.load %arg2[%c3_59, %c2_60, %c0_61, %c0_62] : memref<4x4x128x128xbf16, #tpu.memory_space<vmem>>, vector<1x1x128x128xbf16>
    %47 = vector.shape_cast %46 : vector<1x1x128x128xbf16> to vector<128x128xbf16>
    %cst_63 = arith.constant dense<0.000000e+00> : vector<16x128xf32>
    %48 = tpu.matmul %4, %47, %cst_63 {dimension_numbers = #tpu.dot_dimension_numbers<[1], [0], [0], [1], [0, 0, 1, 1], [], []>} : vector<16x128xbf16>, vector<128x128xbf16>, vector<16x128xf32> -> vector<16x128xf32>
    %49 = arith.addf %45, %48 : vector<16x128xf32>
    %c3_64 = arith.constant 3 : index
    %c0_65 = arith.constant 0 : index
    %c0_66 = arith.constant 0 : index
    %c0_67 = arith.constant 0 : index
    %50 = vector.load %arg2[%c3_64, %c0_65, %c0_66, %c0_67] : memref<4x4x128x128xbf16, #tpu.memory_space<vmem>>, vector<1x1x128x128xbf16>
    %51 = vector.shape_cast %50 : vector<1x1x128x128xbf16> to vector<128x128xbf16>
    %cst_68 = arith.constant dense<0.000000e+00> : vector<16x128xf32>
    %52 = tpu.matmul %6, %51, %cst_68 {dimension_numbers = #tpu.dot_dimension_numbers<[1], [0], [0], [1], [0, 0, 1, 1], [], []>} : vector<16x128xbf16>, vector<128x128xbf16>, vector<16x128xf32> -> vector<16x128xf32>
    %53 = arith.addf %49, %52 : vector<16x128xf32>
    %c1_69 = arith.constant 1 : index
    %c2_70 = arith.constant 2 : index
    %c0_71 = arith.constant 0 : index
    %c0_72 = arith.constant 0 : index
    %54 = vector.load %arg2[%c1_69, %c2_70, %c0_71, %c0_72] : memref<4x4x128x128xbf16, #tpu.memory_space<vmem>>, vector<1x1x128x128xbf16>
    %55 = vector.shape_cast %54 : vector<1x1x128x128xbf16> to vector<128x128xbf16>
    %cst_73 = arith.constant dense<0.000000e+00> : vector<16x128xf32>
    %56 = tpu.matmul %10, %55, %cst_73 {dimension_numbers = #tpu.dot_dimension_numbers<[1], [0], [0], [1], [0, 0, 1, 1], [], []>} : vector<16x128xbf16>, vector<128x128xbf16>, vector<16x128xf32> -> vector<16x128xf32>
    %57 = arith.addf %53, %56 : vector<16x128xf32>
    %c1_74 = arith.constant 1 : index
    %c0_75 = arith.constant 0 : index
    %c0_76 = arith.constant 0 : index
    %c0_77 = arith.constant 0 : index
    %58 = vector.load %arg2[%c1_74, %c0_75, %c0_76, %c0_77] : memref<4x4x128x128xbf16, #tpu.memory_space<vmem>>, vector<1x1x128x128xbf16>
    %59 = vector.shape_cast %58 : vector<1x1x128x128xbf16> to vector<128x128xbf16>
    %cst_78 = arith.constant dense<0.000000e+00> : vector<16x128xf32>
    %60 = tpu.matmul %12, %59, %cst_78 {dimension_numbers = #tpu.dot_dimension_numbers<[1], [0], [0], [1], [0, 0, 1, 1], [], []>} : vector<16x128xbf16>, vector<128x128xbf16>, vector<16x128xf32> -> vector<16x128xf32>
    %61 = arith.addf %57, %60 : vector<16x128xf32>
    %62 = vector.broadcast %0 : vector<1x128xf32> to vector<16x128xf32>
    %63 = arith.addf %61, %62 : vector<16x128xf32>
    %cst_79 = arith.constant 0.000000e+00 : f32
    %64 = vector.broadcast %cst_79 : f32 to vector<16x128xf32>
    %65 = arith.cmpf oge, %63, %64 : vector<16x128xf32>
    %cst_80 = arith.constant 2.000000e-01 : f32
    %66 = vector.broadcast %cst_80 : f32 to vector<16x128xf32>
    %67 = arith.mulf %66, %63 : vector<16x128xf32>
    %68 = arith.select %65, %63, %67 : vector<16x128xi1>, vector<16x128xf32>
    %69 = arith.truncf %68 : vector<16x128xf32> to vector<16x128xbf16>
    %c0_81 = arith.constant 0 : index
    %c128 = arith.constant 128 : index
    %70 = vector.load %arg4[%c0_81, %c128] : memref<16x512xbf16, #tpu.memory_space<vmem>>, vector<16x128xbf16>
    tpu.vector_store %arg4[%c0_81, %c128], %69 {strides = array<i32>} : memref<16x512xbf16, #tpu.memory_space<vmem>>, vector<16x128xbf16>,
    %cst_82 = arith.constant 0.000000e+00 : f32
    %71 = vector.broadcast %cst_82 : f32 to vector<16x128xf32>
    %c2_83 = arith.constant 2 : index
    %c3_84 = arith.constant 3 : index
    %c0_85 = arith.constant 0 : index
    %c0_86 = arith.constant 0 : index
    %72 = vector.load %arg2[%c2_83, %c3_84, %c0_85, %c0_86] : memref<4x4x128x128xbf16, #tpu.memory_space<vmem>>, vector<1x1x128x128xbf16>
    %73 = vector.shape_cast %72 : vector<1x1x128x128xbf16> to vector<128x128xbf16>
    %cst_87 = arith.constant dense<0.000000e+00> : vector<16x128xf32>
    %74 = tpu.matmul %8, %73, %cst_87 {dimension_numbers = #tpu.dot_dimension_numbers<[1], [0], [0], [1], [0, 0, 1, 1], [], []>} : vector<16x128xbf16>, vector<128x128xbf16>, vector<16x128xf32> -> vector<16x128xf32>
    %75 = arith.addf %71, %74 : vector<16x128xf32>
    %c2_88 = arith.constant 2 : index
    %c1_89 = arith.constant 1 : index
    %c0_90 = arith.constant 0 : index
    %c0_91 = arith.constant 0 : index
    %76 = vector.load %arg2[%c2_88, %c1_89, %c0_90, %c0_91] : memref<4x4x128x128xbf16, #tpu.memory_space<vmem>>, vector<1x1x128x128xbf16>
    %77 = vector.shape_cast %76 : vector<1x1x128x128xbf16> to vector<128x128xbf16>
    %cst_92 = arith.constant dense<0.000000e+00> : vector<16x128xf32>
    %78 = tpu.matmul %10, %77, %cst_92 {dimension_numbers = #tpu.dot_dimension_numbers<[1], [0], [0], [1], [0, 0, 1, 1], [], []>} : vector<16x128xbf16>, vector<128x128xbf16>, vector<16x128xf32> -> vector<16x128xf32>
    %79 = arith.addf %75, %78 : vector<16x128xf32>
    %c0_93 = arith.constant 0 : index
    %c3_94 = arith.constant 3 : index
    %c0_95 = arith.constant 0 : index
    %c0_96 = arith.constant 0 : index
    %80 = vector.load %arg2[%c0_93, %c3_94, %c0_95, %c0_96] : memref<4x4x128x128xbf16, #tpu.memory_space<vmem>>, vector<1x1x128x128xbf16>
    %81 = vector.shape_cast %80 : vector<1x1x128x128xbf16> to vector<128x128xbf16>
    %cst_97 = arith.constant dense<0.000000e+00> : vector<16x128xf32>
    %82 = tpu.matmul %14, %81, %cst_97 {dimension_numbers = #tpu.dot_dimension_numbers<[1], [0], [0], [1], [0, 0, 1, 1], [], []>} : vector<16x128xbf16>, vector<128x128xbf16>, vector<16x128xf32> -> vector<16x128xf32>
    %83 = arith.addf %79, %82 : vector<16x128xf32>
    %c0_98 = arith.constant 0 : index
    %c1_99 = arith.constant 1 : index
    %c0_100 = arith.constant 0 : index
    %c0_101 = arith.constant 0 : index
    %84 = vector.load %arg2[%c0_98, %c1_99, %c0_100, %c0_101] : memref<4x4x128x128xbf16, #tpu.memory_space<vmem>>, vector<1x1x128x128xbf16>
    %85 = vector.shape_cast %84 : vector<1x1x128x128xbf16> to vector<128x128xbf16>
    %cst_102 = arith.constant dense<0.000000e+00> : vector<16x128xf32>
    %86 = tpu.matmul %16, %85, %cst_102 {dimension_numbers = #tpu.dot_dimension_numbers<[1], [0], [0], [1], [0, 0, 1, 1], [], []>} : vector<16x128xbf16>, vector<128x128xbf16>, vector<16x128xf32> -> vector<16x128xf32>
    %87 = arith.addf %83, %86 : vector<16x128xf32>
    %88 = vector.broadcast %0 : vector<1x128xf32> to vector<16x128xf32>
    %89 = arith.addf %87, %88 : vector<16x128xf32>
    %cst_103 = arith.constant 0.000000e+00 : f32
    %90 = vector.broadcast %cst_103 : f32 to vector<16x128xf32>
    %91 = arith.cmpf oge, %89, %90 : vector<16x128xf32>
    %cst_104 = arith.constant 2.000000e-01 : f32
    %92 = vector.broadcast %cst_104 : f32 to vector<16x128xf32>
    %93 = arith.mulf %92, %89 : vector<16x128xf32>
    %94 = arith.select %91, %89, %93 : vector<16x128xi1>, vector<16x128xf32>
    %95 = arith.truncf %94 : vector<16x128xf32> to vector<16x128xbf16>
    %c0_105 = arith.constant 0 : index
    %c256 = arith.constant 256 : index
    %96 = vector.load %arg4[%c0_105, %c256] : memref<16x512xbf16, #tpu.memory_space<vmem>>, vector<16x128xbf16>
    tpu.vector_store %arg4[%c0_105, %c256], %95 {strides = array<i32>} : memref<16x512xbf16, #tpu.memory_space<vmem>>, vector<16x128xbf16>,
    %cst_106 = arith.constant 0.000000e+00 : f32
    %97 = vector.broadcast %cst_106 : f32 to vector<16x128xf32>
    %c2_107 = arith.constant 2 : index
    %c2_108 = arith.constant 2 : index
    %c0_109 = arith.constant 0 : index
    %c0_110 = arith.constant 0 : index
    %98 = vector.load %arg2[%c2_107, %c2_108, %c0_109, %c0_110] : memref<4x4x128x128xbf16, #tpu.memory_space<vmem>>, vector<1x1x128x128xbf16>
    %99 = vector.shape_cast %98 : vector<1x1x128x128xbf16> to vector<128x128xbf16>
    %cst_111 = arith.constant dense<0.000000e+00> : vector<16x128xf32>
    %100 = tpu.matmul %10, %99, %cst_111 {dimension_numbers = #tpu.dot_dimension_numbers<[1], [0], [0], [1], [0, 0, 1, 1], [], []>} : vector<16x128xbf16>, vector<128x128xbf16>, vector<16x128xf32> -> vector<16x128xf32>
    %101 = arith.addf %97, %100 : vector<16x128xf32>
    %c2_112 = arith.constant 2 : index
    %c0_113 = arith.constant 0 : index
    %c0_114 = arith.constant 0 : index
    %c0_115 = arith.constant 0 : index
    %102 = vector.load %arg2[%c2_112, %c0_113, %c0_114, %c0_115] : memref<4x4x128x128xbf16, #tpu.memory_space<vmem>>, vector<1x1x128x128xbf16>
    %103 = vector.shape_cast %102 : vector<1x1x128x128xbf16> to vector<128x128xbf16>
    %cst_116 = arith.constant dense<0.000000e+00> : vector<16x128xf32>
    %104 = tpu.matmul %12, %103, %cst_116 {dimension_numbers = #tpu.dot_dimension_numbers<[1], [0], [0], [1], [0, 0, 1, 1], [], []>} : vector<16x128xbf16>, vector<128x128xbf16>, vector<16x128xf32> -> vector<16x128xf32>
    %105 = arith.addf %101, %104 : vector<16x128xf32>
    %c0_117 = arith.constant 0 : index
    %c2_118 = arith.constant 2 : index
    %c0_119 = arith.constant 0 : index
    %c0_120 = arith.constant 0 : index
    %106 = vector.load %arg2[%c0_117, %c2_118, %c0_119, %c0_120] : memref<4x4x128x128xbf16, #tpu.memory_space<vmem>>, vector<1x1x128x128xbf16>
    %107 = vector.shape_cast %106 : vector<1x1x128x128xbf16> to vector<128x128xbf16>
    %cst_121 = arith.constant dense<0.000000e+00> : vector<16x128xf32>
    %108 = tpu.matmul %16, %107, %cst_121 {dimension_numbers = #tpu.dot_dimension_numbers<[1], [0], [0], [1], [0, 0, 1, 1], [], []>} : vector<16x128xbf16>, vector<128x128xbf16>, vector<16x128xf32> -> vector<16x128xf32>
    %109 = arith.addf %105, %108 : vector<16x128xf32>
    %c0_122 = arith.constant 0 : index
    %c0_123 = arith.constant 0 : index
    %c0_124 = arith.constant 0 : index
    %c0_125 = arith.constant 0 : index
    %110 = vector.load %arg2[%c0_122, %c0_123, %c0_124, %c0_125] : memref<4x4x128x128xbf16, #tpu.memory_space<vmem>>, vector<1x1x128x128xbf16>
    %111 = vector.shape_cast %110 : vector<1x1x128x128xbf16> to vector<128x128xbf16>
    %cst_126 = arith.constant dense<0.000000e+00> : vector<16x128xf32>
    %112 = tpu.matmul %18, %111, %cst_126 {dimension_numbers = #tpu.dot_dimension_numbers<[1], [0], [0], [1], [0, 0, 1, 1], [], []>} : vector<16x128xbf16>, vector<128x128xbf16>, vector<16x128xf32> -> vector<16x128xf32>
    %113 = arith.addf %109, %112 : vector<16x128xf32>
    %114 = vector.broadcast %0 : vector<1x128xf32> to vector<16x128xf32>
    %115 = arith.addf %113, %114 : vector<16x128xf32>
    %cst_127 = arith.constant 0.000000e+00 : f32
    %116 = vector.broadcast %cst_127 : f32 to vector<16x128xf32>
    %117 = arith.cmpf oge, %115, %116 : vector<16x128xf32>
    %cst_128 = arith.constant 2.000000e-01 : f32
    %118 = vector.broadcast %cst_128 : f32 to vector<16x128xf32>
    %119 = arith.mulf %118, %115 : vector<16x128xf32>
    %120 = arith.select %117, %115, %119 : vector<16x128xi1>, vector<16x128xf32>
    %121 = arith.truncf %120 : vector<16x128xf32> to vector<16x128xbf16>
    %c0_129 = arith.constant 0 : index
    %c384 = arith.constant 384 : index
    %122 = vector.load %arg4[%c0_129, %c384] : memref<16x512xbf16, #tpu.memory_space<vmem>>, vector<16x128xbf16>
    tpu.vector_store %arg4[%c0_129, %c384], %121 {strides = array<i32>} : memref<16x512xbf16, #tpu.memory_space<vmem>>, vector<16x128xbf16>,
    return
  }
  func.func @transform_0(%arg0: i32) -> (i32, i32, i32, i32) {
    %c0_i32 = arith.constant 0 : i32
    %c0_i32_0 = arith.constant 0 : i32
    %c0_i32_1 = arith.constant 0 : i32
    %c0_i32_2 = arith.constant 0 : i32
    return %arg0, %c0_i32, %c0_i32_0, %c0_i32_1 : i32, i32, i32, i32
  }
  func.func @transform_1(%arg0: i32) -> (i32, i32, i32, i32) {
    %c0_i32 = arith.constant 0 : i32
    %c0_i32_0 = arith.constant 0 : i32
    %c0_i32_1 = arith.constant 0 : i32
    %c0_i32_2 = arith.constant 0 : i32
    %c0_i32_3 = arith.constant 0 : i32
    return %c0_i32, %c0_i32_0, %c0_i32_1, %c0_i32_2 : i32, i32, i32, i32
  }
  func.func @transform_2(%arg0: i32) -> (i32, i32) {
    %c0_i32 = arith.constant 0 : i32
    %c0_i32_0 = arith.constant 0 : i32
    %c0_i32_1 = arith.constant 0 : i32
    return %c0_i32, %c0_i32_0 : i32, i32
  }
  func.func @transform_3(%arg0: i32) -> (i32, i32) {
    %c0_i32 = arith.constant 0 : i32
    %c0_i32_0 = arith.constant 0 : i32
    return %arg0, %c0_i32 : i32, i32
  }
}

module attributes {stable_mosaic.version = 11 : i64} {
  func.func @kernel(%arg0: i32, %arg1: memref<1x10x10x64xbf16, #tpu.memory_space<vmem>>, %arg2: memref<4x4x64x128xbf16, #tpu.memory_space<vmem>>, %arg3: memref<1x128xf32, #tpu.memory_space<vmem>>, %arg4: memref<64x512xf32, #tpu.memory_space<vmem>>) attributes {dimension_semantics = [#tpu.dimension_semantics<parallel>], iteration_bounds = array<i64: 2>, scalar_prefetch = 0 : i64, scratch_operands = 0 : i64, tpu.core_type = #tpu.core_type<tc>, window_params = [{transform_indices = @transform_0, window_bounds = array<i64: 1, 10, 10, 64>}, {pipeline_mode = #tpu.pipeline_mode<synchronous>, transform_indices = @transform_1, window_bounds = array<i64: 4, 4, 64, 128>}, {pipeline_mode = #tpu.pipeline_mode<synchronous>, transform_indices = @transform_2, window_bounds = array<i64: 1, 128>}, {transform_indices = @transform_3, window_bounds = array<i64: 64, 512>}]} {
    %c0 = arith.constant 0 : index
    %c0_0 = arith.constant 0 : index
    %0 = vector.load %arg3[%c0, %c0_0] : memref<1x128xf32, #tpu.memory_space<vmem>>, vector<1x128xf32>
    %c0_1 = arith.constant 0 : index
    %c0_2 = arith.constant 0 : index
    %c0_3 = arith.constant 0 : index
    %c0_4 = arith.constant 0 : index
    %1 = vector.load %arg1[%c0_1, %c0_2, %c0_3, %c0_4] : memref<1x10x10x64xbf16, #tpu.memory_space<vmem>>, vector<1x8x8x64xbf16>
    %2 = vector.shape_cast %1 : vector<1x8x8x64xbf16> to vector<64x64xbf16>
    %c0_5 = arith.constant 0 : index
    %c0_6 = arith.constant 0 : index
    %c1 = arith.constant 1 : index
    %c0_7 = arith.constant 0 : index
    %3 = vector.load %arg1[%c0_5, %c0_6, %c1, %c0_7] : memref<1x10x10x64xbf16, #tpu.memory_space<vmem>>, vector<1x8x8x64xbf16>
    %4 = vector.shape_cast %3 : vector<1x8x8x64xbf16> to vector<64x64xbf16>
    %c0_8 = arith.constant 0 : index
    %c0_9 = arith.constant 0 : index
    %c2 = arith.constant 2 : index
    %c0_10 = arith.constant 0 : index
    %5 = vector.load %arg1[%c0_8, %c0_9, %c2, %c0_10] : memref<1x10x10x64xbf16, #tpu.memory_space<vmem>>, vector<1x8x8x64xbf16>
    %6 = vector.shape_cast %5 : vector<1x8x8x64xbf16> to vector<64x64xbf16>
    %c0_11 = arith.constant 0 : index
    %c1_12 = arith.constant 1 : index
    %c0_13 = arith.constant 0 : index
    %c0_14 = arith.constant 0 : index
    %7 = vector.load %arg1[%c0_11, %c1_12, %c0_13, %c0_14] : memref<1x10x10x64xbf16, #tpu.memory_space<vmem>>, vector<1x8x8x64xbf16>
    %8 = vector.shape_cast %7 : vector<1x8x8x64xbf16> to vector<64x64xbf16>
    %c0_15 = arith.constant 0 : index
    %c1_16 = arith.constant 1 : index
    %c1_17 = arith.constant 1 : index
    %c0_18 = arith.constant 0 : index
    %9 = vector.load %arg1[%c0_15, %c1_16, %c1_17, %c0_18] : memref<1x10x10x64xbf16, #tpu.memory_space<vmem>>, vector<1x8x8x64xbf16>
    %10 = vector.shape_cast %9 : vector<1x8x8x64xbf16> to vector<64x64xbf16>
    %c0_19 = arith.constant 0 : index
    %c1_20 = arith.constant 1 : index
    %c2_21 = arith.constant 2 : index
    %c0_22 = arith.constant 0 : index
    %11 = vector.load %arg1[%c0_19, %c1_20, %c2_21, %c0_22] : memref<1x10x10x64xbf16, #tpu.memory_space<vmem>>, vector<1x8x8x64xbf16>
    %12 = vector.shape_cast %11 : vector<1x8x8x64xbf16> to vector<64x64xbf16>
    %c0_23 = arith.constant 0 : index
    %c2_24 = arith.constant 2 : index
    %c0_25 = arith.constant 0 : index
    %c0_26 = arith.constant 0 : index
    %13 = vector.load %arg1[%c0_23, %c2_24, %c0_25, %c0_26] : memref<1x10x10x64xbf16, #tpu.memory_space<vmem>>, vector<1x8x8x64xbf16>
    %14 = vector.shape_cast %13 : vector<1x8x8x64xbf16> to vector<64x64xbf16>
    %c0_27 = arith.constant 0 : index
    %c2_28 = arith.constant 2 : index
    %c1_29 = arith.constant 1 : index
    %c0_30 = arith.constant 0 : index
    %15 = vector.load %arg1[%c0_27, %c2_28, %c1_29, %c0_30] : memref<1x10x10x64xbf16, #tpu.memory_space<vmem>>, vector<1x8x8x64xbf16>
    %16 = vector.shape_cast %15 : vector<1x8x8x64xbf16> to vector<64x64xbf16>
    %c0_31 = arith.constant 0 : index
    %c2_32 = arith.constant 2 : index
    %c2_33 = arith.constant 2 : index
    %c0_34 = arith.constant 0 : index
    %17 = vector.load %arg1[%c0_31, %c2_32, %c2_33, %c0_34] : memref<1x10x10x64xbf16, #tpu.memory_space<vmem>>, vector<1x8x8x64xbf16>
    %18 = vector.shape_cast %17 : vector<1x8x8x64xbf16> to vector<64x64xbf16>
    %cst = arith.constant 0.000000e+00 : f32
    %19 = vector.broadcast %cst : f32 to vector<64x128xf32>
    %c3 = arith.constant 3 : index
    %c3_35 = arith.constant 3 : index
    %c0_36 = arith.constant 0 : index
    %c0_37 = arith.constant 0 : index
    %20 = vector.load %arg2[%c3, %c3_35, %c0_36, %c0_37] : memref<4x4x64x128xbf16, #tpu.memory_space<vmem>>, vector<1x1x64x128xbf16>
    %21 = vector.shape_cast %20 : vector<1x1x64x128xbf16> to vector<64x128xbf16>
    %cst_38 = arith.constant dense<0.000000e+00> : vector<64x128xf32>
    %22 = tpu.matmul %2, %21, %cst_38 {dimension_numbers = #tpu.dot_dimension_numbers<[1], [0], [0], [1], [0, 0, 1, 1], [], []>} : vector<64x64xbf16>, vector<64x128xbf16>, vector<64x128xf32> -> vector<64x128xf32>
    %23 = arith.addf %19, %22 : vector<64x128xf32>
    %c3_39 = arith.constant 3 : index
    %c1_40 = arith.constant 1 : index
    %c0_41 = arith.constant 0 : index
    %c0_42 = arith.constant 0 : index
    %24 = vector.load %arg2[%c3_39, %c1_40, %c0_41, %c0_42] : memref<4x4x64x128xbf16, #tpu.memory_space<vmem>>, vector<1x1x64x128xbf16>
    %25 = vector.shape_cast %24 : vector<1x1x64x128xbf16> to vector<64x128xbf16>
    %cst_43 = arith.constant dense<0.000000e+00> : vector<64x128xf32>
    %26 = tpu.matmul %4, %25, %cst_43 {dimension_numbers = #tpu.dot_dimension_numbers<[1], [0], [0], [1], [0, 0, 1, 1], [], []>} : vector<64x64xbf16>, vector<64x128xbf16>, vector<64x128xf32> -> vector<64x128xf32>
    %27 = arith.addf %23, %26 : vector<64x128xf32>
    %c1_44 = arith.constant 1 : index
    %c3_45 = arith.constant 3 : index
    %c0_46 = arith.constant 0 : index
    %c0_47 = arith.constant 0 : index
    %28 = vector.load %arg2[%c1_44, %c3_45, %c0_46, %c0_47] : memref<4x4x64x128xbf16, #tpu.memory_space<vmem>>, vector<1x1x64x128xbf16>
    %29 = vector.shape_cast %28 : vector<1x1x64x128xbf16> to vector<64x128xbf16>
    %cst_48 = arith.constant dense<0.000000e+00> : vector<64x128xf32>
    %30 = tpu.matmul %8, %29, %cst_48 {dimension_numbers = #tpu.dot_dimension_numbers<[1], [0], [0], [1], [0, 0, 1, 1], [], []>} : vector<64x64xbf16>, vector<64x128xbf16>, vector<64x128xf32> -> vector<64x128xf32>
    %31 = arith.addf %27, %30 : vector<64x128xf32>
    %c1_49 = arith.constant 1 : index
    %c1_50 = arith.constant 1 : index
    %c0_51 = arith.constant 0 : index
    %c0_52 = arith.constant 0 : index
    %32 = vector.load %arg2[%c1_49, %c1_50, %c0_51, %c0_52] : memref<4x4x64x128xbf16, #tpu.memory_space<vmem>>, vector<1x1x64x128xbf16>
    %33 = vector.shape_cast %32 : vector<1x1x64x128xbf16> to vector<64x128xbf16>
    %cst_53 = arith.constant dense<0.000000e+00> : vector<64x128xf32>
    %34 = tpu.matmul %10, %33, %cst_53 {dimension_numbers = #tpu.dot_dimension_numbers<[1], [0], [0], [1], [0, 0, 1, 1], [], []>} : vector<64x64xbf16>, vector<64x128xbf16>, vector<64x128xf32> -> vector<64x128xf32>
    %35 = arith.addf %31, %34 : vector<64x128xf32>
    %36 = vector.broadcast %0 : vector<1x128xf32> to vector<64x128xf32>
    %37 = arith.addf %35, %36 : vector<64x128xf32>
    %38 = arith.negf %37 : vector<64x128xf32>
    %39 = math.exp %38 : vector<64x128xf32>
    %cst_54 = arith.constant 1.000000e+00 : f32
    %40 = vector.broadcast %cst_54 : f32 to vector<64x128xf32>
    %41 = arith.addf %40, %39 : vector<64x128xf32>
    %42 = arith.divf %40, %41 : vector<64x128xf32>
    %c0_55 = arith.constant 0 : index
    %c0_56 = arith.constant 0 : index
    %43 = vector.load %arg4[%c0_55, %c0_56] : memref<64x512xf32, #tpu.memory_space<vmem>>, vector<64x128xf32>
    tpu.vector_store %arg4[%c0_55, %c0_56], %42 {strides = array<i32>} : memref<64x512xf32, #tpu.memory_space<vmem>>, vector<64x128xf32>,
    %cst_57 = arith.constant 0.000000e+00 : f32
    %44 = vector.broadcast %cst_57 : f32 to vector<64x128xf32>
    %c3_58 = arith.constant 3 : index
    %c2_59 = arith.constant 2 : index
    %c0_60 = arith.constant 0 : index
    %c0_61 = arith.constant 0 : index
    %45 = vector.load %arg2[%c3_58, %c2_59, %c0_60, %c0_61] : memref<4x4x64x128xbf16, #tpu.memory_space<vmem>>, vector<1x1x64x128xbf16>
    %46 = vector.shape_cast %45 : vector<1x1x64x128xbf16> to vector<64x128xbf16>
    %cst_62 = arith.constant dense<0.000000e+00> : vector<64x128xf32>
    %47 = tpu.matmul %4, %46, %cst_62 {dimension_numbers = #tpu.dot_dimension_numbers<[1], [0], [0], [1], [0, 0, 1, 1], [], []>} : vector<64x64xbf16>, vector<64x128xbf16>, vector<64x128xf32> -> vector<64x128xf32>
    %48 = arith.addf %44, %47 : vector<64x128xf32>
    %c3_63 = arith.constant 3 : index
    %c0_64 = arith.constant 0 : index
    %c0_65 = arith.constant 0 : index
    %c0_66 = arith.constant 0 : index
    %49 = vector.load %arg2[%c3_63, %c0_64, %c0_65, %c0_66] : memref<4x4x64x128xbf16, #tpu.memory_space<vmem>>, vector<1x1x64x128xbf16>
    %50 = vector.shape_cast %49 : vector<1x1x64x128xbf16> to vector<64x128xbf16>
    %cst_67 = arith.constant dense<0.000000e+00> : vector<64x128xf32>
    %51 = tpu.matmul %6, %50, %cst_67 {dimension_numbers = #tpu.dot_dimension_numbers<[1], [0], [0], [1], [0, 0, 1, 1], [], []>} : vector<64x64xbf16>, vector<64x128xbf16>, vector<64x128xf32> -> vector<64x128xf32>
    %52 = arith.addf %48, %51 : vector<64x128xf32>
    %c1_68 = arith.constant 1 : index
    %c2_69 = arith.constant 2 : index
    %c0_70 = arith.constant 0 : index
    %c0_71 = arith.constant 0 : index
    %53 = vector.load %arg2[%c1_68, %c2_69, %c0_70, %c0_71] : memref<4x4x64x128xbf16, #tpu.memory_space<vmem>>, vector<1x1x64x128xbf16>
    %54 = vector.shape_cast %53 : vector<1x1x64x128xbf16> to vector<64x128xbf16>
    %cst_72 = arith.constant dense<0.000000e+00> : vector<64x128xf32>
    %55 = tpu.matmul %10, %54, %cst_72 {dimension_numbers = #tpu.dot_dimension_numbers<[1], [0], [0], [1], [0, 0, 1, 1], [], []>} : vector<64x64xbf16>, vector<64x128xbf16>, vector<64x128xf32> -> vector<64x128xf32>
    %56 = arith.addf %52, %55 : vector<64x128xf32>
    %c1_73 = arith.constant 1 : index
    %c0_74 = arith.constant 0 : index
    %c0_75 = arith.constant 0 : index
    %c0_76 = arith.constant 0 : index
    %57 = vector.load %arg2[%c1_73, %c0_74, %c0_75, %c0_76] : memref<4x4x64x128xbf16, #tpu.memory_space<vmem>>, vector<1x1x64x128xbf16>
    %58 = vector.shape_cast %57 : vector<1x1x64x128xbf16> to vector<64x128xbf16>
    %cst_77 = arith.constant dense<0.000000e+00> : vector<64x128xf32>
    %59 = tpu.matmul %12, %58, %cst_77 {dimension_numbers = #tpu.dot_dimension_numbers<[1], [0], [0], [1], [0, 0, 1, 1], [], []>} : vector<64x64xbf16>, vector<64x128xbf16>, vector<64x128xf32> -> vector<64x128xf32>
    %60 = arith.addf %56, %59 : vector<64x128xf32>
    %61 = vector.broadcast %0 : vector<1x128xf32> to vector<64x128xf32>
    %62 = arith.addf %60, %61 : vector<64x128xf32>
    %63 = arith.negf %62 : vector<64x128xf32>
    %64 = math.exp %63 : vector<64x128xf32>
    %cst_78 = arith.constant 1.000000e+00 : f32
    %65 = vector.broadcast %cst_78 : f32 to vector<64x128xf32>
    %66 = arith.addf %65, %64 : vector<64x128xf32>
    %67 = arith.divf %65, %66 : vector<64x128xf32>
    %c0_79 = arith.constant 0 : index
    %c128 = arith.constant 128 : index
    %68 = vector.load %arg4[%c0_79, %c128] : memref<64x512xf32, #tpu.memory_space<vmem>>, vector<64x128xf32>
    tpu.vector_store %arg4[%c0_79, %c128], %67 {strides = array<i32>} : memref<64x512xf32, #tpu.memory_space<vmem>>, vector<64x128xf32>,
    %cst_80 = arith.constant 0.000000e+00 : f32
    %69 = vector.broadcast %cst_80 : f32 to vector<64x128xf32>
    %c2_81 = arith.constant 2 : index
    %c3_82 = arith.constant 3 : index
    %c0_83 = arith.constant 0 : index
    %c0_84 = arith.constant 0 : index
    %70 = vector.load %arg2[%c2_81, %c3_82, %c0_83, %c0_84] : memref<4x4x64x128xbf16, #tpu.memory_space<vmem>>, vector<1x1x64x128xbf16>
    %71 = vector.shape_cast %70 : vector<1x1x64x128xbf16> to vector<64x128xbf16>
    %cst_85 = arith.constant dense<0.000000e+00> : vector<64x128xf32>
    %72 = tpu.matmul %8, %71, %cst_85 {dimension_numbers = #tpu.dot_dimension_numbers<[1], [0], [0], [1], [0, 0, 1, 1], [], []>} : vector<64x64xbf16>, vector<64x128xbf16>, vector<64x128xf32> -> vector<64x128xf32>
    %73 = arith.addf %69, %72 : vector<64x128xf32>
    %c2_86 = arith.constant 2 : index
    %c1_87 = arith.constant 1 : index
    %c0_88 = arith.constant 0 : index
    %c0_89 = arith.constant 0 : index
    %74 = vector.load %arg2[%c2_86, %c1_87, %c0_88, %c0_89] : memref<4x4x64x128xbf16, #tpu.memory_space<vmem>>, vector<1x1x64x128xbf16>
    %75 = vector.shape_cast %74 : vector<1x1x64x128xbf16> to vector<64x128xbf16>
    %cst_90 = arith.constant dense<0.000000e+00> : vector<64x128xf32>
    %76 = tpu.matmul %10, %75, %cst_90 {dimension_numbers = #tpu.dot_dimension_numbers<[1], [0], [0], [1], [0, 0, 1, 1], [], []>} : vector<64x64xbf16>, vector<64x128xbf16>, vector<64x128xf32> -> vector<64x128xf32>
    %77 = arith.addf %73, %76 : vector<64x128xf32>
    %c0_91 = arith.constant 0 : index
    %c3_92 = arith.constant 3 : index
    %c0_93 = arith.constant 0 : index
    %c0_94 = arith.constant 0 : index
    %78 = vector.load %arg2[%c0_91, %c3_92, %c0_93, %c0_94] : memref<4x4x64x128xbf16, #tpu.memory_space<vmem>>, vector<1x1x64x128xbf16>
    %79 = vector.shape_cast %78 : vector<1x1x64x128xbf16> to vector<64x128xbf16>
    %cst_95 = arith.constant dense<0.000000e+00> : vector<64x128xf32>
    %80 = tpu.matmul %14, %79, %cst_95 {dimension_numbers = #tpu.dot_dimension_numbers<[1], [0], [0], [1], [0, 0, 1, 1], [], []>} : vector<64x64xbf16>, vector<64x128xbf16>, vector<64x128xf32> -> vector<64x128xf32>
    %81 = arith.addf %77, %80 : vector<64x128xf32>
    %c0_96 = arith.constant 0 : index
    %c1_97 = arith.constant 1 : index
    %c0_98 = arith.constant 0 : index
    %c0_99 = arith.constant 0 : index
    %82 = vector.load %arg2[%c0_96, %c1_97, %c0_98, %c0_99] : memref<4x4x64x128xbf16, #tpu.memory_space<vmem>>, vector<1x1x64x128xbf16>
    %83 = vector.shape_cast %82 : vector<1x1x64x128xbf16> to vector<64x128xbf16>
    %cst_100 = arith.constant dense<0.000000e+00> : vector<64x128xf32>
    %84 = tpu.matmul %16, %83, %cst_100 {dimension_numbers = #tpu.dot_dimension_numbers<[1], [0], [0], [1], [0, 0, 1, 1], [], []>} : vector<64x64xbf16>, vector<64x128xbf16>, vector<64x128xf32> -> vector<64x128xf32>
    %85 = arith.addf %81, %84 : vector<64x128xf32>
    %86 = vector.broadcast %0 : vector<1x128xf32> to vector<64x128xf32>
    %87 = arith.addf %85, %86 : vector<64x128xf32>
    %88 = arith.negf %87 : vector<64x128xf32>
    %89 = math.exp %88 : vector<64x128xf32>
    %cst_101 = arith.constant 1.000000e+00 : f32
    %90 = vector.broadcast %cst_101 : f32 to vector<64x128xf32>
    %91 = arith.addf %90, %89 : vector<64x128xf32>
    %92 = arith.divf %90, %91 : vector<64x128xf32>
    %c0_102 = arith.constant 0 : index
    %c256 = arith.constant 256 : index
    %93 = vector.load %arg4[%c0_102, %c256] : memref<64x512xf32, #tpu.memory_space<vmem>>, vector<64x128xf32>
    tpu.vector_store %arg4[%c0_102, %c256], %92 {strides = array<i32>} : memref<64x512xf32, #tpu.memory_space<vmem>>, vector<64x128xf32>,
    %cst_103 = arith.constant 0.000000e+00 : f32
    %94 = vector.broadcast %cst_103 : f32 to vector<64x128xf32>
    %c2_104 = arith.constant 2 : index
    %c2_105 = arith.constant 2 : index
    %c0_106 = arith.constant 0 : index
    %c0_107 = arith.constant 0 : index
    %95 = vector.load %arg2[%c2_104, %c2_105, %c0_106, %c0_107] : memref<4x4x64x128xbf16, #tpu.memory_space<vmem>>, vector<1x1x64x128xbf16>
    %96 = vector.shape_cast %95 : vector<1x1x64x128xbf16> to vector<64x128xbf16>
    %cst_108 = arith.constant dense<0.000000e+00> : vector<64x128xf32>
    %97 = tpu.matmul %10, %96, %cst_108 {dimension_numbers = #tpu.dot_dimension_numbers<[1], [0], [0], [1], [0, 0, 1, 1], [], []>} : vector<64x64xbf16>, vector<64x128xbf16>, vector<64x128xf32> -> vector<64x128xf32>
    %98 = arith.addf %94, %97 : vector<64x128xf32>
    %c2_109 = arith.constant 2 : index
    %c0_110 = arith.constant 0 : index
    %c0_111 = arith.constant 0 : index
    %c0_112 = arith.constant 0 : index
    %99 = vector.load %arg2[%c2_109, %c0_110, %c0_111, %c0_112] : memref<4x4x64x128xbf16, #tpu.memory_space<vmem>>, vector<1x1x64x128xbf16>
    %100 = vector.shape_cast %99 : vector<1x1x64x128xbf16> to vector<64x128xbf16>
    %cst_113 = arith.constant dense<0.000000e+00> : vector<64x128xf32>
    %101 = tpu.matmul %12, %100, %cst_113 {dimension_numbers = #tpu.dot_dimension_numbers<[1], [0], [0], [1], [0, 0, 1, 1], [], []>} : vector<64x64xbf16>, vector<64x128xbf16>, vector<64x128xf32> -> vector<64x128xf32>
    %102 = arith.addf %98, %101 : vector<64x128xf32>
    %c0_114 = arith.constant 0 : index
    %c2_115 = arith.constant 2 : index
    %c0_116 = arith.constant 0 : index
    %c0_117 = arith.constant 0 : index
    %103 = vector.load %arg2[%c0_114, %c2_115, %c0_116, %c0_117] : memref<4x4x64x128xbf16, #tpu.memory_space<vmem>>, vector<1x1x64x128xbf16>
    %104 = vector.shape_cast %103 : vector<1x1x64x128xbf16> to vector<64x128xbf16>
    %cst_118 = arith.constant dense<0.000000e+00> : vector<64x128xf32>
    %105 = tpu.matmul %16, %104, %cst_118 {dimension_numbers = #tpu.dot_dimension_numbers<[1], [0], [0], [1], [0, 0, 1, 1], [], []>} : vector<64x64xbf16>, vector<64x128xbf16>, vector<64x128xf32> -> vector<64x128xf32>
    %106 = arith.addf %102, %105 : vector<64x128xf32>
    %c0_119 = arith.constant 0 : index
    %c0_120 = arith.constant 0 : index
    %c0_121 = arith.constant 0 : index
    %c0_122 = arith.constant 0 : index
    %107 = vector.load %arg2[%c0_119, %c0_120, %c0_121, %c0_122] : memref<4x4x64x128xbf16, #tpu.memory_space<vmem>>, vector<1x1x64x128xbf16>
    %108 = vector.shape_cast %107 : vector<1x1x64x128xbf16> to vector<64x128xbf16>
    %cst_123 = arith.constant dense<0.000000e+00> : vector<64x128xf32>
    %109 = tpu.matmul %18, %108, %cst_123 {dimension_numbers = #tpu.dot_dimension_numbers<[1], [0], [0], [1], [0, 0, 1, 1], [], []>} : vector<64x64xbf16>, vector<64x128xbf16>, vector<64x128xf32> -> vector<64x128xf32>
    %110 = arith.addf %106, %109 : vector<64x128xf32>
    %111 = vector.broadcast %0 : vector<1x128xf32> to vector<64x128xf32>
    %112 = arith.addf %110, %111 : vector<64x128xf32>
    %113 = arith.negf %112 : vector<64x128xf32>
    %114 = math.exp %113 : vector<64x128xf32>
    %cst_124 = arith.constant 1.000000e+00 : f32
    %115 = vector.broadcast %cst_124 : f32 to vector<64x128xf32>
    %116 = arith.addf %115, %114 : vector<64x128xf32>
    %117 = arith.divf %115, %116 : vector<64x128xf32>
    %c0_125 = arith.constant 0 : index
    %c384 = arith.constant 384 : index
    %118 = vector.load %arg4[%c0_125, %c384] : memref<64x512xf32, #tpu.memory_space<vmem>>, vector<64x128xf32>
    tpu.vector_store %arg4[%c0_125, %c384], %117 {strides = array<i32>} : memref<64x512xf32, #tpu.memory_space<vmem>>, vector<64x128xf32>,
    return
  }
  func.func @transform_0(%arg0: i32) -> (i32, i32, i32, i32) {
    %c0_i32 = arith.constant 0 : i32
    %c0_i32_0 = arith.constant 0 : i32
    %c0_i32_1 = arith.constant 0 : i32
    %c0_i32_2 = arith.constant 0 : i32
    return %arg0, %c0_i32, %c0_i32_0, %c0_i32_1 : i32, i32, i32, i32
  }
  func.func @transform_1(%arg0: i32) -> (i32, i32, i32, i32) {
    %c0_i32 = arith.constant 0 : i32
    %c0_i32_0 = arith.constant 0 : i32
    %c0_i32_1 = arith.constant 0 : i32
    %c0_i32_2 = arith.constant 0 : i32
    %c0_i32_3 = arith.constant 0 : i32
    return %c0_i32, %c0_i32_0, %c0_i32_1, %c0_i32_2 : i32, i32, i32, i32
  }
  func.func @transform_2(%arg0: i32) -> (i32, i32) {
    %c0_i32 = arith.constant 0 : i32
    %c0_i32_0 = arith.constant 0 : i32
    %c0_i32_1 = arith.constant 0 : i32
    return %c0_i32, %c0_i32_0 : i32, i32
  }
  func.func @transform_3(%arg0: i32) -> (i32, i32) {
    %c0_i32 = arith.constant 0 : i32
    %c0_i32_0 = arith.constant 0 : i32
    return %arg0, %c0_i32 : i32, i32
  }
}

</mosaic_0001>

<llo_original>
// kernel: netg_forward.3
$region0: #{netg_forward.3}
  #allocation0 [shape = 'u32[]', space=smem, size = 0x4, offset = 0x4, fixed_abs, tag = 'smem constant byte address 0x4 - core index']
  #allocation1 [shape = 'u32[144,128]{1,0:T(1,128)}', space=vmem, size = 0x12000, scoped, tag = 'internal scratch']
  %s0 = inlined_call_operand.vmem [shape: f32[2,32], index: 0, kind: input, shape index: {}]
  %s1 = inlined_call_operand.vmem [shape: bf16[32,1024], index: 1, kind: input, shape index: {}]
  %s2 = inlined_call_operand.vmem [shape: bf16[1024,2048], index: 2, kind: input, shape index: {}]
  %s3 = inlined_call_operand.vmem [shape: bf16[2,2048], index: 3, kind: output, shape index: {}]
  %s4 = sld [smem:[#allocation0]]
  $region68: #{netg_forward.3} parent=0
    _
  %s6 = ssub.s32 1, %s4
  %s7 = scalar_select 0, %s6, %s4
  $region1: #{netg_forward.3} parent=0
    #allocation2 [shape = 'u8[4194304]{0}', space=vmem, size = 0x400000, scoped, tag = 'input window, operand 2']
    loop: start=0, step=1, limit=4
    $region2: #{netg_forward.3} parent=1 // loop_pre_header
      _
    $region3: #{netg_forward.3} parent=1 // loop_header
      %s9 = sphi 0, %s13
      %p10 = scmp.ge.s32.totalorder %s9, 4
      %s17 = sphi 0, %s17
      %s19 = sphi 0, %s17
      %s20 = sphi 0, %s19
      %s34 = sphi 0, %s20
      %s38 = sphi 0, %s38
      %s40 = sphi 0, %s38
      %s41 = sphi 0, %s40
      %s55 = sphi 0, %s41
      %s61 = sphi 0, %s63
      %s64 = sphi 0, %s61
      %s65 = sphi 0, %s64
      %s81 = sphi 0, %s65
      %s87 = sphi 0, %s89
      %s90 = sphi 0, %s87
      %s91 = sphi 0, %s90
      %s107 = sphi 0, %s91
    $region4: #{netg_forward.3} parent=1 // loop_header_branch
      %12 = sbr.rel (%p10) target = $region8
    $region5: #{netg_forward.3} parent=1 // loop_body
      %s14 = ssub.s32 %s9, 1
      %s15 = ssub.s32 %s9, 2
      %s16 = sadd.s32 %s9, 1
      %s18 = sadd.s32 %s17, 1
      %p21 = scmp.eq.s32.totalorder %s9, 1
      %p22 = scmp.ne.s32.totalorder %s17, %s19
      %p23 = scmp.eq.s32.totalorder %s9, 0
      %p24 = por %p22, %p23
      %p25 = scmp.ne.s32.totalorder %s17, %s19
      %p26 = scmp.eq.s32.totalorder %s14, 1
      %p27 = por %p25, %p26
      %p28 = scmp.ne.s32.totalorder %s19, %s20
      %p29 = scmp.eq.s32.totalorder %s14, 0
      %p30 = por %p28, %p29
      %p31 = scmp.ne.s32.totalorder %s19, %s20
      %p32 = scmp.eq.s32.totalorder %s15, 1
      %p33 = por %p31, %p32
      %p35 = scmp.ne.s32.totalorder %s20, %s34
      %p36 = scmp.eq.s32.totalorder %s15, 0
      %p37 = por %p35, %p36
      %s39 = sadd.s32 %s38, 1
      %p42 = scmp.eq.s32.totalorder %s9, 1
      %p43 = scmp.ne.s32.totalorder %s38, %s40
      %p44 = scmp.eq.s32.totalorder %s9, 0
      %p45 = por %p43, %p44
      %p46 = scmp.ne.s32.totalorder %s38, %s40
      %p47 = scmp.eq.s32.totalorder %s14, 1
      %p48 = por %p46, %p47
      %p49 = scmp.ne.s32.totalorder %s40, %s41
      %p50 = scmp.eq.s32.totalorder %s14, 0
      %p51 = por %p49, %p50
      %p52 = scmp.ne.s32.totalorder %s40, %s41
      %p53 = scmp.eq.s32.totalorder %s15, 1
      %p54 = por %p52, %p53
      %p56 = scmp.ne.s32.totalorder %s41, %s55
      %p57 = scmp.eq.s32.totalorder %s15, 0
      %p58 = por %p56, %p57
      %s59 = ssub.s32 %s9, %s16
      %p60 = scmp.eq.s32.totalorder %s59, 0
      %s62 = sadd.s32 %s61, 1
      %s63 = scalar_select %p60, %s61, %s62
      %p66 = pneg %p60
      %p67 = scmp.eq.s32.totalorder %s9, 1
      %p68 = por %p66, %p67
      %p69 = scmp.ne.s32.totalorder %s61, %s64
      %p70 = scmp.eq.s32.totalorder %s9, 0
      %p71 = por %p69, %p70
      %p72 = scmp.ne.s32.totalorder %s61, %s64
      %p73 = scmp.eq.s32.totalorder %s14, 1
      %p74 = por %p72, %p73
      %p75 = scmp.ne.s32.totalorder %s64, %s65
      %p76 = scmp.eq.s32.totalorder %s14, 0
      %p77 = por %p75, %p76
      %p78 = scmp.ne.s32.totalorder %s64, %s65
      %p79 = scmp.eq.s32.totalorder %s15, 1
      %p80 = por %p78, %p79
      %p82 = scmp.ne.s32.totalorder %s65, %s81
      %p83 = scmp.eq.s32.totalorder %s15, 0
      %p84 = por %p82, %p83
      %s85 = ssub.s32 %s9, %s16
      %p86 = scmp.eq.s32.totalorder %s85, 0
      %s88 = sadd.s32 %s87, 1
      %s89 = scalar_select %p86, %s87, %s88
      %p92 = pneg %p86
      %p93 = scmp.eq.s32.totalorder %s9, 1
      %p94 = por %p92, %p93
      %p95 = scmp.ne.s32.totalorder %s87, %s90
      %p96 = scmp.eq.s32.totalorder %s9, 0
      %p97 = por %p95, %p96
      %p98 = scmp.ne.s32.totalorder %s87, %s90
      %p99 = scmp.eq.s32.totalorder %s14, 1
      %p100 = por %p98, %p99
      %p101 = scmp.ne.s32.totalorder %s90, %s91
      %p102 = scmp.eq.s32.totalorder %s14, 0
      %p103 = por %p101, %p102
      %p104 = scmp.ne.s32.totalorder %s90, %s91
      %p105 = scmp.eq.s32.totalorder %s15, 1
      %p106 = por %p104, %p105
      %p108 = scmp.ne.s32.totalorder %s91, %s107
      %p109 = scmp.eq.s32.totalorder %s15, 0
      %p110 = por %p108, %p109
      %p111 = scmp.le.s32.totalorder 1, %s9
      %p112 = scmp.lt.s32.totalorder %s9, 3
      %p113 = pnand %p111, %p112
      %p114 = pneg %p113
      // Predicated region
      $region9: #{netg_forward.3} parent=5 // pred_check
        _
      $region10: #{netg_forward.3} parent=5 // pred_check_branch
        %116 = sbr.rel (%p113) target = $region12
      $region11: #{netg_forward.3} parent=5 // pred_region
        %s117 = ssub.s32 %s9, 1
        // Predicated region
        $region13: #{netg_forward.3} parent=11 // pred_check
          %p118 = pneg %p30
        $region14: #{netg_forward.3} parent=11 // pred_check_branch
          %120 = sbr.rel (%p118) target = $region16
        $region15: #{netg_forward.3} parent=11 // pred_region
          _
        $region16: #{netg_forward.3} parent=11 // pred_fallthru
          _
        // Predicated region
        $region17: #{netg_forward.3} parent=11 // pred_check
          %p121 = pneg %p51
        $region18: #{netg_forward.3} parent=11 // pred_check_branch
          %123 = sbr.rel (%p121) target = $region20
        $region19: #{netg_forward.3} parent=11 // pred_region
          _
        $region20: #{netg_forward.3} parent=11 // pred_fallthru
          _
      $region12: #{netg_forward.3} parent=5 // pred_fallthru
        _
      %p124 = scmp.lt.s32.totalorder %s9, 2
      // Predicated region
      $region21: #{netg_forward.3} parent=5 // pred_check
        %p125 = pneg %p124
      $region22: #{netg_forward.3} parent=5 // pred_check_branch
        %127 = sbr.rel (%p125) target = $region24
      $region23: #{netg_forward.3} parent=5 // pred_region
        // Predicated region
        $region25: #{netg_forward.3} parent=23 // pred_check
          %p128 = pneg %p71
        $region26: #{netg_forward.3} parent=23 // pred_check_branch
          %130 = sbr.rel (%p128) target = $region28
        $region27: #{netg_forward.3} parent=23 // pred_region
          %s131 = sand.u32 %s61, 1
          %s132 = sand.u32 %s61, 1
          %s133 = smul.addr %s132, 4096
          %s134 = scalar_lea.vmem [#allocation2], %s133
          %s135 = smul.u32 8, %s9
          %s136 = smul.addr %s135, 4
          %s137 = scalar_lea.vmem %s2, %s136
          // Predicated region
          $region29: #{netg_forward.3} parent=27 // pred_check
            _
          $region30: #{netg_forward.3} parent=27 // pred_check_branch
            %139 = sbr.rel (0) target = $region32
          $region31: #{netg_forward.3} parent=27 // pred_region
            // Predicated region
            $region33: #{netg_forward.3} parent=31 // pred_check
              _
            $region34: #{netg_forward.3} parent=31 // pred_check_branch
              %141 = sbr.rel (0) target = $region36
            $region35: #{netg_forward.3} parent=31 // pred_region
              loop: start=0, step=1, limit=1
              $region37: #{netg_forward.3} parent=35 // loop_pre_header
                _
              $region38: #{netg_forward.3} parent=35 // loop_header
                %s143 = sphi 0, %s147
                %p144 = scmp.ge.s32.totalorder %s143, 1
                %s148 = sphi %s137, %s137
                %s149 = sphi %s134, %s134
              $region39: #{netg_forward.3} parent=35 // loop_header_branch
                %146 = sbr.rel (%p144) target = $region43
              $region40: #{netg_forward.3} parent=35 // loop_body
                %v150 = vld [vmem:[%s148] sm:$0xff]
                %151 = vst [vmem:[%s149] sm:$0xff] %v150
                %v152 = vld [vmem:[%s148 + $0x8] sm:$0xff]
                %153 = vst [vmem:[%s149 + $0x8] sm:$0xff] %v152
                %v154 = vld [vmem:[%s148 + $0x10] sm:$0xff]
                %155 = vst [vmem:[%s149 + $0x10] sm:$0xff] %v154
                %v156 = vld [vmem:[%s148 + $0x18] sm:$0xff]
                %157 = vst [vmem:[%s149 + $0x18] sm:$0xff] %v156
                %v158 = vld [vmem:[%s148 + $0x40] sm:$0xff]
                %159 = vst [vmem:[%s149 + $0x20] sm:$0xff] %v158
                %v160 = vld [vmem:[%s148 + $0x48] sm:$0xff]
                %161 = vst [vmem:[%s149 + $0x28] sm:$0xff] %v160
                %v162 = vld [vmem:[%s148 + $0x50] sm:$0xff]
                %163 = vst [vmem:[%s149 + $0x30] sm:$0xff] %v162
                %v164 = vld [vmem:[%s148 + $0x58] sm:$0xff]
                %165 = vst [vmem:[%s149 + $0x38] sm:$0xff] %v164
                %v166 = vld [vmem:[%s148 + $0x80] sm:$0xff]
                %167 = vst [vmem:[%s149 + $0x40] sm:$0xff] %v166
                %v168 = vld [vmem:[%s148 + $0x88] sm:$0xff]
                %169 = vst [vmem:[%s149 + $0x48] sm:$0xff] %v168
                %v170 = vld [vmem:[%s148 + $0x90] sm:$0xff]
                %171 = vst [vmem:[%s149 + $0x50] sm:$0xff] %v170
                %v172 = vld [vmem:[%s148 + $0x98] sm:$0xff]
                %173 = vst [vmem:[%s149 + $0x58] sm:$0xff] %v172
                %v174 = vld [vmem:[%s148 + $0xc0] sm:$0xff]
                %175 = vst [vmem:[%s149 + $0x60] sm:$0xff] %v174
                %v176 = vld [vmem:[%s148 + $0xc8] sm:$0xff]
                %177 = vst [vmem:[%s149 + $0x68] sm:$0xff] %v176
                %v178 = vld [vmem:[%s148 + $0xd0] sm:$0xff]
                %179 = vst [vmem:[%s149 + $0x70] sm:$0xff] %v178
                %v180 = vld [vmem:[%s148 + $0xd8] sm:$0xff]
                %181 = vst [vmem:[%s149 + $0x78] sm:$0xff] %v180
                %v182 = vld [vmem:[%s148 + $0x100] sm:$0xff]
                %183 = vst [vmem:[%s149 + $0x80] sm:$0xff] %v182
                %v184 = vld [vmem:[%s148 + $0x108] sm:$0xff]
                %185 = vst [vmem:[%s149 + $0x88] sm:$0xff] %v184
                %v186 = vld [vmem:[%s148 + $0x110] sm:$0xff]
                %187 = vst [vmem:[%s149 + $0x90] sm:$0xff] %v186
                %v188 = vld [vmem:[%s148 + $0x118] sm:$0xff]
                %189 = vst [vmem:[%s149 + $0x98] sm:$0xff] %v188
                %v190 = vld [vmem:[%s148 + $0x140] sm:$0xff]
                %191 = vst [vmem:[%s149 + $0xa0] sm:$0xff] %v190
                %v192 = vld [vmem:[%s148 + $0x148] sm:$0xff]
                %193 = vst [vmem:[%s149 + $0xa8] sm:$0xff] %v192
                %v194 = vld [vmem:[%s148 + $0x150] sm:$0xff]
                %195 = vst [vmem:[%s149 + $0xb0] sm:$0xff] %v194
                %v196 = vld [vmem:[%s148 + $0x158] sm:$0xff]
                %197 = vst [vmem:[%s149 + $0xb8] sm:$0xff] %v196
                %v198 = vld [vmem:[%s148 + $0x180] sm:$0xff]
                %199 = vst [vmem:[%s149 + $0xc0] sm:$0xff] %v198
                %v200 = vld [vmem:[%s148 + $0x188] sm:$0xff]
                %201 = vst [vmem:[%s149 + $0xc8] sm:$0xff] %v200
                %v202 = vld [vmem:[%s148 + $0x190] sm:$0xff]
                %203 = vst [vmem:[%s149 + $0xd0] sm:$0xff] %v202
                %v204 = vld [vmem:[%s148 + $0x198] sm:$0xff]
                %205 = vst [vmem:[%s149 + $0xd8] sm:$0xff] %v204
                %v206 = vld [vmem:[%s148 + $0x1c0] sm:$0xff]
                %207 = vst [vmem:[%s149 + $0xe0] sm:$0xff] %v206
                %v208 = vld [vmem:[%s148 + $0x1c8] sm:$0xff]
                %209 = vst [vmem:[%s149 + $0xe8] sm:$0xff] %v208
                %v210 = vld [vmem:[%s148 + $0x1d0] sm:$0xff]
                %211 = vst [vmem:[%s149 + $0xf0] sm:$0xff] %v210
                %v212 = vld [vmem:[%s148 + $0x1d8] sm:$0xff]
                %213 = vst [vmem:[%s149 + $0xf8] sm:$0xff] %v212
                %v214 = vld [vmem:[%s148 + $0x200] sm:$0xff]
                %215 = vst [vmem:[%s149 + $0x100] sm:$0xff] %v214
                %v216 = vld [vmem:[%s148 + $0x208] sm:$0xff]
                %217 = vst [vmem:[%s149 + $0x108] sm:$0xff] %v216
                %v218 = vld [vmem:[%s148 + $0x210] sm:$0xff]
                %219 = vst [vmem:[%s149 + $0x110] sm:$0xff] %v218
                %v220 = vld [vmem:[%s148 + $0x218] sm:$0xff]
                %221 = vst [vmem:[%s149 + $0x118] sm:$0xff] %v220
                %v222 = vld [vmem:[%s148 + $0x240] sm:$0xff]
                %223 = vst [vmem:[%s149 + $0x120] sm:$0xff] %v222
                %v224 = vld [vmem:[%s148 + $0x248] sm:$0xff]
                %225 = vst [vmem:[%s149 + $0x128] sm:$0xff] %v224
                %v226 = vld [vmem:[%s148 + $0x250] sm:$0xff]
                %227 = vst [vmem:[%s149 + $0x130] sm:$0xff] %v226
                %v228 = vld [vmem:[%s148 + $0x258] sm:$0xff]
                %229 = vst [vmem:[%s149 + $0x138] sm:$0xff] %v228
                %v230 = vld [vmem:[%s148 + $0x280] sm:$0xff]
                %231 = vst [vmem:[%s149 + $0x140] sm:$0xff] %v230
                %v232 = vld [vmem:[%s148 + $0x288] sm:$0xff]
                %233 = vst [vmem:[%s149 + $0x148] sm:$0xff] %v232
                %v234 = vld [vmem:[%s148 + $0x290] sm:$0xff]
                %235 = vst [vmem:[%s149 + $0x150] sm:$0xff] %v234
                %v236 = vld [vmem:[%s148 + $0x298] sm:$0xff]
                %237 = vst [vmem:[%s149 + $0x158] sm:$0xff] %v236
                %v238 = vld [vmem:[%s148 + $0x2c0] sm:$0xff]
                %239 = vst [vmem:[%s149 + $0x160] sm:$0xff] %v238
                %v240 = vld [vmem:[%s148 + $0x2c8] sm:$0xff]
                %241 = vst [vmem:[%s149 + $0x168] sm:$0xff] %v240
                %v242 = vld [vmem:[%s148 + $0x2d0] sm:$0xff]
                %243 = vst [vmem:[%s149 + $0x170] sm:$0xff] %v242
                %v244 = vld [vmem:[%s148 + $0x2d8] sm:$0xff]
                %245 = vst [vmem:[%s149 + $0x178] sm:$0xff] %v244
                %v246 = vld [vmem:[%s148 + $0x300] sm:$0xff]
                %247 = vst [vmem:[%s149 + $0x180] sm:$0xff] %v246
                %v248 = vld [vmem:[%s148 + $0x308] sm:$0xff]
                %249 = vst [vmem:[%s149 + $0x188] sm:$0xff] %v248
                %v250 = vld [vmem:[%s148 + $0x310] sm:$0xff]
                %251 = vst [vmem:[%s149 + $0x190] sm:$0xff] %v250
                %v252 = vld [vmem:[%s148 + $0x318] sm:$0xff]
                %253 = vst [vmem:[%s149 + $0x198] sm:$0xff] %v252
                %v254 = vld [vmem:[%s148 + $0x340] sm:$0xff]
                %255 = vst [vmem:[%s149 + $0x1a0] sm:$0xff] %v254
                %v256 = vld [vmem:[%s148 + $0x348] sm:$0xff]
                %257 = vst [vmem:[%s149 + $0x1a8] sm:$0xff] %v256
                %v258 = vld [vmem:[%s148 + $0x350] sm:$0xff]
                %259 = vst [vmem:[%s149 + $0x1b0] sm:$0xff] %v258
                %v260 = vld [vmem:[%s148 + $0x358] sm:$0xff]
                %261 = vst [vmem:[%s149 + $0x1b8] sm:$0xff] %v260
                %v262 = vld [vmem:[%s148 + $0x380] sm:$0xff]
                %263 = vst [vmem:[%s149 + $0x1c0] sm:$0xff] %v262
                %v264 = vld [vmem:[%s148 + $0x388] sm:$0xff]
                %265 = vst [vmem:[%s149 + $0x1c8] sm:$0xff] %v264
                %v266 = vld [vmem:[%s148 + $0x390] sm:$0xff]
                %267 = vst [vmem:[%s149 + $0x1d0] sm:$0xff] %v266
                %v268 = vld [vmem:[%s148 + $0x398] sm:$0xff]
                %269 = vst [vmem:[%s149 + $0x1d8] sm:$0xff] %v268
                %v270 = vld [vmem:[%s148 + $0x3c0] sm:$0xff]
                %271 = vst [vmem:[%s149 + $0x1e0] sm:$0xff] %v270
                %v272 = vld [vmem:[%s148 + $0x3c8] sm:$0xff]
                %273 = vst [vmem:[%s149 + $0x1e8] sm:$0xff] %v272
                %v274 = vld [vmem:[%s148 + $0x3d0] sm:$0xff]
                %275 = vst [vmem:[%s149 + $0x1f0] sm:$0xff] %v274
                %v276 = vld [vmem:[%s148 + $0x3d8] sm:$0xff]
                %277 = vst [vmem:[%s149 + $0x1f8] sm:$0xff] %v276
                %v278 = vld [vmem:[%s148 + $0x400] sm:$0xff]
                %279 = vst [vmem:[%s149 + $0x200] sm:$0xff] %v278
                %v280 = vld [vmem:[%s148 + $0x408] sm:$0xff]
                %281 = vst [vmem:[%s149 + $0x208] sm:$0xff] %v280
                %v282 = vld [vmem:[%s148 + $0x410] sm:$0xff]
                %283 = vst [vmem:[%s149 + $0x210] sm:$0xff] %v282
                %v284 = vld [vmem:[%s148 + $0x418] sm:$0xff]
                %285 = vst [vmem:[%s149 + $0x218] sm:$0xff] %v284
                %v286 = vld [vmem:[%s148 + $0x440] sm:$0xff]
                %287 = vst [vmem:[%s149 + $0x220] sm:$0xff] %v286
                %v288 = vld [vmem:[%s148 + $0x448] sm:$0xff]
                %289 = vst [vmem:[%s149 + $0x228] sm:$0xff] %v288
                %v290 = vld [vmem:[%s148 + $0x450] sm:$0xff]
                %291 = vst [vmem:[%s149 + $0x230] sm:$0xff] %v290
                %v292 = vld [vmem:[%s148 + $0x458] sm:$0xff]
                %293 = vst [vmem:[%s149 + $0x238] sm:$0xff] %v292
                %v294 = vld [vmem:[%s148 + $0x480] sm:$0xff]
                %295 = vst [vmem:[%s149 + $0x240] sm:$0xff] %v294
                %v296 = vld [vmem:[%s148 + $0x488] sm:$0xff]
                %297 = vst [vmem:[%s149 + $0x248] sm:$0xff] %v296
                %v298 = vld [vmem:[%s148 + $0x490] sm:$0xff]
                %299 = vst [vmem:[%s149 + $0x250] sm:$0xff] %v298
                %v300 = vld [vmem:[%s148 + $0x498] sm:$0xff]
                %301 = vst [vmem:[%s149 + $0x258] sm:$0xff] %v300
                %v302 = vld [vmem:[%s148 + $0x4c0] sm:$0xff]
                %303 = vst [vmem:[%s149 + $0x260] sm:$0xff] %v302
                %v304 = vld [vmem:[%s148 + $0x4c8] sm:$0xff]
                %305 = vst [vmem:[%s149 + $0x268] sm:$0xff] %v304
                %v306 = vld [vmem:[%s148 + $0x4d0] sm:$0xff]
                %307 = vst [vmem:[%s149 + $0x270] sm:$0xff] %v306
                %v308 = vld [vmem:[%s148 + $0x4d8] sm:$0xff]
                %309 = vst [vmem:[%s149 + $0x278] sm:$0xff] %v308
                %v310 = vld [vmem:[%s148 + $0x500] sm:$0xff]
                %311 = vst [vmem:[%s149 + $0x280] sm:$0xff] %v310
                %v312 = vld [vmem:[%s148 + $0x508] sm:$0xff]
                %313 = vst [vmem:[%s149 + $0x288] sm:$0xff] %v312
                %v314 = vld [vmem:[%s148 + $0x510] sm:$0xff]
                %315 = vst [vmem:[%s149 + $0x290] sm:$0xff] %v314
                %v316 = vld [vmem:[%s148 + $0x518] sm:$0xff]
                %317 = vst [vmem:[%s149 + $0x298] sm:$0xff] %v316
                %v318 = vld [vmem:[%s148 + $0x540] sm:$0xff]
                %319 = vst [vmem:[%s149 + $0x2a0] sm:$0xff] %v318
                %v320 = vld [vmem:[%s148 + $0x548] sm:$0xff]
                %321 = vst [vmem:[%s149 + $0x2a8] sm:$0xff] %v320
                %v322 = vld [vmem:[%s148 + $0x550] sm:$0xff]
                %323 = vst [vmem:[%s149 + $0x2b0] sm:$0xff] %v322
                %v324 = vld [vmem:[%s148 + $0x558] sm:$0xff]
                %325 = vst [vmem:[%s149 + $0x2b8] sm:$0xff] %v324
                %v326 = vld [vmem:[%s148 + $0x580] sm:$0xff]
                %327 = vst [vmem:[%s149 + $0x2c0] sm:$0xff] %v326
                %v328 = vld [vmem:[%s148 + $0x588] sm:$0xff]
                %329 = vst [vmem:[%s149 + $0x2c8] sm:$0xff] %v328
                %v330 = vld [vmem:[%s148 + $0x590] sm:$0xff]
                %331 = vst [vmem:[%s149 + $0x2d0] sm:$0xff] %v330
                %v332 = vld [vmem:[%s148 + $0x598] sm:$0xff]
                %333 = vst [vmem:[%s149 + $0x2d8] sm:$0xff] %v332
                %v334 = vld [vmem:[%s148 + $0x5c0] sm:$0xff]
                %335 = vst [vmem:[%s149 + $0x2e0] sm:$0xff] %v334
                %v336 = vld [vmem:[%s148 + $0x5c8] sm:$0xff]
                %337 = vst [vmem:[%s149 + $0x2e8] sm:$0xff] %v336
                %v338 = vld [vmem:[%s148 + $0x5d0] sm:$0xff]
                %339 = vst [vmem:[%s149 + $0x2f0] sm:$0xff] %v338
                %v340 = vld [vmem:[%s148 + $0x5d8] sm:$0xff]
                %341 = vst [vmem:[%s149 + $0x2f8] sm:$0xff] %v340
                %v342 = vld [vmem:[%s148 + $0x600] sm:$0xff]
                %343 = vst [vmem:[%s149 + $0x300] sm:$0xff] %v342
                %v344 = vld [vmem:[%s148 + $0x608] sm:$0xff]
                %345 = vst [vmem:[%s149 + $0x308] sm:$0xff] %v344
                %v346 = vld [vmem:[%s148 + $0x610] sm:$0xff]
                %347 = vst [vmem:[%s149 + $0x310] sm:$0xff] %v346
                %v348 = vld [vmem:[%s148 + $0x618] sm:$0xff]
                %349 = vst [vmem:[%s149 + $0x318] sm:$0xff] %v348
                %v350 = vld [vmem:[%s148 + $0x640] sm:$0xff]
                %351 = vst [vmem:[%s149 + $0x320] sm:$0xff] %v350
                %v352 = vld [vmem:[%s148 + $0x648] sm:$0xff]
                %353 = vst [vmem:[%s149 + $0x328] sm:$0xff] %v352
                %v354 = vld [vmem:[%s148 + $0x650] sm:$0xff]
                %355 = vst [vmem:[%s149 + $0x330] sm:$0xff] %v354
                %v356 = vld [vmem:[%s148 + $0x658] sm:$0xff]
                %357 = vst [vmem:[%s149 + $0x338] sm:$0xff] %v356
                %v358 = vld [vmem:[%s148 + $0x680] sm:$0xff]
                %359 = vst [vmem:[%s149 + $0x340] sm:$0xff] %v358
                %v360 = vld [vmem:[%s148 + $0x688] sm:$0xff]
                %361 = vst [vmem:[%s149 + $0x348] sm:$0xff] %v360
                %v362 = vld [vmem:[%s148 + $0x690] sm:$0xff]
                %363 = vst [vmem:[%s149 + $0x350] sm:$0xff] %v362
                %v364 = vld [vmem:[%s148 + $0x698] sm:$0xff]
                %365 = vst [vmem:[%s149 + $0x358] sm:$0xff] %v364
                %v366 = vld [vmem:[%s148 + $0x6c0] sm:$0xff]
                %367 = vst [vmem:[%s149 + $0x360] sm:$0xff] %v366
                %v368 = vld [vmem:[%s148 + $0x6c8] sm:$0xff]
                %369 = vst [vmem:[%s149 + $0x368] sm:$0xff] %v368
                %v370 = vld [vmem:[%s148 + $0x6d0] sm:$0xff]
                %371 = vst [vmem:[%s149 + $0x370] sm:$0xff] %v370
                %v372 = vld [vmem:[%s148 + $0x6d8] sm:$0xff]
                %373 = vst [vmem:[%s149 + $0x378] sm:$0xff] %v372
                %v374 = vld [vmem:[%s148 + $0x700] sm:$0xff]
                %375 = vst [vmem:[%s149 + $0x380] sm:$0xff] %v374
                %v376 = vld [vmem:[%s148 + $0x708] sm:$0xff]
                %377 = vst [vmem:[%s149 + $0x388] sm:$0xff] %v376
                %v378 = vld [vmem:[%s148 + $0x710] sm:$0xff]
                %379 = vst [vmem:[%s149 + $0x390] sm:$0xff] %v378
                %v380 = vld [vmem:[%s148 + $0x718] sm:$0xff]
                %381 = vst [vmem:[%s149 + $0x398] sm:$0xff] %v380
                %v382 = vld [vmem:[%s148 + $0x740] sm:$0xff]
                %383 = vst [vmem:[%s149 + $0x3a0] sm:$0xff] %v382
                %v384 = vld [vmem:[%s148 + $0x748] sm:$0xff]
                %385 = vst [vmem:[%s149 + $0x3a8] sm:$0xff] %v384
                %v386 = vld [vmem:[%s148 + $0x750] sm:$0xff]
                %387 = vst [vmem:[%s149 + $0x3b0] sm:$0xff] %v386
                %v388 = vld [vmem:[%s148 + $0x758] sm:$0xff]
                %389 = vst [vmem:[%s149 + $0x3b8] sm:$0xff] %v388
                %v390 = vld [vmem:[%s148 + $0x780] sm:$0xff]
                %391 = vst [vmem:[%s149 + $0x3c0] sm:$0xff] %v390
                %v392 = vld [vmem:[%s148 + $0x788] sm:$0xff]
                %393 = vst [vmem:[%s149 + $0x3c8] sm:$0xff] %v392
                %v394 = vld [vmem:[%s148 + $0x790] sm:$0xff]
                %395 = vst [vmem:[%s149 + $0x3d0] sm:$0xff] %v394
                %v396 = vld [vmem:[%s148 + $0x798] sm:$0xff]
                %397 = vst [vmem:[%s149 + $0x3d8] sm:$0xff] %v396
                %v398 = vld [vmem:[%s148 + $0x7c0] sm:$0xff]
                %399 = vst [vmem:[%s149 + $0x3e0] sm:$0xff] %v398
                %v400 = vld [vmem:[%s148 + $0x7c8] sm:$0xff]
                %401 = vst [vmem:[%s149 + $0x3e8] sm:$0xff] %v400
                %v402 = vld [vmem:[%s148 + $0x7d0] sm:$0xff]
                %403 = vst [vmem:[%s149 + $0x3f0] sm:$0xff] %v402
                %v404 = vld [vmem:[%s148 + $0x7d8] sm:$0xff]
                %405 = vst [vmem:[%s149 + $0x3f8] sm:$0xff] %v404
                %v406 = vld [vmem:[%s148 + $0x800] sm:$0xff]
                %407 = vst [vmem:[%s149 + $0x400] sm:$0xff] %v406
                %v408 = vld [vmem:[%s148 + $0x808] sm:$0xff]
                %409 = vst [vmem:[%s149 + $0x408] sm:$0xff] %v408
                %v410 = vld [vmem:[%s148 + $0x810] sm:$0xff]
                %411 = vst [vmem:[%s149 + $0x410] sm:$0xff] %v410
                %v412 = vld [vmem:[%s148 + $0x818] sm:$0xff]
                %413 = vst [vmem:[%s149 + $0x418] sm:$0xff] %v412
                %v414 = vld [vmem:[%s148 + $0x840] sm:$0xff]
                %415 = vst [vmem:[%s149 + $0x420] sm:$0xff] %v414
                %v416 = vld [vmem:[%s148 + $0x848] sm:$0xff]
                %417 = vst [vmem:[%s149 + $0x428] sm:$0xff] %v416
                %v418 = vld [vmem:[%s148 + $0x850] sm:$0xff]
                %419 = vst [vmem:[%s149 + $0x430] sm:$0xff] %v418
                %v420 = vld [vmem:[%s148 + $0x858] sm:$0xff]
                %421 = vst [vmem:[%s149 + $0x438] sm:$0xff] %v420
                %v422 = vld [vmem:[%s148 + $0x880] sm:$0xff]
                %423 = vst [vmem:[%s149 + $0x440] sm:$0xff] %v422
                %v424 = vld [vmem:[%s148 + $0x888] sm:$0xff]
                %425 = vst [vmem:[%s149 + $0x448] sm:$0xff] %v424
                %v426 = vld [vmem:[%s148 + $0x890] sm:$0xff]
                %427 = vst [vmem:[%s149 + $0x450] sm:$0xff] %v426
                %v428 = vld [vmem:[%s148 + $0x898] sm:$0xff]
                %429 = vst [vmem:[%s149 + $0x458] sm:$0xff] %v428
                %v430 = vld [vmem:[%s148 + $0x8c0] sm:$0xff]
                %431 = vst [vmem:[%s149 + $0x460] sm:$0xff] %v430
                %v432 = vld [vmem:[%s148 + $0x8c8] sm:$0xff]
                %433 = vst [vmem:[%s149 + $0x468] sm:$0xff] %v432
                %v434 = vld [vmem:[%s148 + $0x8d0] sm:$0xff]
                %435 = vst [vmem:[%s149 + $0x470] sm:$0xff] %v434
                %v436 = vld [vmem:[%s148 + $0x8d8] sm:$0xff]
                %437 = vst [vmem:[%s149 + $0x478] sm:$0xff] %v436
                %v438 = vld [vmem:[%s148 + $0x900] sm:$0xff]
                %439 = vst [vmem:[%s149 + $0x480] sm:$0xff] %v438
                %v440 = vld [vmem:[%s148 + $0x908] sm:$0xff]
                %441 = vst [vmem:[%s149 + $0x488] sm:$0xff] %v440
                %v442 = vld [vmem:[%s148 + $0x910] sm:$0xff]
                %443 = vst [vmem:[%s149 + $0x490] sm:$0xff] %v442
                %v444 = vld [vmem:[%s148 + $0x918] sm:$0xff]
                %445 = vst [vmem:[%s149 + $0x498] sm:$0xff] %v444
                %v446 = vld [vmem:[%s148 + $0x940] sm:$0xff]
                %447 = vst [vmem:[%s149 + $0x4a0] sm:$0xff] %v446
                %v448 = vld [vmem:[%s148 + $0x948] sm:$0xff]
                %449 = vst [vmem:[%s149 + $0x4a8] sm:$0xff] %v448
                %v450 = vld [vmem:[%s148 + $0x950] sm:$0xff]
                %451 = vst [vmem:[%s149 + $0x4b0] sm:$0xff] %v450
                %v452 = vld [vmem:[%s148 + $0x958] sm:$0xff]
                %453 = vst [vmem:[%s149 + $0x4b8] sm:$0xff] %v452
                %v454 = vld [vmem:[%s148 + $0x980] sm:$0xff]
                %455 = vst [vmem:[%s149 + $0x4c0] sm:$0xff] %v454
                %v456 = vld [vmem:[%s148 + $0x988] sm:$0xff]
                %457 = vst [vmem:[%s149 + $0x4c8] sm:$0xff] %v456
                %v458 = vld [vmem:[%s148 + $0x990] sm:$0xff]
                %459 = vst [vmem:[%s149 + $0x4d0] sm:$0xff] %v458
                %v460 = vld [vmem:[%s148 + $0x998] sm:$0xff]
                %461 = vst [vmem:[%s149 + $0x4d8] sm:$0xff] %v460
                %v462 = vld [vmem:[%s148 + $0x9c0] sm:$0xff]
                %463 = vst [vmem:[%s149 + $0x4e0] sm:$0xff] %v462
                %v464 = vld [vmem:[%s148 + $0x9c8] sm:$0xff]
                %465 = vst [vmem:[%s149 + $0x4e8] sm:$0xff] %v464
                %v466 = vld [vmem:[%s148 + $0x9d0] sm:$0xff]
                %467 = vst [vmem:[%s149 + $0x4f0] sm:$0xff] %v466
                %v468 = vld [vmem:[%s148 + $0x9d8] sm:$0xff]
                %469 = vst [vmem:[%s149 + $0x4f8] sm:$0xff] %v468
                %v470 = vld [vmem:[%s148 + $0xa00] sm:$0xff]
                %471 = vst [vmem:[%s149 + $0x500] sm:$0xff] %v470
                %v472 = vld [vmem:[%s148 + $0xa08] sm:$0xff]
                %473 = vst [vmem:[%s149 + $0x508] sm:$0xff] %v472
                %v474 = vld [vmem:[%s148 + $0xa10] sm:$0xff]
                %475 = vst [vmem:[%s149 + $0x510] sm:$0xff] %v474
                %v476 = vld [vmem:[%s148 + $0xa18] sm:$0xff]
                %477 = vst [vmem:[%s149 + $0x518] sm:$0xff] %v476
                %v478 = vld [vmem:[%s148 + $0xa40] sm:$0xff]
                %479 = vst [vmem:[%s149 + $0x520] sm:$0xff] %v478
                %v480 = vld [vmem:[%s148 + $0xa48] sm:$0xff]
                %481 = vst [vmem:[%s149 + $0x528] sm:$0xff] %v480
                %v482 = vld [vmem:[%s148 + $0xa50] sm:$0xff]
                %483 = vst [vmem:[%s149 + $0x530] sm:$0xff] %v482
                %v484 = vld [vmem:[%s148 + $0xa58] sm:$0xff]
                %485 = vst [vmem:[%s149 + $0x538] sm:$0xff] %v484
                %v486 = vld [vmem:[%s148 + $0xa80] sm:$0xff]
                %487 = vst [vmem:[%s149 + $0x540] sm:$0xff] %v486
                %v488 = vld [vmem:[%s148 + $0xa88] sm:$0xff]
                %489 = vst [vmem:[%s149 + $0x548] sm:$0xff] %v488
                %v490 = vld [vmem:[%s148 + $0xa90] sm:$0xff]
                %491 = vst [vmem:[%s149 + $0x550] sm:$0xff] %v490
                %v492 = vld [vmem:[%s148 + $0xa98] sm:$0xff]
                %493 = vst [vmem:[%s149 + $0x558] sm:$0xff] %v492
                %v494 = vld [vmem:[%s148 + $0xac0] sm:$0xff]
                %495 = vst [vmem:[%s149 + $0x560] sm:$0xff] %v494
                %v496 = vld [vmem:[%s148 + $0xac8] sm:$0xff]
                %497 = vst [vmem:[%s149 + $0x568] sm:$0xff] %v496
                %v498 = vld [vmem:[%s148 + $0xad0] sm:$0xff]
                %499 = vst [vmem:[%s149 + $0x570] sm:$0xff] %v498
                %v500 = vld [vmem:[%s148 + $0xad8] sm:$0xff]
                %501 = vst [vmem:[%s149 + $0x578] sm:$0xff] %v500
                %v502 = vld [vmem:[%s148 + $0xb00] sm:$0xff]
                %503 = vst [vmem:[%s149 + $0x580] sm:$0xff] %v502
                %v504 = vld [vmem:[%s148 + $0xb08] sm:$0xff]
                %505 = vst [vmem:[%s149 + $0x588] sm:$0xff] %v504
                %v506 = vld [vmem:[%s148 + $0xb10] sm:$0xff]
                %507 = vst [vmem:[%s149 + $0x590] sm:$0xff] %v506
                %v508 = vld [vmem:[%s148 + $0xb18] sm:$0xff]
                %509 = vst [vmem:[%s149 + $0x598] sm:$0xff] %v508
                %v510 = vld [vmem:[%s148 + $0xb40] sm:$0xff]
                %511 = vst [vmem:[%s149 + $0x5a0] sm:$0xff] %v510
                %v512 = vld [vmem:[%s148 + $0xb48] sm:$0xff]
                %513 = vst [vmem:[%s149 + $0x5a8] sm:$0xff] %v512
                %v514 = vld [vmem:[%s148 + $0xb50] sm:$0xff]
                %515 = vst [vmem:[%s149 + $0x5b0] sm:$0xff] %v514
                %v516 = vld [vmem:[%s148 + $0xb58] sm:$0xff]
                %517 = vst [vmem:[%s149 + $0x5b8] sm:$0xff] %v516
                %v518 = vld [vmem:[%s148 + $0xb80] sm:$0xff]
                %519 = vst [vmem:[%s149 + $0x5c0] sm:$0xff] %v518
                %v520 = vld [vmem:[%s148 + $0xb88] sm:$0xff]
                %521 = vst [vmem:[%s149 + $0x5c8] sm:$0xff] %v520
                %v522 = vld [vmem:[%s148 + $0xb90] sm:$0xff]
                %523 = vst [vmem:[%s149 + $0x5d0] sm:$0xff] %v522
                %v524 = vld [vmem:[%s148 + $0xb98] sm:$0xff]
                %525 = vst [vmem:[%s149 + $0x5d8] sm:$0xff] %v524
                %v526 = vld [vmem:[%s148 + $0xbc0] sm:$0xff]
                %527 = vst [vmem:[%s149 + $0x5e0] sm:$0xff] %v526
                %v528 = vld [vmem:[%s148 + $0xbc8] sm:$0xff]
                %529 = vst [vmem:[%s149 + $0x5e8] sm:$0xff] %v528
                %v530 = vld [vmem:[%s148 + $0xbd0] sm:$0xff]
                %531 = vst [vmem:[%s149 + $0x5f0] sm:$0xff] %v530
                %v532 = vld [vmem:[%s148 + $0xbd8] sm:$0xff]
                %533 = vst [vmem:[%s149 + $0x5f8] sm:$0xff] %v532
                %v534 = vld [vmem:[%s148 + $0xc00] sm:$0xff]
                %535 = vst [vmem:[%s149 + $0x600] sm:$0xff] %v534
                %v536 = vld [vmem:[%s148 + $0xc08] sm:$0xff]
                %537 = vst [vmem:[%s149 + $0x608] sm:$0xff] %v536
                %v538 = vld [vmem:[%s148 + $0xc10] sm:$0xff]
                %539 = vst [vmem:[%s149 + $0x610] sm:$0xff] %v538
                %v540 = vld [vmem:[%s148 + $0xc18] sm:$0xff]
                %541 = vst [vmem:[%s149 + $0x618] sm:$0xff] %v540
                %v542 = vld [vmem:[%s148 + $0xc40] sm:$0xff]
                %543 = vst [vmem:[%s149 + $0x620] sm:$0xff] %v542
                %v544 = vld [vmem:[%s148 + $0xc48] sm:$0xff]
                %545 = vst [vmem:[%s149 + $0x628] sm:$0xff] %v544
                %v546 = vld [vmem:[%s148 + $0xc50] sm:$0xff]
                %547 = vst [vmem:[%s149 + $0x630] sm:$0xff] %v546
                %v548 = vld [vmem:[%s148 + $0xc58] sm:$0xff]
                %549 = vst [vmem:[%s149 + $0x638] sm:$0xff] %v548
                %v550 = vld [vmem:[%s148 + $0xc80] sm:$0xff]
                %551 = vst [vmem:[%s149 + $0x640] sm:$0xff] %v550
                %v552 = vld [vmem:[%s148 + $0xc88] sm:$0xff]
                %553 = vst [vmem:[%s149 + $0x648] sm:$0xff] %v552
                %v554 = vld [vmem:[%s148 + $0xc90] sm:$0xff]
                %555 = vst [vmem:[%s149 + $0x650] sm:$0xff] %v554
                %v556 = vld [vmem:[%s148 + $0xc98] sm:$0xff]
                %557 = vst [vmem:[%s149 + $0x658] sm:$0xff] %v556
                %v558 = vld [vmem:[%s148 + $0xcc0] sm:$0xff]
                %559 = vst [vmem:[%s149 + $0x660] sm:$0xff] %v558
                %v560 = vld [vmem:[%s148 + $0xcc8] sm:$0xff]
                %561 = vst [vmem:[%s149 + $0x668] sm:$0xff] %v560
                %v562 = vld [vmem:[%s148 + $0xcd0] sm:$0xff]
                %563 = vst [vmem:[%s149 + $0x670] sm:$0xff] %v562
                %v564 = vld [vmem:[%s148 + $0xcd8] sm:$0xff]
                %565 = vst [vmem:[%s149 + $0x678] sm:$0xff] %v564
                %v566 = vld [vmem:[%s148 + $0xd00] sm:$0xff]
                %567 = vst [vmem:[%s149 + $0x680] sm:$0xff] %v566
                %v568 = vld [vmem:[%s148 + $0xd08] sm:$0xff]
                %569 = vst [vmem:[%s149 + $0x688] sm:$0xff] %v568
                %v570 = vld [vmem:[%s148 + $0xd10] sm:$0xff]
                %571 = vst [vmem:[%s149 + $0x690] sm:$0xff] %v570
                %v572 = vld [vmem:[%s148 + $0xd18] sm:$0xff]
                %573 = vst [vmem:[%s149 + $0x698] sm:$0xff] %v572
                %v574 = vld [vmem:[%s148 + $0xd40] sm:$0xff]
                %575 = vst [vmem:[%s149 + $0x6a0] sm:$0xff] %v574
                %v576 = vld [vmem:[%s148 + $0xd48] sm:$0xff]
                %577 = vst [vmem:[%s149 + $0x6a8] sm:$0xff] %v576
                %v578 = vld [vmem:[%s148 + $0xd50] sm:$0xff]
                %579 = vst [vmem:[%s149 + $0x6b0] sm:$0xff] %v578
                %v580 = vld [vmem:[%s148 + $0xd58] sm:$0xff]
                %581 = vst [vmem:[%s149 + $0x6b8] sm:$0xff] %v580
                %v582 = vld [vmem:[%s148 + $0xd80] sm:$0xff]
                %583 = vst [vmem:[%s149 + $0x6c0] sm:$0xff] %v582
                %v584 = vld [vmem:[%s148 + $0xd88] sm:$0xff]
                %585 = vst [vmem:[%s149 + $0x6c8] sm:$0xff] %v584
                %v586 = vld [vmem:[%s148 + $0xd90] sm:$0xff]
                %587 = vst [vmem:[%s149 + $0x6d0] sm:$0xff] %v586
                %v588 = vld [vmem:[%s148 + $0xd98] sm:$0xff]
                %589 = vst [vmem:[%s149 + $0x6d8] sm:$0xff] %v588
                %v590 = vld [vmem:[%s148 + $0xdc0] sm:$0xff]
                %591 = vst [vmem:[%s149 + $0x6e0] sm:$0xff] %v590
                %v592 = vld [vmem:[%s148 + $0xdc8] sm:$0xff]
                %593 = vst [vmem:[%s149 + $0x6e8] sm:$0xff] %v592
                %v594 = vld [vmem:[%s148 + $0xdd0] sm:$0xff]
                %595 = vst [vmem:[%s149 + $0x6f0] sm:$0xff] %v594
                %v596 = vld [vmem:[%s148 + $0xdd8] sm:$0xff]
                %597 = vst [vmem:[%s149 + $0x6f8] sm:$0xff] %v596
                %v598 = vld [vmem:[%s148 + $0xe00] sm:$0xff]
                %599 = vst [vmem:[%s149 + $0x700] sm:$0xff] %v598
                %v600 = vld [vmem:[%s148 + $0xe08] sm:$0xff]
                %601 = vst [vmem:[%s149 + $0x708] sm:$0xff] %v600
                %v602 = vld [vmem:[%s148 + $0xe10] sm:$0xff]
                %603 = vst [vmem:[%s149 + $0x710] sm:$0xff] %v602
                %v604 = vld [vmem:[%s148 + $0xe18] sm:$0xff]
                %605 = vst [vmem:[%s149 + $0x718] sm:$0xff] %v604
                %v606 = vld [vmem:[%s148 + $0xe40] sm:$0xff]
                %607 = vst [vmem:[%s149 + $0x720] sm:$0xff] %v606
                %v608 = vld [vmem:[%s148 + $0xe48] sm:$0xff]
                %609 = vst [vmem:[%s149 + $0x728] sm:$0xff] %v608
                %v610 = vld [vmem:[%s148 + $0xe50] sm:$0xff]
                %611 = vst [vmem:[%s149 + $0x730] sm:$0xff] %v610
                %v612 = vld [vmem:[%s148 + $0xe58] sm:$0xff]
                %613 = vst [vmem:[%s149 + $0x738] sm:$0xff] %v612
                %v614 = vld [vmem:[%s148 + $0xe80] sm:$0xff]
                %615 = vst [vmem:[%s149 + $0x740] sm:$0xff] %v614
                %v616 = vld [vmem:[%s148 + $0xe88] sm:$0xff]
                %617 = vst [vmem:[%s149 + $0x748] sm:$0xff] %v616
                %v618 = vld [vmem:[%s148 + $0xe90] sm:$0xff]
                %619 = vst [vmem:[%s149 + $0x750] sm:$0xff] %v618
                %v620 = vld [vmem:[%s148 + $0xe98] sm:$0xff]
                %621 = vst [vmem:[%s149 + $0x758] sm:$0xff] %v620
                %v622 = vld [vmem:[%s148 + $0xec0] sm:$0xff]
                %623 = vst [vmem:[%s149 + $0x760] sm:$0xff] %v622
                %v624 = vld [vmem:[%s148 + $0xec8] sm:$0xff]
                %625 = vst [vmem:[%s149 + $0x768] sm:$0xff] %v624
                %v626 = vld [vmem:[%s148 + $0xed0] sm:$0xff]
                %627 = vst [vmem:[%s149 + $0x770] sm:$0xff] %v626
                %v628 = vld [vmem:[%s148 + $0xed8] sm:$0xff]
                %629 = vst [vmem:[%s149 + $0x778] sm:$0xff] %v628
                %v630 = vld [vmem:[%s148 + $0xf00] sm:$0xff]
                %631 = vst [vmem:[%s149 + $0x780] sm:$0xff] %v630
                %v632 = vld [vmem:[%s148 + $0xf08] sm:$0xff]
                %633 = vst [vmem:[%s149 + $0x788] sm:$0xff] %v632
                %v634 = vld [vmem:[%s148 + $0xf10] sm:$0xff]
                %635 = vst [vmem:[%s149 + $0x790] sm:$0xff] %v634
                %v636 = vld [vmem:[%s148 + $0xf18] sm:$0xff]
                %637 = vst [vmem:[%s149 + $0x798] sm:$0xff] %v636
                %v638 = vld [vmem:[%s148 + $0xf40] sm:$0xff]
                %639 = vst [vmem:[%s149 + $0x7a0] sm:$0xff] %v638
                %v640 = vld [vmem:[%s148 + $0xf48] sm:$0xff]
                %641 = vst [vmem:[%s149 + $0x7a8] sm:$0xff] %v640
                %v642 = vld [vmem:[%s148 + $0xf50] sm:$0xff]
                %643 = vst [vmem:[%s149 + $0x7b0] sm:$0xff] %v642
                %v644 = vld [vmem:[%s148 + $0xf58] sm:$0xff]
                %645 = vst [vmem:[%s149 + $0x7b8] sm:$0xff] %v644
                %v646 = vld [vmem:[%s148 + $0xf80] sm:$0xff]
                %647 = vst [vmem:[%s149 + $0x7c0] sm:$0xff] %v646
                %v648 = vld [vmem:[%s148 + $0xf88] sm:$0xff]
                %649 = vst [vmem:[%s149 + $0x7c8] sm:$0xff] %v648
                %v650 = vld [vmem:[%s148 + $0xf90] sm:$0xff]
                %651 = vst [vmem:[%s149 + $0x7d0] sm:$0xff] %v650
                %v652 = vld [vmem:[%s148 + $0xf98] sm:$0xff]
                %653 = vst [vmem:[%s149 + $0x7d8] sm:$0xff] %v652
                %v654 = vld [vmem:[%s148 + $0xfc0] sm:$0xff]
                %655 = vst [vmem:[%s149 + $0x7e0] sm:$0xff] %v654
                %v656 = vld [vmem:[%s148 + $0xfc8] sm:$0xff]
                %657 = vst [vmem:[%s149 + $0x7e8] sm:$0xff] %v656
                %v658 = vld [vmem:[%s148 + $0xfd0] sm:$0xff]
                %659 = vst [vmem:[%s149 + $0x7f0] sm:$0xff] %v658
                %v660 = vld [vmem:[%s148 + $0xfd8] sm:$0xff]
                %661 = vst [vmem:[%s149 + $0x7f8] sm:$0xff] %v660
                %v662 = vld [vmem:[%s148 + $0x1000] sm:$0xff]
                %663 = vst [vmem:[%s149 + $0x800] sm:$0xff] %v662
                %v664 = vld [vmem:[%s148 + $0x1008] sm:$0xff]
                %665 = vst [vmem:[%s149 + $0x808] sm:$0xff] %v664
                %v666 = vld [vmem:[%s148 + $0x1010] sm:$0xff]
                %667 = vst [vmem:[%s149 + $0x810] sm:$0xff] %v666
                %v668 = vld [vmem:[%s148 + $0x1018] sm:$0xff]
                %669 = vst [vmem:[%s149 + $0x818] sm:$0xff] %v668
                %v670 = vld [vmem:[%s148 + $0x1040] sm:$0xff]
                %671 = vst [vmem:[%s149 + $0x820] sm:$0xff] %v670
                %v672 = vld [vmem:[%s148 + $0x1048] sm:$0xff]
                %673 = vst [vmem:[%s149 + $0x828] sm:$0xff] %v672
                %v674 = vld [vmem:[%s148 + $0x1050] sm:$0xff]
                %675 = vst [vmem:[%s149 + $0x830] sm:$0xff] %v674
                %v676 = vld [vmem:[%s148 + $0x1058] sm:$0xff]
                %677 = vst [vmem:[%s149 + $0x838] sm:$0xff] %v676
                %v678 = vld [vmem:[%s148 + $0x1080] sm:$0xff]
                %679 = vst [vmem:[%s149 + $0x840] sm:$0xff] %v678
                %v680 = vld [vmem:[%s148 + $0x1088] sm:$0xff]
                %681 = vst [vmem:[%s149 + $0x848] sm:$0xff] %v680
                %v682 = vld [vmem:[%s148 + $0x1090] sm:$0xff]
                %683 = vst [vmem:[%s149 + $0x850] sm:$0xff] %v682
                %v684 = vld [vmem:[%s148 + $0x1098] sm:$0xff]
                %685 = vst [vmem:[%s149 + $0x858] sm:$0xff] %v684
                %v686 = vld [vmem:[%s148 + $0x10c0] sm:$0xff]
                %687 = vst [vmem:[%s149 + $0x860] sm:$0xff] %v686
                %v688 = vld [vmem:[%s148 + $0x10c8] sm:$0xff]
                %689 = vst [vmem:[%s149 + $0x868] sm:$0xff] %v688
                %v690 = vld [vmem:[%s148 + $0x10d0] sm:$0xff]
                %691 = vst [vmem:[%s149 + $0x870] sm:$0xff] %v690
                %v692 = vld [vmem:[%s148 + $0x10d8] sm:$0xff]
                %693 = vst [vmem:[%s149 + $0x878] sm:$0xff] %v692
                %v694 = vld [vmem:[%s148 + $0x1100] sm:$0xff]
                %695 = vst [vmem:[%s149 + $0x880] sm:$0xff] %v694
                %v696 = vld [vmem:[%s148 + $0x1108] sm:$0xff]
                %697 = vst [vmem:[%s149 + $0x888] sm:$0xff] %v696
                %v698 = vld [vmem:[%s148 + $0x1110] sm:$0xff]
                %699 = vst [vmem:[%s149 + $0x890] sm:$0xff] %v698
                %v700 = vld [vmem:[%s148 + $0x1118] sm:$0xff]
                %701 = vst [vmem:[%s149 + $0x898] sm:$0xff] %v700
                %v702 = vld [vmem:[%s148 + $0x1140] sm:$0xff]
                %703 = vst [vmem:[%s149 + $0x8a0] sm:$0xff] %v702
                %v704 = vld [vmem:[%s148 + $0x1148] sm:$0xff]
                %705 = vst [vmem:[%s149 + $0x8a8] sm:$0xff] %v704
                %v706 = vld [vmem:[%s148 + $0x1150] sm:$0xff]
                %707 = vst [vmem:[%s149 + $0x8b0] sm:$0xff] %v706
                %v708 = vld [vmem:[%s148 + $0x1158] sm:$0xff]
                %709 = vst [vmem:[%s149 + $0x8b8] sm:$0xff] %v708
                %v710 = vld [vmem:[%s148 + $0x1180] sm:$0xff]
                %711 = vst [vmem:[%s149 + $0x8c0] sm:$0xff] %v710
                %v712 = vld [vmem:[%s148 + $0x1188] sm:$0xff]
                %713 = vst [vmem:[%s149 + $0x8c8] sm:$0xff] %v712
                %v714 = vld [vmem:[%s148 + $0x1190] sm:$0xff]
                %715 = vst [vmem:[%s149 + $0x8d0] sm:$0xff] %v714
                %v716 = vld [vmem:[%s148 + $0x1198] sm:$0xff]
                %717 = vst [vmem:[%s149 + $0x8d8] sm:$0xff] %v716
                %v718 = vld [vmem:[%s148 + $0x11c0] sm:$0xff]
                %719 = vst [vmem:[%s149 + $0x8e0] sm:$0xff] %v718
                %v720 = vld [vmem:[%s148 + $0x11c8] sm:$0xff]
                %721 = vst [vmem:[%s149 + $0x8e8] sm:$0xff] %v720
                %v722 = vld [vmem:[%s148 + $0x11d0] sm:$0xff]
                %723 = vst [vmem:[%s149 + $0x8f0] sm:$0xff] %v722
                %v724 = vld [vmem:[%s148 + $0x11d8] sm:$0xff]
                %725 = vst [vmem:[%s149 + $0x8f8] sm:$0xff] %v724
                %v726 = vld [vmem:[%s148 + $0x1200] sm:$0xff]
                %727 = vst [vmem:[%s149 + $0x900] sm:$0xff] %v726
                %v728 = vld [vmem:[%s148 + $0x1208] sm:$0xff]
                %729 = vst [vmem:[%s149 + $0x908] sm:$0xff] %v728
                %v730 = vld [vmem:[%s148 + $0x1210] sm:$0xff]
                %731 = vst [vmem:[%s149 + $0x910] sm:$0xff] %v730
                %v732 = vld [vmem:[%s148 + $0x1218] sm:$0xff]
                %733 = vst [vmem:[%s149 + $0x918] sm:$0xff] %v732
                %v734 = vld [vmem:[%s148 + $0x1240] sm:$0xff]
                %735 = vst [vmem:[%s149 + $0x920] sm:$0xff] %v734
                %v736 = vld [vmem:[%s148 + $0x1248] sm:$0xff]
                %737 = vst [vmem:[%s149 + $0x928] sm:$0xff] %v736
                %v738 = vld [vmem:[%s148 + $0x1250] sm:$0xff]
                %739 = vst [vmem:[%s149 + $0x930] sm:$0xff] %v738
                %v740 = vld [vmem:[%s148 + $0x1258] sm:$0xff]
                %741 = vst [vmem:[%s149 + $0x938] sm:$0xff] %v740
                %v742 = vld [vmem:[%s148 + $0x1280] sm:$0xff]
                %743 = vst [vmem:[%s149 + $0x940] sm:$0xff] %v742
                %v744 = vld [vmem:[%s148 + $0x1288] sm:$0xff]
                %745 = vst [vmem:[%s149 + $0x948] sm:$0xff] %v744
                %v746 = vld [vmem:[%s148 + $0x1290] sm:$0xff]
                %747 = vst [vmem:[%s149 + $0x950] sm:$0xff] %v746
                %v748 = vld [vmem:[%s148 + $0x1298] sm:$0xff]
                %749 = vst [vmem:[%s149 + $0x958] sm:$0xff] %v748
                %v750 = vld [vmem:[%s148 + $0x12c0] sm:$0xff]
                %751 = vst [vmem:[%s149 + $0x960] sm:$0xff] %v750
                %v752 = vld [vmem:[%s148 + $0x12c8] sm:$0xff]
                %753 = vst [vmem:[%s149 + $0x968] sm:$0xff] %v752
                %v754 = vld [vmem:[%s148 + $0x12d0] sm:$0xff]
                %755 = vst [vmem:[%s149 + $0x970] sm:$0xff] %v754
                %v756 = vld [vmem:[%s148 + $0x12d8] sm:$0xff]
                %757 = vst [vmem:[%s149 + $0x978] sm:$0xff] %v756
                %v758 = vld [vmem:[%s148 + $0x1300] sm:$0xff]
                %759 = vst [vmem:[%s149 + $0x980] sm:$0xff] %v758
                %v760 = vld [vmem:[%s148 + $0x1308] sm:$0xff]
                %761 = vst [vmem:[%s149 + $0x988] sm:$0xff] %v760
                %v762 = vld [vmem:[%s148 + $0x1310] sm:$0xff]
                %763 = vst [vmem:[%s149 + $0x990] sm:$0xff] %v762
                %v764 = vld [vmem:[%s148 + $0x1318] sm:$0xff]
                %765 = vst [vmem:[%s149 + $0x998] sm:$0xff] %v764
                %v766 = vld [vmem:[%s148 + $0x1340] sm:$0xff]
                %767 = vst [vmem:[%s149 + $0x9a0] sm:$0xff] %v766
                %v768 = vld [vmem:[%s148 + $0x1348] sm:$0xff]
                %769 = vst [vmem:[%s149 + $0x9a8] sm:$0xff] %v768
                %v770 = vld [vmem:[%s148 + $0x1350] sm:$0xff]
                %771 = vst [vmem:[%s149 + $0x9b0] sm:$0xff] %v770
                %v772 = vld [vmem:[%s148 + $0x1358] sm:$0xff]
                %773 = vst [vmem:[%s149 + $0x9b8] sm:$0xff] %v772
                %v774 = vld [vmem:[%s148 + $0x1380] sm:$0xff]
                %775 = vst [vmem:[%s149 + $0x9c0] sm:$0xff] %v774
                %v776 = vld [vmem:[%s148 + $0x1388] sm:$0xff]
                %777 = vst [vmem:[%s149 + $0x9c8] sm:$0xff] %v776
                %v778 = vld [vmem:[%s148 + $0x1390] sm:$0xff]
                %779 = vst [vmem:[%s149 + $0x9d0] sm:$0xff] %v778
                %v780 = vld [vmem:[%s148 + $0x1398] sm:$0xff]
                %781 = vst [vmem:[%s149 + $0x9d8] sm:$0xff] %v780
                %v782 = vld [vmem:[%s148 + $0x13c0] sm:$0xff]
                %783 = vst [vmem:[%s149 + $0x9e0] sm:$0xff] %v782
                %v784 = vld [vmem:[%s148 + $0x13c8] sm:$0xff]
                %785 = vst [vmem:[%s149 + $0x9e8] sm:$0xff] %v784
                %v786 = vld [vmem:[%s148 + $0x13d0] sm:$0xff]
                %787 = vst [vmem:[%s149 + $0x9f0] sm:$0xff] %v786
                %v788 = vld [vmem:[%s148 + $0x13d8] sm:$0xff]
                %789 = vst [vmem:[%s149 + $0x9f8] sm:$0xff] %v788
                %v790 = vld [vmem:[%s148 + $0x1400] sm:$0xff]
                %791 = vst [vmem:[%s149 + $0xa00] sm:$0xff] %v790
                %v792 = vld [vmem:[%s148 + $0x1408] sm:$0xff]
                %793 = vst [vmem:[%s149 + $0xa08] sm:$0xff] %v792
                %v794 = vld [vmem:[%s148 + $0x1410] sm:$0xff]
                %795 = vst [vmem:[%s149 + $0xa10] sm:$0xff] %v794
                %v796 = vld [vmem:[%s148 + $0x1418] sm:$0xff]
                %797 = vst [vmem:[%s149 + $0xa18] sm:$0xff] %v796
                %v798 = vld [vmem:[%s148 + $0x1440] sm:$0xff]
                %799 = vst [vmem:[%s149 + $0xa20] sm:$0xff] %v798
                %v800 = vld [vmem:[%s148 + $0x1448] sm:$0xff]
                %801 = vst [vmem:[%s149 + $0xa28] sm:$0xff] %v800
                %v802 = vld [vmem:[%s148 + $0x1450] sm:$0xff]
                %803 = vst [vmem:[%s149 + $0xa30] sm:$0xff] %v802
                %v804 = vld [vmem:[%s148 + $0x1458] sm:$0xff]
                %805 = vst [vmem:[%s149 + $0xa38] sm:$0xff] %v804
                %v806 = vld [vmem:[%s148 + $0x1480] sm:$0xff]
                %807 = vst [vmem:[%s149 + $0xa40] sm:$0xff] %v806
                %v808 = vld [vmem:[%s148 + $0x1488] sm:$0xff]
                %809 = vst [vmem:[%s149 + $0xa48] sm:$0xff] %v808
                %v810 = vld [vmem:[%s148 + $0x1490] sm:$0xff]
                %811 = vst [vmem:[%s149 + $0xa50] sm:$0xff] %v810
                %v812 = vld [vmem:[%s148 + $0x1498] sm:$0xff]
                %813 = vst [vmem:[%s149 + $0xa58] sm:$0xff] %v812
                %v814 = vld [vmem:[%s148 + $0x14c0] sm:$0xff]
                %815 = vst [vmem:[%s149 + $0xa60] sm:$0xff] %v814
                %v816 = vld [vmem:[%s148 + $0x14c8] sm:$0xff]
                %817 = vst [vmem:[%s149 + $0xa68] sm:$0xff] %v816
                %v818 = vld [vmem:[%s148 + $0x14d0] sm:$0xff]
                %819 = vst [vmem:[%s149 + $0xa70] sm:$0xff] %v818
                %v820 = vld [vmem:[%s148 + $0x14d8] sm:$0xff]
                %821 = vst [vmem:[%s149 + $0xa78] sm:$0xff] %v820
                %v822 = vld [vmem:[%s148 + $0x1500] sm:$0xff]
                %823 = vst [vmem:[%s149 + $0xa80] sm:$0xff] %v822
                %v824 = vld [vmem:[%s148 + $0x1508] sm:$0xff]
                %825 = vst [vmem:[%s149 + $0xa88] sm:$0xff] %v824
                %v826 = vld [vmem:[%s148 + $0x1510] sm:$0xff]
                %827 = vst [vmem:[%s149 + $0xa90] sm:$0xff] %v826
                %v828 = vld [vmem:[%s148 + $0x1518] sm:$0xff]
                %829 = vst [vmem:[%s149 + $0xa98] sm:$0xff] %v828
                %v830 = vld [vmem:[%s148 + $0x1540] sm:$0xff]
                %831 = vst [vmem:[%s149 + $0xaa0] sm:$0xff] %v830
                %v832 = vld [vmem:[%s148 + $0x1548] sm:$0xff]
                %833 = vst [vmem:[%s149 + $0xaa8] sm:$0xff] %v832
                %v834 = vld [vmem:[%s148 + $0x1550] sm:$0xff]
                %835 = vst [vmem:[%s149 + $0xab0] sm:$0xff] %v834
                %v836 = vld [vmem:[%s148 + $0x1558] sm:$0xff]
                %837 = vst [vmem:[%s149 + $0xab8] sm:$0xff] %v836
                %v838 = vld [vmem:[%s148 + $0x1580] sm:$0xff]
                %839 = vst [vmem:[%s149 + $0xac0] sm:$0xff] %v838
                %v840 = vld [vmem:[%s148 + $0x1588] sm:$0xff]
                %841 = vst [vmem:[%s149 + $0xac8] sm:$0xff] %v840
                %v842 = vld [vmem:[%s148 + $0x1590] sm:$0xff]
                %843 = vst [vmem:[%s149 + $0xad0] sm:$0xff] %v842
                %v844 = vld [vmem:[%s148 + $0x1598] sm:$0xff]
                %845 = vst [vmem:[%s149 + $0xad8] sm:$0xff] %v844
                %v846 = vld [vmem:[%s148 + $0x15c0] sm:$0xff]
                %847 = vst [vmem:[%s149 + $0xae0] sm:$0xff] %v846
                %v848 = vld [vmem:[%s148 + $0x15c8] sm:$0xff]
                %849 = vst [vmem:[%s149 + $0xae8] sm:$0xff] %v848
                %v850 = vld [vmem:[%s148 + $0x15d0] sm:$0xff]
                %851 = vst [vmem:[%s149 + $0xaf0] sm:$0xff] %v850
                %v852 = vld [vmem:[%s148 + $0x15d8] sm:$0xff]
                %853 = vst [vmem:[%s149 + $0xaf8] sm:$0xff] %v852
                %v854 = vld [vmem:[%s148 + $0x1600] sm:$0xff]
                %855 = vst [vmem:[%s149 + $0xb00] sm:$0xff] %v854
                %v856 = vld [vmem:[%s148 + $0x1608] sm:$0xff]
                %857 = vst [vmem:[%s149 + $0xb08] sm:$0xff] %v856
                %v858 = vld [vmem:[%s148 + $0x1610] sm:$0xff]
                %859 = vst [vmem:[%s149 + $0xb10] sm:$0xff] %v858
                %v860 = vld [vmem:[%s148 + $0x1618] sm:$0xff]
                %861 = vst [vmem:[%s149 + $0xb18] sm:$0xff] %v860
                %v862 = vld [vmem:[%s148 + $0x1640] sm:$0xff]
                %863 = vst [vmem:[%s149 + $0xb20] sm:$0xff] %v862
                %v864 = vld [vmem:[%s148 + $0x1648] sm:$0xff]
                %865 = vst [vmem:[%s149 + $0xb28] sm:$0xff] %v864
                %v866 = vld [vmem:[%s148 + $0x1650] sm:$0xff]
                %867 = vst [vmem:[%s149 + $0xb30] sm:$0xff] %v866
                %v868 = vld [vmem:[%s148 + $0x1658] sm:$0xff]
                %869 = vst [vmem:[%s149 + $0xb38] sm:$0xff] %v868
                %v870 = vld [vmem:[%s148 + $0x1680] sm:$0xff]
                %871 = vst [vmem:[%s149 + $0xb40] sm:$0xff] %v870
                %v872 = vld [vmem:[%s148 + $0x1688] sm:$0xff]
                %873 = vst [vmem:[%s149 + $0xb48] sm:$0xff] %v872
                %v874 = vld [vmem:[%s148 + $0x1690] sm:$0xff]
                %875 = vst [vmem:[%s149 + $0xb50] sm:$0xff] %v874
                %v876 = vld [vmem:[%s148 + $0x1698] sm:$0xff]
                %877 = vst [vmem:[%s149 + $0xb58] sm:$0xff] %v876
                %v878 = vld [vmem:[%s148 + $0x16c0] sm:$0xff]
                %879 = vst [vmem:[%s149 + $0xb60] sm:$0xff] %v878
                %v880 = vld [vmem:[%s148 + $0x16c8] sm:$0xff]
                %881 = vst [vmem:[%s149 + $0xb68] sm:$0xff] %v880
                %v882 = vld [vmem:[%s148 + $0x16d0] sm:$0xff]
                %883 = vst [vmem:[%s149 + $0xb70] sm:$0xff] %v882
                %v884 = vld [vmem:[%s148 + $0x16d8] sm:$0xff]
                %885 = vst [vmem:[%s149 + $0xb78] sm:$0xff] %v884
                %v886 = vld [vmem:[%s148 + $0x1700] sm:$0xff]
                %887 = vst [vmem:[%s149 + $0xb80] sm:$0xff] %v886
                %v888 = vld [vmem:[%s148 + $0x1708] sm:$0xff]
                %889 = vst [vmem:[%s149 + $0xb88] sm:$0xff] %v888
                %v890 = vld [vmem:[%s148 + $0x1710] sm:$0xff]
                %891 = vst [vmem:[%s149 + $0xb90] sm:$0xff] %v890
                %v892 = vld [vmem:[%s148 + $0x1718] sm:$0xff]
                %893 = vst [vmem:[%s149 + $0xb98] sm:$0xff] %v892
                %v894 = vld [vmem:[%s148 + $0x1740] sm:$0xff]
                %895 = vst [vmem:[%s149 + $0xba0] sm:$0xff] %v894
                %v896 = vld [vmem:[%s148 + $0x1748] sm:$0xff]
                %897 = vst [vmem:[%s149 + $0xba8] sm:$0xff] %v896
                %v898 = vld [vmem:[%s148 + $0x1750] sm:$0xff]
                %899 = vst [vmem:[%s149 + $0xbb0] sm:$0xff] %v898
                %v900 = vld [vmem:[%s148 + $0x1758] sm:$0xff]
                %901 = vst [vmem:[%s149 + $0xbb8] sm:$0xff] %v900
                %v902 = vld [vmem:[%s148 + $0x1780] sm:$0xff]
                %903 = vst [vmem:[%s149 + $0xbc0] sm:$0xff] %v902
                %v904 = vld [vmem:[%s148 + $0x1788] sm:$0xff]
                %905 = vst [vmem:[%s149 + $0xbc8] sm:$0xff] %v904
                %v906 = vld [vmem:[%s148 + $0x1790] sm:$0xff]
                %907 = vst [vmem:[%s149 + $0xbd0] sm:$0xff] %v906
                %v908 = vld [vmem:[%s148 + $0x1798] sm:$0xff]
                %909 = vst [vmem:[%s149 + $0xbd8] sm:$0xff] %v908
                %v910 = vld [vmem:[%s148 + $0x17c0] sm:$0xff]
                %911 = vst [vmem:[%s149 + $0xbe0] sm:$0xff] %v910
                %v912 = vld [vmem:[%s148 + $0x17c8] sm:$0xff]
                %913 = vst [vmem:[%s149 + $0xbe8] sm:$0xff] %v912
                %v914 = vld [vmem:[%s148 + $0x17d0] sm:$0xff]
                %915 = vst [vmem:[%s149 + $0xbf0] sm:$0xff] %v914
                %v916 = vld [vmem:[%s148 + $0x17d8] sm:$0xff]
                %917 = vst [vmem:[%s149 + $0xbf8] sm:$0xff] %v916
                %v918 = vld [vmem:[%s148 + $0x1800] sm:$0xff]
                %919 = vst [vmem:[%s149 + $0xc00] sm:$0xff] %v918
                %v920 = vld [vmem:[%s148 + $0x1808] sm:$0xff]
                %921 = vst [vmem:[%s149 + $0xc08] sm:$0xff] %v920
                %v922 = vld [vmem:[%s148 + $0x1810] sm:$0xff]
                %923 = vst [vmem:[%s149 + $0xc10] sm:$0xff] %v922
                %v924 = vld [vmem:[%s148 + $0x1818] sm:$0xff]
                %925 = vst [vmem:[%s149 + $0xc18] sm:$0xff] %v924
                %v926 = vld [vmem:[%s148 + $0x1840] sm:$0xff]
                %927 = vst [vmem:[%s149 + $0xc20] sm:$0xff] %v926
                %v928 = vld [vmem:[%s148 + $0x1848] sm:$0xff]
                %929 = vst [vmem:[%s149 + $0xc28] sm:$0xff] %v928
                %v930 = vld [vmem:[%s148 + $0x1850] sm:$0xff]
                %931 = vst [vmem:[%s149 + $0xc30] sm:$0xff] %v930
                %v932 = vld [vmem:[%s148 + $0x1858] sm:$0xff]
                %933 = vst [vmem:[%s149 + $0xc38] sm:$0xff] %v932
                %v934 = vld [vmem:[%s148 + $0x1880] sm:$0xff]
                %935 = vst [vmem:[%s149 + $0xc40] sm:$0xff] %v934
                %v936 = vld [vmem:[%s148 + $0x1888] sm:$0xff]
                %937 = vst [vmem:[%s149 + $0xc48] sm:$0xff] %v936
                %v938 = vld [vmem:[%s148 + $0x1890] sm:$0xff]
                %939 = vst [vmem:[%s149 + $0xc50] sm:$0xff] %v938
                %v940 = vld [vmem:[%s148 + $0x1898] sm:$0xff]
                %941 = vst [vmem:[%s149 + $0xc58] sm:$0xff] %v940
                %v942 = vld [vmem:[%s148 + $0x18c0] sm:$0xff]
                %943 = vst [vmem:[%s149 + $0xc60] sm:$0xff] %v942
                %v944 = vld [vmem:[%s148 + $0x18c8] sm:$0xff]
                %945 = vst [vmem:[%s149 + $0xc68] sm:$0xff] %v944
                %v946 = vld [vmem:[%s148 + $0x18d0] sm:$0xff]
                %947 = vst [vmem:[%s149 + $0xc70] sm:$0xff] %v946
                %v948 = vld [vmem:[%s148 + $0x18d8] sm:$0xff]
                %949 = vst [vmem:[%s149 + $0xc78] sm:$0xff] %v948
                %v950 = vld [vmem:[%s148 + $0x1900] sm:$0xff]
                %951 = vst [vmem:[%s149 + $0xc80] sm:$0xff] %v950
                %v952 = vld [vmem:[%s148 + $0x1908] sm:$0xff]
                %953 = vst [vmem:[%s149 + $0xc88] sm:$0xff] %v952
                %v954 = vld [vmem:[%s148 + $0x1910] sm:$0xff]
                %955 = vst [vmem:[%s149 + $0xc90] sm:$0xff] %v954
                %v956 = vld [vmem:[%s148 + $0x1918] sm:$0xff]
                %957 = vst [vmem:[%s149 + $0xc98] sm:$0xff] %v956
                %v958 = vld [vmem:[%s148 + $0x1940] sm:$0xff]
                %959 = vst [vmem:[%s149 + $0xca0] sm:$0xff] %v958
                %v960 = vld [vmem:[%s148 + $0x1948] sm:$0xff]
                %961 = vst [vmem:[%s149 + $0xca8] sm:$0xff] %v960
                %v962 = vld [vmem:[%s148 + $0x1950] sm:$0xff]
                %963 = vst [vmem:[%s149 + $0xcb0] sm:$0xff] %v962
                %v964 = vld [vmem:[%s148 + $0x1958] sm:$0xff]
                %965 = vst [vmem:[%s149 + $0xcb8] sm:$0xff] %v964
                %v966 = vld [vmem:[%s148 + $0x1980] sm:$0xff]
                %967 = vst [vmem:[%s149 + $0xcc0] sm:$0xff] %v966
                %v968 = vld [vmem:[%s148 + $0x1988] sm:$0xff]
                %969 = vst [vmem:[%s149 + $0xcc8] sm:$0xff] %v968
                %v970 = vld [vmem:[%s148 + $0x1990] sm:$0xff]
                %971 = vst [vmem:[%s149 + $0xcd0] sm:$0xff] %v970
                %v972 = vld [vmem:[%s148 + $0x1998] sm:$0xff]
                %973 = vst [vmem:[%s149 + $0xcd8] sm:$0xff] %v972
                %v974 = vld [vmem:[%s148 + $0x19c0] sm:$0xff]
                %975 = vst [vmem:[%s149 + $0xce0] sm:$0xff] %v974
                %v976 = vld [vmem:[%s148 + $0x19c8] sm:$0xff]
                %977 = vst [vmem:[%s149 + $0xce8] sm:$0xff] %v976
                %v978 = vld [vmem:[%s148 + $0x19d0] sm:$0xff]
                %979 = vst [vmem:[%s149 + $0xcf0] sm:$0xff] %v978
                %v980 = vld [vmem:[%s148 + $0x19d8] sm:$0xff]
                %981 = vst [vmem:[%s149 + $0xcf8] sm:$0xff] %v980
                %v982 = vld [vmem:[%s148 + $0x1a00] sm:$0xff]
                %983 = vst [vmem:[%s149 + $0xd00] sm:$0xff] %v982
                %v984 = vld [vmem:[%s148 + $0x1a08] sm:$0xff]
                %985 = vst [vmem:[%s149 + $0xd08] sm:$0xff] %v984
                %v986 = vld [vmem:[%s148 + $0x1a10] sm:$0xff]
                %987 = vst [vmem:[%s149 + $0xd10] sm:$0xff] %v986
                %v988 = vld [vmem:[%s148 + $0x1a18] sm:$0xff]
                %989 = vst [vmem:[%s149 + $0xd18] sm:$0xff] %v988
                %v990 = vld [vmem:[%s148 + $0x1a40] sm:$0xff]
                %991 = vst [vmem:[%s149 + $0xd20] sm:$0xff] %v990
                %v992 = vld [vmem:[%s148 + $0x1a48] sm:$0xff]
                %993 = vst [vmem:[%s149 + $0xd28] sm:$0xff] %v992
                %v994 = vld [vmem:[%s148 + $0x1a50] sm:$0xff]
                %995 = vst [vmem:[%s149 + $0xd30] sm:$0xff] %v994
                %v996 = vld [vmem:[%s148 + $0x1a58] sm:$0xff]
                %997 = vst [vmem:[%s149 + $0xd38] sm:$0xff] %v996
                %v998 = vld [vmem:[%s148 + $0x1a80] sm:$0xff]
                %999 = vst [vmem:[%s149 + $0xd40] sm:$0xff] %v998
                %v1000 = vld [vmem:[%s148 + $0x1a88] sm:$0xff]
                %1001 = vst [vmem:[%s149 + $0xd48] sm:$0xff] %v1000
                %v1002 = vld [vmem:[%s148 + $0x1a90] sm:$0xff]
                %1003 = vst [vmem:[%s149 + $0xd50] sm:$0xff] %v1002
                %v1004 = vld [vmem:[%s148 + $0x1a98] sm:$0xff]
                %1005 = vst [vmem:[%s149 + $0xd58] sm:$0xff] %v1004
                %v1006 = vld [vmem:[%s148 + $0x1ac0] sm:$0xff]
                %1007 = vst [vmem:[%s149 + $0xd60] sm:$0xff] %v1006
                %v1008 = vld [vmem:[%s148 + $0x1ac8] sm:$0xff]
                %1009 = vst [vmem:[%s149 + $0xd68] sm:$0xff] %v1008
                %v1010 = vld [vmem:[%s148 + $0x1ad0] sm:$0xff]
                %1011 = vst [vmem:[%s149 + $0xd70] sm:$0xff] %v1010
                %v1012 = vld [vmem:[%s148 + $0x1ad8] sm:$0xff]
                %1013 = vst [vmem:[%s149 + $0xd78] sm:$0xff] %v1012
                %v1014 = vld [vmem:[%s148 + $0x1b00] sm:$0xff]
                %1015 = vst [vmem:[%s149 + $0xd80] sm:$0xff] %v1014
                %v1016 = vld [vmem:[%s148 + $0x1b08] sm:$0xff]
                %1017 = vst [vmem:[%s149 + $0xd88] sm:$0xff] %v1016
                %v1018 = vld [vmem:[%s148 + $0x1b10] sm:$0xff]
                %1019 = vst [vmem:[%s149 + $0xd90] sm:$0xff] %v1018
                %v1020 = vld [vmem:[%s148 + $0x1b18] sm:$0xff]
                %1021 = vst [vmem:[%s149 + $0xd98] sm:$0xff] %v1020
                %v1022 = vld [vmem:[%s148 + $0x1b40] sm:$0xff]
                %1023 = vst [vmem:[%s149 + $0xda0] sm:$0xff] %v1022
                %v1024 = vld [vmem:[%s148 + $0x1b48] sm:$0xff]
                %1025 = vst [vmem:[%s149 + $0xda8] sm:$0xff] %v1024
                %v1026 = vld [vmem:[%s148 + $0x1b50] sm:$0xff]
                %1027 = vst [vmem:[%s149 + $0xdb0] sm:$0xff] %v1026
                %v1028 = vld [vmem:[%s148 + $0x1b58] sm:$0xff]
                %1029 = vst [vmem:[%s149 + $0xdb8] sm:$0xff] %v1028
                %v1030 = vld [vmem:[%s148 + $0x1b80] sm:$0xff]
                %1031 = vst [vmem:[%s149 + $0xdc0] sm:$0xff] %v1030
                %v1032 = vld [vmem:[%s148 + $0x1b88] sm:$0xff]
                %1033 = vst [vmem:[%s149 + $0xdc8] sm:$0xff] %v1032
                %v1034 = vld [vmem:[%s148 + $0x1b90] sm:$0xff]
                %1035 = vst [vmem:[%s149 + $0xdd0] sm:$0xff] %v1034
                %v1036 = vld [vmem:[%s148 + $0x1b98] sm:$0xff]
                %1037 = vst [vmem:[%s149 + $0xdd8] sm:$0xff] %v1036
                %v1038 = vld [vmem:[%s148 + $0x1bc0] sm:$0xff]
                %1039 = vst [vmem:[%s149 + $0xde0] sm:$0xff] %v1038
                %v1040 = vld [vmem:[%s148 + $0x1bc8] sm:$0xff]
                %1041 = vst [vmem:[%s149 + $0xde8] sm:$0xff] %v1040
                %v1042 = vld [vmem:[%s148 + $0x1bd0] sm:$0xff]
                %1043 = vst [vmem:[%s149 + $0xdf0] sm:$0xff] %v1042
                %v1044 = vld [vmem:[%s148 + $0x1bd8] sm:$0xff]
                %1045 = vst [vmem:[%s149 + $0xdf8] sm:$0xff] %v1044
                %v1046 = vld [vmem:[%s148 + $0x1c00] sm:$0xff]
                %1047 = vst [vmem:[%s149 + $0xe00] sm:$0xff] %v1046
                %v1048 = vld [vmem:[%s148 + $0x1c08] sm:$0xff]
                %1049 = vst [vmem:[%s149 + $0xe08] sm:$0xff] %v1048
                %v1050 = vld [vmem:[%s148 + $0x1c10] sm:$0xff]
                %1051 = vst [vmem:[%s149 + $0xe10] sm:$0xff] %v1050
                %v1052 = vld [vmem:[%s148 + $0x1c18] sm:$0xff]
                %1053 = vst [vmem:[%s149 + $0xe18] sm:$0xff] %v1052
                %v1054 = vld [vmem:[%s148 + $0x1c40] sm:$0xff]
                %1055 = vst [vmem:[%s149 + $0xe20] sm:$0xff] %v1054
                %v1056 = vld [vmem:[%s148 + $0x1c48] sm:$0xff]
                %1057 = vst [vmem:[%s149 + $0xe28] sm:$0xff] %v1056
                %v1058 = vld [vmem:[%s148 + $0x1c50] sm:$0xff]
                %1059 = vst [vmem:[%s149 + $0xe30] sm:$0xff] %v1058
                %v1060 = vld [vmem:[%s148 + $0x1c58] sm:$0xff]
                %1061 = vst [vmem:[%s149 + $0xe38] sm:$0xff] %v1060
                %v1062 = vld [vmem:[%s148 + $0x1c80] sm:$0xff]
                %1063 = vst [vmem:[%s149 + $0xe40] sm:$0xff] %v1062
                %v1064 = vld [vmem:[%s148 + $0x1c88] sm:$0xff]
                %1065 = vst [vmem:[%s149 + $0xe48] sm:$0xff] %v1064
                %v1066 = vld [vmem:[%s148 + $0x1c90] sm:$0xff]
                %1067 = vst [vmem:[%s149 + $0xe50] sm:$0xff] %v1066
                %v1068 = vld [vmem:[%s148 + $0x1c98] sm:$0xff]
                %1069 = vst [vmem:[%s149 + $0xe58] sm:$0xff] %v1068
                %v1070 = vld [vmem:[%s148 + $0x1cc0] sm:$0xff]
                %1071 = vst [vmem:[%s149 + $0xe60] sm:$0xff] %v1070
                %v1072 = vld [vmem:[%s148 + $0x1cc8] sm:$0xff]
                %1073 = vst [vmem:[%s149 + $0xe68] sm:$0xff] %v1072
                %v1074 = vld [vmem:[%s148 + $0x1cd0] sm:$0xff]
                %1075 = vst [vmem:[%s149 + $0xe70] sm:$0xff] %v1074
                %v1076 = vld [vmem:[%s148 + $0x1cd8] sm:$0xff]
                %1077 = vst [vmem:[%s149 + $0xe78] sm:$0xff] %v1076
                %v1078 = vld [vmem:[%s148 + $0x1d00] sm:$0xff]
                %1079 = vst [vmem:[%s149 + $0xe80] sm:$0xff] %v1078
                %v1080 = vld [vmem:[%s148 + $0x1d08] sm:$0xff]
                %1081 = vst [vmem:[%s149 + $0xe88] sm:$0xff] %v1080
                %v1082 = vld [vmem:[%s148 + $0x1d10] sm:$0xff]
                %1083 = vst [vmem:[%s149 + $0xe90] sm:$0xff] %v1082
                %v1084 = vld [vmem:[%s148 + $0x1d18] sm:$0xff]
                %1085 = vst [vmem:[%s149 + $0xe98] sm:$0xff] %v1084
                %v1086 = vld [vmem:[%s148 + $0x1d40] sm:$0xff]
                %1087 = vst [vmem:[%s149 + $0xea0] sm:$0xff] %v1086
                %v1088 = vld [vmem:[%s148 + $0x1d48] sm:$0xff]
                %1089 = vst [vmem:[%s149 + $0xea8] sm:$0xff] %v1088
                %v1090 = vld [vmem:[%s148 + $0x1d50] sm:$0xff]
                %1091 = vst [vmem:[%s149 + $0xeb0] sm:$0xff] %v1090
                %v1092 = vld [vmem:[%s148 + $0x1d58] sm:$0xff]
                %1093 = vst [vmem:[%s149 + $0xeb8] sm:$0xff] %v1092
                %v1094 = vld [vmem:[%s148 + $0x1d80] sm:$0xff]
                %1095 = vst [vmem:[%s149 + $0xec0] sm:$0xff] %v1094
                %v1096 = vld [vmem:[%s148 + $0x1d88] sm:$0xff]
                %1097 = vst [vmem:[%s149 + $0xec8] sm:$0xff] %v1096
                %v1098 = vld [vmem:[%s148 + $0x1d90] sm:$0xff]
                %1099 = vst [vmem:[%s149 + $0xed0] sm:$0xff] %v1098
                %v1100 = vld [vmem:[%s148 + $0x1d98] sm:$0xff]
                %1101 = vst [vmem:[%s149 + $0xed8] sm:$0xff] %v1100
                %v1102 = vld [vmem:[%s148 + $0x1dc0] sm:$0xff]
                %1103 = vst [vmem:[%s149 + $0xee0] sm:$0xff] %v1102
                %v1104 = vld [vmem:[%s148 + $0x1dc8] sm:$0xff]
                %1105 = vst [vmem:[%s149 + $0xee8] sm:$0xff] %v1104
                %v1106 = vld [vmem:[%s148 + $0x1dd0] sm:$0xff]
                %1107 = vst [vmem:[%s149 + $0xef0] sm:$0xff] %v1106
                %v1108 = vld [vmem:[%s148 + $0x1dd8] sm:$0xff]
                %1109 = vst [vmem:[%s149 + $0xef8] sm:$0xff] %v1108
                %v1110 = vld [vmem:[%s148 + $0x1e00] sm:$0xff]
                %1111 = vst [vmem:[%s149 + $0xf00] sm:$0xff] %v1110
                %v1112 = vld [vmem:[%s148 + $0x1e08] sm:$0xff]
                %1113 = vst [vmem:[%s149 + $0xf08] sm:$0xff] %v1112
                %v1114 = vld [vmem:[%s148 + $0x1e10] sm:$0xff]
                %1115 = vst [vmem:[%s149 + $0xf10] sm:$0xff] %v1114
                %v1116 = vld [vmem:[%s148 + $0x1e18] sm:$0xff]
                %1117 = vst [vmem:[%s149 + $0xf18] sm:$0xff] %v1116
                %v1118 = vld [vmem:[%s148 + $0x1e40] sm:$0xff]
                %1119 = vst [vmem:[%s149 + $0xf20] sm:$0xff] %v1118
                %v1120 = vld [vmem:[%s148 + $0x1e48] sm:$0xff]
                %1121 = vst [vmem:[%s149 + $0xf28] sm:$0xff] %v1120
                %v1122 = vld [vmem:[%s148 + $0x1e50] sm:$0xff]
                %1123 = vst [vmem:[%s149 + $0xf30] sm:$0xff] %v1122
                %v1124 = vld [vmem:[%s148 + $0x1e58] sm:$0xff]
                %1125 = vst [vmem:[%s149 + $0xf38] sm:$0xff] %v1124
                %v1126 = vld [vmem:[%s148 + $0x1e80] sm:$0xff]
                %1127 = vst [vmem:[%s149 + $0xf40] sm:$0xff] %v1126
                %v1128 = vld [vmem:[%s148 + $0x1e88] sm:$0xff]
                %1129 = vst [vmem:[%s149 + $0xf48] sm:$0xff] %v1128
                %v1130 = vld [vmem:[%s148 + $0x1e90] sm:$0xff]
                %1131 = vst [vmem:[%s149 + $0xf50] sm:$0xff] %v1130
                %v1132 = vld [vmem:[%s148 + $0x1e98] sm:$0xff]
                %1133 = vst [vmem:[%s149 + $0xf58] sm:$0xff] %v1132
                %v1134 = vld [vmem:[%s148 + $0x1ec0] sm:$0xff]
                %1135 = vst [vmem:[%s149 + $0xf60] sm:$0xff] %v1134
                %v1136 = vld [vmem:[%s148 + $0x1ec8] sm:$0xff]
                %1137 = vst [vmem:[%s149 + $0xf68] sm:$0xff] %v1136
                %v1138 = vld [vmem:[%s148 + $0x1ed0] sm:$0xff]
                %1139 = vst [vmem:[%s149 + $0xf70] sm:$0xff] %v1138
                %v1140 = vld [vmem:[%s148 + $0x1ed8] sm:$0xff]
                %1141 = vst [vmem:[%s149 + $0xf78] sm:$0xff] %v1140
                %v1142 = vld [vmem:[%s148 + $0x1f00] sm:$0xff]
                %1143 = vst [vmem:[%s149 + $0xf80] sm:$0xff] %v1142
                %v1144 = vld [vmem:[%s148 + $0x1f08] sm:$0xff]
                %1145 = vst [vmem:[%s149 + $0xf88] sm:$0xff] %v1144
                %v1146 = vld [vmem:[%s148 + $0x1f10] sm:$0xff]
                %1147 = vst [vmem:[%s149 + $0xf90] sm:$0xff] %v1146
                %v1148 = vld [vmem:[%s148 + $0x1f18] sm:$0xff]
                %1149 = vst [vmem:[%s149 + $0xf98] sm:$0xff] %v1148
                %v1150 = vld [vmem:[%s148 + $0x1f40] sm:$0xff]
                %1151 = vst [vmem:[%s149 + $0xfa0] sm:$0xff] %v1150
                %v1152 = vld [vmem:[%s148 + $0x1f48] sm:$0xff]
                %1153 = vst [vmem:[%s149 + $0xfa8] sm:$0xff] %v1152
                %v1154 = vld [vmem:[%s148 + $0x1f50] sm:$0xff]
                %1155 = vst [vmem:[%s149 + $0xfb0] sm:$0xff] %v1154
                %v1156 = vld [vmem:[%s148 + $0x1f58] sm:$0xff]
                %1157 = vst [vmem:[%s149 + $0xfb8] sm:$0xff] %v1156
                %v1158 = vld [vmem:[%s148 + $0x1f80] sm:$0xff]
                %1159 = vst [vmem:[%s149 + $0xfc0] sm:$0xff] %v1158
                %v1160 = vld [vmem:[%s148 + $0x1f88] sm:$0xff]
                %1161 = vst [vmem:[%s149 + $0xfc8] sm:$0xff] %v1160
                %v1162 = vld [vmem:[%s148 + $0x1f90] sm:$0xff]
                %1163 = vst [vmem:[%s149 + $0xfd0] sm:$0xff] %v1162
                %v1164 = vld [vmem:[%s148 + $0x1f98] sm:$0xff]
                %1165 = vst [vmem:[%s149 + $0xfd8] sm:$0xff] %v1164
                %v1166 = vld [vmem:[%s148 + $0x1fc0] sm:$0xff]
                %1167 = vst [vmem:[%s149 + $0xfe0] sm:$0xff] %v1166
                %v1168 = vld [vmem:[%s148 + $0x1fc8] sm:$0xff]
                %1169 = vst [vmem:[%s149 + $0xfe8] sm:$0xff] %v1168
                %v1170 = vld [vmem:[%s148 + $0x1fd0] sm:$0xff]
                %1171 = vst [vmem:[%s149 + $0xff0] sm:$0xff] %v1170
                %v1172 = vld [vmem:[%s148 + $0x1fd8] sm:$0xff]
                %1173 = vst [vmem:[%s149 + $0xff8] sm:$0xff] %v1172
              $region41: #{netg_forward.3} parent=35 // loop_footer
                %s147 = sadd.s32 1, %s143
              $region42: #{netg_forward.3} parent=35 // loop_footer_branch
                %142 = sbr.rel target = $region38
              $region43: #{netg_forward.3} parent=35 // loop_exit
                _
            $region36: #{netg_forward.3} parent=31 // pred_fallthru
              _
            // Predicated region
            $region44: #{netg_forward.3} parent=31 // pred_check
              _
            $region45: #{netg_forward.3} parent=31 // pred_check_branch
              %1175 = sbr.rel target = $region47
            $region46: #{netg_forward.3} parent=31 // pred_region
              _
            $region47: #{netg_forward.3} parent=31 // pred_fallthru
              _
          $region32: #{netg_forward.3} parent=27 // pred_fallthru
            _
          %1176 = vnop
        $region28: #{netg_forward.3} parent=23 // pred_fallthru
          _
      $region24: #{netg_forward.3} parent=5 // pred_fallthru
        _
      %p1177 = scmp.le.s32.totalorder 1, %s9
      %p1178 = scmp.lt.s32.totalorder %s9, 3
      %p1179 = pnand %p1177, %p1178
      %p1180 = pneg %p1179
      // Predicated region
      $region48: #{netg_forward.3} parent=5 // pred_check
        _
      $region49: #{netg_forward.3} parent=5 // pred_check_branch
        %1182 = sbr.rel (%p1179) target = $region51
      $region50: #{netg_forward.3} parent=5 // pred_region
        %s1183 = ssub.s32 %s9, 1
        %s1184 = sand.u32 %s64, 1
        %s1185 = sand.u32 %s64, 1
        %s1186 = smul.addr %s1185, 4096
        %s1187 = scalar_lea.vmem [#allocation2], %s1186
        // Predicated region
        $region52: #{netg_forward.3} parent=50 // pred_check
          %p1188 = pneg %p77
        $region53: #{netg_forward.3} parent=50 // pred_check_branch
          %1190 = sbr.rel (%p1188) target = $region55
        $region54: #{netg_forward.3} parent=50 // pred_region
          _
        $region55: #{netg_forward.3} parent=50 // pred_fallthru
          _
        %p1191 = pneg %p30
        %p1192 = pneg %p27
        %p1193 = pneg %p51
        %p1194 = pneg %p48
        %s1195 = sand.u32 %s64, 1
        %s1196 = sand.u32 %s64, 1
        %s1197 = smul.addr %s1196, 4096
        %s1198 = scalar_lea.vmem [#allocation2], %s1197
        %p1199 = pneg %p77
        %p1200 = pneg %p74
        %p1201 = pneg %p103
        %p1202 = pneg %p100
        %s1203 = smul.u32 8, %s14
        %p1204 = scmp.lt.s32.totalorder %s1203, 15
        %s1205 = scalar_select %p1204, %s1203, 15
        %s1206 = scalar_lea.vmem %s3, %s1205
        %s1207 = smul.u32 8, %s14
        %s1208 = smul.u32 8, %s14
        %p1209 = scmp.lt.s32.totalorder %s1208, 15
        %s1210 = scalar_select %p1209, %s1208, 15
        %s1211 = scalar_lea.vmem %s3, %s1210
        %s1212 = smul.u32 8, %s14
        %v1214 = vld [vmem:[%s0] sm:$0x3]
        %v1215 = vmul.f32 %v1214, %v1214
        %vm1216 = vcmask 254976
        %v1217 = vsel %vm1216, %v1215, 0.0
        %1218 = vadd.xlane.f32.xlu0 %v1217
        %v1219 = vpop.xlane.xlu0 %1218
        %v1220 = vrsqrt.pop %v1219
        %v1221 = vmul.f32 %v1214, %v1220
        %v1222 = vpack.c.bf16 %v1221, %v1221
        %v1223 = vld [vmem:[%s1] sm:$0xff]
        %v1224 = vld [vmem:[%s1 + $0x8] sm:$0xff]
        %v1225 = vld [vmem:[%s1 + $0x10] sm:$0xff]
        %v1226 = vld [vmem:[%s1 + $0x18] sm:$0xff]
        %v1227 = vld [vmem:[%s1 + $0x20] sm:$0xff]
        %v1228 = vld [vmem:[%s1 + $0x28] sm:$0xff]
        %v1229 = vld [vmem:[%s1 + $0x30] sm:$0xff]
        %v1230 = vld [vmem:[%s1 + $0x38] sm:$0xff]
        %v1231 = vld [vmem:[%s1 + $0x40] sm:$0xff]
        %v1232 = vld [vmem:[%s1 + $0x48] sm:$0xff]
        %v1233 = vld [vmem:[%s1 + $0x50] sm:$0xff]
        %v1234 = vld [vmem:[%s1 + $0x58] sm:$0xff]
        %v1235 = vld [vmem:[%s1 + $0x60] sm:$0xff]
        %v1236 = vld [vmem:[%s1 + $0x68] sm:$0xff]
        %v1237 = vld [vmem:[%s1 + $0x70] sm:$0xff]
        %v1238 = vld [vmem:[%s1 + $0x78] sm:$0xff]
        %v1255 = vunpack.c.l.b16 %v1223
        %v1256 = vunpack.c.h.b16 %v1223
        %v1257 = vunpack.c.l.b16 %v1224
        %v1258 = vunpack.c.h.b16 %v1224
        %v1259 = vunpack.c.l.b16 %v1225
        %v1260 = vunpack.c.h.b16 %v1225
        %v1261 = vunpack.c.l.b16 %v1226
        %v1262 = vunpack.c.h.b16 %v1226
        %v1263 = vunpack.c.l.b16 %v1227
        %v1264 = vunpack.c.h.b16 %v1227
        %v1265 = vunpack.c.l.b16 %v1228
        %v1266 = vunpack.c.h.b16 %v1228
        %v1267 = vunpack.c.l.b16 %v1229
        %v1268 = vunpack.c.h.b16 %v1229
        %v1269 = vunpack.c.l.b16 %v1230
        %v1270 = vunpack.c.h.b16 %v1230
        %v1271 = vunpack.c.l.b16 %v1231
        %v1272 = vunpack.c.h.b16 %v1231
        %v1273 = vunpack.c.l.b16 %v1232
        %v1274 = vunpack.c.h.b16 %v1232
        %v1275 = vunpack.c.l.b16 %v1233
        %v1276 = vunpack.c.h.b16 %v1233
        %v1277 = vunpack.c.l.b16 %v1234
        %v1278 = vunpack.c.h.b16 %v1234
        %v1279 = vunpack.c.l.b16 %v1235
        %v1280 = vunpack.c.h.b16 %v1235
        %v1281 = vunpack.c.l.b16 %v1236
        %v1282 = vunpack.c.h.b16 %v1236
        %v1283 = vunpack.c.l.b16 %v1237
        %v1284 = vunpack.c.h.b16 %v1237
        %v1285 = vunpack.c.l.b16 %v1238
        %v1286 = vunpack.c.h.b16 %v1238
        %v1287 = vpack.c.b16 %v1263, %v1255
        %v1288 = vpack.c.b16 %v1264, %v1256
        %v1289 = vpack.c.b16 %v1265, %v1257
        %v1290 = vpack.c.b16 %v1266, %v1258
        %v1291 = vpack.c.b16 %v1267, %v1259
        %v1292 = vpack.c.b16 %v1268, %v1260
        %v1293 = vpack.c.b16 %v1269, %v1261
        %v1294 = vpack.c.b16 %v1270, %v1262
        %v1295 = vpack.c.b16 %v1279, %v1271
        %v1296 = vpack.c.b16 %v1280, %v1272
        %v1297 = vpack.c.b16 %v1281, %v1273
        %v1298 = vpack.c.b16 %v1282, %v1274
        %v1299 = vpack.c.b16 %v1283, %v1275
        %v1300 = vpack.c.b16 %v1284, %v1276
        %v1301 = vpack.c.b16 %v1285, %v1277
        %v1302 = vpack.c.b16 %v1286, %v1278
        %vm1319 = vcmask 261120
        %v1321 = vsel %vm1319, %v1222, 0
        %1323 = vmatprep.subr.bf16.mxu0 %v1288
        %1324 = vmatpush1.bf16.msra.mxu0 %v1287
        %1325 = vmatprep.subr.bf16.mxu0 %v1296
        %1326 = vmatpush1.bf16.msra.mxu0 %v1295
        %1327 = vmatprep.subr.bf16.mxu0 0
        %1328 = vmatpush1.bf16.msra.mxu0 0
        %1329 = vmatprep.subr.bf16.mxu0 0
        %1330 = vmatpush1.bf16.msra.mxu0 0
        %1331 = vmatprep.subr.bf16.mxu0 0
        %1332 = vmatpush1.bf16.msra.mxu0 0
        %1333 = vmatprep.subr.bf16.mxu0 0
        %1334 = vmatpush1.bf16.msra.mxu0 0
        %1335 = vmatprep.subr.bf16.mxu0 0
        %1336 = vmatpush1.bf16.msra.mxu0 0
        %1337 = vmatprep.subr.bf16.mxu0 0
        %1338 = vmatpush1.bf16.msra.mxu0 0
        %1339 = vmatprep.subr.bf16.mxu0 0
        %1340 = vmatpush1.bf16.msra.mxu0 0
        %1341 = vmatprep.subr.bf16.mxu0 0
        %1342 = vmatpush1.bf16.msra.mxu0 0
        %1343 = vmatprep.subr.bf16.mxu0 0
        %1344 = vmatpush1.bf16.msra.mxu0 0
        %1345 = vmatprep.subr.bf16.mxu0 0
        %1346 = vmatpush1.bf16.msra.mxu0 0
        %1347 = vmatprep.subr.bf16.mxu0 0
        %1348 = vmatpush1.bf16.msra.mxu0 0
        %1349 = vmatprep.subr.bf16.mxu0 0
        %1350 = vmatpush1.bf16.msra.mxu0 0
        %1351 = vmatprep.subr.bf16.mxu0 0
        %1352 = vmatpush1.bf16.msra.mxu0 0
        %1353 = vmatprep.subr.bf16.mxu0 0
        %1354 = vmatpush1.bf16.msra.mxu0 0
        %1355 = vmatprep.mubr.bf16.mxu0 0
        %1356 = vmatmul.mubr.bf16.gmra.mrb[0].mxu0 %v1321
        %v1357 = vpop.f32.mrb[0].mxu0
        %v1358 = vadd.f32 0.0, %v1357
        %v1359 = vpop.f32.mrb[0].mxu0
        %v1360 = vadd.f32 0.0, %v1359
        %v1361 = vpop.f32.mrb[0].mxu0
        %v1362 = vpop.f32.mrb[0].mxu0
        %1363 = vdwg.mxu0
        %1364 = vmatprep.subr.bf16.mxu0 %v1290
        %1365 = vmatpush1.bf16.msra.mxu0 %v1289
        %1366 = vmatprep.subr.bf16.mxu0 %v1298
        %1367 = vmatpush1.bf16.msra.mxu0 %v1297
        %1368 = vmatprep.subr.bf16.mxu0 0
        %1369 = vmatpush1.bf16.msra.mxu0 0
        %1370 = vmatprep.subr.bf16.mxu0 0
        %1371 = vmatpush1.bf16.msra.mxu0 0
        %1372 = vmatprep.subr.bf16.mxu0 0
        %1373 = vmatpush1.bf16.msra.mxu0 0
        %1374 = vmatprep.subr.bf16.mxu0 0
        %1375 = vmatpush1.bf16.msra.mxu0 0
        %1376 = vmatprep.subr.bf16.mxu0 0
        %1377 = vmatpush1.bf16.msra.mxu0 0
        %1378 = vmatprep.subr.bf16.mxu0 0
        %1379 = vmatpush1.bf16.msra.mxu0 0
        %1380 = vmatprep.subr.bf16.mxu0 0
        %1381 = vmatpush1.bf16.msra.mxu0 0
        %1382 = vmatprep.subr.bf16.mxu0 0
        %1383 = vmatpush1.bf16.msra.mxu0 0
        %1384 = vmatprep.subr.bf16.mxu0 0
        %1385 = vmatpush1.bf16.msra.mxu0 0
        %1386 = vmatprep.subr.bf16.mxu0 0
        %1387 = vmatpush1.bf16.msra.mxu0 0
        %1388 = vmatprep.subr.bf16.mxu0 0
        %1389 = vmatpush1.bf16.msra.mxu0 0
        %1390 = vmatprep.subr.bf16.mxu0 0
        %1391 = vmatpush1.bf16.msra.mxu0 0
        %1392 = vmatprep.subr.bf16.mxu0 0
        %1393 = vmatpush1.bf16.msra.mxu0 0
        %1394 = vmatprep.subr.bf16.mxu0 0
        %1395 = vmatpush1.bf16.msra.mxu0 0
        %1396 = vmatprep.mubr.bf16.mxu0 0
        %1397 = vmatmul.mubr.bf16.gmra.mrb[0].mxu0 %v1321
        %v1398 = vpop.f32.mrb[0].mxu0
        %v1399 = vadd.f32 0.0, %v1398
        %v1400 = vpop.f32.mrb[0].mxu0
        %v1401 = vadd.f32 0.0, %v1400
        %v1402 = vpop.f32.mrb[0].mxu0
        %v1403 = vpop.f32.mrb[0].mxu0
        %1404 = vdwg.mxu0
        %1405 = vmatprep.subr.bf16.mxu0 %v1292
        %1406 = vmatpush1.bf16.msra.mxu0 %v1291
        %1407 = vmatprep.subr.bf16.mxu0 %v1300
        %1408 = vmatpush1.bf16.msra.mxu0 %v1299
        %1409 = vmatprep.subr.bf16.mxu0 0
        %1410 = vmatpush1.bf16.msra.mxu0 0
        %1411 = vmatprep.subr.bf16.mxu0 0
        %1412 = vmatpush1.bf16.msra.mxu0 0
        %1413 = vmatprep.subr.bf16.mxu0 0
        %1414 = vmatpush1.bf16.msra.mxu0 0
        %1415 = vmatprep.subr.bf16.mxu0 0
        %1416 = vmatpush1.bf16.msra.mxu0 0
        %1417 = vmatprep.subr.bf16.mxu0 0
        %1418 = vmatpush1.bf16.msra.mxu0 0
        %1419 = vmatprep.subr.bf16.mxu0 0
        %1420 = vmatpush1.bf16.msra.mxu0 0
        %1421 = vmatprep.subr.bf16.mxu0 0
        %1422 = vmatpush1.bf16.msra.mxu0 0
        %1423 = vmatprep.subr.bf16.mxu0 0
        %1424 = vmatpush1.bf16.msra.mxu0 0
        %1425 = vmatprep.subr.bf16.mxu0 0
        %1426 = vmatpush1.bf16.msra.mxu0 0
        %1427 = vmatprep.subr.bf16.mxu0 0
        %1428 = vmatpush1.bf16.msra.mxu0 0
        %1429 = vmatprep.subr.bf16.mxu0 0
        %1430 = vmatpush1.bf16.msra.mxu0 0
        %1431 = vmatprep.subr.bf16.mxu0 0
        %1432 = vmatpush1.bf16.msra.mxu0 0
        %1433 = vmatprep.subr.bf16.mxu0 0
        %1434 = vmatpush1.bf16.msra.mxu0 0
        %1435 = vmatprep.subr.bf16.mxu0 0
        %1436 = vmatpush1.bf16.msra.mxu0 0
        %1437 = vmatprep.mubr.bf16.mxu0 0
        %1438 = vmatmul.mubr.bf16.gmra.mrb[0].mxu0 %v1321
        %v1439 = vpop.f32.mrb[0].mxu0
        %v1440 = vadd.f32 0.0, %v1439
        %v1441 = vpop.f32.mrb[0].mxu0
        %v1442 = vadd.f32 0.0, %v1441
        %v1443 = vpop.f32.mrb[0].mxu0
        %v1444 = vpop.f32.mrb[0].mxu0
        %1445 = vdwg.mxu0
        %1446 = vmatprep.subr.bf16.mxu0 %v1294
        %1447 = vmatpush1.bf16.msra.mxu0 %v1293
        %1448 = vmatprep.subr.bf16.mxu0 %v1302
        %1449 = vmatpush1.bf16.msra.mxu0 %v1301
        %1450 = vmatprep.subr.bf16.mxu0 0
        %1451 = vmatpush1.bf16.msra.mxu0 0
        %1452 = vmatprep.subr.bf16.mxu0 0
        %1453 = vmatpush1.bf16.msra.mxu0 0
        %1454 = vmatprep.subr.bf16.mxu0 0
        %1455 = vmatpush1.bf16.msra.mxu0 0
        %1456 = vmatprep.subr.bf16.mxu0 0
        %1457 = vmatpush1.bf16.msra.mxu0 0
        %1458 = vmatprep.subr.bf16.mxu0 0
        %1459 = vmatpush1.bf16.msra.mxu0 0
        %1460 = vmatprep.subr.bf16.mxu0 0
        %1461 = vmatpush1.bf16.msra.mxu0 0
        %1462 = vmatprep.subr.bf16.mxu0 0
        %1463 = vmatpush1.bf16.msra.mxu0 0
        %1464 = vmatprep.subr.bf16.mxu0 0
        %1465 = vmatpush1.bf16.msra.mxu0 0
        %1466 = vmatprep.subr.bf16.mxu0 0
        %1467 = vmatpush1.bf16.msra.mxu0 0
        %1468 = vmatprep.subr.bf16.mxu0 0
        %1469 = vmatpush1.bf16.msra.mxu0 0
        %1470 = vmatprep.subr.bf16.mxu0 0
        %1471 = vmatpush1.bf16.msra.mxu0 0
        %1472 = vmatprep.subr.bf16.mxu0 0
        %1473 = vmatpush1.bf16.msra.mxu0 0
        %1474 = vmatprep.subr.bf16.mxu0 0
        %1475 = vmatpush1.bf16.msra.mxu0 0
        %1476 = vmatprep.subr.bf16.mxu0 0
        %1477 = vmatpush1.bf16.msra.mxu0 0
        %1478 = vmatprep.mubr.bf16.mxu0 0
        %1479 = vmatmul.mubr.bf16.gmra.mrb[0].mxu0 %v1321
        %v1480 = vpop.f32.mrb[0].mxu0
        %v1481 = vadd.f32 0.0, %v1480
        %v1482 = vpop.f32.mrb[0].mxu0
        %v1483 = vadd.f32 0.0, %v1482
        %v1484 = vpop.f32.mrb[0].mxu0
        %v1485 = vpop.f32.mrb[0].mxu0
        %1486 = vdwg.mxu0
        %vm1487 = vcmp.ge.f32.partialorder %v1358, 0.0
        %vm1488 = vcmp.ge.f32.partialorder %v1360, 0.0
        %vm1489 = vcmp.ge.f32.partialorder %v1399, 0.0
        %vm1490 = vcmp.ge.f32.partialorder %v1401, 0.0
        %vm1491 = vcmp.ge.f32.partialorder %v1440, 0.0
        %vm1492 = vcmp.ge.f32.partialorder %v1442, 0.0
        %vm1493 = vcmp.ge.f32.partialorder %v1481, 0.0
        %vm1494 = vcmp.ge.f32.partialorder %v1483, 0.0
        %v1495 = vmul.f32 %v1358, 0.2
        %v1496 = vmul.f32 %v1360, 0.2
        %v1497 = vmul.f32 %v1399, 0.2
        %v1498 = vmul.f32 %v1401, 0.2
        %v1499 = vmul.f32 %v1440, 0.2
        %v1500 = vmul.f32 %v1442, 0.2
        %v1501 = vmul.f32 %v1481, 0.2
        %v1502 = vmul.f32 %v1483, 0.2
        %v1503 = vsel %vm1487, %v1358, %v1495
        %v1504 = vsel %vm1488, %v1360, %v1496
        %v1505 = vsel %vm1489, %v1399, %v1497
        %v1506 = vsel %vm1490, %v1401, %v1498
        %v1507 = vsel %vm1491, %v1440, %v1499
        %v1508 = vsel %vm1492, %v1442, %v1500
        %v1509 = vsel %vm1493, %v1481, %v1501
        %v1510 = vsel %vm1494, %v1483, %v1502
        %v1511 = vpack.c.bf16 %v1503, %v1503
        %v1512 = vpack.c.bf16 %v1504, %v1504
        %v1513 = vpack.c.bf16 %v1505, %v1505
        %v1514 = vpack.c.bf16 %v1506, %v1506
        %v1515 = vpack.c.bf16 %v1507, %v1507
        %v1516 = vpack.c.bf16 %v1508, %v1508
        %v1517 = vpack.c.bf16 %v1509, %v1509
        %v1518 = vpack.c.bf16 %v1510, %v1510
        %v1519 = vld [vmem:[%s1187] sm:$0xff]
        %v1520 = vld [vmem:[%s1187 + $0x8] sm:$0xff]
        %v1521 = vld [vmem:[%s1187 + $0x10] sm:$0xff]
        %v1522 = vld [vmem:[%s1187 + $0x18] sm:$0xff]
        %v1523 = vld [vmem:[%s1187 + $0x20] sm:$0xff]
        %v1524 = vld [vmem:[%s1187 + $0x28] sm:$0xff]
        %v1525 = vld [vmem:[%s1187 + $0x30] sm:$0xff]
        %v1526 = vld [vmem:[%s1187 + $0x38] sm:$0xff]
        %v1527 = vld [vmem:[%s1187 + $0x40] sm:$0xff]
        %v1528 = vld [vmem:[%s1187 + $0x48] sm:$0xff]
        %v1529 = vld [vmem:[%s1187 + $0x50] sm:$0xff]
        %v1530 = vld [vmem:[%s1187 + $0x58] sm:$0xff]
        %v1531 = vld [vmem:[%s1187 + $0x60] sm:$0xff]
        %v1532 = vld [vmem:[%s1187 + $0x68] sm:$0xff]
        %v1533 = vld [vmem:[%s1187 + $0x70] sm:$0xff]
        %v1534 = vld [vmem:[%s1187 + $0x78] sm:$0xff]
        %v1535 = vld [vmem:[%s1187 + $0x80] sm:$0xff]
        %v1536 = vld [vmem:[%s1187 + $0x88] sm:$0xff]
        %v1537 = vld [vmem:[%s1187 + $0x90] sm:$0xff]
        %v1538 = vld [vmem:[%s1187 + $0x98] sm:$0xff]
        %v1539 = vld [vmem:[%s1187 + $0xa0] sm:$0xff]
        %v1540 = vld [vmem:[%s1187 + $0xa8] sm:$0xff]
        %v1541 = vld [vmem:[%s1187 + $0xb0] sm:$0xff]
        %v1542 = vld [vmem:[%s1187 + $0xb8] sm:$0xff]
        %v1543 = vld [vmem:[%s1187 + $0xc0] sm:$0xff]
        %v1544 = vld [vmem:[%s1187 + $0xc8] sm:$0xff]
        %v1545 = vld [vmem:[%s1187 + $0xd0] sm:$0xff]
        %v1546 = vld [vmem:[%s1187 + $0xd8] sm:$0xff]
        %v1547 = vld [vmem:[%s1187 + $0xe0] sm:$0xff]
        %v1548 = vld [vmem:[%s1187 + $0xe8] sm:$0xff]
        %v1549 = vld [vmem:[%s1187 + $0xf0] sm:$0xff]
        %v1550 = vld [vmem:[%s1187 + $0xf8] sm:$0xff]
        %v1551 = vld [vmem:[%s1187 + $0x100] sm:$0xff]
        %v1552 = vld [vmem:[%s1187 + $0x108] sm:$0xff]
        %v1553 = vld [vmem:[%s1187 + $0x110] sm:$0xff]
        %v1554 = vld [vmem:[%s1187 + $0x118] sm:$0xff]
        %v1555 = vld [vmem:[%s1187 + $0x120] sm:$0xff]
        %v1556 = vld [vmem:[%s1187 + $0x128] sm:$0xff]
        %v1557 = vld [vmem:[%s1187 + $0x130] sm:$0xff]
        %v1558 = vld [vmem:[%s1187 + $0x138] sm:$0xff]
        %v1559 = vld [vmem:[%s1187 + $0x140] sm:$0xff]
        %v1560 = vld [vmem:[%s1187 + $0x148] sm:$0xff]
        %v1561 = vld [vmem:[%s1187 + $0x150] sm:$0xff]
        %v1562 = vld [vmem:[%s1187 + $0x158] sm:$0xff]
        %v1563 = vld [vmem:[%s1187 + $0x160] sm:$0xff]
        %v1564 = vld [vmem:[%s1187 + $0x168] sm:$0xff]
        %v1565 = vld [vmem:[%s1187 + $0x170] sm:$0xff]
        %v1566 = vld [vmem:[%s1187 + $0x178] sm:$0xff]
        %v1567 = vld [vmem:[%s1187 + $0x180] sm:$0xff]
        %v1568 = vld [vmem:[%s1187 + $0x188] sm:$0xff]
        %v1569 = vld [vmem:[%s1187 + $0x190] sm:$0xff]
        %v1570 = vld [vmem:[%s1187 + $0x198] sm:$0xff]
        %v1571 = vld [vmem:[%s1187 + $0x1a0] sm:$0xff]
        %v1572 = vld [vmem:[%s1187 + $0x1a8] sm:$0xff]
        %v1573 = vld [vmem:[%s1187 + $0x1b0] sm:$0xff]
        %v1574 = vld [vmem:[%s1187 + $0x1b8] sm:$0xff]
        %v1575 = vld [vmem:[%s1187 + $0x1c0] sm:$0xff]
        %v1576 = vld [vmem:[%s1187 + $0x1c8] sm:$0xff]
        %v1577 = vld [vmem:[%s1187 + $0x1d0] sm:$0xff]
        %v1578 = vld [vmem:[%s1187 + $0x1d8] sm:$0xff]
        %v1579 = vld [vmem:[%s1187 + $0x1e0] sm:$0xff]
        %v1580 = vld [vmem:[%s1187 + $0x1e8] sm:$0xff]
        %v1581 = vld [vmem:[%s1187 + $0x1f0] sm:$0xff]
        %v1582 = vld [vmem:[%s1187 + $0x1f8] sm:$0xff]
        %v1583 = vld [vmem:[%s1187 + $0x200] sm:$0xff]
        %v1584 = vld [vmem:[%s1187 + $0x208] sm:$0xff]
        %v1585 = vld [vmem:[%s1187 + $0x210] sm:$0xff]
        %v1586 = vld [vmem:[%s1187 + $0x218] sm:$0xff]
        %v1587 = vld [vmem:[%s1187 + $0x220] sm:$0xff]
        %v1588 = vld [vmem:[%s1187 + $0x228] sm:$0xff]
        %v1589 = vld [vmem:[%s1187 + $0x230] sm:$0xff]
        %v1590 = vld [vmem:[%s1187 + $0x238] sm:$0xff]
        %v1591 = vld [vmem:[%s1187 + $0x240] sm:$0xff]
        %v1592 = vld [vmem:[%s1187 + $0x248] sm:$0xff]
        %v1593 = vld [vmem:[%s1187 + $0x250] sm:$0xff]
        %v1594 = vld [vmem:[%s1187 + $0x258] sm:$0xff]
        %v1595 = vld [vmem:[%s1187 + $0x260] sm:$0xff]
        %v1596 = vld [vmem:[%s1187 + $0x268] sm:$0xff]
        %v1597 = vld [vmem:[%s1187 + $0x270] sm:$0xff]
        %v1598 = vld [vmem:[%s1187 + $0x278] sm:$0xff]
        %v1599 = vld [vmem:[%s1187 + $0x280] sm:$0xff]
        %v1600 = vld [vmem:[%s1187 + $0x288] sm:$0xff]
        %v1601 = vld [vmem:[%s1187 + $0x290] sm:$0xff]
        %v1602 = vld [vmem:[%s1187 + $0x298] sm:$0xff]
        %v1603 = vld [vmem:[%s1187 + $0x2a0] sm:$0xff]
        %v1604 = vld [vmem:[%s1187 + $0x2a8] sm:$0xff]
        %v1605 = vld [vmem:[%s1187 + $0x2b0] sm:$0xff]
        %v1606 = vld [vmem:[%s1187 + $0x2b8] sm:$0xff]
        %v1607 = vld [vmem:[%s1187 + $0x2c0] sm:$0xff]
        %v1608 = vld [vmem:[%s1187 + $0x2c8] sm:$0xff]
        %v1609 = vld [vmem:[%s1187 + $0x2d0] sm:$0xff]
        %v1610 = vld [vmem:[%s1187 + $0x2d8] sm:$0xff]
        %v1611 = vld [vmem:[%s1187 + $0x2e0] sm:$0xff]
        %v1612 = vld [vmem:[%s1187 + $0x2e8] sm:$0xff]
        %v1613 = vld [vmem:[%s1187 + $0x2f0] sm:$0xff]
        %v1614 = vld [vmem:[%s1187 + $0x2f8] sm:$0xff]
        %v1615 = vld [vmem:[%s1187 + $0x300] sm:$0xff]
        %v1616 = vld [vmem:[%s1187 + $0x308] sm:$0xff]
        %v1617 = vld [vmem:[%s1187 + $0x310] sm:$0xff]
        %v1618 = vld [vmem:[%s1187 + $0x318] sm:$0xff]
        %v1619 = vld [vmem:[%s1187 + $0x320] sm:$0xff]
        %v1620 = vld [vmem:[%s1187 + $0x328] sm:$0xff]
        %v1621 = vld [vmem:[%s1187 + $0x330] sm:$0xff]
        %v1622 = vld [vmem:[%s1187 + $0x338] sm:$0xff]
        %v1623 = vld [vmem:[%s1187 + $0x340] sm:$0xff]
        %v1624 = vld [vmem:[%s1187 + $0x348] sm:$0xff]
        %v1625 = vld [vmem:[%s1187 + $0x350] sm:$0xff]
        %v1626 = vld [vmem:[%s1187 + $0x358] sm:$0xff]
        %v1627 = vld [vmem:[%s1187 + $0x360] sm:$0xff]
        %v1628 = vld [vmem:[%s1187 + $0x368] sm:$0xff]
        %v1629 = vld [vmem:[%s1187 + $0x370] sm:$0xff]
        %v1630 = vld [vmem:[%s1187 + $0x378] sm:$0xff]
        %v1631 = vld [vmem:[%s1187 + $0x380] sm:$0xff]
        %v1632 = vld [vmem:[%s1187 + $0x388] sm:$0xff]
        %v1633 = vld [vmem:[%s1187 + $0x390] sm:$0xff]
        %v1634 = vld [vmem:[%s1187 + $0x398] sm:$0xff]
        %v1635 = vld [vmem:[%s1187 + $0x3a0] sm:$0xff]
        %v1636 = vld [vmem:[%s1187 + $0x3a8] sm:$0xff]
        %v1637 = vld [vmem:[%s1187 + $0x3b0] sm:$0xff]
        %v1638 = vld [vmem:[%s1187 + $0x3b8] sm:$0xff]
        %v1639 = vld [vmem:[%s1187 + $0x3c0] sm:$0xff]
        %v1640 = vld [vmem:[%s1187 + $0x3c8] sm:$0xff]
        %v1641 = vld [vmem:[%s1187 + $0x3d0] sm:$0xff]
        %v1642 = vld [vmem:[%s1187 + $0x3d8] sm:$0xff]
        %v1643 = vld [vmem:[%s1187 + $0x3e0] sm:$0xff]
        %v1644 = vld [vmem:[%s1187 + $0x3e8] sm:$0xff]
        %v1645 = vld [vmem:[%s1187 + $0x3f0] sm:$0xff]
        %v1646 = vld [vmem:[%s1187 + $0x3f8] sm:$0xff]
        %v1647 = vld [vmem:[%s1187 + $0x400] sm:$0xff]
        %v1648 = vld [vmem:[%s1187 + $0x408] sm:$0xff]
        %v1649 = vld [vmem:[%s1187 + $0x410] sm:$0xff]
        %v1650 = vld [vmem:[%s1187 + $0x418] sm:$0xff]
        %v1651 = vld [vmem:[%s1187 + $0x420] sm:$0xff]
        %v1652 = vld [vmem:[%s1187 + $0x428] sm:$0xff]
        %v1653 = vld [vmem:[%s1187 + $0x430] sm:$0xff]
        %v1654 = vld [vmem:[%s1187 + $0x438] sm:$0xff]
        %v1655 = vld [vmem:[%s1187 + $0x440] sm:$0xff]
        %v1656 = vld [vmem:[%s1187 + $0x448] sm:$0xff]
        %v1657 = vld [vmem:[%s1187 + $0x450] sm:$0xff]
        %v1658 = vld [vmem:[%s1187 + $0x458] sm:$0xff]
        %v1659 = vld [vmem:[%s1187 + $0x460] sm:$0xff]
        %v1660 = vld [vmem:[%s1187 + $0x468] sm:$0xff]
        %v1661 = vld [vmem:[%s1187 + $0x470] sm:$0xff]
        %v1662 = vld [vmem:[%s1187 + $0x478] sm:$0xff]
        %v1663 = vld [vmem:[%s1187 + $0x480] sm:$0xff]
        %v1664 = vld [vmem:[%s1187 + $0x488] sm:$0xff]
        %v1665 = vld [vmem:[%s1187 + $0x490] sm:$0xff]
        %v1666 = vld [vmem:[%s1187 + $0x498] sm:$0xff]
        %v1667 = vld [vmem:[%s1187 + $0x4a0] sm:$0xff]
        %v1668 = vld [vmem:[%s1187 + $0x4a8] sm:$0xff]
        %v1669 = vld [vmem:[%s1187 + $0x4b0] sm:$0xff]
        %v1670 = vld [vmem:[%s1187 + $0x4b8] sm:$0xff]
        %v1671 = vld [vmem:[%s1187 + $0x4c0] sm:$0xff]
        %v1672 = vld [vmem:[%s1187 + $0x4c8] sm:$0xff]
        %v1673 = vld [vmem:[%s1187 + $0x4d0] sm:$0xff]
        %v1674 = vld [vmem:[%s1187 + $0x4d8] sm:$0xff]
        %v1675 = vld [vmem:[%s1187 + $0x4e0] sm:$0xff]
        %v1676 = vld [vmem:[%s1187 + $0x4e8] sm:$0xff]
        %v1677 = vld [vmem:[%s1187 + $0x4f0] sm:$0xff]
        %v1678 = vld [vmem:[%s1187 + $0x4f8] sm:$0xff]
        %v1679 = vld [vmem:[%s1187 + $0x500] sm:$0xff]
        %v1680 = vld [vmem:[%s1187 + $0x508] sm:$0xff]
        %v1681 = vld [vmem:[%s1187 + $0x510] sm:$0xff]
        %v1682 = vld [vmem:[%s1187 + $0x518] sm:$0xff]
        %v1683 = vld [vmem:[%s1187 + $0x520] sm:$0xff]
        %v1684 = vld [vmem:[%s1187 + $0x528] sm:$0xff]
        %v1685 = vld [vmem:[%s1187 + $0x530] sm:$0xff]
        %v1686 = vld [vmem:[%s1187 + $0x538] sm:$0xff]
        %v1687 = vld [vmem:[%s1187 + $0x540] sm:$0xff]
        %v1688 = vld [vmem:[%s1187 + $0x548] sm:$0xff]
        %v1689 = vld [vmem:[%s1187 + $0x550] sm:$0xff]
        %v1690 = vld [vmem:[%s1187 + $0x558] sm:$0xff]
        %v1691 = vld [vmem:[%s1187 + $0x560] sm:$0xff]
        %v1692 = vld [vmem:[%s1187 + $0x568] sm:$0xff]
        %v1693 = vld [vmem:[%s1187 + $0x570] sm:$0xff]
        %v1694 = vld [vmem:[%s1187 + $0x578] sm:$0xff]
        %v1695 = vld [vmem:[%s1187 + $0x580] sm:$0xff]
        %v1696 = vld [vmem:[%s1187 + $0x588] sm:$0xff]
        %v1697 = vld [vmem:[%s1187 + $0x590] sm:$0xff]
        %v1698 = vld [vmem:[%s1187 + $0x598] sm:$0xff]
        %v1699 = vld [vmem:[%s1187 + $0x5a0] sm:$0xff]
        %v1700 = vld [vmem:[%s1187 + $0x5a8] sm:$0xff]
        %v1701 = vld [vmem:[%s1187 + $0x5b0] sm:$0xff]
        %v1702 = vld [vmem:[%s1187 + $0x5b8] sm:$0xff]
        %v1703 = vld [vmem:[%s1187 + $0x5c0] sm:$0xff]
        %v1704 = vld [vmem:[%s1187 + $0x5c8] sm:$0xff]
        %v1705 = vld [vmem:[%s1187 + $0x5d0] sm:$0xff]
        %v1706 = vld [vmem:[%s1187 + $0x5d8] sm:$0xff]
        %v1707 = vld [vmem:[%s1187 + $0x5e0] sm:$0xff]
        %v1708 = vld [vmem:[%s1187 + $0x5e8] sm:$0xff]
        %v1709 = vld [vmem:[%s1187 + $0x5f0] sm:$0xff]
        %v1710 = vld [vmem:[%s1187 + $0x5f8] sm:$0xff]
        %v1711 = vld [vmem:[%s1187 + $0x600] sm:$0xff]
        %v1712 = vld [vmem:[%s1187 + $0x608] sm:$0xff]
        %v1713 = vld [vmem:[%s1187 + $0x610] sm:$0xff]
        %v1714 = vld [vmem:[%s1187 + $0x618] sm:$0xff]
        %v1715 = vld [vmem:[%s1187 + $0x620] sm:$0xff]
        %v1716 = vld [vmem:[%s1187 + $0x628] sm:$0xff]
        %v1717 = vld [vmem:[%s1187 + $0x630] sm:$0xff]
        %v1718 = vld [vmem:[%s1187 + $0x638] sm:$0xff]
        %v1719 = vld [vmem:[%s1187 + $0x640] sm:$0xff]
        %v1720 = vld [vmem:[%s1187 + $0x648] sm:$0xff]
        %v1721 = vld [vmem:[%s1187 + $0x650] sm:$0xff]
        %v1722 = vld [vmem:[%s1187 + $0x658] sm:$0xff]
        %v1723 = vld [vmem:[%s1187 + $0x660] sm:$0xff]
        %v1724 = vld [vmem:[%s1187 + $0x668] sm:$0xff]
        %v1725 = vld [vmem:[%s1187 + $0x670] sm:$0xff]
        %v1726 = vld [vmem:[%s1187 + $0x678] sm:$0xff]
        %v1727 = vld [vmem:[%s1187 + $0x680] sm:$0xff]
        %v1728 = vld [vmem:[%s1187 + $0x688] sm:$0xff]
        %v1729 = vld [vmem:[%s1187 + $0x690] sm:$0xff]
        %v1730 = vld [vmem:[%s1187 + $0x698] sm:$0xff]
        %v1731 = vld [vmem:[%s1187 + $0x6a0] sm:$0xff]
        %v1732 = vld [vmem:[%s1187 + $0x6a8] sm:$0xff]
        %v1733 = vld [vmem:[%s1187 + $0x6b0] sm:$0xff]
        %v1734 = vld [vmem:[%s1187 + $0x6b8] sm:$0xff]
        %v1735 = vld [vmem:[%s1187 + $0x6c0] sm:$0xff]
        %v1736 = vld [vmem:[%s1187 + $0x6c8] sm:$0xff]
        %v1737 = vld [vmem:[%s1187 + $0x6d0] sm:$0xff]
        %v1738 = vld [vmem:[%s1187 + $0x6d8] sm:$0xff]
        %v1739 = vld [vmem:[%s1187 + $0x6e0] sm:$0xff]
        %v1740 = vld [vmem:[%s1187 + $0x6e8] sm:$0xff]
        %v1741 = vld [vmem:[%s1187 + $0x6f0] sm:$0xff]
        %v1742 = vld [vmem:[%s1187 + $0x6f8] sm:$0xff]
        %v1743 = vld [vmem:[%s1187 + $0x700] sm:$0xff]
        %v1744 = vld [vmem:[%s1187 + $0x708] sm:$0xff]
        %v1745 = vld [vmem:[%s1187 + $0x710] sm:$0xff]
        %v1746 = vld [vmem:[%s1187 + $0x718] sm:$0xff]
        %v1747 = vld [vmem:[%s1187 + $0x720] sm:$0xff]
        %v1748 = vld [vmem:[%s1187 + $0x728] sm:$0xff]
        %v1749 = vld [vmem:[%s1187 + $0x730] sm:$0xff]
        %v1750 = vld [vmem:[%s1187 + $0x738] sm:$0xff]
        %v1751 = vld [vmem:[%s1187 + $0x740] sm:$0xff]
        %v1752 = vld [vmem:[%s1187 + $0x748] sm:$0xff]
        %v1753 = vld [vmem:[%s1187 + $0x750] sm:$0xff]
        %v1754 = vld [vmem:[%s1187 + $0x758] sm:$0xff]
        %v1755 = vld [vmem:[%s1187 + $0x760] sm:$0xff]
        %v1756 = vld [vmem:[%s1187 + $0x768] sm:$0xff]
        %v1757 = vld [vmem:[%s1187 + $0x770] sm:$0xff]
        %v1758 = vld [vmem:[%s1187 + $0x778] sm:$0xff]
        %v1759 = vld [vmem:[%s1187 + $0x780] sm:$0xff]
        %v1760 = vld [vmem:[%s1187 + $0x788] sm:$0xff]
        %v1761 = vld [vmem:[%s1187 + $0x790] sm:$0xff]
        %v1762 = vld [vmem:[%s1187 + $0x798] sm:$0xff]
        %v1763 = vld [vmem:[%s1187 + $0x7a0] sm:$0xff]
        %v1764 = vld [vmem:[%s1187 + $0x7a8] sm:$0xff]
        %v1765 = vld [vmem:[%s1187 + $0x7b0] sm:$0xff]
        %v1766 = vld [vmem:[%s1187 + $0x7b8] sm:$0xff]
        %v1767 = vld [vmem:[%s1187 + $0x7c0] sm:$0xff]
        %v1768 = vld [vmem:[%s1187 + $0x7c8] sm:$0xff]
        %v1769 = vld [vmem:[%s1187 + $0x7d0] sm:$0xff]
        %v1770 = vld [vmem:[%s1187 + $0x7d8] sm:$0xff]
        %v1771 = vld [vmem:[%s1187 + $0x7e0] sm:$0xff]
        %v1772 = vld [vmem:[%s1187 + $0x7e8] sm:$0xff]
        %v1773 = vld [vmem:[%s1187 + $0x7f0] sm:$0xff]
        %v1774 = vld [vmem:[%s1187 + $0x7f8] sm:$0xff]
        %v1775 = vld [vmem:[%s1187 + $0x800] sm:$0xff]
        %v1776 = vld [vmem:[%s1187 + $0x808] sm:$0xff]
        %v1777 = vld [vmem:[%s1187 + $0x810] sm:$0xff]
        %v1778 = vld [vmem:[%s1187 + $0x818] sm:$0xff]
        %v1779 = vld [vmem:[%s1187 + $0x820] sm:$0xff]
        %v1780 = vld [vmem:[%s1187 + $0x828] sm:$0xff]
        %v1781 = vld [vmem:[%s1187 + $0x830] sm:$0xff]
        %v1782 = vld [vmem:[%s1187 + $0x838] sm:$0xff]
        %v1783 = vld [vmem:[%s1187 + $0x840] sm:$0xff]
        %v1784 = vld [vmem:[%s1187 + $0x848] sm:$0xff]
        %v1785 = vld [vmem:[%s1187 + $0x850] sm:$0xff]
        %v1786 = vld [vmem:[%s1187 + $0x858] sm:$0xff]
        %v1787 = vld [vmem:[%s1187 + $0x860] sm:$0xff]
        %v1788 = vld [vmem:[%s1187 + $0x868] sm:$0xff]
        %v1789 = vld [vmem:[%s1187 + $0x870] sm:$0xff]
        %v1790 = vld [vmem:[%s1187 + $0x878] sm:$0xff]
        %v1791 = vld [vmem:[%s1187 + $0x880] sm:$0xff]
        %v1792 = vld [vmem:[%s1187 + $0x888] sm:$0xff]
        %v1793 = vld [vmem:[%s1187 + $0x890] sm:$0xff]
        %v1794 = vld [vmem:[%s1187 + $0x898] sm:$0xff]
        %v1795 = vld [vmem:[%s1187 + $0x8a0] sm:$0xff]
        %v1796 = vld [vmem:[%s1187 + $0x8a8] sm:$0xff]
        %v1797 = vld [vmem:[%s1187 + $0x8b0] sm:$0xff]
        %v1798 = vld [vmem:[%s1187 + $0x8b8] sm:$0xff]
        %v1799 = vld [vmem:[%s1187 + $0x8c0] sm:$0xff]
        %v1800 = vld [vmem:[%s1187 + $0x8c8] sm:$0xff]
        %v1801 = vld [vmem:[%s1187 + $0x8d0] sm:$0xff]
        %v1802 = vld [vmem:[%s1187 + $0x8d8] sm:$0xff]
        %v1803 = vld [vmem:[%s1187 + $0x8e0] sm:$0xff]
        %v1804 = vld [vmem:[%s1187 + $0x8e8] sm:$0xff]
        %v1805 = vld [vmem:[%s1187 + $0x8f0] sm:$0xff]
        %v1806 = vld [vmem:[%s1187 + $0x8f8] sm:$0xff]
        %v1807 = vld [vmem:[%s1187 + $0x900] sm:$0xff]
        %v1808 = vld [vmem:[%s1187 + $0x908] sm:$0xff]
        %v1809 = vld [vmem:[%s1187 + $0x910] sm:$0xff]
        %v1810 = vld [vmem:[%s1187 + $0x918] sm:$0xff]
        %v1811 = vld [vmem:[%s1187 + $0x920] sm:$0xff]
        %v1812 = vld [vmem:[%s1187 + $0x928] sm:$0xff]
        %v1813 = vld [vmem:[%s1187 + $0x930] sm:$0xff]
        %v1814 = vld [vmem:[%s1187 + $0x938] sm:$0xff]
        %v1815 = vld [vmem:[%s1187 + $0x940] sm:$0xff]
        %v1816 = vld [vmem:[%s1187 + $0x948] sm:$0xff]
        %v1817 = vld [vmem:[%s1187 + $0x950] sm:$0xff]
        %v1818 = vld [vmem:[%s1187 + $0x958] sm:$0xff]
        %v1819 = vld [vmem:[%s1187 + $0x960] sm:$0xff]
        %v1820 = vld [vmem:[%s1187 + $0x968] sm:$0xff]
        %v1821 = vld [vmem:[%s1187 + $0x970] sm:$0xff]
        %v1822 = vld [vmem:[%s1187 + $0x978] sm:$0xff]
        %v1823 = vld [vmem:[%s1187 + $0x980] sm:$0xff]
        %v1824 = vld [vmem:[%s1187 + $0x988] sm:$0xff]
        %v1825 = vld [vmem:[%s1187 + $0x990] sm:$0xff]
        %v1826 = vld [vmem:[%s1187 + $0x998] sm:$0xff]
        %v1827 = vld [vmem:[%s1187 + $0x9a0] sm:$0xff]
        %v1828 = vld [vmem:[%s1187 + $0x9a8] sm:$0xff]
        %v1829 = vld [vmem:[%s1187 + $0x9b0] sm:$0xff]
        %v1830 = vld [vmem:[%s1187 + $0x9b8] sm:$0xff]
        %v1831 = vld [vmem:[%s1187 + $0x9c0] sm:$0xff]
        %v1832 = vld [vmem:[%s1187 + $0x9c8] sm:$0xff]
        %v1833 = vld [vmem:[%s1187 + $0x9d0] sm:$0xff]
        %v1834 = vld [vmem:[%s1187 + $0x9d8] sm:$0xff]
        %v1835 = vld [vmem:[%s1187 + $0x9e0] sm:$0xff]
        %v1836 = vld [vmem:[%s1187 + $0x9e8] sm:$0xff]
        %v1837 = vld [vmem:[%s1187 + $0x9f0] sm:$0xff]
        %v1838 = vld [vmem:[%s1187 + $0x9f8] sm:$0xff]
        %v1839 = vld [vmem:[%s1187 + $0xa00] sm:$0xff]
        %v1840 = vld [vmem:[%s1187 + $0xa08] sm:$0xff]
        %v1841 = vld [vmem:[%s1187 + $0xa10] sm:$0xff]
        %v1842 = vld [vmem:[%s1187 + $0xa18] sm:$0xff]
        %v1843 = vld [vmem:[%s1187 + $0xa20] sm:$0xff]
        %v1844 = vld [vmem:[%s1187 + $0xa28] sm:$0xff]
        %v1845 = vld [vmem:[%s1187 + $0xa30] sm:$0xff]
        %v1846 = vld [vmem:[%s1187 + $0xa38] sm:$0xff]
        %v1847 = vld [vmem:[%s1187 + $0xa40] sm:$0xff]
        %v1848 = vld [vmem:[%s1187 + $0xa48] sm:$0xff]
        %v1849 = vld [vmem:[%s1187 + $0xa50] sm:$0xff]
        %v1850 = vld [vmem:[%s1187 + $0xa58] sm:$0xff]
        %v1851 = vld [vmem:[%s1187 + $0xa60] sm:$0xff]
        %v1852 = vld [vmem:[%s1187 + $0xa68] sm:$0xff]
        %v1853 = vld [vmem:[%s1187 + $0xa70] sm:$0xff]
        %v1854 = vld [vmem:[%s1187 + $0xa78] sm:$0xff]
        %v1855 = vld [vmem:[%s1187 + $0xa80] sm:$0xff]
        %v1856 = vld [vmem:[%s1187 + $0xa88] sm:$0xff]
        %v1857 = vld [vmem:[%s1187 + $0xa90] sm:$0xff]
        %v1858 = vld [vmem:[%s1187 + $0xa98] sm:$0xff]
        %v1859 = vld [vmem:[%s1187 + $0xaa0] sm:$0xff]
        %v1860 = vld [vmem:[%s1187 + $0xaa8] sm:$0xff]
        %v1861 = vld [vmem:[%s1187 + $0xab0] sm:$0xff]
        %v1862 = vld [vmem:[%s1187 + $0xab8] sm:$0xff]
        %v1863 = vld [vmem:[%s1187 + $0xac0] sm:$0xff]
        %v1864 = vld [vmem:[%s1187 + $0xac8] sm:$0xff]
        %v1865 = vld [vmem:[%s1187 + $0xad0] sm:$0xff]
        %v1866 = vld [vmem:[%s1187 + $0xad8] sm:$0xff]
        %v1867 = vld [vmem:[%s1187 + $0xae0] sm:$0xff]
        %v1868 = vld [vmem:[%s1187 + $0xae8] sm:$0xff]
        %v1869 = vld [vmem:[%s1187 + $0xaf0] sm:$0xff]
        %v1870 = vld [vmem:[%s1187 + $0xaf8] sm:$0xff]
        %v1871 = vld [vmem:[%s1187 + $0xb00] sm:$0xff]
        %v1872 = vld [vmem:[%s1187 + $0xb08] sm:$0xff]
        %v1873 = vld [vmem:[%s1187 + $0xb10] sm:$0xff]
        %v1874 = vld [vmem:[%s1187 + $0xb18] sm:$0xff]
        %v1875 = vld [vmem:[%s1187 + $0xb20] sm:$0xff]
        %v1876 = vld [vmem:[%s1187 + $0xb28] sm:$0xff]
        %v1877 = vld [vmem:[%s1187 + $0xb30] sm:$0xff]
        %v1878 = vld [vmem:[%s1187 + $0xb38] sm:$0xff]
        %v1879 = vld [vmem:[%s1187 + $0xb40] sm:$0xff]
        %v1880 = vld [vmem:[%s1187 + $0xb48] sm:$0xff]
        %v1881 = vld [vmem:[%s1187 + $0xb50] sm:$0xff]
        %v1882 = vld [vmem:[%s1187 + $0xb58] sm:$0xff]
        %v1883 = vld [vmem:[%s1187 + $0xb60] sm:$0xff]
        %v1884 = vld [vmem:[%s1187 + $0xb68] sm:$0xff]
        %v1885 = vld [vmem:[%s1187 + $0xb70] sm:$0xff]
        %v1886 = vld [vmem:[%s1187 + $0xb78] sm:$0xff]
        %v1887 = vld [vmem:[%s1187 + $0xb80] sm:$0xff]
        %v1888 = vld [vmem:[%s1187 + $0xb88] sm:$0xff]
        %v1889 = vld [vmem:[%s1187 + $0xb90] sm:$0xff]
        %v1890 = vld [vmem:[%s1187 + $0xb98] sm:$0xff]
        %v1891 = vld [vmem:[%s1187 + $0xba0] sm:$0xff]
        %v1892 = vld [vmem:[%s1187 + $0xba8] sm:$0xff]
        %v1893 = vld [vmem:[%s1187 + $0xbb0] sm:$0xff]
        %v1894 = vld [vmem:[%s1187 + $0xbb8] sm:$0xff]
        %v1895 = vld [vmem:[%s1187 + $0xbc0] sm:$0xff]
        %v1896 = vld [vmem:[%s1187 + $0xbc8] sm:$0xff]
        %v1897 = vld [vmem:[%s1187 + $0xbd0] sm:$0xff]
        %v1898 = vld [vmem:[%s1187 + $0xbd8] sm:$0xff]
        %v1899 = vld [vmem:[%s1187 + $0xbe0] sm:$0xff]
        %v1900 = vld [vmem:[%s1187 + $0xbe8] sm:$0xff]
        %v1901 = vld [vmem:[%s1187 + $0xbf0] sm:$0xff]
        %v1902 = vld [vmem:[%s1187 + $0xbf8] sm:$0xff]
        %v1903 = vld [vmem:[%s1187 + $0xc00] sm:$0xff]
        %v1904 = vld [vmem:[%s1187 + $0xc08] sm:$0xff]
        %v1905 = vld [vmem:[%s1187 + $0xc10] sm:$0xff]
        %v1906 = vld [vmem:[%s1187 + $0xc18] sm:$0xff]
        %v1907 = vld [vmem:[%s1187 + $0xc20] sm:$0xff]
        %v1908 = vld [vmem:[%s1187 + $0xc28] sm:$0xff]
        %v1909 = vld [vmem:[%s1187 + $0xc30] sm:$0xff]
        %v1910 = vld [vmem:[%s1187 + $0xc38] sm:$0xff]
        %v1911 = vld [vmem:[%s1187 + $0xc40] sm:$0xff]
        %v1912 = vld [vmem:[%s1187 + $0xc48] sm:$0xff]
        %v1913 = vld [vmem:[%s1187 + $0xc50] sm:$0xff]
        %v1914 = vld [vmem:[%s1187 + $0xc58] sm:$0xff]
        %v1915 = vld [vmem:[%s1187 + $0xc60] sm:$0xff]
        %v1916 = vld [vmem:[%s1187 + $0xc68] sm:$0xff]
        %v1917 = vld [vmem:[%s1187 + $0xc70] sm:$0xff]
        %v1918 = vld [vmem:[%s1187 + $0xc78] sm:$0xff]
        %v1919 = vld [vmem:[%s1187 + $0xc80] sm:$0xff]
        %v1920 = vld [vmem:[%s1187 + $0xc88] sm:$0xff]
        %v1921 = vld [vmem:[%s1187 + $0xc90] sm:$0xff]
        %v1922 = vld [vmem:[%s1187 + $0xc98] sm:$0xff]
        %v1923 = vld [vmem:[%s1187 + $0xca0] sm:$0xff]
        %v1924 = vld [vmem:[%s1187 + $0xca8] sm:$0xff]
        %v1925 = vld [vmem:[%s1187 + $0xcb0] sm:$0xff]
        %v1926 = vld [vmem:[%s1187 + $0xcb8] sm:$0xff]
        %v1927 = vld [vmem:[%s1187 + $0xcc0] sm:$0xff]
        %v1928 = vld [vmem:[%s1187 + $0xcc8] sm:$0xff]
        %v1929 = vld [vmem:[%s1187 + $0xcd0] sm:$0xff]
        %v1930 = vld [vmem:[%s1187 + $0xcd8] sm:$0xff]
        %v1931 = vld [vmem:[%s1187 + $0xce0] sm:$0xff]
        %v1932 = vld [vmem:[%s1187 + $0xce8] sm:$0xff]
        %v1933 = vld [vmem:[%s1187 + $0xcf0] sm:$0xff]
        %v1934 = vld [vmem:[%s1187 + $0xcf8] sm:$0xff]
        %v1935 = vld [vmem:[%s1187 + $0xd00] sm:$0xff]
        %v1936 = vld [vmem:[%s1187 + $0xd08] sm:$0xff]
        %v1937 = vld [vmem:[%s1187 + $0xd10] sm:$0xff]
        %v1938 = vld [vmem:[%s1187 + $0xd18] sm:$0xff]
        %v1939 = vld [vmem:[%s1187 + $0xd20] sm:$0xff]
        %v1940 = vld [vmem:[%s1187 + $0xd28] sm:$0xff]
        %v1941 = vld [vmem:[%s1187 + $0xd30] sm:$0xff]
        %v1942 = vld [vmem:[%s1187 + $0xd38] sm:$0xff]
        %v1943 = vld [vmem:[%s1187 + $0xd40] sm:$0xff]
        %v1944 = vld [vmem:[%s1187 + $0xd48] sm:$0xff]
        %v1945 = vld [vmem:[%s1187 + $0xd50] sm:$0xff]
        %v1946 = vld [vmem:[%s1187 + $0xd58] sm:$0xff]
        %v1947 = vld [vmem:[%s1187 + $0xd60] sm:$0xff]
        %v1948 = vld [vmem:[%s1187 + $0xd68] sm:$0xff]
        %v1949 = vld [vmem:[%s1187 + $0xd70] sm:$0xff]
        %v1950 = vld [vmem:[%s1187 + $0xd78] sm:$0xff]
        %v1951 = vld [vmem:[%s1187 + $0xd80] sm:$0xff]
        %v1952 = vld [vmem:[%s1187 + $0xd88] sm:$0xff]
        %v1953 = vld [vmem:[%s1187 + $0xd90] sm:$0xff]
        %v1954 = vld [vmem:[%s1187 + $0xd98] sm:$0xff]
        %v1955 = vld [vmem:[%s1187 + $0xda0] sm:$0xff]
        %v1956 = vld [vmem:[%s1187 + $0xda8] sm:$0xff]
        %v1957 = vld [vmem:[%s1187 + $0xdb0] sm:$0xff]
        %v1958 = vld [vmem:[%s1187 + $0xdb8] sm:$0xff]
        %v1959 = vld [vmem:[%s1187 + $0xdc0] sm:$0xff]
        %v1960 = vld [vmem:[%s1187 + $0xdc8] sm:$0xff]
        %v1961 = vld [vmem:[%s1187 + $0xdd0] sm:$0xff]
        %v1962 = vld [vmem:[%s1187 + $0xdd8] sm:$0xff]
        %v1963 = vld [vmem:[%s1187 + $0xde0] sm:$0xff]
        %v1964 = vld [vmem:[%s1187 + $0xde8] sm:$0xff]
        %v1965 = vld [vmem:[%s1187 + $0xdf0] sm:$0xff]
        %v1966 = vld [vmem:[%s1187 + $0xdf8] sm:$0xff]
        %v1967 = vld [vmem:[%s1187 + $0xe00] sm:$0xff]
        %v1968 = vld [vmem:[%s1187 + $0xe08] sm:$0xff]
        %v1969 = vld [vmem:[%s1187 + $0xe10] sm:$0xff]
        %v1970 = vld [vmem:[%s1187 + $0xe18] sm:$0xff]
        %v1971 = vld [vmem:[%s1187 + $0xe20] sm:$0xff]
        %v1972 = vld [vmem:[%s1187 + $0xe28] sm:$0xff]
        %v1973 = vld [vmem:[%s1187 + $0xe30] sm:$0xff]
        %v1974 = vld [vmem:[%s1187 + $0xe38] sm:$0xff]
        %v1975 = vld [vmem:[%s1187 + $0xe40] sm:$0xff]
        %v1976 = vld [vmem:[%s1187 + $0xe48] sm:$0xff]
        %v1977 = vld [vmem:[%s1187 + $0xe50] sm:$0xff]
        %v1978 = vld [vmem:[%s1187 + $0xe58] sm:$0xff]
        %v1979 = vld [vmem:[%s1187 + $0xe60] sm:$0xff]
        %v1980 = vld [vmem:[%s1187 + $0xe68] sm:$0xff]
        %v1981 = vld [vmem:[%s1187 + $0xe70] sm:$0xff]
        %v1982 = vld [vmem:[%s1187 + $0xe78] sm:$0xff]
        %v1983 = vld [vmem:[%s1187 + $0xe80] sm:$0xff]
        %v1984 = vld [vmem:[%s1187 + $0xe88] sm:$0xff]
        %v1985 = vld [vmem:[%s1187 + $0xe90] sm:$0xff]
        %v1986 = vld [vmem:[%s1187 + $0xe98] sm:$0xff]
        %v1987 = vld [vmem:[%s1187 + $0xea0] sm:$0xff]
        %v1988 = vld [vmem:[%s1187 + $0xea8] sm:$0xff]
        %v1989 = vld [vmem:[%s1187 + $0xeb0] sm:$0xff]
        %v1990 = vld [vmem:[%s1187 + $0xeb8] sm:$0xff]
        %v1991 = vld [vmem:[%s1187 + $0xec0] sm:$0xff]
        %v1992 = vld [vmem:[%s1187 + $0xec8] sm:$0xff]
        %v1993 = vld [vmem:[%s1187 + $0xed0] sm:$0xff]
        %v1994 = vld [vmem:[%s1187 + $0xed8] sm:$0xff]
        %v1995 = vld [vmem:[%s1187 + $0xee0] sm:$0xff]
        %v1996 = vld [vmem:[%s1187 + $0xee8] sm:$0xff]
        %v1997 = vld [vmem:[%s1187 + $0xef0] sm:$0xff]
        %v1998 = vld [vmem:[%s1187 + $0xef8] sm:$0xff]
        %v1999 = vld [vmem:[%s1187 + $0xf00] sm:$0xff]
        %v2000 = vld [vmem:[%s1187 + $0xf08] sm:$0xff]
        %v2001 = vld [vmem:[%s1187 + $0xf10] sm:$0xff]
        %v2002 = vld [vmem:[%s1187 + $0xf18] sm:$0xff]
        %v2003 = vld [vmem:[%s1187 + $0xf20] sm:$0xff]
        %v2004 = vld [vmem:[%s1187 + $0xf28] sm:$0xff]
        %v2005 = vld [vmem:[%s1187 + $0xf30] sm:$0xff]
        %v2006 = vld [vmem:[%s1187 + $0xf38] sm:$0xff]
        %v2007 = vld [vmem:[%s1187 + $0xf40] sm:$0xff]
        %v2008 = vld [vmem:[%s1187 + $0xf48] sm:$0xff]
        %v2009 = vld [vmem:[%s1187 + $0xf50] sm:$0xff]
        %v2010 = vld [vmem:[%s1187 + $0xf58] sm:$0xff]
        %v2011 = vld [vmem:[%s1187 + $0xf60] sm:$0xff]
        %v2012 = vld [vmem:[%s1187 + $0xf68] sm:$0xff]
        %v2013 = vld [vmem:[%s1187 + $0xf70] sm:$0xff]
        %v2014 = vld [vmem:[%s1187 + $0xf78] sm:$0xff]
        %v2015 = vld [vmem:[%s1187 + $0xf80] sm:$0xff]
        %v2016 = vld [vmem:[%s1187 + $0xf88] sm:$0xff]
        %v2017 = vld [vmem:[%s1187 + $0xf90] sm:$0xff]
        %v2018 = vld [vmem:[%s1187 + $0xf98] sm:$0xff]
        %v2019 = vld [vmem:[%s1187 + $0xfa0] sm:$0xff]
        %v2020 = vld [vmem:[%s1187 + $0xfa8] sm:$0xff]
        %v2021 = vld [vmem:[%s1187 + $0xfb0] sm:$0xff]
        %v2022 = vld [vmem:[%s1187 + $0xfb8] sm:$0xff]
        %v2023 = vld [vmem:[%s1187 + $0xfc0] sm:$0xff]
        %v2024 = vld [vmem:[%s1187 + $0xfc8] sm:$0xff]
        %v2025 = vld [vmem:[%s1187 + $0xfd0] sm:$0xff]
        %v2026 = vld [vmem:[%s1187 + $0xfd8] sm:$0xff]
        %v2027 = vld [vmem:[%s1187 + $0xfe0] sm:$0xff]
        %v2028 = vld [vmem:[%s1187 + $0xfe8] sm:$0xff]
        %v2029 = vld [vmem:[%s1187 + $0xff0] sm:$0xff]
        %v2030 = vld [vmem:[%s1187 + $0xff8] sm:$0xff]
        %v2543 = vunpack.c.l.b16 %v1519
        %v2544 = vunpack.c.h.b16 %v1519
        %v2545 = vunpack.c.l.b16 %v1520
        %v2546 = vunpack.c.h.b16 %v1520
        %v2547 = vunpack.c.l.b16 %v1521
        %v2548 = vunpack.c.h.b16 %v1521
        %v2549 = vunpack.c.l.b16 %v1522
        %v2550 = vunpack.c.h.b16 %v1522
        %v2551 = vunpack.c.l.b16 %v1523
        %v2552 = vunpack.c.h.b16 %v1523
        %v2553 = vunpack.c.l.b16 %v1524
        %v2554 = vunpack.c.h.b16 %v1524
        %v2555 = vunpack.c.l.b16 %v1525
        %v2556 = vunpack.c.h.b16 %v1525
        %v2557 = vunpack.c.l.b16 %v1526
        %v2558 = vunpack.c.h.b16 %v1526
        %v2559 = vunpack.c.l.b16 %v1527
        %v2560 = vunpack.c.h.b16 %v1527
        %v2561 = vunpack.c.l.b16 %v1528
        %v2562 = vunpack.c.h.b16 %v1528
        %v2563 = vunpack.c.l.b16 %v1529
        %v2564 = vunpack.c.h.b16 %v1529
        %v2565 = vunpack.c.l.b16 %v1530
        %v2566 = vunpack.c.h.b16 %v1530
        %v2567 = vunpack.c.l.b16 %v1531
        %v2568 = vunpack.c.h.b16 %v1531
        %v2569 = vunpack.c.l.b16 %v1532
        %v2570 = vunpack.c.h.b16 %v1532
        %v2571 = vunpack.c.l.b16 %v1533
        %v2572 = vunpack.c.h.b16 %v1533
        %v2573 = vunpack.c.l.b16 %v1534
        %v2574 = vunpack.c.h.b16 %v1534
        %v2575 = vunpack.c.l.b16 %v1535
        %v2576 = vunpack.c.h.b16 %v1535
        %v2577 = vunpack.c.l.b16 %v1536
        %v2578 = vunpack.c.h.b16 %v1536
        %v2579 = vunpack.c.l.b16 %v1537
        %v2580 = vunpack.c.h.b16 %v1537
        %v2581 = vunpack.c.l.b16 %v1538
        %v2582 = vunpack.c.h.b16 %v1538
        %v2583 = vunpack.c.l.b16 %v1539
        %v2584 = vunpack.c.h.b16 %v1539
        %v2585 = vunpack.c.l.b16 %v1540
        %v2586 = vunpack.c.h.b16 %v1540
        %v2587 = vunpack.c.l.b16 %v1541
        %v2588 = vunpack.c.h.b16 %v1541
        %v2589 = vunpack.c.l.b16 %v1542
        %v2590 = vunpack.c.h.b16 %v1542
        %v2591 = vunpack.c.l.b16 %v1543
        %v2592 = vunpack.c.h.b16 %v1543
        %v2593 = vunpack.c.l.b16 %v1544
        %v2594 = vunpack.c.h.b16 %v1544
        %v2595 = vunpack.c.l.b16 %v1545
        %v2596 = vunpack.c.h.b16 %v1545
        %v2597 = vunpack.c.l.b16 %v1546
        %v2598 = vunpack.c.h.b16 %v1546
        %v2599 = vunpack.c.l.b16 %v1547
        %v2600 = vunpack.c.h.b16 %v1547
        %v2601 = vunpack.c.l.b16 %v1548
        %v2602 = vunpack.c.h.b16 %v1548
        %v2603 = vunpack.c.l.b16 %v1549
        %v2604 = vunpack.c.h.b16 %v1549
        %v2605 = vunpack.c.l.b16 %v1550
        %v2606 = vunpack.c.h.b16 %v1550
        %v2607 = vunpack.c.l.b16 %v1551
        %v2608 = vunpack.c.h.b16 %v1551
        %v2609 = vunpack.c.l.b16 %v1552
        %v2610 = vunpack.c.h.b16 %v1552
        %v2611 = vunpack.c.l.b16 %v1553
        %v2612 = vunpack.c.h.b16 %v1553
        %v2613 = vunpack.c.l.b16 %v1554
        %v2614 = vunpack.c.h.b16 %v1554
        %v2615 = vunpack.c.l.b16 %v1555
        %v2616 = vunpack.c.h.b16 %v1555
        %v2617 = vunpack.c.l.b16 %v1556
        %v2618 = vunpack.c.h.b16 %v1556
        %v2619 = vunpack.c.l.b16 %v1557
        %v2620 = vunpack.c.h.b16 %v1557
        %v2621 = vunpack.c.l.b16 %v1558
        %v2622 = vunpack.c.h.b16 %v1558
        %v2623 = vunpack.c.l.b16 %v1559
        %v2624 = vunpack.c.h.b16 %v1559
        %v2625 = vunpack.c.l.b16 %v1560
        %v2626 = vunpack.c.h.b16 %v1560
        %v2627 = vunpack.c.l.b16 %v1561
        %v2628 = vunpack.c.h.b16 %v1561
        %v2629 = vunpack.c.l.b16 %v1562
        %v2630 = vunpack.c.h.b16 %v1562
        %v2631 = vunpack.c.l.b16 %v1563
        %v2632 = vunpack.c.h.b16 %v1563
        %v2633 = vunpack.c.l.b16 %v1564
        %v2634 = vunpack.c.h.b16 %v1564
        %v2635 = vunpack.c.l.b16 %v1565
        %v2636 = vunpack.c.h.b16 %v1565
        %v2637 = vunpack.c.l.b16 %v1566
        %v2638 = vunpack.c.h.b16 %v1566
        %v2639 = vunpack.c.l.b16 %v1567
        %v2640 = vunpack.c.h.b16 %v1567
        %v2641 = vunpack.c.l.b16 %v1568
        %v2642 = vunpack.c.h.b16 %v1568
        %v2643 = vunpack.c.l.b16 %v1569
        %v2644 = vunpack.c.h.b16 %v1569
        %v2645 = vunpack.c.l.b16 %v1570
        %v2646 = vunpack.c.h.b16 %v1570
        %v2647 = vunpack.c.l.b16 %v1571
        %v2648 = vunpack.c.h.b16 %v1571
        %v2649 = vunpack.c.l.b16 %v1572
        %v2650 = vunpack.c.h.b16 %v1572
        %v2651 = vunpack.c.l.b16 %v1573
        %v2652 = vunpack.c.h.b16 %v1573
        %v2653 = vunpack.c.l.b16 %v1574
        %v2654 = vunpack.c.h.b16 %v1574
        %v2655 = vunpack.c.l.b16 %v1575
        %v2656 = vunpack.c.h.b16 %v1575
        %v2657 = vunpack.c.l.b16 %v1576
        %v2658 = vunpack.c.h.b16 %v1576
        %v2659 = vunpack.c.l.b16 %v1577
        %v2660 = vunpack.c.h.b16 %v1577
        %v2661 = vunpack.c.l.b16 %v1578
        %v2662 = vunpack.c.h.b16 %v1578
        %v2663 = vunpack.c.l.b16 %v1579
        %v2664 = vunpack.c.h.b16 %v1579
        %v2665 = vunpack.c.l.b16 %v1580
        %v2666 = vunpack.c.h.b16 %v1580
        %v2667 = vunpack.c.l.b16 %v1581
        %v2668 = vunpack.c.h.b16 %v1581
        %v2669 = vunpack.c.l.b16 %v1582
        %v2670 = vunpack.c.h.b16 %v1582
        %v2671 = vunpack.c.l.b16 %v1583
        %v2672 = vunpack.c.h.b16 %v1583
        %v2673 = vunpack.c.l.b16 %v1584
        %v2674 = vunpack.c.h.b16 %v1584
        %v2675 = vunpack.c.l.b16 %v1585
        %v2676 = vunpack.c.h.b16 %v1585
        %v2677 = vunpack.c.l.b16 %v1586
        %v2678 = vunpack.c.h.b16 %v1586
        %v2679 = vunpack.c.l.b16 %v1587
        %v2680 = vunpack.c.h.b16 %v1587
        %v2681 = vunpack.c.l.b16 %v1588
        %v2682 = vunpack.c.h.b16 %v1588
        %v2683 = vunpack.c.l.b16 %v1589
        %v2684 = vunpack.c.h.b16 %v1589
        %v2685 = vunpack.c.l.b16 %v1590
        %v2686 = vunpack.c.h.b16 %v1590
        %v2687 = vunpack.c.l.b16 %v1591
        %v2688 = vunpack.c.h.b16 %v1591
        %v2689 = vunpack.c.l.b16 %v1592
        %v2690 = vunpack.c.h.b16 %v1592
        %v2691 = vunpack.c.l.b16 %v1593
        %v2692 = vunpack.c.h.b16 %v1593
        %v2693 = vunpack.c.l.b16 %v1594
        %v2694 = vunpack.c.h.b16 %v1594
        %v2695 = vunpack.c.l.b16 %v1595
        %v2696 = vunpack.c.h.b16 %v1595
        %v2697 = vunpack.c.l.b16 %v1596
        %v2698 = vunpack.c.h.b16 %v1596
        %v2699 = vunpack.c.l.b16 %v1597
        %v2700 = vunpack.c.h.b16 %v1597
        %v2701 = vunpack.c.l.b16 %v1598
        %v2702 = vunpack.c.h.b16 %v1598
        %v2703 = vunpack.c.l.b16 %v1599
        %v2704 = vunpack.c.h.b16 %v1599
        %v2705 = vunpack.c.l.b16 %v1600
        %v2706 = vunpack.c.h.b16 %v1600
        %v2707 = vunpack.c.l.b16 %v1601
        %v2708 = vunpack.c.h.b16 %v1601
        %v2709 = vunpack.c.l.b16 %v1602
        %v2710 = vunpack.c.h.b16 %v1602
        %v2711 = vunpack.c.l.b16 %v1603
        %v2712 = vunpack.c.h.b16 %v1603
        %v2713 = vunpack.c.l.b16 %v1604
        %v2714 = vunpack.c.h.b16 %v1604
        %v2715 = vunpack.c.l.b16 %v1605
        %v2716 = vunpack.c.h.b16 %v1605
        %v2717 = vunpack.c.l.b16 %v1606
        %v2718 = vunpack.c.h.b16 %v1606
        %v2719 = vunpack.c.l.b16 %v1607
        %v2720 = vunpack.c.h.b16 %v1607
        %v2721 = vunpack.c.l.b16 %v1608
        %v2722 = vunpack.c.h.b16 %v1608
        %v2723 = vunpack.c.l.b16 %v1609
        %v2724 = vunpack.c.h.b16 %v1609
        %v2725 = vunpack.c.l.b16 %v1610
        %v2726 = vunpack.c.h.b16 %v1610
        %v2727 = vunpack.c.l.b16 %v1611
        %v2728 = vunpack.c.h.b16 %v1611
        %v2729 = vunpack.c.l.b16 %v1612
        %v2730 = vunpack.c.h.b16 %v1612
        %v2731 = vunpack.c.l.b16 %v1613
        %v2732 = vunpack.c.h.b16 %v1613
        %v2733 = vunpack.c.l.b16 %v1614
        %v2734 = vunpack.c.h.b16 %v1614
        %v2735 = vunpack.c.l.b16 %v1615
        %v2736 = vunpack.c.h.b16 %v1615
        %v2737 = vunpack.c.l.b16 %v1616
        %v2738 = vunpack.c.h.b16 %v1616
        %v2739 = vunpack.c.l.b16 %v1617
        %v2740 = vunpack.c.h.b16 %v1617
        %v2741 = vunpack.c.l.b16 %v1618
        %v2742 = vunpack.c.h.b16 %v1618
        %v2743 = vunpack.c.l.b16 %v1619
        %v2744 = vunpack.c.h.b16 %v1619
        %v2745 = vunpack.c.l.b16 %v1620
        %v2746 = vunpack.c.h.b16 %v1620
        %v2747 = vunpack.c.l.b16 %v1621
        %v2748 = vunpack.c.h.b16 %v1621
        %v2749 = vunpack.c.l.b16 %v1622
        %v2750 = vunpack.c.h.b16 %v1622
        %v2751 = vunpack.c.l.b16 %v1623
        %v2752 = vunpack.c.h.b16 %v1623
        %v2753 = vunpack.c.l.b16 %v1624
        %v2754 = vunpack.c.h.b16 %v1624
        %v2755 = vunpack.c.l.b16 %v1625
        %v2756 = vunpack.c.h.b16 %v1625
        %v2757 = vunpack.c.l.b16 %v1626
        %v2758 = vunpack.c.h.b16 %v1626
        %v2759 = vunpack.c.l.b16 %v1627
        %v2760 = vunpack.c.h.b16 %v1627
        %v2761 = vunpack.c.l.b16 %v1628
        %v2762 = vunpack.c.h.b16 %v1628
        %v2763 = vunpack.c.l.b16 %v1629
        %v2764 = vunpack.c.h.b16 %v1629
        %v2765 = vunpack.c.l.b16 %v1630
        %v2766 = vunpack.c.h.b16 %v1630
        %v2767 = vunpack.c.l.b16 %v1631
        %v2768 = vunpack.c.h.b16 %v1631
        %v2769 = vunpack.c.l.b16 %v1632
        %v2770 = vunpack.c.h.b16 %v1632
        %v2771 = vunpack.c.l.b16 %v1633
        %v2772 = vunpack.c.h.b16 %v1633
        %v2773 = vunpack.c.l.b16 %v1634
        %v2774 = vunpack.c.h.b16 %v1634
        %v2775 = vunpack.c.l.b16 %v1635
        %v2776 = vunpack.c.h.b16 %v1635
        %v2777 = vunpack.c.l.b16 %v1636
        %v2778 = vunpack.c.h.b16 %v1636
        %v2779 = vunpack.c.l.b16 %v1637
        %v2780 = vunpack.c.h.b16 %v1637
        %v2781 = vunpack.c.l.b16 %v1638
        %v2782 = vunpack.c.h.b16 %v1638
        %v2783 = vunpack.c.l.b16 %v1639
        %v2784 = vunpack.c.h.b16 %v1639
        %v2785 = vunpack.c.l.b16 %v1640
        %v2786 = vunpack.c.h.b16 %v1640
        %v2787 = vunpack.c.l.b16 %v1641
        %v2788 = vunpack.c.h.b16 %v1641
        %v2789 = vunpack.c.l.b16 %v1642
        %v2790 = vunpack.c.h.b16 %v1642
        %v2791 = vunpack.c.l.b16 %v1643
        %v2792 = vunpack.c.h.b16 %v1643
        %v2793 = vunpack.c.l.b16 %v1644
        %v2794 = vunpack.c.h.b16 %v1644
        %v2795 = vunpack.c.l.b16 %v1645
        %v2796 = vunpack.c.h.b16 %v1645
        %v2797 = vunpack.c.l.b16 %v1646
        %v2798 = vunpack.c.h.b16 %v1646
        %v2799 = vunpack.c.l.b16 %v1647
        %v2800 = vunpack.c.h.b16 %v1647
        %v2801 = vunpack.c.l.b16 %v1648
        %v2802 = vunpack.c.h.b16 %v1648
        %v2803 = vunpack.c.l.b16 %v1649
        %v2804 = vunpack.c.h.b16 %v1649
        %v2805 = vunpack.c.l.b16 %v1650
        %v2806 = vunpack.c.h.b16 %v1650
        %v2807 = vunpack.c.l.b16 %v1651
        %v2808 = vunpack.c.h.b16 %v1651
        %v2809 = vunpack.c.l.b16 %v1652
        %v2810 = vunpack.c.h.b16 %v1652
        %v2811 = vunpack.c.l.b16 %v1653
        %v2812 = vunpack.c.h.b16 %v1653
        %v2813 = vunpack.c.l.b16 %v1654
        %v2814 = vunpack.c.h.b16 %v1654
        %v2815 = vunpack.c.l.b16 %v1655
        %v2816 = vunpack.c.h.b16 %v1655
        %v2817 = vunpack.c.l.b16 %v1656
        %v2818 = vunpack.c.h.b16 %v1656
        %v2819 = vunpack.c.l.b16 %v1657
        %v2820 = vunpack.c.h.b16 %v1657
        %v2821 = vunpack.c.l.b16 %v1658
        %v2822 = vunpack.c.h.b16 %v1658
        %v2823 = vunpack.c.l.b16 %v1659
        %v2824 = vunpack.c.h.b16 %v1659
        %v2825 = vunpack.c.l.b16 %v1660
        %v2826 = vunpack.c.h.b16 %v1660
        %v2827 = vunpack.c.l.b16 %v1661
        %v2828 = vunpack.c.h.b16 %v1661
        %v2829 = vunpack.c.l.b16 %v1662
        %v2830 = vunpack.c.h.b16 %v1662
        %v2831 = vunpack.c.l.b16 %v1663
        %v2832 = vunpack.c.h.b16 %v1663
        %v2833 = vunpack.c.l.b16 %v1664
        %v2834 = vunpack.c.h.b16 %v1664
        %v2835 = vunpack.c.l.b16 %v1665
        %v2836 = vunpack.c.h.b16 %v1665
        %v2837 = vunpack.c.l.b16 %v1666
        %v2838 = vunpack.c.h.b16 %v1666
        %v2839 = vunpack.c.l.b16 %v1667
        %v2840 = vunpack.c.h.b16 %v1667
        %v2841 = vunpack.c.l.b16 %v1668
        %v2842 = vunpack.c.h.b16 %v1668
        %v2843 = vunpack.c.l.b16 %v1669
        %v2844 = vunpack.c.h.b16 %v1669
        %v2845 = vunpack.c.l.b16 %v1670
        %v2846 = vunpack.c.h.b16 %v1670
        %v2847 = vunpack.c.l.b16 %v1671
        %v2848 = vunpack.c.h.b16 %v1671
        %v2849 = vunpack.c.l.b16 %v1672
        %v2850 = vunpack.c.h.b16 %v1672
        %v2851 = vunpack.c.l.b16 %v1673
        %v2852 = vunpack.c.h.b16 %v1673
        %v2853 = vunpack.c.l.b16 %v1674
        %v2854 = vunpack.c.h.b16 %v1674
        %v2855 = vunpack.c.l.b16 %v1675
        %v2856 = vunpack.c.h.b16 %v1675
        %v2857 = vunpack.c.l.b16 %v1676
        %v2858 = vunpack.c.h.b16 %v1676
        %v2859 = vunpack.c.l.b16 %v1677
        %v2860 = vunpack.c.h.b16 %v1677
        %v2861 = vunpack.c.l.b16 %v1678
        %v2862 = vunpack.c.h.b16 %v1678
        %v2863 = vunpack.c.l.b16 %v1679
        %v2864 = vunpack.c.h.b16 %v1679
        %v2865 = vunpack.c.l.b16 %v1680
        %v2866 = vunpack.c.h.b16 %v1680
        %v2867 = vunpack.c.l.b16 %v1681
        %v2868 = vunpack.c.h.b16 %v1681
        %v2869 = vunpack.c.l.b16 %v1682
        %v2870 = vunpack.c.h.b16 %v1682
        %v2871 = vunpack.c.l.b16 %v1683
        %v2872 = vunpack.c.h.b16 %v1683
        %v2873 = vunpack.c.l.b16 %v1684
        %v2874 = vunpack.c.h.b16 %v1684
        %v2875 = vunpack.c.l.b16 %v1685
        %v2876 = vunpack.c.h.b16 %v1685
        %v2877 = vunpack.c.l.b16 %v1686
        %v2878 = vunpack.c.h.b16 %v1686
        %v2879 = vunpack.c.l.b16 %v1687
        %v2880 = vunpack.c.h.b16 %v1687
        %v2881 = vunpack.c.l.b16 %v1688
        %v2882 = vunpack.c.h.b16 %v1688
        %v2883 = vunpack.c.l.b16 %v1689
        %v2884 = vunpack.c.h.b16 %v1689
        %v2885 = vunpack.c.l.b16 %v1690
        %v2886 = vunpack.c.h.b16 %v1690
        %v2887 = vunpack.c.l.b16 %v1691
        %v2888 = vunpack.c.h.b16 %v1691
        %v2889 = vunpack.c.l.b16 %v1692
        %v2890 = vunpack.c.h.b16 %v1692
        %v2891 = vunpack.c.l.b16 %v1693
        %v2892 = vunpack.c.h.b16 %v1693
        %v2893 = vunpack.c.l.b16 %v1694
        %v2894 = vunpack.c.h.b16 %v1694
        %v2895 = vunpack.c.l.b16 %v1695
        %v2896 = vunpack.c.h.b16 %v1695
        %v2897 = vunpack.c.l.b16 %v1696
        %v2898 = vunpack.c.h.b16 %v1696
        %v2899 = vunpack.c.l.b16 %v1697
        %v2900 = vunpack.c.h.b16 %v1697
        %v2901 = vunpack.c.l.b16 %v1698
        %v2902 = vunpack.c.h.b16 %v1698
        %v2903 = vunpack.c.l.b16 %v1699
        %v2904 = vunpack.c.h.b16 %v1699
        %v2905 = vunpack.c.l.b16 %v1700
        %v2906 = vunpack.c.h.b16 %v1700
        %v2907 = vunpack.c.l.b16 %v1701
        %v2908 = vunpack.c.h.b16 %v1701
        %v2909 = vunpack.c.l.b16 %v1702
        %v2910 = vunpack.c.h.b16 %v1702
        %v2911 = vunpack.c.l.b16 %v1703
        %v2912 = vunpack.c.h.b16 %v1703
        %v2913 = vunpack.c.l.b16 %v1704
        %v2914 = vunpack.c.h.b16 %v1704
        %v2915 = vunpack.c.l.b16 %v1705
        %v2916 = vunpack.c.h.b16 %v1705
        %v2917 = vunpack.c.l.b16 %v1706
        %v2918 = vunpack.c.h.b16 %v1706
        %v2919 = vunpack.c.l.b16 %v1707
        %v2920 = vunpack.c.h.b16 %v1707
        %v2921 = vunpack.c.l.b16 %v1708
        %v2922 = vunpack.c.h.b16 %v1708
        %v2923 = vunpack.c.l.b16 %v1709
        %v2924 = vunpack.c.h.b16 %v1709
        %v2925 = vunpack.c.l.b16 %v1710
        %v2926 = vunpack.c.h.b16 %v1710
        %v2927 = vunpack.c.l.b16 %v1711
        %v2928 = vunpack.c.h.b16 %v1711
        %v2929 = vunpack.c.l.b16 %v1712
        %v2930 = vunpack.c.h.b16 %v1712
        %v2931 = vunpack.c.l.b16 %v1713
        %v2932 = vunpack.c.h.b16 %v1713
        %v2933 = vunpack.c.l.b16 %v1714
        %v2934 = vunpack.c.h.b16 %v1714
        %v2935 = vunpack.c.l.b16 %v1715
        %v2936 = vunpack.c.h.b16 %v1715
        %v2937 = vunpack.c.l.b16 %v1716
        %v2938 = vunpack.c.h.b16 %v1716
        %v2939 = vunpack.c.l.b16 %v1717
        %v2940 = vunpack.c.h.b16 %v1717
        %v2941 = vunpack.c.l.b16 %v1718
        %v2942 = vunpack.c.h.b16 %v1718
        %v2943 = vunpack.c.l.b16 %v1719
        %v2944 = vunpack.c.h.b16 %v1719
        %v2945 = vunpack.c.l.b16 %v1720
        %v2946 = vunpack.c.h.b16 %v1720
        %v2947 = vunpack.c.l.b16 %v1721
        %v2948 = vunpack.c.h.b16 %v1721
        %v2949 = vunpack.c.l.b16 %v1722
        %v2950 = vunpack.c.h.b16 %v1722
        %v2951 = vunpack.c.l.b16 %v1723
        %v2952 = vunpack.c.h.b16 %v1723
        %v2953 = vunpack.c.l.b16 %v1724
        %v2954 = vunpack.c.h.b16 %v1724
        %v2955 = vunpack.c.l.b16 %v1725
        %v2956 = vunpack.c.h.b16 %v1725
        %v2957 = vunpack.c.l.b16 %v1726
        %v2958 = vunpack.c.h.b16 %v1726
        %v2959 = vunpack.c.l.b16 %v1727
        %v2960 = vunpack.c.h.b16 %v1727
        %v2961 = vunpack.c.l.b16 %v1728
        %v2962 = vunpack.c.h.b16 %v1728
        %v2963 = vunpack.c.l.b16 %v1729
        %v2964 = vunpack.c.h.b16 %v1729
        %v2965 = vunpack.c.l.b16 %v1730
        %v2966 = vunpack.c.h.b16 %v1730
        %v2967 = vunpack.c.l.b16 %v1731
        %v2968 = vunpack.c.h.b16 %v1731
        %v2969 = vunpack.c.l.b16 %v1732
        %v2970 = vunpack.c.h.b16 %v1732
        %v2971 = vunpack.c.l.b16 %v1733
        %v2972 = vunpack.c.h.b16 %v1733
        %v2973 = vunpack.c.l.b16 %v1734
        %v2974 = vunpack.c.h.b16 %v1734
        %v2975 = vunpack.c.l.b16 %v1735
        %v2976 = vunpack.c.h.b16 %v1735
        %v2977 = vunpack.c.l.b16 %v1736
        %v2978 = vunpack.c.h.b16 %v1736
        %v2979 = vunpack.c.l.b16 %v1737
        %v2980 = vunpack.c.h.b16 %v1737
        %v2981 = vunpack.c.l.b16 %v1738
        %v2982 = vunpack.c.h.b16 %v1738
        %v2983 = vunpack.c.l.b16 %v1739
        %v2984 = vunpack.c.h.b16 %v1739
        %v2985 = vunpack.c.l.b16 %v1740
        %v2986 = vunpack.c.h.b16 %v1740
        %v2987 = vunpack.c.l.b16 %v1741
        %v2988 = vunpack.c.h.b16 %v1741
        %v2989 = vunpack.c.l.b16 %v1742
        %v2990 = vunpack.c.h.b16 %v1742
        %v2991 = vunpack.c.l.b16 %v1743
        %v2992 = vunpack.c.h.b16 %v1743
        %v2993 = vunpack.c.l.b16 %v1744
        %v2994 = vunpack.c.h.b16 %v1744
        %v2995 = vunpack.c.l.b16 %v1745
        %v2996 = vunpack.c.h.b16 %v1745
        %v2997 = vunpack.c.l.b16 %v1746
        %v2998 = vunpack.c.h.b16 %v1746
        %v2999 = vunpack.c.l.b16 %v1747
        %v3000 = vunpack.c.h.b16 %v1747
        %v3001 = vunpack.c.l.b16 %v1748
        %v3002 = vunpack.c.h.b16 %v1748
        %v3003 = vunpack.c.l.b16 %v1749
        %v3004 = vunpack.c.h.b16 %v1749
        %v3005 = vunpack.c.l.b16 %v1750
        %v3006 = vunpack.c.h.b16 %v1750
        %v3007 = vunpack.c.l.b16 %v1751
        %v3008 = vunpack.c.h.b16 %v1751
        %v3009 = vunpack.c.l.b16 %v1752
        %v3010 = vunpack.c.h.b16 %v1752
        %v3011 = vunpack.c.l.b16 %v1753
        %v3012 = vunpack.c.h.b16 %v1753
        %v3013 = vunpack.c.l.b16 %v1754
        %v3014 = vunpack.c.h.b16 %v1754
        %v3015 = vunpack.c.l.b16 %v1755
        %v3016 = vunpack.c.h.b16 %v1755
        %v3017 = vunpack.c.l.b16 %v1756
        %v3018 = vunpack.c.h.b16 %v1756
        %v3019 = vunpack.c.l.b16 %v1757
        %v3020 = vunpack.c.h.b16 %v1757
        %v3021 = vunpack.c.l.b16 %v1758
        %v3022 = vunpack.c.h.b16 %v1758
        %v3023 = vunpack.c.l.b16 %v1759
        %v3024 = vunpack.c.h.b16 %v1759
        %v3025 = vunpack.c.l.b16 %v1760
        %v3026 = vunpack.c.h.b16 %v1760
        %v3027 = vunpack.c.l.b16 %v1761
        %v3028 = vunpack.c.h.b16 %v1761
        %v3029 = vunpack.c.l.b16 %v1762
        %v3030 = vunpack.c.h.b16 %v1762
        %v3031 = vunpack.c.l.b16 %v1763
        %v3032 = vunpack.c.h.b16 %v1763
        %v3033 = vunpack.c.l.b16 %v1764
        %v3034 = vunpack.c.h.b16 %v1764
        %v3035 = vunpack.c.l.b16 %v1765
        %v3036 = vunpack.c.h.b16 %v1765
        %v3037 = vunpack.c.l.b16 %v1766
        %v3038 = vunpack.c.h.b16 %v1766
        %v3039 = vunpack.c.l.b16 %v1767
        %v3040 = vunpack.c.h.b16 %v1767
        %v3041 = vunpack.c.l.b16 %v1768
        %v3042 = vunpack.c.h.b16 %v1768
        %v3043 = vunpack.c.l.b16 %v1769
        %v3044 = vunpack.c.h.b16 %v1769
        %v3045 = vunpack.c.l.b16 %v1770
        %v3046 = vunpack.c.h.b16 %v1770
        %v3047 = vunpack.c.l.b16 %v1771
        %v3048 = vunpack.c.h.b16 %v1771
        %v3049 = vunpack.c.l.b16 %v1772
        %v3050 = vunpack.c.h.b16 %v1772
        %v3051 = vunpack.c.l.b16 %v1773
        %v3052 = vunpack.c.h.b16 %v1773
        %v3053 = vunpack.c.l.b16 %v1774
        %v3054 = vunpack.c.h.b16 %v1774
        %v3055 = vunpack.c.l.b16 %v1775
        %v3056 = vunpack.c.h.b16 %v1775
        %v3057 = vunpack.c.l.b16 %v1776
        %v3058 = vunpack.c.h.b16 %v1776
        %v3059 = vunpack.c.l.b16 %v1777
        %v3060 = vunpack.c.h.b16 %v1777
        %v3061 = vunpack.c.l.b16 %v1778
        %v3062 = vunpack.c.h.b16 %v1778
        %v3063 = vunpack.c.l.b16 %v1779
        %v3064 = vunpack.c.h.b16 %v1779
        %v3065 = vunpack.c.l.b16 %v1780
        %v3066 = vunpack.c.h.b16 %v1780
        %v3067 = vunpack.c.l.b16 %v1781
        %v3068 = vunpack.c.h.b16 %v1781
        %v3069 = vunpack.c.l.b16 %v1782
        %v3070 = vunpack.c.h.b16 %v1782
        %v3071 = vunpack.c.l.b16 %v1783
        %v3072 = vunpack.c.h.b16 %v1783
        %v3073 = vunpack.c.l.b16 %v1784
        %v3074 = vunpack.c.h.b16 %v1784
        %v3075 = vunpack.c.l.b16 %v1785
        %v3076 = vunpack.c.h.b16 %v1785
        %v3077 = vunpack.c.l.b16 %v1786
        %v3078 = vunpack.c.h.b16 %v1786
        %v3079 = vunpack.c.l.b16 %v1787
        %v3080 = vunpack.c.h.b16 %v1787
        %v3081 = vunpack.c.l.b16 %v1788
        %v3082 = vunpack.c.h.b16 %v1788
        %v3083 = vunpack.c.l.b16 %v1789
        %v3084 = vunpack.c.h.b16 %v1789
        %v3085 = vunpack.c.l.b16 %v1790
        %v3086 = vunpack.c.h.b16 %v1790
        %v3087 = vunpack.c.l.b16 %v1791
        %v3088 = vunpack.c.h.b16 %v1791
        %v3089 = vunpack.c.l.b16 %v1792
        %v3090 = vunpack.c.h.b16 %v1792
        %v3091 = vunpack.c.l.b16 %v1793
        %v3092 = vunpack.c.h.b16 %v1793
        %v3093 = vunpack.c.l.b16 %v1794
        %v3094 = vunpack.c.h.b16 %v1794
        %v3095 = vunpack.c.l.b16 %v1795
        %v3096 = vunpack.c.h.b16 %v1795
        %v3097 = vunpack.c.l.b16 %v1796
        %v3098 = vunpack.c.h.b16 %v1796
        %v3099 = vunpack.c.l.b16 %v1797
        %v3100 = vunpack.c.h.b16 %v1797
        %v3101 = vunpack.c.l.b16 %v1798
        %v3102 = vunpack.c.h.b16 %v1798
        %v3103 = vunpack.c.l.b16 %v1799
        %v3104 = vunpack.c.h.b16 %v1799
        %v3105 = vunpack.c.l.b16 %v1800
        %v3106 = vunpack.c.h.b16 %v1800
        %v3107 = vunpack.c.l.b16 %v1801
        %v3108 = vunpack.c.h.b16 %v1801
        %v3109 = vunpack.c.l.b16 %v1802
        %v3110 = vunpack.c.h.b16 %v1802
        %v3111 = vunpack.c.l.b16 %v1803
        %v3112 = vunpack.c.h.b16 %v1803
        %v3113 = vunpack.c.l.b16 %v1804
        %v3114 = vunpack.c.h.b16 %v1804
        %v3115 = vunpack.c.l.b16 %v1805
        %v3116 = vunpack.c.h.b16 %v1805
        %v3117 = vunpack.c.l.b16 %v1806
        %v3118 = vunpack.c.h.b16 %v1806
        %v3119 = vunpack.c.l.b16 %v1807
        %v3120 = vunpack.c.h.b16 %v1807
        %v3121 = vunpack.c.l.b16 %v1808
        %v3122 = vunpack.c.h.b16 %v1808
        %v3123 = vunpack.c.l.b16 %v1809
        %v3124 = vunpack.c.h.b16 %v1809
        %v3125 = vunpack.c.l.b16 %v1810
        %v3126 = vunpack.c.h.b16 %v1810
        %v3127 = vunpack.c.l.b16 %v1811
        %v3128 = vunpack.c.h.b16 %v1811
        %v3129 = vunpack.c.l.b16 %v1812
        %v3130 = vunpack.c.h.b16 %v1812
        %v3131 = vunpack.c.l.b16 %v1813
        %v3132 = vunpack.c.h.b16 %v1813
        %v3133 = vunpack.c.l.b16 %v1814
        %v3134 = vunpack.c.h.b16 %v1814
        %v3135 = vunpack.c.l.b16 %v1815
        %v3136 = vunpack.c.h.b16 %v1815
        %v3137 = vunpack.c.l.b16 %v1816
        %v3138 = vunpack.c.h.b16 %v1816
        %v3139 = vunpack.c.l.b16 %v1817
        %v3140 = vunpack.c.h.b16 %v1817
        %v3141 = vunpack.c.l.b16 %v1818
        %v3142 = vunpack.c.h.b16 %v1818
        %v3143 = vunpack.c.l.b16 %v1819
        %v3144 = vunpack.c.h.b16 %v1819
        %v3145 = vunpack.c.l.b16 %v1820
        %v3146 = vunpack.c.h.b16 %v1820
        %v3147 = vunpack.c.l.b16 %v1821
        %v3148 = vunpack.c.h.b16 %v1821
        %v3149 = vunpack.c.l.b16 %v1822
        %v3150 = vunpack.c.h.b16 %v1822
        %v3151 = vunpack.c.l.b16 %v1823
        %v3152 = vunpack.c.h.b16 %v1823
        %v3153 = vunpack.c.l.b16 %v1824
        %v3154 = vunpack.c.h.b16 %v1824
        %v3155 = vunpack.c.l.b16 %v1825
        %v3156 = vunpack.c.h.b16 %v1825
        %v3157 = vunpack.c.l.b16 %v1826
        %v3158 = vunpack.c.h.b16 %v1826
        %v3159 = vunpack.c.l.b16 %v1827
        %v3160 = vunpack.c.h.b16 %v1827
        %v3161 = vunpack.c.l.b16 %v1828
        %v3162 = vunpack.c.h.b16 %v1828
        %v3163 = vunpack.c.l.b16 %v1829
        %v3164 = vunpack.c.h.b16 %v1829
        %v3165 = vunpack.c.l.b16 %v1830
        %v3166 = vunpack.c.h.b16 %v1830
        %v3167 = vunpack.c.l.b16 %v1831
        %v3168 = vunpack.c.h.b16 %v1831
        %v3169 = vunpack.c.l.b16 %v1832
        %v3170 = vunpack.c.h.b16 %v1832
        %v3171 = vunpack.c.l.b16 %v1833
        %v3172 = vunpack.c.h.b16 %v1833
        %v3173 = vunpack.c.l.b16 %v1834
        %v3174 = vunpack.c.h.b16 %v1834
        %v3175 = vunpack.c.l.b16 %v1835
        %v3176 = vunpack.c.h.b16 %v1835
        %v3177 = vunpack.c.l.b16 %v1836
        %v3178 = vunpack.c.h.b16 %v1836
        %v3179 = vunpack.c.l.b16 %v1837
        %v3180 = vunpack.c.h.b16 %v1837
        %v3181 = vunpack.c.l.b16 %v1838
        %v3182 = vunpack.c.h.b16 %v1838
        %v3183 = vunpack.c.l.b16 %v1839
        %v3184 = vunpack.c.h.b16 %v1839
        %v3185 = vunpack.c.l.b16 %v1840
        %v3186 = vunpack.c.h.b16 %v1840
        %v3187 = vunpack.c.l.b16 %v1841
        %v3188 = vunpack.c.h.b16 %v1841
        %v3189 = vunpack.c.l.b16 %v1842
        %v3190 = vunpack.c.h.b16 %v1842
        %v3191 = vunpack.c.l.b16 %v1843
        %v3192 = vunpack.c.h.b16 %v1843
        %v3193 = vunpack.c.l.b16 %v1844
        %v3194 = vunpack.c.h.b16 %v1844
        %v3195 = vunpack.c.l.b16 %v1845
        %v3196 = vunpack.c.h.b16 %v1845
        %v3197 = vunpack.c.l.b16 %v1846
        %v3198 = vunpack.c.h.b16 %v1846
        %v3199 = vunpack.c.l.b16 %v1847
        %v3200 = vunpack.c.h.b16 %v1847
        %v3201 = vunpack.c.l.b16 %v1848
        %v3202 = vunpack.c.h.b16 %v1848
        %v3203 = vunpack.c.l.b16 %v1849
        %v3204 = vunpack.c.h.b16 %v1849
        %v3205 = vunpack.c.l.b16 %v1850
        %v3206 = vunpack.c.h.b16 %v1850
        %v3207 = vunpack.c.l.b16 %v1851
        %v3208 = vunpack.c.h.b16 %v1851
        %v3209 = vunpack.c.l.b16 %v1852
        %v3210 = vunpack.c.h.b16 %v1852
        %v3211 = vunpack.c.l.b16 %v1853
        %v3212 = vunpack.c.h.b16 %v1853
        %v3213 = vunpack.c.l.b16 %v1854
        %v3214 = vunpack.c.h.b16 %v1854
        %v3215 = vunpack.c.l.b16 %v1855
        %v3216 = vunpack.c.h.b16 %v1855
        %v3217 = vunpack.c.l.b16 %v1856
        %v3218 = vunpack.c.h.b16 %v1856
        %v3219 = vunpack.c.l.b16 %v1857
        %v3220 = vunpack.c.h.b16 %v1857
        %v3221 = vunpack.c.l.b16 %v1858
        %v3222 = vunpack.c.h.b16 %v1858
        %v3223 = vunpack.c.l.b16 %v1859
        %v3224 = vunpack.c.h.b16 %v1859
        %v3225 = vunpack.c.l.b16 %v1860
        %v3226 = vunpack.c.h.b16 %v1860
        %v3227 = vunpack.c.l.b16 %v1861
        %v3228 = vunpack.c.h.b16 %v1861
        %v3229 = vunpack.c.l.b16 %v1862
        %v3230 = vunpack.c.h.b16 %v1862
        %v3231 = vunpack.c.l.b16 %v1863
        %v3232 = vunpack.c.h.b16 %v1863
        %v3233 = vunpack.c.l.b16 %v1864
        %v3234 = vunpack.c.h.b16 %v1864
        %v3235 = vunpack.c.l.b16 %v1865
        %v3236 = vunpack.c.h.b16 %v1865
        %v3237 = vunpack.c.l.b16 %v1866
        %v3238 = vunpack.c.h.b16 %v1866
        %v3239 = vunpack.c.l.b16 %v1867
        %v3240 = vunpack.c.h.b16 %v1867
        %v3241 = vunpack.c.l.b16 %v1868
        %v3242 = vunpack.c.h.b16 %v1868
        %v3243 = vunpack.c.l.b16 %v1869
        %v3244 = vunpack.c.h.b16 %v1869
        %v3245 = vunpack.c.l.b16 %v1870
        %v3246 = vunpack.c.h.b16 %v1870
        %v3247 = vunpack.c.l.b16 %v1871
        %v3248 = vunpack.c.h.b16 %v1871
        %v3249 = vunpack.c.l.b16 %v1872
        %v3250 = vunpack.c.h.b16 %v1872
        %v3251 = vunpack.c.l.b16 %v1873
        %v3252 = vunpack.c.h.b16 %v1873
        %v3253 = vunpack.c.l.b16 %v1874
        %v3254 = vunpack.c.h.b16 %v1874
        %v3255 = vunpack.c.l.b16 %v1875
        %v3256 = vunpack.c.h.b16 %v1875
        %v3257 = vunpack.c.l.b16 %v1876
        %v3258 = vunpack.c.h.b16 %v1876
        %v3259 = vunpack.c.l.b16 %v1877
        %v3260 = vunpack.c.h.b16 %v1877
        %v3261 = vunpack.c.l.b16 %v1878
        %v3262 = vunpack.c.h.b16 %v1878
        %v3263 = vunpack.c.l.b16 %v1879
        %v3264 = vunpack.c.h.b16 %v1879
        %v3265 = vunpack.c.l.b16 %v1880
        %v3266 = vunpack.c.h.b16 %v1880
        %v3267 = vunpack.c.l.b16 %v1881
        %v3268 = vunpack.c.h.b16 %v1881
        %v3269 = vunpack.c.l.b16 %v1882
        %v3270 = vunpack.c.h.b16 %v1882
        %v3271 = vunpack.c.l.b16 %v1883
        %v3272 = vunpack.c.h.b16 %v1883
        %v3273 = vunpack.c.l.b16 %v1884
        %v3274 = vunpack.c.h.b16 %v1884
        %v3275 = vunpack.c.l.b16 %v1885
        %v3276 = vunpack.c.h.b16 %v1885
        %v3277 = vunpack.c.l.b16 %v1886
        %v3278 = vunpack.c.h.b16 %v1886
        %v3279 = vunpack.c.l.b16 %v1887
        %v3280 = vunpack.c.h.b16 %v1887
        %v3281 = vunpack.c.l.b16 %v1888
        %v3282 = vunpack.c.h.b16 %v1888
        %v3283 = vunpack.c.l.b16 %v1889
        %v3284 = vunpack.c.h.b16 %v1889
        %v3285 = vunpack.c.l.b16 %v1890
        %v3286 = vunpack.c.h.b16 %v1890
        %v3287 = vunpack.c.l.b16 %v1891
        %v3288 = vunpack.c.h.b16 %v1891
        %v3289 = vunpack.c.l.b16 %v1892
        %v3290 = vunpack.c.h.b16 %v1892
        %v3291 = vunpack.c.l.b16 %v1893
        %v3292 = vunpack.c.h.b16 %v1893
        %v3293 = vunpack.c.l.b16 %v1894
        %v3294 = vunpack.c.h.b16 %v1894
        %v3295 = vunpack.c.l.b16 %v1895
        %v3296 = vunpack.c.h.b16 %v1895
        %v3297 = vunpack.c.l.b16 %v1896
        %v3298 = vunpack.c.h.b16 %v1896
        %v3299 = vunpack.c.l.b16 %v1897
        %v3300 = vunpack.c.h.b16 %v1897
        %v3301 = vunpack.c.l.b16 %v1898
        %v3302 = vunpack.c.h.b16 %v1898
        %v3303 = vunpack.c.l.b16 %v1899
        %v3304 = vunpack.c.h.b16 %v1899
        %v3305 = vunpack.c.l.b16 %v1900
        %v3306 = vunpack.c.h.b16 %v1900
        %v3307 = vunpack.c.l.b16 %v1901
        %v3308 = vunpack.c.h.b16 %v1901
        %v3309 = vunpack.c.l.b16 %v1902
        %v3310 = vunpack.c.h.b16 %v1902
        %v3311 = vunpack.c.l.b16 %v1903
        %v3312 = vunpack.c.h.b16 %v1903
        %v3313 = vunpack.c.l.b16 %v1904
        %v3314 = vunpack.c.h.b16 %v1904
        %v3315 = vunpack.c.l.b16 %v1905
        %v3316 = vunpack.c.h.b16 %v1905
        %v3317 = vunpack.c.l.b16 %v1906
        %v3318 = vunpack.c.h.b16 %v1906
        %v3319 = vunpack.c.l.b16 %v1907
        %v3320 = vunpack.c.h.b16 %v1907
        %v3321 = vunpack.c.l.b16 %v1908
        %v3322 = vunpack.c.h.b16 %v1908
        %v3323 = vunpack.c.l.b16 %v1909
        %v3324 = vunpack.c.h.b16 %v1909
        %v3325 = vunpack.c.l.b16 %v1910
        %v3326 = vunpack.c.h.b16 %v1910
        %v3327 = vunpack.c.l.b16 %v1911
        %v3328 = vunpack.c.h.b16 %v1911
        %v3329 = vunpack.c.l.b16 %v1912
        %v3330 = vunpack.c.h.b16 %v1912
        %v3331 = vunpack.c.l.b16 %v1913
        %v3332 = vunpack.c.h.b16 %v1913
        %v3333 = vunpack.c.l.b16 %v1914
        %v3334 = vunpack.c.h.b16 %v1914
        %v3335 = vunpack.c.l.b16 %v1915
        %v3336 = vunpack.c.h.b16 %v1915
        %v3337 = vunpack.c.l.b16 %v1916
        %v3338 = vunpack.c.h.b16 %v1916
        %v3339 = vunpack.c.l.b16 %v1917
        %v3340 = vunpack.c.h.b16 %v1917
        %v3341 = vunpack.c.l.b16 %v1918
        %v3342 = vunpack.c.h.b16 %v1918
        %v3343 = vunpack.c.l.b16 %v1919
        %v3344 = vunpack.c.h.b16 %v1919
        %v3345 = vunpack.c.l.b16 %v1920
        %v3346 = vunpack.c.h.b16 %v1920
        %v3347 = vunpack.c.l.b16 %v1921
        %v3348 = vunpack.c.h.b16 %v1921
        %v3349 = vunpack.c.l.b16 %v1922
        %v3350 = vunpack.c.h.b16 %v1922
        %v3351 = vunpack.c.l.b16 %v1923
        %v3352 = vunpack.c.h.b16 %v1923
        %v3353 = vunpack.c.l.b16 %v1924
        %v3354 = vunpack.c.h.b16 %v1924
        %v3355 = vunpack.c.l.b16 %v1925
        %v3356 = vunpack.c.h.b16 %v1925
        %v3357 = vunpack.c.l.b16 %v1926
        %v3358 = vunpack.c.h.b16 %v1926
        %v3359 = vunpack.c.l.b16 %v1927
        %v3360 = vunpack.c.h.b16 %v1927
        %v3361 = vunpack.c.l.b16 %v1928
        %v3362 = vunpack.c.h.b16 %v1928
        %v3363 = vunpack.c.l.b16 %v1929
        %v3364 = vunpack.c.h.b16 %v1929
        %v3365 = vunpack.c.l.b16 %v1930
        %v3366 = vunpack.c.h.b16 %v1930
        %v3367 = vunpack.c.l.b16 %v1931
        %v3368 = vunpack.c.h.b16 %v1931
        %v3369 = vunpack.c.l.b16 %v1932
        %v3370 = vunpack.c.h.b16 %v1932
        %v3371 = vunpack.c.l.b16 %v1933
        %v3372 = vunpack.c.h.b16 %v1933
        %v3373 = vunpack.c.l.b16 %v1934
        %v3374 = vunpack.c.h.b16 %v1934
        %v3375 = vunpack.c.l.b16 %v1935
        %v3376 = vunpack.c.h.b16 %v1935
        %v3377 = vunpack.c.l.b16 %v1936
        %v3378 = vunpack.c.h.b16 %v1936
        %v3379 = vunpack.c.l.b16 %v1937
        %v3380 = vunpack.c.h.b16 %v1937
        %v3381 = vunpack.c.l.b16 %v1938
        %v3382 = vunpack.c.h.b16 %v1938
        %v3383 = vunpack.c.l.b16 %v1939
        %v3384 = vunpack.c.h.b16 %v1939
        %v3385 = vunpack.c.l.b16 %v1940
        %v3386 = vunpack.c.h.b16 %v1940
        %v3387 = vunpack.c.l.b16 %v1941
        %v3388 = vunpack.c.h.b16 %v1941
        %v3389 = vunpack.c.l.b16 %v1942
        %v3390 = vunpack.c.h.b16 %v1942
        %v3391 = vunpack.c.l.b16 %v1943
        %v3392 = vunpack.c.h.b16 %v1943
        %v3393 = vunpack.c.l.b16 %v1944
        %v3394 = vunpack.c.h.b16 %v1944
        %v3395 = vunpack.c.l.b16 %v1945
        %v3396 = vunpack.c.h.b16 %v1945
        %v3397 = vunpack.c.l.b16 %v1946
        %v3398 = vunpack.c.h.b16 %v1946
        %v3399 = vunpack.c.l.b16 %v1947
        %v3400 = vunpack.c.h.b16 %v1947
        %v3401 = vunpack.c.l.b16 %v1948
        %v3402 = vunpack.c.h.b16 %v1948
        %v3403 = vunpack.c.l.b16 %v1949
        %v3404 = vunpack.c.h.b16 %v1949
        %v3405 = vunpack.c.l.b16 %v1950
        %v3406 = vunpack.c.h.b16 %v1950
        %v3407 = vunpack.c.l.b16 %v1951
        %v3408 = vunpack.c.h.b16 %v1951
        %v3409 = vunpack.c.l.b16 %v1952
        %v3410 = vunpack.c.h.b16 %v1952
        %v3411 = vunpack.c.l.b16 %v1953
        %v3412 = vunpack.c.h.b16 %v1953
        %v3413 = vunpack.c.l.b16 %v1954
        %v3414 = vunpack.c.h.b16 %v1954
        %v3415 = vunpack.c.l.b16 %v1955
        %v3416 = vunpack.c.h.b16 %v1955
        %v3417 = vunpack.c.l.b16 %v1956
        %v3418 = vunpack.c.h.b16 %v1956
        %v3419 = vunpack.c.l.b16 %v1957
        %v3420 = vunpack.c.h.b16 %v1957
        %v3421 = vunpack.c.l.b16 %v1958
        %v3422 = vunpack.c.h.b16 %v1958
        %v3423 = vunpack.c.l.b16 %v1959
        %v3424 = vunpack.c.h.b16 %v1959
        %v3425 = vunpack.c.l.b16 %v1960
        %v3426 = vunpack.c.h.b16 %v1960
        %v3427 = vunpack.c.l.b16 %v1961
        %v3428 = vunpack.c.h.b16 %v1961
        %v3429 = vunpack.c.l.b16 %v1962
        %v3430 = vunpack.c.h.b16 %v1962
        %v3431 = vunpack.c.l.b16 %v1963
        %v3432 = vunpack.c.h.b16 %v1963
        %v3433 = vunpack.c.l.b16 %v1964
        %v3434 = vunpack.c.h.b16 %v1964
        %v3435 = vunpack.c.l.b16 %v1965
        %v3436 = vunpack.c.h.b16 %v1965
        %v3437 = vunpack.c.l.b16 %v1966
        %v3438 = vunpack.c.h.b16 %v1966
        %v3439 = vunpack.c.l.b16 %v1967
        %v3440 = vunpack.c.h.b16 %v1967
        %v3441 = vunpack.c.l.b16 %v1968
        %v3442 = vunpack.c.h.b16 %v1968
        %v3443 = vunpack.c.l.b16 %v1969
        %v3444 = vunpack.c.h.b16 %v1969
        %v3445 = vunpack.c.l.b16 %v1970
        %v3446 = vunpack.c.h.b16 %v1970
        %v3447 = vunpack.c.l.b16 %v1971
        %v3448 = vunpack.c.h.b16 %v1971
        %v3449 = vunpack.c.l.b16 %v1972
        %v3450 = vunpack.c.h.b16 %v1972
        %v3451 = vunpack.c.l.b16 %v1973
        %v3452 = vunpack.c.h.b16 %v1973
        %v3453 = vunpack.c.l.b16 %v1974
        %v3454 = vunpack.c.h.b16 %v1974
        %v3455 = vunpack.c.l.b16 %v1975
        %v3456 = vunpack.c.h.b16 %v1975
        %v3457 = vunpack.c.l.b16 %v1976
        %v3458 = vunpack.c.h.b16 %v1976
        %v3459 = vunpack.c.l.b16 %v1977
        %v3460 = vunpack.c.h.b16 %v1977
        %v3461 = vunpack.c.l.b16 %v1978
        %v3462 = vunpack.c.h.b16 %v1978
        %v3463 = vunpack.c.l.b16 %v1979
        %v3464 = vunpack.c.h.b16 %v1979
        %v3465 = vunpack.c.l.b16 %v1980
        %v3466 = vunpack.c.h.b16 %v1980
        %v3467 = vunpack.c.l.b16 %v1981
        %v3468 = vunpack.c.h.b16 %v1981
        %v3469 = vunpack.c.l.b16 %v1982
        %v3470 = vunpack.c.h.b16 %v1982
        %v3471 = vunpack.c.l.b16 %v1983
        %v3472 = vunpack.c.h.b16 %v1983
        %v3473 = vunpack.c.l.b16 %v1984
        %v3474 = vunpack.c.h.b16 %v1984
        %v3475 = vunpack.c.l.b16 %v1985
        %v3476 = vunpack.c.h.b16 %v1985
        %v3477 = vunpack.c.l.b16 %v1986
        %v3478 = vunpack.c.h.b16 %v1986
        %v3479 = vunpack.c.l.b16 %v1987
        %v3480 = vunpack.c.h.b16 %v1987
        %v3481 = vunpack.c.l.b16 %v1988
        %v3482 = vunpack.c.h.b16 %v1988
        %v3483 = vunpack.c.l.b16 %v1989
        %v3484 = vunpack.c.h.b16 %v1989
        %v3485 = vunpack.c.l.b16 %v1990
        %v3486 = vunpack.c.h.b16 %v1990
        %v3487 = vunpack.c.l.b16 %v1991
        %v3488 = vunpack.c.h.b16 %v1991
        %v3489 = vunpack.c.l.b16 %v1992
        %v3490 = vunpack.c.h.b16 %v1992
        %v3491 = vunpack.c.l.b16 %v1993
        %v3492 = vunpack.c.h.b16 %v1993
        %v3493 = vunpack.c.l.b16 %v1994
        %v3494 = vunpack.c.h.b16 %v1994
        %v3495 = vunpack.c.l.b16 %v1995
        %v3496 = vunpack.c.h.b16 %v1995
        %v3497 = vunpack.c.l.b16 %v1996
        %v3498 = vunpack.c.h.b16 %v1996
        %v3499 = vunpack.c.l.b16 %v1997
        %v3500 = vunpack.c.h.b16 %v1997
        %v3501 = vunpack.c.l.b16 %v1998
        %v3502 = vunpack.c.h.b16 %v1998
        %v3503 = vunpack.c.l.b16 %v1999
        %v3504 = vunpack.c.h.b16 %v1999
        %v3505 = vunpack.c.l.b16 %v2000
        %v3506 = vunpack.c.h.b16 %v2000
        %v3507 = vunpack.c.l.b16 %v2001
        %v3508 = vunpack.c.h.b16 %v2001
        %v3509 = vunpack.c.l.b16 %v2002
        %v3510 = vunpack.c.h.b16 %v2002
        %v3511 = vunpack.c.l.b16 %v2003
        %v3512 = vunpack.c.h.b16 %v2003
        %v3513 = vunpack.c.l.b16 %v2004
        %v3514 = vunpack.c.h.b16 %v2004
        %v3515 = vunpack.c.l.b16 %v2005
        %v3516 = vunpack.c.h.b16 %v2005
        %v3517 = vunpack.c.l.b16 %v2006
        %v3518 = vunpack.c.h.b16 %v2006
        %v3519 = vunpack.c.l.b16 %v2007
        %v3520 = vunpack.c.h.b16 %v2007
        %v3521 = vunpack.c.l.b16 %v2008
        %v3522 = vunpack.c.h.b16 %v2008
        %v3523 = vunpack.c.l.b16 %v2009
        %v3524 = vunpack.c.h.b16 %v2009
        %v3525 = vunpack.c.l.b16 %v2010
        %v3526 = vunpack.c.h.b16 %v2010
        %v3527 = vunpack.c.l.b16 %v2011
        %v3528 = vunpack.c.h.b16 %v2011
        %v3529 = vunpack.c.l.b16 %v2012
        %v3530 = vunpack.c.h.b16 %v2012
        %v3531 = vunpack.c.l.b16 %v2013
        %v3532 = vunpack.c.h.b16 %v2013
        %v3533 = vunpack.c.l.b16 %v2014
        %v3534 = vunpack.c.h.b16 %v2014
        %v3535 = vunpack.c.l.b16 %v2015
        %v3536 = vunpack.c.h.b16 %v2015
        %v3537 = vunpack.c.l.b16 %v2016
        %v3538 = vunpack.c.h.b16 %v2016
        %v3539 = vunpack.c.l.b16 %v2017
        %v3540 = vunpack.c.h.b16 %v2017
        %v3541 = vunpack.c.l.b16 %v2018
        %v3542 = vunpack.c.h.b16 %v2018
        %v3543 = vunpack.c.l.b16 %v2019
        %v3544 = vunpack.c.h.b16 %v2019
        %v3545 = vunpack.c.l.b16 %v2020
        %v3546 = vunpack.c.h.b16 %v2020
        %v3547 = vunpack.c.l.b16 %v2021
        %v3548 = vunpack.c.h.b16 %v2021
        %v3549 = vunpack.c.l.b16 %v2022
        %v3550 = vunpack.c.h.b16 %v2022
        %v3551 = vunpack.c.l.b16 %v2023
        %v3552 = vunpack.c.h.b16 %v2023
        %v3553 = vunpack.c.l.b16 %v2024
        %v3554 = vunpack.c.h.b16 %v2024
        %v3555 = vunpack.c.l.b16 %v2025
        %v3556 = vunpack.c.h.b16 %v2025
        %v3557 = vunpack.c.l.b16 %v2026
        %v3558 = vunpack.c.h.b16 %v2026
        %v3559 = vunpack.c.l.b16 %v2027
        %v3560 = vunpack.c.h.b16 %v2027
        %v3561 = vunpack.c.l.b16 %v2028
        %v3562 = vunpack.c.h.b16 %v2028
        %v3563 = vunpack.c.l.b16 %v2029
        %v3564 = vunpack.c.h.b16 %v2029
        %v3565 = vunpack.c.l.b16 %v2030
        %v3566 = vunpack.c.h.b16 %v2030
        %v3567 = vpack.c.b16 %v2551, %v2543
        %v3568 = vpack.c.b16 %v2552, %v2544
        %v3569 = vpack.c.b16 %v2553, %v2545
        %v3570 = vpack.c.b16 %v2554, %v2546
        %v3571 = vpack.c.b16 %v2555, %v2547
        %v3572 = vpack.c.b16 %v2556, %v2548
        %v3573 = vpack.c.b16 %v2557, %v2549
        %v3574 = vpack.c.b16 %v2558, %v2550
        %v3575 = vpack.c.b16 %v2567, %v2559
        %v3576 = vpack.c.b16 %v2568, %v2560
        %v3577 = vpack.c.b16 %v2569, %v2561
        %v3578 = vpack.c.b16 %v2570, %v2562
        %v3579 = vpack.c.b16 %v2571, %v2563
        %v3580 = vpack.c.b16 %v2572, %v2564
        %v3581 = vpack.c.b16 %v2573, %v2565
        %v3582 = vpack.c.b16 %v2574, %v2566
        %v3583 = vpack.c.b16 %v2583, %v2575
        %v3584 = vpack.c.b16 %v2584, %v2576
        %v3585 = vpack.c.b16 %v2585, %v2577
        %v3586 = vpack.c.b16 %v2586, %v2578
        %v3587 = vpack.c.b16 %v2587, %v2579
        %v3588 = vpack.c.b16 %v2588, %v2580
        %v3589 = vpack.c.b16 %v2589, %v2581
        %v3590 = vpack.c.b16 %v2590, %v2582
        %v3591 = vpack.c.b16 %v2599, %v2591
        %v3592 = vpack.c.b16 %v2600, %v2592
        %v3593 = vpack.c.b16 %v2601, %v2593
        %v3594 = vpack.c.b16 %v2602, %v2594
        %v3595 = vpack.c.b16 %v2603, %v2595
        %v3596 = vpack.c.b16 %v2604, %v2596
        %v3597 = vpack.c.b16 %v2605, %v2597
        %v3598 = vpack.c.b16 %v2606, %v2598
        %v3599 = vpack.c.b16 %v2615, %v2607
        %v3600 = vpack.c.b16 %v2616, %v2608
        %v3601 = vpack.c.b16 %v2617, %v2609
        %v3602 = vpack.c.b16 %v2618, %v2610
        %v3603 = vpack.c.b16 %v2619, %v2611
        %v3604 = vpack.c.b16 %v2620, %v2612
        %v3605 = vpack.c.b16 %v2621, %v2613
        %v3606 = vpack.c.b16 %v2622, %v2614
        %v3607 = vpack.c.b16 %v2631, %v2623
        %v3608 = vpack.c.b16 %v2632, %v2624
        %v3609 = vpack.c.b16 %v2633, %v2625
        %v3610 = vpack.c.b16 %v2634, %v2626
        %v3611 = vpack.c.b16 %v2635, %v2627
        %v3612 = vpack.c.b16 %v2636, %v2628
        %v3613 = vpack.c.b16 %v2637, %v2629
        %v3614 = vpack.c.b16 %v2638, %v2630
        %v3615 = vpack.c.b16 %v2647, %v2639
        %v3616 = vpack.c.b16 %v2648, %v2640
        %v3617 = vpack.c.b16 %v2649, %v2641
        %v3618 = vpack.c.b16 %v2650, %v2642
        %v3619 = vpack.c.b16 %v2651, %v2643
        %v3620 = vpack.c.b16 %v2652, %v2644
        %v3621 = vpack.c.b16 %v2653, %v2645
        %v3622 = vpack.c.b16 %v2654, %v2646
        %v3623 = vpack.c.b16 %v2663, %v2655
        %v3624 = vpack.c.b16 %v2664, %v2656
        %v3625 = vpack.c.b16 %v2665, %v2657
        %v3626 = vpack.c.b16 %v2666, %v2658
        %v3627 = vpack.c.b16 %v2667, %v2659
        %v3628 = vpack.c.b16 %v2668, %v2660
        %v3629 = vpack.c.b16 %v2669, %v2661
        %v3630 = vpack.c.b16 %v2670, %v2662
        %v3631 = vpack.c.b16 %v2679, %v2671
        %v3632 = vpack.c.b16 %v2680, %v2672
        %v3633 = vpack.c.b16 %v2681, %v2673
        %v3634 = vpack.c.b16 %v2682, %v2674
        %v3635 = vpack.c.b16 %v2683, %v2675
        %v3636 = vpack.c.b16 %v2684, %v2676
        %v3637 = vpack.c.b16 %v2685, %v2677
        %v3638 = vpack.c.b16 %v2686, %v2678
        %v3639 = vpack.c.b16 %v2695, %v2687
        %v3640 = vpack.c.b16 %v2696, %v2688
        %v3641 = vpack.c.b16 %v2697, %v2689
        %v3642 = vpack.c.b16 %v2698, %v2690
        %v3643 = vpack.c.b16 %v2699, %v2691
        %v3644 = vpack.c.b16 %v2700, %v2692
        %v3645 = vpack.c.b16 %v2701, %v2693
        %v3646 = vpack.c.b16 %v2702, %v2694
        %v3647 = vpack.c.b16 %v2711, %v2703
        %v3648 = vpack.c.b16 %v2712, %v2704
        %v3649 = vpack.c.b16 %v2713, %v2705
        %v3650 = vpack.c.b16 %v2714, %v2706
        %v3651 = vpack.c.b16 %v2715, %v2707
        %v3652 = vpack.c.b16 %v2716, %v2708
        %v3653 = vpack.c.b16 %v2717, %v2709
        %v3654 = vpack.c.b16 %v2718, %v2710
        %v3655 = vpack.c.b16 %v2727, %v2719
        %v3656 = vpack.c.b16 %v2728, %v2720
        %v3657 = vpack.c.b16 %v2729, %v2721
        %v3658 = vpack.c.b16 %v2730, %v2722
        %v3659 = vpack.c.b16 %v2731, %v2723
        %v3660 = vpack.c.b16 %v2732, %v2724
        %v3661 = vpack.c.b16 %v2733, %v2725
        %v3662 = vpack.c.b16 %v2734, %v2726
        %v3663 = vpack.c.b16 %v2743, %v2735
        %v3664 = vpack.c.b16 %v2744, %v2736
        %v3665 = vpack.c.b16 %v2745, %v2737
        %v3666 = vpack.c.b16 %v2746, %v2738
        %v3667 = vpack.c.b16 %v2747, %v2739
        %v3668 = vpack.c.b16 %v2748, %v2740
        %v3669 = vpack.c.b16 %v2749, %v2741
        %v3670 = vpack.c.b16 %v2750, %v2742
        %v3671 = vpack.c.b16 %v2759, %v2751
        %v3672 = vpack.c.b16 %v2760, %v2752
        %v3673 = vpack.c.b16 %v2761, %v2753
        %v3674 = vpack.c.b16 %v2762, %v2754
        %v3675 = vpack.c.b16 %v2763, %v2755
        %v3676 = vpack.c.b16 %v2764, %v2756
        %v3677 = vpack.c.b16 %v2765, %v2757
        %v3678 = vpack.c.b16 %v2766, %v2758
        %v3679 = vpack.c.b16 %v2775, %v2767
        %v3680 = vpack.c.b16 %v2776, %v2768
        %v3681 = vpack.c.b16 %v2777, %v2769
        %v3682 = vpack.c.b16 %v2778, %v2770
        %v3683 = vpack.c.b16 %v2779, %v2771
        %v3684 = vpack.c.b16 %v2780, %v2772
        %v3685 = vpack.c.b16 %v2781, %v2773
        %v3686 = vpack.c.b16 %v2782, %v2774
        %v3687 = vpack.c.b16 %v2791, %v2783
        %v3688 = vpack.c.b16 %v2792, %v2784
        %v3689 = vpack.c.b16 %v2793, %v2785
        %v3690 = vpack.c.b16 %v2794, %v2786
        %v3691 = vpack.c.b16 %v2795, %v2787
        %v3692 = vpack.c.b16 %v2796, %v2788
        %v3693 = vpack.c.b16 %v2797, %v2789
        %v3694 = vpack.c.b16 %v2798, %v2790
        %v3695 = vpack.c.b16 %v2807, %v2799
        %v3696 = vpack.c.b16 %v2808, %v2800
        %v3697 = vpack.c.b16 %v2809, %v2801
        %v3698 = vpack.c.b16 %v2810, %v2802
        %v3699 = vpack.c.b16 %v2811, %v2803
        %v3700 = vpack.c.b16 %v2812, %v2804
        %v3701 = vpack.c.b16 %v2813, %v2805
        %v3702 = vpack.c.b16 %v2814, %v2806
        %v3703 = vpack.c.b16 %v2823, %v2815
        %v3704 = vpack.c.b16 %v2824, %v2816
        %v3705 = vpack.c.b16 %v2825, %v2817
        %v3706 = vpack.c.b16 %v2826, %v2818
        %v3707 = vpack.c.b16 %v2827, %v2819
        %v3708 = vpack.c.b16 %v2828, %v2820
        %v3709 = vpack.c.b16 %v2829, %v2821
        %v3710 = vpack.c.b16 %v2830, %v2822
        %v3711 = vpack.c.b16 %v2839, %v2831
        %v3712 = vpack.c.b16 %v2840, %v2832
        %v3713 = vpack.c.b16 %v2841, %v2833
        %v3714 = vpack.c.b16 %v2842, %v2834
        %v3715 = vpack.c.b16 %v2843, %v2835
        %v3716 = vpack.c.b16 %v2844, %v2836
        %v3717 = vpack.c.b16 %v2845, %v2837
        %v3718 = vpack.c.b16 %v2846, %v2838
        %v3719 = vpack.c.b16 %v2855, %v2847
        %v3720 = vpack.c.b16 %v2856, %v2848
        %v3721 = vpack.c.b16 %v2857, %v2849
        %v3722 = vpack.c.b16 %v2858, %v2850
        %v3723 = vpack.c.b16 %v2859, %v2851
        %v3724 = vpack.c.b16 %v2860, %v2852
        %v3725 = vpack.c.b16 %v2861, %v2853
        %v3726 = vpack.c.b16 %v2862, %v2854
        %v3727 = vpack.c.b16 %v2871, %v2863
        %v3728 = vpack.c.b16 %v2872, %v2864
        %v3729 = vpack.c.b16 %v2873, %v2865
        %v3730 = vpack.c.b16 %v2874, %v2866
        %v3731 = vpack.c.b16 %v2875, %v2867
        %v3732 = vpack.c.b16 %v2876, %v2868
        %v3733 = vpack.c.b16 %v2877, %v2869
        %v3734 = vpack.c.b16 %v2878, %v2870
        %v3735 = vpack.c.b16 %v2887, %v2879
        %v3736 = vpack.c.b16 %v2888, %v2880
        %v3737 = vpack.c.b16 %v2889, %v2881
        %v3738 = vpack.c.b16 %v2890, %v2882
        %v3739 = vpack.c.b16 %v2891, %v2883
        %v3740 = vpack.c.b16 %v2892, %v2884
        %v3741 = vpack.c.b16 %v2893, %v2885
        %v3742 = vpack.c.b16 %v2894, %v2886
        %v3743 = vpack.c.b16 %v2903, %v2895
        %v3744 = vpack.c.b16 %v2904, %v2896
        %v3745 = vpack.c.b16 %v2905, %v2897
        %v3746 = vpack.c.b16 %v2906, %v2898
        %v3747 = vpack.c.b16 %v2907, %v2899
        %v3748 = vpack.c.b16 %v2908, %v2900
        %v3749 = vpack.c.b16 %v2909, %v2901
        %v3750 = vpack.c.b16 %v2910, %v2902
        %v3751 = vpack.c.b16 %v2919, %v2911
        %v3752 = vpack.c.b16 %v2920, %v2912
        %v3753 = vpack.c.b16 %v2921, %v2913
        %v3754 = vpack.c.b16 %v2922, %v2914
        %v3755 = vpack.c.b16 %v2923, %v2915
        %v3756 = vpack.c.b16 %v2924, %v2916
        %v3757 = vpack.c.b16 %v2925, %v2917
        %v3758 = vpack.c.b16 %v2926, %v2918
        %v3759 = vpack.c.b16 %v2935, %v2927
        %v3760 = vpack.c.b16 %v2936, %v2928
        %v3761 = vpack.c.b16 %v2937, %v2929
        %v3762 = vpack.c.b16 %v2938, %v2930
        %v3763 = vpack.c.b16 %v2939, %v2931
        %v3764 = vpack.c.b16 %v2940, %v2932
        %v3765 = vpack.c.b16 %v2941, %v2933
        %v3766 = vpack.c.b16 %v2942, %v2934
        %v3767 = vpack.c.b16 %v2951, %v2943
        %v3768 = vpack.c.b16 %v2952, %v2944
        %v3769 = vpack.c.b16 %v2953, %v2945
        %v3770 = vpack.c.b16 %v2954, %v2946
        %v3771 = vpack.c.b16 %v2955, %v2947
        %v3772 = vpack.c.b16 %v2956, %v2948
        %v3773 = vpack.c.b16 %v2957, %v2949
        %v3774 = vpack.c.b16 %v2958, %v2950
        %v3775 = vpack.c.b16 %v2967, %v2959
        %v3776 = vpack.c.b16 %v2968, %v2960
        %v3777 = vpack.c.b16 %v2969, %v2961
        %v3778 = vpack.c.b16 %v2970, %v2962
        %v3779 = vpack.c.b16 %v2971, %v2963
        %v3780 = vpack.c.b16 %v2972, %v2964
        %v3781 = vpack.c.b16 %v2973, %v2965
        %v3782 = vpack.c.b16 %v2974, %v2966
        %v3783 = vpack.c.b16 %v2983, %v2975
        %v3784 = vpack.c.b16 %v2984, %v2976
        %v3785 = vpack.c.b16 %v2985, %v2977
        %v3786 = vpack.c.b16 %v2986, %v2978
        %v3787 = vpack.c.b16 %v2987, %v2979
        %v3788 = vpack.c.b16 %v2988, %v2980
        %v3789 = vpack.c.b16 %v2989, %v2981
        %v3790 = vpack.c.b16 %v2990, %v2982
        %v3791 = vpack.c.b16 %v2999, %v2991
        %v3792 = vpack.c.b16 %v3000, %v2992
        %v3793 = vpack.c.b16 %v3001, %v2993
        %v3794 = vpack.c.b16 %v3002, %v2994
        %v3795 = vpack.c.b16 %v3003, %v2995
        %v3796 = vpack.c.b16 %v3004, %v2996
        %v3797 = vpack.c.b16 %v3005, %v2997
        %v3798 = vpack.c.b16 %v3006, %v2998
        %v3799 = vpack.c.b16 %v3015, %v3007
        %v3800 = vpack.c.b16 %v3016, %v3008
        %v3801 = vpack.c.b16 %v3017, %v3009
        %v3802 = vpack.c.b16 %v3018, %v3010
        %v3803 = vpack.c.b16 %v3019, %v3011
        %v3804 = vpack.c.b16 %v3020, %v3012
        %v3805 = vpack.c.b16 %v3021, %v3013
        %v3806 = vpack.c.b16 %v3022, %v3014
        %v3807 = vpack.c.b16 %v3031, %v3023
        %v3808 = vpack.c.b16 %v3032, %v3024
        %v3809 = vpack.c.b16 %v3033, %v3025
        %v3810 = vpack.c.b16 %v3034, %v3026
        %v3811 = vpack.c.b16 %v3035, %v3027
        %v3812 = vpack.c.b16 %v3036, %v3028
        %v3813 = vpack.c.b16 %v3037, %v3029
        %v3814 = vpack.c.b16 %v3038, %v3030
        %v3815 = vpack.c.b16 %v3047, %v3039
        %v3816 = vpack.c.b16 %v3048, %v3040
        %v3817 = vpack.c.b16 %v3049, %v3041
        %v3818 = vpack.c.b16 %v3050, %v3042
        %v3819 = vpack.c.b16 %v3051, %v3043
        %v3820 = vpack.c.b16 %v3052, %v3044
        %v3821 = vpack.c.b16 %v3053, %v3045
        %v3822 = vpack.c.b16 %v3054, %v3046
        %v3823 = vpack.c.b16 %v3063, %v3055
        %v3824 = vpack.c.b16 %v3064, %v3056
        %v3825 = vpack.c.b16 %v3065, %v3057
        %v3826 = vpack.c.b16 %v3066, %v3058
        %v3827 = vpack.c.b16 %v3067, %v3059
        %v3828 = vpack.c.b16 %v3068, %v3060
        %v3829 = vpack.c.b16 %v3069, %v3061
        %v3830 = vpack.c.b16 %v3070, %v3062
        %v3831 = vpack.c.b16 %v3079, %v3071
        %v3832 = vpack.c.b16 %v3080, %v3072
        %v3833 = vpack.c.b16 %v3081, %v3073
        %v3834 = vpack.c.b16 %v3082, %v3074
        %v3835 = vpack.c.b16 %v3083, %v3075
        %v3836 = vpack.c.b16 %v3084, %v3076
        %v3837 = vpack.c.b16 %v3085, %v3077
        %v3838 = vpack.c.b16 %v3086, %v3078
        %v3839 = vpack.c.b16 %v3095, %v3087
        %v3840 = vpack.c.b16 %v3096, %v3088
        %v3841 = vpack.c.b16 %v3097, %v3089
        %v3842 = vpack.c.b16 %v3098, %v3090
        %v3843 = vpack.c.b16 %v3099, %v3091
        %v3844 = vpack.c.b16 %v3100, %v3092
        %v3845 = vpack.c.b16 %v3101, %v3093
        %v3846 = vpack.c.b16 %v3102, %v3094
        %v3847 = vpack.c.b16 %v3111, %v3103
        %v3848 = vpack.c.b16 %v3112, %v3104
        %v3849 = vpack.c.b16 %v3113, %v3105
        %v3850 = vpack.c.b16 %v3114, %v3106
        %v3851 = vpack.c.b16 %v3115, %v3107
        %v3852 = vpack.c.b16 %v3116, %v3108
        %v3853 = vpack.c.b16 %v3117, %v3109
        %v3854 = vpack.c.b16 %v3118, %v3110
        %v3855 = vpack.c.b16 %v3127, %v3119
        %v3856 = vpack.c.b16 %v3128, %v3120
        %v3857 = vpack.c.b16 %v3129, %v3121
        %v3858 = vpack.c.b16 %v3130, %v3122
        %v3859 = vpack.c.b16 %v3131, %v3123
        %v3860 = vpack.c.b16 %v3132, %v3124
        %v3861 = vpack.c.b16 %v3133, %v3125
        %v3862 = vpack.c.b16 %v3134, %v3126
        %v3863 = vpack.c.b16 %v3143, %v3135
        %v3864 = vpack.c.b16 %v3144, %v3136
        %v3865 = vpack.c.b16 %v3145, %v3137
        %v3866 = vpack.c.b16 %v3146, %v3138
        %v3867 = vpack.c.b16 %v3147, %v3139
        %v3868 = vpack.c.b16 %v3148, %v3140
        %v3869 = vpack.c.b16 %v3149, %v3141
        %v3870 = vpack.c.b16 %v3150, %v3142
        %v3871 = vpack.c.b16 %v3159, %v3151
        %v3872 = vpack.c.b16 %v3160, %v3152
        %v3873 = vpack.c.b16 %v3161, %v3153
        %v3874 = vpack.c.b16 %v3162, %v3154
        %v3875 = vpack.c.b16 %v3163, %v3155
        %v3876 = vpack.c.b16 %v3164, %v3156
        %v3877 = vpack.c.b16 %v3165, %v3157
        %v3878 = vpack.c.b16 %v3166, %v3158
        %v3879 = vpack.c.b16 %v3175, %v3167
        %v3880 = vpack.c.b16 %v3176, %v3168
        %v3881 = vpack.c.b16 %v3177, %v3169
        %v3882 = vpack.c.b16 %v3178, %v3170
        %v3883 = vpack.c.b16 %v3179, %v3171
        %v3884 = vpack.c.b16 %v3180, %v3172
        %v3885 = vpack.c.b16 %v3181, %v3173
        %v3886 = vpack.c.b16 %v3182, %v3174
        %v3887 = vpack.c.b16 %v3191, %v3183
        %v3888 = vpack.c.b16 %v3192, %v3184
        %v3889 = vpack.c.b16 %v3193, %v3185
        %v3890 = vpack.c.b16 %v3194, %v3186
        %v3891 = vpack.c.b16 %v3195, %v3187
        %v3892 = vpack.c.b16 %v3196, %v3188
        %v3893 = vpack.c.b16 %v3197, %v3189
        %v3894 = vpack.c.b16 %v3198, %v3190
        %v3895 = vpack.c.b16 %v3207, %v3199
        %v3896 = vpack.c.b16 %v3208, %v3200
        %v3897 = vpack.c.b16 %v3209, %v3201
        %v3898 = vpack.c.b16 %v3210, %v3202
        %v3899 = vpack.c.b16 %v3211, %v3203
        %v3900 = vpack.c.b16 %v3212, %v3204
        %v3901 = vpack.c.b16 %v3213, %v3205
        %v3902 = vpack.c.b16 %v3214, %v3206
        %v3903 = vpack.c.b16 %v3223, %v3215
        %v3904 = vpack.c.b16 %v3224, %v3216
        %v3905 = vpack.c.b16 %v3225, %v3217
        %v3906 = vpack.c.b16 %v3226, %v3218
        %v3907 = vpack.c.b16 %v3227, %v3219
        %v3908 = vpack.c.b16 %v3228, %v3220
        %v3909 = vpack.c.b16 %v3229, %v3221
        %v3910 = vpack.c.b16 %v3230, %v3222
        %v3911 = vpack.c.b16 %v3239, %v3231
        %v3912 = vpack.c.b16 %v3240, %v3232
        %v3913 = vpack.c.b16 %v3241, %v3233
        %v3914 = vpack.c.b16 %v3242, %v3234
        %v3915 = vpack.c.b16 %v3243, %v3235
        %v3916 = vpack.c.b16 %v3244, %v3236
        %v3917 = vpack.c.b16 %v3245, %v3237
        %v3918 = vpack.c.b16 %v3246, %v3238
        %v3919 = vpack.c.b16 %v3255, %v3247
        %v3920 = vpack.c.b16 %v3256, %v3248
        %v3921 = vpack.c.b16 %v3257, %v3249
        %v3922 = vpack.c.b16 %v3258, %v3250
        %v3923 = vpack.c.b16 %v3259, %v3251
        %v3924 = vpack.c.b16 %v3260, %v3252
        %v3925 = vpack.c.b16 %v3261, %v3253
        %v3926 = vpack.c.b16 %v3262, %v3254
        %v3927 = vpack.c.b16 %v3271, %v3263
        %v3928 = vpack.c.b16 %v3272, %v3264
        %v3929 = vpack.c.b16 %v3273, %v3265
        %v3930 = vpack.c.b16 %v3274, %v3266
        %v3931 = vpack.c.b16 %v3275, %v3267
        %v3932 = vpack.c.b16 %v3276, %v3268
        %v3933 = vpack.c.b16 %v3277, %v3269
        %v3934 = vpack.c.b16 %v3278, %v3270
        %v3935 = vpack.c.b16 %v3287, %v3279
        %v3936 = vpack.c.b16 %v3288, %v3280
        %v3937 = vpack.c.b16 %v3289, %v3281
        %v3938 = vpack.c.b16 %v3290, %v3282
        %v3939 = vpack.c.b16 %v3291, %v3283
        %v3940 = vpack.c.b16 %v3292, %v3284
        %v3941 = vpack.c.b16 %v3293, %v3285
        %v3942 = vpack.c.b16 %v3294, %v3286
        %v3943 = vpack.c.b16 %v3303, %v3295
        %v3944 = vpack.c.b16 %v3304, %v3296
        %v3945 = vpack.c.b16 %v3305, %v3297
        %v3946 = vpack.c.b16 %v3306, %v3298
        %v3947 = vpack.c.b16 %v3307, %v3299
        %v3948 = vpack.c.b16 %v3308, %v3300
        %v3949 = vpack.c.b16 %v3309, %v3301
        %v3950 = vpack.c.b16 %v3310, %v3302
        %v3951 = vpack.c.b16 %v3319, %v3311
        %v3952 = vpack.c.b16 %v3320, %v3312
        %v3953 = vpack.c.b16 %v3321, %v3313
        %v3954 = vpack.c.b16 %v3322, %v3314
        %v3955 = vpack.c.b16 %v3323, %v3315
        %v3956 = vpack.c.b16 %v3324, %v3316
        %v3957 = vpack.c.b16 %v3325, %v3317
        %v3958 = vpack.c.b16 %v3326, %v3318
        %v3959 = vpack.c.b16 %v3335, %v3327
        %v3960 = vpack.c.b16 %v3336, %v3328
        %v3961 = vpack.c.b16 %v3337, %v3329
        %v3962 = vpack.c.b16 %v3338, %v3330
        %v3963 = vpack.c.b16 %v3339, %v3331
        %v3964 = vpack.c.b16 %v3340, %v3332
        %v3965 = vpack.c.b16 %v3341, %v3333
        %v3966 = vpack.c.b16 %v3342, %v3334
        %v3967 = vpack.c.b16 %v3351, %v3343
        %v3968 = vpack.c.b16 %v3352, %v3344
        %v3969 = vpack.c.b16 %v3353, %v3345
        %v3970 = vpack.c.b16 %v3354, %v3346
        %v3971 = vpack.c.b16 %v3355, %v3347
        %v3972 = vpack.c.b16 %v3356, %v3348
        %v3973 = vpack.c.b16 %v3357, %v3349
        %v3974 = vpack.c.b16 %v3358, %v3350
        %v3975 = vpack.c.b16 %v3367, %v3359
        %v3976 = vpack.c.b16 %v3368, %v3360
        %v3977 = vpack.c.b16 %v3369, %v3361
        %v3978 = vpack.c.b16 %v3370, %v3362
        %v3979 = vpack.c.b16 %v3371, %v3363
        %v3980 = vpack.c.b16 %v3372, %v3364
        %v3981 = vpack.c.b16 %v3373, %v3365
        %v3982 = vpack.c.b16 %v3374, %v3366
        %v3983 = vpack.c.b16 %v3383, %v3375
        %v3984 = vpack.c.b16 %v3384, %v3376
        %v3985 = vpack.c.b16 %v3385, %v3377
        %v3986 = vpack.c.b16 %v3386, %v3378
        %v3987 = vpack.c.b16 %v3387, %v3379
        %v3988 = vpack.c.b16 %v3388, %v3380
        %v3989 = vpack.c.b16 %v3389, %v3381
        %v3990 = vpack.c.b16 %v3390, %v3382
        %v3991 = vpack.c.b16 %v3399, %v3391
        %v3992 = vpack.c.b16 %v3400, %v3392
        %v3993 = vpack.c.b16 %v3401, %v3393
        %v3994 = vpack.c.b16 %v3402, %v3394
        %v3995 = vpack.c.b16 %v3403, %v3395
        %v3996 = vpack.c.b16 %v3404, %v3396
        %v3997 = vpack.c.b16 %v3405, %v3397
        %v3998 = vpack.c.b16 %v3406, %v3398
        %v3999 = vpack.c.b16 %v3415, %v3407
        %v4000 = vpack.c.b16 %v3416, %v3408
        %v4001 = vpack.c.b16 %v3417, %v3409
        %v4002 = vpack.c.b16 %v3418, %v3410
        %v4003 = vpack.c.b16 %v3419, %v3411
        %v4004 = vpack.c.b16 %v3420, %v3412
        %v4005 = vpack.c.b16 %v3421, %v3413
        %v4006 = vpack.c.b16 %v3422, %v3414
        %v4007 = vpack.c.b16 %v3431, %v3423
        %v4008 = vpack.c.b16 %v3432, %v3424
        %v4009 = vpack.c.b16 %v3433, %v3425
        %v4010 = vpack.c.b16 %v3434, %v3426
        %v4011 = vpack.c.b16 %v3435, %v3427
        %v4012 = vpack.c.b16 %v3436, %v3428
        %v4013 = vpack.c.b16 %v3437, %v3429
        %v4014 = vpack.c.b16 %v3438, %v3430
        %v4015 = vpack.c.b16 %v3447, %v3439
        %v4016 = vpack.c.b16 %v3448, %v3440
        %v4017 = vpack.c.b16 %v3449, %v3441
        %v4018 = vpack.c.b16 %v3450, %v3442
        %v4019 = vpack.c.b16 %v3451, %v3443
        %v4020 = vpack.c.b16 %v3452, %v3444
        %v4021 = vpack.c.b16 %v3453, %v3445
        %v4022 = vpack.c.b16 %v3454, %v3446
        %v4023 = vpack.c.b16 %v3463, %v3455
        %v4024 = vpack.c.b16 %v3464, %v3456
        %v4025 = vpack.c.b16 %v3465, %v3457
        %v4026 = vpack.c.b16 %v3466, %v3458
        %v4027 = vpack.c.b16 %v3467, %v3459
        %v4028 = vpack.c.b16 %v3468, %v3460
        %v4029 = vpack.c.b16 %v3469, %v3461
        %v4030 = vpack.c.b16 %v3470, %v3462
        %v4031 = vpack.c.b16 %v3479, %v3471
        %v4032 = vpack.c.b16 %v3480, %v3472
        %v4033 = vpack.c.b16 %v3481, %v3473
        %v4034 = vpack.c.b16 %v3482, %v3474
        %v4035 = vpack.c.b16 %v3483, %v3475
        %v4036 = vpack.c.b16 %v3484, %v3476
        %v4037 = vpack.c.b16 %v3485, %v3477
        %v4038 = vpack.c.b16 %v3486, %v3478
        %v4039 = vpack.c.b16 %v3495, %v3487
        %v4040 = vpack.c.b16 %v3496, %v3488
        %v4041 = vpack.c.b16 %v3497, %v3489
        %v4042 = vpack.c.b16 %v3498, %v3490
        %v4043 = vpack.c.b16 %v3499, %v3491
        %v4044 = vpack.c.b16 %v3500, %v3492
        %v4045 = vpack.c.b16 %v3501, %v3493
        %v4046 = vpack.c.b16 %v3502, %v3494
        %v4047 = vpack.c.b16 %v3511, %v3503
        %v4048 = vpack.c.b16 %v3512, %v3504
        %v4049 = vpack.c.b16 %v3513, %v3505
        %v4050 = vpack.c.b16 %v3514, %v3506
        %v4051 = vpack.c.b16 %v3515, %v3507
        %v4052 = vpack.c.b16 %v3516, %v3508
        %v4053 = vpack.c.b16 %v3517, %v3509
        %v4054 = vpack.c.b16 %v3518, %v3510
        %v4055 = vpack.c.b16 %v3527, %v3519
        %v4056 = vpack.c.b16 %v3528, %v3520
        %v4057 = vpack.c.b16 %v3529, %v3521
        %v4058 = vpack.c.b16 %v3530, %v3522
        %v4059 = vpack.c.b16 %v3531, %v3523
        %v4060 = vpack.c.b16 %v3532, %v3524
        %v4061 = vpack.c.b16 %v3533, %v3525
        %v4062 = vpack.c.b16 %v3534, %v3526
        %v4063 = vpack.c.b16 %v3543, %v3535
        %v4064 = vpack.c.b16 %v3544, %v3536
        %v4065 = vpack.c.b16 %v3545, %v3537
        %v4066 = vpack.c.b16 %v3546, %v3538
        %v4067 = vpack.c.b16 %v3547, %v3539
        %v4068 = vpack.c.b16 %v3548, %v3540
        %v4069 = vpack.c.b16 %v3549, %v3541
        %v4070 = vpack.c.b16 %v3550, %v3542
        %v4071 = vpack.c.b16 %v3559, %v3551
        %v4072 = vpack.c.b16 %v3560, %v3552
        %v4073 = vpack.c.b16 %v3561, %v3553
        %v4074 = vpack.c.b16 %v3562, %v3554
        %v4075 = vpack.c.b16 %v3563, %v3555
        %v4076 = vpack.c.b16 %v3564, %v3556
        %v4077 = vpack.c.b16 %v3565, %v3557
        %v4078 = vpack.c.b16 %v3566, %v3558
        %4591 = vmatprep.subr.bf16.mxu0 %v3568
        %4592 = vmatpush1.bf16.msra.mxu0 %v3567
        %4593 = vmatprep.subr.bf16.mxu0 %v3576
        %4594 = vmatpush1.bf16.msra.mxu0 %v3575
        %4595 = vmatprep.subr.bf16.mxu0 %v3584
        %4596 = vmatpush1.bf16.msra.mxu0 %v3583
        %4597 = vmatprep.subr.bf16.mxu0 %v3592
        %4598 = vmatpush1.bf16.msra.mxu0 %v3591
        %4599 = vmatprep.subr.bf16.mxu0 %v3600
        %4600 = vmatpush1.bf16.msra.mxu0 %v3599
        %4601 = vmatprep.subr.bf16.mxu0 %v3608
        %4602 = vmatpush1.bf16.msra.mxu0 %v3607
        %4603 = vmatprep.subr.bf16.mxu0 %v3616
        %4604 = vmatpush1.bf16.msra.mxu0 %v3615
        %4605 = vmatprep.subr.bf16.mxu0 %v3624
        %4606 = vmatpush1.bf16.msra.mxu0 %v3623
        %4607 = vmatprep.subr.bf16.mxu0 %v3632
        %4608 = vmatpush1.bf16.msra.mxu0 %v3631
        %4609 = vmatprep.subr.bf16.mxu0 %v3640
        %4610 = vmatpush1.bf16.msra.mxu0 %v3639
        %4611 = vmatprep.subr.bf16.mxu0 %v3648
        %4612 = vmatpush1.bf16.msra.mxu0 %v3647
        %4613 = vmatprep.subr.bf16.mxu0 %v3656
        %4614 = vmatpush1.bf16.msra.mxu0 %v3655
        %4615 = vmatprep.subr.bf16.mxu0 %v3664
        %4616 = vmatpush1.bf16.msra.mxu0 %v3663
        %4617 = vmatprep.subr.bf16.mxu0 %v3672
        %4618 = vmatpush1.bf16.msra.mxu0 %v3671
        %4619 = vmatprep.subr.bf16.mxu0 %v3680
        %4620 = vmatpush1.bf16.msra.mxu0 %v3679
        %4621 = vmatprep.subr.bf16.mxu0 %v3688
        %4622 = vmatpush1.bf16.msra.mxu0 %v3687
        %4623 = vmatprep.mubr.bf16.mxu0 %v1512
        %4624 = vmatmul.mubr.bf16.gmra.mrb[0].mxu0 %v1511
        %v4625 = vpop.f32.mrb[0].mxu0
        %v4626 = vadd.f32 0.0, %v4625
        %v4627 = vpop.f32.mrb[0].mxu0
        %v4628 = vadd.f32 0.0, %v4627
        %v4629 = vpop.f32.mrb[0].mxu0
        %v4630 = vpop.f32.mrb[0].mxu0
        %4631 = vdwg.mxu0
        %4632 = vmatprep.subr.bf16.mxu0 %v3696
        %4633 = vmatpush1.bf16.msra.mxu0 %v3695
        %4634 = vmatprep.subr.bf16.mxu0 %v3704
        %4635 = vmatpush1.bf16.msra.mxu0 %v3703
        %4636 = vmatprep.subr.bf16.mxu0 %v3712
        %4637 = vmatpush1.bf16.msra.mxu0 %v3711
        %4638 = vmatprep.subr.bf16.mxu0 %v3720
        %4639 = vmatpush1.bf16.msra.mxu0 %v3719
        %4640 = vmatprep.subr.bf16.mxu0 %v3728
        %4641 = vmatpush1.bf16.msra.mxu0 %v3727
        %4642 = vmatprep.subr.bf16.mxu0 %v3736
        %4643 = vmatpush1.bf16.msra.mxu0 %v3735
        %4644 = vmatprep.subr.bf16.mxu0 %v3744
        %4645 = vmatpush1.bf16.msra.mxu0 %v3743
        %4646 = vmatprep.subr.bf16.mxu0 %v3752
        %4647 = vmatpush1.bf16.msra.mxu0 %v3751
        %4648 = vmatprep.subr.bf16.mxu0 %v3760
        %4649 = vmatpush1.bf16.msra.mxu0 %v3759
        %4650 = vmatprep.subr.bf16.mxu0 %v3768
        %4651 = vmatpush1.bf16.msra.mxu0 %v3767
        %4652 = vmatprep.subr.bf16.mxu0 %v3776
        %4653 = vmatpush1.bf16.msra.mxu0 %v3775
        %4654 = vmatprep.subr.bf16.mxu0 %v3784
        %4655 = vmatpush1.bf16.msra.mxu0 %v3783
        %4656 = vmatprep.subr.bf16.mxu0 %v3792
        %4657 = vmatpush1.bf16.msra.mxu0 %v3791
        %4658 = vmatprep.subr.bf16.mxu0 %v3800
        %4659 = vmatpush1.bf16.msra.mxu0 %v3799
        %4660 = vmatprep.subr.bf16.mxu0 %v3808
        %4661 = vmatpush1.bf16.msra.mxu0 %v3807
        %4662 = vmatprep.subr.bf16.mxu0 %v3816
        %4663 = vmatpush1.bf16.msra.mxu0 %v3815
        %4664 = vmatprep.mubr.bf16.mxu0 %v1514
        %4665 = vmatmul.mubr.bf16.gmra.mrb[0].mxu0 %v1513
        %v4666 = vpop.f32.mrb[0].mxu0
        %v4667 = vadd.f32 %v4626, %v4666
        %v4668 = vpop.f32.mrb[0].mxu0
        %v4669 = vadd.f32 %v4628, %v4668
        %v4670 = vpop.f32.mrb[0].mxu0
        %v4671 = vpop.f32.mrb[0].mxu0
        %4672 = vdwg.mxu0
        %4673 = vmatprep.subr.bf16.mxu0 %v3824
        %4674 = vmatpush1.bf16.msra.mxu0 %v3823
        %4675 = vmatprep.subr.bf16.mxu0 %v3832
        %4676 = vmatpush1.bf16.msra.mxu0 %v3831
        %4677 = vmatprep.subr.bf16.mxu0 %v3840
        %4678 = vmatpush1.bf16.msra.mxu0 %v3839
        %4679 = vmatprep.subr.bf16.mxu0 %v3848
        %4680 = vmatpush1.bf16.msra.mxu0 %v3847
        %4681 = vmatprep.subr.bf16.mxu0 %v3856
        %4682 = vmatpush1.bf16.msra.mxu0 %v3855
        %4683 = vmatprep.subr.bf16.mxu0 %v3864
        %4684 = vmatpush1.bf16.msra.mxu0 %v3863
        %4685 = vmatprep.subr.bf16.mxu0 %v3872
        %4686 = vmatpush1.bf16.msra.mxu0 %v3871
        %4687 = vmatprep.subr.bf16.mxu0 %v3880
        %4688 = vmatpush1.bf16.msra.mxu0 %v3879
        %4689 = vmatprep.subr.bf16.mxu0 %v3888
        %4690 = vmatpush1.bf16.msra.mxu0 %v3887
        %4691 = vmatprep.subr.bf16.mxu0 %v3896
        %4692 = vmatpush1.bf16.msra.mxu0 %v3895
        %4693 = vmatprep.subr.bf16.mxu0 %v3904
        %4694 = vmatpush1.bf16.msra.mxu0 %v3903
        %4695 = vmatprep.subr.bf16.mxu0 %v3912
        %4696 = vmatpush1.bf16.msra.mxu0 %v3911
        %4697 = vmatprep.subr.bf16.mxu0 %v3920
        %4698 = vmatpush1.bf16.msra.mxu0 %v3919
        %4699 = vmatprep.subr.bf16.mxu0 %v3928
        %4700 = vmatpush1.bf16.msra.mxu0 %v3927
        %4701 = vmatprep.subr.bf16.mxu0 %v3936
        %4702 = vmatpush1.bf16.msra.mxu0 %v3935
        %4703 = vmatprep.subr.bf16.mxu0 %v3944
        %4704 = vmatpush1.bf16.msra.mxu0 %v3943
        %4705 = vmatprep.mubr.bf16.mxu0 %v1516
        %4706 = vmatmul.mubr.bf16.gmra.mrb[0].mxu0 %v1515
        %v4707 = vpop.f32.mrb[0].mxu0
        %v4708 = vadd.f32 %v4667, %v4707
        %v4709 = vpop.f32.mrb[0].mxu0
        %v4710 = vadd.f32 %v4669, %v4709
        %v4711 = vpop.f32.mrb[0].mxu0
        %v4712 = vpop.f32.mrb[0].mxu0
        %4713 = vdwg.mxu0
        %4714 = vmatprep.subr.bf16.mxu0 %v3952
        %4715 = vmatpush1.bf16.msra.mxu0 %v3951
        %4716 = vmatprep.subr.bf16.mxu0 %v3960
        %4717 = vmatpush1.bf16.msra.mxu0 %v3959
        %4718 = vmatprep.subr.bf16.mxu0 %v3968
        %4719 = vmatpush1.bf16.msra.mxu0 %v3967
        %4720 = vmatprep.subr.bf16.mxu0 %v3976
        %4721 = vmatpush1.bf16.msra.mxu0 %v3975
        %4722 = vmatprep.subr.bf16.mxu0 %v3984
        %4723 = vmatpush1.bf16.msra.mxu0 %v3983
        %4724 = vmatprep.subr.bf16.mxu0 %v3992
        %4725 = vmatpush1.bf16.msra.mxu0 %v3991
        %4726 = vmatprep.subr.bf16.mxu0 %v4000
        %4727 = vmatpush1.bf16.msra.mxu0 %v3999
        %4728 = vmatprep.subr.bf16.mxu0 %v4008
        %4729 = vmatpush1.bf16.msra.mxu0 %v4007
        %4730 = vmatprep.subr.bf16.mxu0 %v4016
        %4731 = vmatpush1.bf16.msra.mxu0 %v4015
        %4732 = vmatprep.subr.bf16.mxu0 %v4024
        %4733 = vmatpush1.bf16.msra.mxu0 %v4023
        %4734 = vmatprep.subr.bf16.mxu0 %v4032
        %4735 = vmatpush1.bf16.msra.mxu0 %v4031
        %4736 = vmatprep.subr.bf16.mxu0 %v4040
        %4737 = vmatpush1.bf16.msra.mxu0 %v4039
        %4738 = vmatprep.subr.bf16.mxu0 %v4048
        %4739 = vmatpush1.bf16.msra.mxu0 %v4047
        %4740 = vmatprep.subr.bf16.mxu0 %v4056
        %4741 = vmatpush1.bf16.msra.mxu0 %v4055
        %4742 = vmatprep.subr.bf16.mxu0 %v4064
        %4743 = vmatpush1.bf16.msra.mxu0 %v4063
        %4744 = vmatprep.subr.bf16.mxu0 %v4072
        %4745 = vmatpush1.bf16.msra.mxu0 %v4071
        %4746 = vmatprep.mubr.bf16.mxu0 %v1518
        %4747 = vmatmul.mubr.bf16.gmra.mrb[0].mxu0 %v1517
        %v4748 = vpop.f32.mrb[0].mxu0
        %v4749 = vadd.f32 %v4708, %v4748
        %v4750 = vpop.f32.mrb[0].mxu0
        %v4751 = vadd.f32 %v4710, %v4750
        %v4752 = vpop.f32.mrb[0].mxu0
        %v4753 = vpop.f32.mrb[0].mxu0
        %4754 = vdwg.mxu0
        %4755 = vmatprep.subr.bf16.mxu0 %v3570
        %4756 = vmatpush1.bf16.msra.mxu0 %v3569
        %4757 = vmatprep.subr.bf16.mxu0 %v3578
        %4758 = vmatpush1.bf16.msra.mxu0 %v3577
        %4759 = vmatprep.subr.bf16.mxu0 %v3586
        %4760 = vmatpush1.bf16.msra.mxu0 %v3585
        %4761 = vmatprep.subr.bf16.mxu0 %v3594
        %4762 = vmatpush1.bf16.msra.mxu0 %v3593
        %4763 = vmatprep.subr.bf16.mxu0 %v3602
        %4764 = vmatpush1.bf16.msra.mxu0 %v3601
        %4765 = vmatprep.subr.bf16.mxu0 %v3610
        %4766 = vmatpush1.bf16.msra.mxu0 %v3609
        %4767 = vmatprep.subr.bf16.mxu0 %v3618
        %4768 = vmatpush1.bf16.msra.mxu0 %v3617
        %4769 = vmatprep.subr.bf16.mxu0 %v3626
        %4770 = vmatpush1.bf16.msra.mxu0 %v3625
        %4771 = vmatprep.subr.bf16.mxu0 %v3634
        %4772 = vmatpush1.bf16.msra.mxu0 %v3633
        %4773 = vmatprep.subr.bf16.mxu0 %v3642
        %4774 = vmatpush1.bf16.msra.mxu0 %v3641
        %4775 = vmatprep.subr.bf16.mxu0 %v3650
        %4776 = vmatpush1.bf16.msra.mxu0 %v3649
        %4777 = vmatprep.subr.bf16.mxu0 %v3658
        %4778 = vmatpush1.bf16.msra.mxu0 %v3657
        %4779 = vmatprep.subr.bf16.mxu0 %v3666
        %4780 = vmatpush1.bf16.msra.mxu0 %v3665
        %4781 = vmatprep.subr.bf16.mxu0 %v3674
        %4782 = vmatpush1.bf16.msra.mxu0 %v3673
        %4783 = vmatprep.subr.bf16.mxu0 %v3682
        %4784 = vmatpush1.bf16.msra.mxu0 %v3681
        %4785 = vmatprep.subr.bf16.mxu0 %v3690
        %4786 = vmatpush1.bf16.msra.mxu0 %v3689
        %4787 = vmatprep.mubr.bf16.mxu0 %v1512
        %4788 = vmatmul.mubr.bf16.gmra.mrb[0].mxu0 %v1511
        %v4789 = vpop.f32.mrb[0].mxu0
        %v4790 = vadd.f32 0.0, %v4789
        %v4791 = vpop.f32.mrb[0].mxu0
        %v4792 = vadd.f32 0.0, %v4791
        %v4793 = vpop.f32.mrb[0].mxu0
        %v4794 = vpop.f32.mrb[0].mxu0
        %4795 = vdwg.mxu0
        %4796 = vmatprep.subr.bf16.mxu0 %v3698
        %4797 = vmatpush1.bf16.msra.mxu0 %v3697
        %4798 = vmatprep.subr.bf16.mxu0 %v3706
        %4799 = vmatpush1.bf16.msra.mxu0 %v3705
        %4800 = vmatprep.subr.bf16.mxu0 %v3714
        %4801 = vmatpush1.bf16.msra.mxu0 %v3713
        %4802 = vmatprep.subr.bf16.mxu0 %v3722
        %4803 = vmatpush1.bf16.msra.mxu0 %v3721
        %4804 = vmatprep.subr.bf16.mxu0 %v3730
        %4805 = vmatpush1.bf16.msra.mxu0 %v3729
        %4806 = vmatprep.subr.bf16.mxu0 %v3738
        %4807 = vmatpush1.bf16.msra.mxu0 %v3737
        %4808 = vmatprep.subr.bf16.mxu0 %v3746
        %4809 = vmatpush1.bf16.msra.mxu0 %v3745
        %4810 = vmatprep.subr.bf16.mxu0 %v3754
        %4811 = vmatpush1.bf16.msra.mxu0 %v3753
        %4812 = vmatprep.subr.bf16.mxu0 %v3762
        %4813 = vmatpush1.bf16.msra.mxu0 %v3761
        %4814 = vmatprep.subr.bf16.mxu0 %v3770
        %4815 = vmatpush1.bf16.msra.mxu0 %v3769
        %4816 = vmatprep.subr.bf16.mxu0 %v3778
        %4817 = vmatpush1.bf16.msra.mxu0 %v3777
        %4818 = vmatprep.subr.bf16.mxu0 %v3786
        %4819 = vmatpush1.bf16.msra.mxu0 %v3785
        %4820 = vmatprep.subr.bf16.mxu0 %v3794
        %4821 = vmatpush1.bf16.msra.mxu0 %v3793
        %4822 = vmatprep.subr.bf16.mxu0 %v3802
        %4823 = vmatpush1.bf16.msra.mxu0 %v3801
        %4824 = vmatprep.subr.bf16.mxu0 %v3810
        %4825 = vmatpush1.bf16.msra.mxu0 %v3809
        %4826 = vmatprep.subr.bf16.mxu0 %v3818
        %4827 = vmatpush1.bf16.msra.mxu0 %v3817
        %4828 = vmatprep.mubr.bf16.mxu0 %v1514
        %4829 = vmatmul.mubr.bf16.gmra.mrb[0].mxu0 %v1513
        %v4830 = vpop.f32.mrb[0].mxu0
        %v4831 = vadd.f32 %v4790, %v4830
        %v4832 = vpop.f32.mrb[0].mxu0
        %v4833 = vadd.f32 %v4792, %v4832
        %v4834 = vpop.f32.mrb[0].mxu0
        %v4835 = vpop.f32.mrb[0].mxu0
        %4836 = vdwg.mxu0
        %4837 = vmatprep.subr.bf16.mxu0 %v3826
        %4838 = vmatpush1.bf16.msra.mxu0 %v3825
        %4839 = vmatprep.subr.bf16.mxu0 %v3834
        %4840 = vmatpush1.bf16.msra.mxu0 %v3833
        %4841 = vmatprep.subr.bf16.mxu0 %v3842
        %4842 = vmatpush1.bf16.msra.mxu0 %v3841
        %4843 = vmatprep.subr.bf16.mxu0 %v3850
        %4844 = vmatpush1.bf16.msra.mxu0 %v3849
        %4845 = vmatprep.subr.bf16.mxu0 %v3858
        %4846 = vmatpush1.bf16.msra.mxu0 %v3857
        %4847 = vmatprep.subr.bf16.mxu0 %v3866
        %4848 = vmatpush1.bf16.msra.mxu0 %v3865
        %4849 = vmatprep.subr.bf16.mxu0 %v3874
        %4850 = vmatpush1.bf16.msra.mxu0 %v3873
        %4851 = vmatprep.subr.bf16.mxu0 %v3882
        %4852 = vmatpush1.bf16.msra.mxu0 %v3881
        %4853 = vmatprep.subr.bf16.mxu0 %v3890
        %4854 = vmatpush1.bf16.msra.mxu0 %v3889
        %4855 = vmatprep.subr.bf16.mxu0 %v3898
        %4856 = vmatpush1.bf16.msra.mxu0 %v3897
        %4857 = vmatprep.subr.bf16.mxu0 %v3906
        %4858 = vmatpush1.bf16.msra.mxu0 %v3905
        %4859 = vmatprep.subr.bf16.mxu0 %v3914
        %4860 = vmatpush1.bf16.msra.mxu0 %v3913
        %4861 = vmatprep.subr.bf16.mxu0 %v3922
        %4862 = vmatpush1.bf16.msra.mxu0 %v3921
        %4863 = vmatprep.subr.bf16.mxu0 %v3930
        %4864 = vmatpush1.bf16.msra.mxu0 %v3929
        %4865 = vmatprep.subr.bf16.mxu0 %v3938
        %4866 = vmatpush1.bf16.msra.mxu0 %v3937
        %4867 = vmatprep.subr.bf16.mxu0 %v3946
        %4868 = vmatpush1.bf16.msra.mxu0 %v3945
        %4869 = vmatprep.mubr.bf16.mxu0 %v1516
        %4870 = vmatmul.mubr.bf16.gmra.mrb[0].mxu0 %v1515
        %v4871 = vpop.f32.mrb[0].mxu0
        %v4872 = vadd.f32 %v4831, %v4871
        %v4873 = vpop.f32.mrb[0].mxu0
        %v4874 = vadd.f32 %v4833, %v4873
        %v4875 = vpop.f32.mrb[0].mxu0
        %v4876 = vpop.f32.mrb[0].mxu0
        %4877 = vdwg.mxu0
        %4878 = vmatprep.subr.bf16.mxu0 %v3954
        %4879 = vmatpush1.bf16.msra.mxu0 %v3953
        %4880 = vmatprep.subr.bf16.mxu0 %v3962
        %4881 = vmatpush1.bf16.msra.mxu0 %v3961
        %4882 = vmatprep.subr.bf16.mxu0 %v3970
        %4883 = vmatpush1.bf16.msra.mxu0 %v3969
        %4884 = vmatprep.subr.bf16.mxu0 %v3978
        %4885 = vmatpush1.bf16.msra.mxu0 %v3977
        %4886 = vmatprep.subr.bf16.mxu0 %v3986
        %4887 = vmatpush1.bf16.msra.mxu0 %v3985
        %4888 = vmatprep.subr.bf16.mxu0 %v3994
        %4889 = vmatpush1.bf16.msra.mxu0 %v3993
        %4890 = vmatprep.subr.bf16.mxu0 %v4002
        %4891 = vmatpush1.bf16.msra.mxu0 %v4001
        %4892 = vmatprep.subr.bf16.mxu0 %v4010
        %4893 = vmatpush1.bf16.msra.mxu0 %v4009
        %4894 = vmatprep.subr.bf16.mxu0 %v4018
        %4895 = vmatpush1.bf16.msra.mxu0 %v4017
        %4896 = vmatprep.subr.bf16.mxu0 %v4026
        %4897 = vmatpush1.bf16.msra.mxu0 %v4025
        %4898 = vmatprep.subr.bf16.mxu0 %v4034
        %4899 = vmatpush1.bf16.msra.mxu0 %v4033
        %4900 = vmatprep.subr.bf16.mxu0 %v4042
        %4901 = vmatpush1.bf16.msra.mxu0 %v4041
        %4902 = vmatprep.subr.bf16.mxu0 %v4050
        %4903 = vmatpush1.bf16.msra.mxu0 %v4049
        %4904 = vmatprep.subr.bf16.mxu0 %v4058
        %4905 = vmatpush1.bf16.msra.mxu0 %v4057
        %4906 = vmatprep.subr.bf16.mxu0 %v4066
        %4907 = vmatpush1.bf16.msra.mxu0 %v4065
        %4908 = vmatprep.subr.bf16.mxu0 %v4074
        %4909 = vmatpush1.bf16.msra.mxu0 %v4073
        %4910 = vmatprep.mubr.bf16.mxu0 %v1518
        %4911 = vmatmul.mubr.bf16.gmra.mrb[0].mxu0 %v1517
        %v4912 = vpop.f32.mrb[0].mxu0
        %v4913 = vadd.f32 %v4872, %v4912
        %v4914 = vpop.f32.mrb[0].mxu0
        %v4915 = vadd.f32 %v4874, %v4914
        %v4916 = vpop.f32.mrb[0].mxu0
        %v4917 = vpop.f32.mrb[0].mxu0
        %4918 = vdwg.mxu0
        %4919 = vmatprep.subr.bf16.mxu0 %v3572
        %4920 = vmatpush1.bf16.msra.mxu0 %v3571
        %4921 = vmatprep.subr.bf16.mxu0 %v3580
        %4922 = vmatpush1.bf16.msra.mxu0 %v3579
        %4923 = vmatprep.subr.bf16.mxu0 %v3588
        %4924 = vmatpush1.bf16.msra.mxu0 %v3587
        %4925 = vmatprep.subr.bf16.mxu0 %v3596
        %4926 = vmatpush1.bf16.msra.mxu0 %v3595
        %4927 = vmatprep.subr.bf16.mxu0 %v3604
        %4928 = vmatpush1.bf16.msra.mxu0 %v3603
        %4929 = vmatprep.subr.bf16.mxu0 %v3612
        %4930 = vmatpush1.bf16.msra.mxu0 %v3611
        %4931 = vmatprep.subr.bf16.mxu0 %v3620
        %4932 = vmatpush1.bf16.msra.mxu0 %v3619
        %4933 = vmatprep.subr.bf16.mxu0 %v3628
        %4934 = vmatpush1.bf16.msra.mxu0 %v3627
        %4935 = vmatprep.subr.bf16.mxu0 %v3636
        %4936 = vmatpush1.bf16.msra.mxu0 %v3635
        %4937 = vmatprep.subr.bf16.mxu0 %v3644
        %4938 = vmatpush1.bf16.msra.mxu0 %v3643
        %4939 = vmatprep.subr.bf16.mxu0 %v3652
        %4940 = vmatpush1.bf16.msra.mxu0 %v3651
        %4941 = vmatprep.subr.bf16.mxu0 %v3660
        %4942 = vmatpush1.bf16.msra.mxu0 %v3659
        %4943 = vmatprep.subr.bf16.mxu0 %v3668
        %4944 = vmatpush1.bf16.msra.mxu0 %v3667
        %4945 = vmatprep.subr.bf16.mxu0 %v3676
        %4946 = vmatpush1.bf16.msra.mxu0 %v3675
        %4947 = vmatprep.subr.bf16.mxu0 %v3684
        %4948 = vmatpush1.bf16.msra.mxu0 %v3683
        %4949 = vmatprep.subr.bf16.mxu0 %v3692
        %4950 = vmatpush1.bf16.msra.mxu0 %v3691
        %4951 = vmatprep.mubr.bf16.mxu0 %v1512
        %4952 = vmatmul.mubr.bf16.gmra.mrb[0].mxu0 %v1511
        %v4953 = vpop.f32.mrb[0].mxu0
        %v4954 = vadd.f32 0.0, %v4953
        %v4955 = vpop.f32.mrb[0].mxu0
        %v4956 = vadd.f32 0.0, %v4955
        %v4957 = vpop.f32.mrb[0].mxu0
        %v4958 = vpop.f32.mrb[0].mxu0
        %4959 = vdwg.mxu0
        %4960 = vmatprep.subr.bf16.mxu0 %v3700
        %4961 = vmatpush1.bf16.msra.mxu0 %v3699
        %4962 = vmatprep.subr.bf16.mxu0 %v3708
        %4963 = vmatpush1.bf16.msra.mxu0 %v3707
        %4964 = vmatprep.subr.bf16.mxu0 %v3716
        %4965 = vmatpush1.bf16.msra.mxu0 %v3715
        %4966 = vmatprep.subr.bf16.mxu0 %v3724
        %4967 = vmatpush1.bf16.msra.mxu0 %v3723
        %4968 = vmatprep.subr.bf16.mxu0 %v3732
        %4969 = vmatpush1.bf16.msra.mxu0 %v3731
        %4970 = vmatprep.subr.bf16.mxu0 %v3740
        %4971 = vmatpush1.bf16.msra.mxu0 %v3739
        %4972 = vmatprep.subr.bf16.mxu0 %v3748
        %4973 = vmatpush1.bf16.msra.mxu0 %v3747
        %4974 = vmatprep.subr.bf16.mxu0 %v3756
        %4975 = vmatpush1.bf16.msra.mxu0 %v3755
        %4976 = vmatprep.subr.bf16.mxu0 %v3764
        %4977 = vmatpush1.bf16.msra.mxu0 %v3763
        %4978 = vmatprep.subr.bf16.mxu0 %v3772
        %4979 = vmatpush1.bf16.msra.mxu0 %v3771
        %4980 = vmatprep.subr.bf16.mxu0 %v3780
        %4981 = vmatpush1.bf16.msra.mxu0 %v3779
        %4982 = vmatprep.subr.bf16.mxu0 %v3788
        %4983 = vmatpush1.bf16.msra.mxu0 %v3787
        %4984 = vmatprep.subr.bf16.mxu0 %v3796
        %4985 = vmatpush1.bf16.msra.mxu0 %v3795
        %4986 = vmatprep.subr.bf16.mxu0 %v3804
        %4987 = vmatpush1.bf16.msra.mxu0 %v3803
        %4988 = vmatprep.subr.bf16.mxu0 %v3812
        %4989 = vmatpush1.bf16.msra.mxu0 %v3811
        %4990 = vmatprep.subr.bf16.mxu0 %v3820
        %4991 = vmatpush1.bf16.msra.mxu0 %v3819
        %4992 = vmatprep.mubr.bf16.mxu0 %v1514
        %4993 = vmatmul.mubr.bf16.gmra.mrb[0].mxu0 %v1513
        %v4994 = vpop.f32.mrb[0].mxu0
        %v4995 = vadd.f32 %v4954, %v4994
        %v4996 = vpop.f32.mrb[0].mxu0
        %v4997 = vadd.f32 %v4956, %v4996
        %v4998 = vpop.f32.mrb[0].mxu0
        %v4999 = vpop.f32.mrb[0].mxu0
        %5000 = vdwg.mxu0
        %5001 = vmatprep.subr.bf16.mxu0 %v3828
        %5002 = vmatpush1.bf16.msra.mxu0 %v3827
        %5003 = vmatprep.subr.bf16.mxu0 %v3836
        %5004 = vmatpush1.bf16.msra.mxu0 %v3835
        %5005 = vmatprep.subr.bf16.mxu0 %v3844
        %5006 = vmatpush1.bf16.msra.mxu0 %v3843
        %5007 = vmatprep.subr.bf16.mxu0 %v3852
        %5008 = vmatpush1.bf16.msra.mxu0 %v3851
        %5009 = vmatprep.subr.bf16.mxu0 %v3860
        %5010 = vmatpush1.bf16.msra.mxu0 %v3859
        %5011 = vmatprep.subr.bf16.mxu0 %v3868
        %5012 = vmatpush1.bf16.msra.mxu0 %v3867
        %5013 = vmatprep.subr.bf16.mxu0 %v3876
        %5014 = vmatpush1.bf16.msra.mxu0 %v3875
        %5015 = vmatprep.subr.bf16.mxu0 %v3884
        %5016 = vmatpush1.bf16.msra.mxu0 %v3883
        %5017 = vmatprep.subr.bf16.mxu0 %v3892
        %5018 = vmatpush1.bf16.msra.mxu0 %v3891
        %5019 = vmatprep.subr.bf16.mxu0 %v3900
        %5020 = vmatpush1.bf16.msra.mxu0 %v3899
        %5021 = vmatprep.subr.bf16.mxu0 %v3908
        %5022 = vmatpush1.bf16.msra.mxu0 %v3907
        %5023 = vmatprep.subr.bf16.mxu0 %v3916
        %5024 = vmatpush1.bf16.msra.mxu0 %v3915
        %5025 = vmatprep.subr.bf16.mxu0 %v3924
        %5026 = vmatpush1.bf16.msra.mxu0 %v3923
        %5027 = vmatprep.subr.bf16.mxu0 %v3932
        %5028 = vmatpush1.bf16.msra.mxu0 %v3931
        %5029 = vmatprep.subr.bf16.mxu0 %v3940
        %5030 = vmatpush1.bf16.msra.mxu0 %v3939
        %5031 = vmatprep.subr.bf16.mxu0 %v3948
        %5032 = vmatpush1.bf16.msra.mxu0 %v3947
        %5033 = vmatprep.mubr.bf16.mxu0 %v1516
        %5034 = vmatmul.mubr.bf16.gmra.mrb[0].mxu0 %v1515
        %v5035 = vpop.f32.mrb[0].mxu0
        %v5036 = vadd.f32 %v4995, %v5035
        %v5037 = vpop.f32.mrb[0].mxu0
        %v5038 = vadd.f32 %v4997, %v5037
        %v5039 = vpop.f32.mrb[0].mxu0
        %v5040 = vpop.f32.mrb[0].mxu0
        %5041 = vdwg.mxu0
        %5042 = vmatprep.subr.bf16.mxu0 %v3956
        %5043 = vmatpush1.bf16.msra.mxu0 %v3955
        %5044 = vmatprep.subr.bf16.mxu0 %v3964
        %5045 = vmatpush1.bf16.msra.mxu0 %v3963
        %5046 = vmatprep.subr.bf16.mxu0 %v3972
        %5047 = vmatpush1.bf16.msra.mxu0 %v3971
        %5048 = vmatprep.subr.bf16.mxu0 %v3980
        %5049 = vmatpush1.bf16.msra.mxu0 %v3979
        %5050 = vmatprep.subr.bf16.mxu0 %v3988
        %5051 = vmatpush1.bf16.msra.mxu0 %v3987
        %5052 = vmatprep.subr.bf16.mxu0 %v3996
        %5053 = vmatpush1.bf16.msra.mxu0 %v3995
        %5054 = vmatprep.subr.bf16.mxu0 %v4004
        %5055 = vmatpush1.bf16.msra.mxu0 %v4003
        %5056 = vmatprep.subr.bf16.mxu0 %v4012
        %5057 = vmatpush1.bf16.msra.mxu0 %v4011
        %5058 = vmatprep.subr.bf16.mxu0 %v4020
        %5059 = vmatpush1.bf16.msra.mxu0 %v4019
        %5060 = vmatprep.subr.bf16.mxu0 %v4028
        %5061 = vmatpush1.bf16.msra.mxu0 %v4027
        %5062 = vmatprep.subr.bf16.mxu0 %v4036
        %5063 = vmatpush1.bf16.msra.mxu0 %v4035
        %5064 = vmatprep.subr.bf16.mxu0 %v4044
        %5065 = vmatpush1.bf16.msra.mxu0 %v4043
        %5066 = vmatprep.subr.bf16.mxu0 %v4052
        %5067 = vmatpush1.bf16.msra.mxu0 %v4051
        %5068 = vmatprep.subr.bf16.mxu0 %v4060
        %5069 = vmatpush1.bf16.msra.mxu0 %v4059
        %5070 = vmatprep.subr.bf16.mxu0 %v4068
        %5071 = vmatpush1.bf16.msra.mxu0 %v4067
        %5072 = vmatprep.subr.bf16.mxu0 %v4076
        %5073 = vmatpush1.bf16.msra.mxu0 %v4075
        %5074 = vmatprep.mubr.bf16.mxu0 %v1518
        %5075 = vmatmul.mubr.bf16.gmra.mrb[0].mxu0 %v1517
        %v5076 = vpop.f32.mrb[0].mxu0
        %v5077 = vadd.f32 %v5036, %v5076
        %v5078 = vpop.f32.mrb[0].mxu0
        %v5079 = vadd.f32 %v5038, %v5078
        %v5080 = vpop.f32.mrb[0].mxu0
        %v5081 = vpop.f32.mrb[0].mxu0
        %5082 = vdwg.mxu0
        %5083 = vmatprep.subr.bf16.mxu0 %v3574
        %5084 = vmatpush1.bf16.msra.mxu0 %v3573
        %5085 = vmatprep.subr.bf16.mxu0 %v3582
        %5086 = vmatpush1.bf16.msra.mxu0 %v3581
        %5087 = vmatprep.subr.bf16.mxu0 %v3590
        %5088 = vmatpush1.bf16.msra.mxu0 %v3589
        %5089 = vmatprep.subr.bf16.mxu0 %v3598
        %5090 = vmatpush1.bf16.msra.mxu0 %v3597
        %5091 = vmatprep.subr.bf16.mxu0 %v3606
        %5092 = vmatpush1.bf16.msra.mxu0 %v3605
        %5093 = vmatprep.subr.bf16.mxu0 %v3614
        %5094 = vmatpush1.bf16.msra.mxu0 %v3613
        %5095 = vmatprep.subr.bf16.mxu0 %v3622
        %5096 = vmatpush1.bf16.msra.mxu0 %v3621
        %5097 = vmatprep.subr.bf16.mxu0 %v3630
        %5098 = vmatpush1.bf16.msra.mxu0 %v3629
        %5099 = vmatprep.subr.bf16.mxu0 %v3638
        %5100 = vmatpush1.bf16.msra.mxu0 %v3637
        %5101 = vmatprep.subr.bf16.mxu0 %v3646
        %5102 = vmatpush1.bf16.msra.mxu0 %v3645
        %5103 = vmatprep.subr.bf16.mxu0 %v3654
        %5104 = vmatpush1.bf16.msra.mxu0 %v3653
        %5105 = vmatprep.subr.bf16.mxu0 %v3662
        %5106 = vmatpush1.bf16.msra.mxu0 %v3661
        %5107 = vmatprep.subr.bf16.mxu0 %v3670
        %5108 = vmatpush1.bf16.msra.mxu0 %v3669
        %5109 = vmatprep.subr.bf16.mxu0 %v3678
        %5110 = vmatpush1.bf16.msra.mxu0 %v3677
        %5111 = vmatprep.subr.bf16.mxu0 %v3686
        %5112 = vmatpush1.bf16.msra.mxu0 %v3685
        %5113 = vmatprep.subr.bf16.mxu0 %v3694
        %5114 = vmatpush1.bf16.msra.mxu0 %v3693
        %5115 = vmatprep.mubr.bf16.mxu0 %v1512
        %5116 = vmatmul.mubr.bf16.gmra.mrb[0].mxu0 %v1511
        %v5117 = vpop.f32.mrb[0].mxu0
        %v5118 = vadd.f32 0.0, %v5117
        %v5119 = vpop.f32.mrb[0].mxu0
        %v5120 = vadd.f32 0.0, %v5119
        %v5121 = vpop.f32.mrb[0].mxu0
        %v5122 = vpop.f32.mrb[0].mxu0
        %5123 = vdwg.mxu0
        %5124 = vmatprep.subr.bf16.mxu0 %v3702
        %5125 = vmatpush1.bf16.msra.mxu0 %v3701
        %5126 = vmatprep.subr.bf16.mxu0 %v3710
        %5127 = vmatpush1.bf16.msra.mxu0 %v3709
        %5128 = vmatprep.subr.bf16.mxu0 %v3718
        %5129 = vmatpush1.bf16.msra.mxu0 %v3717
        %5130 = vmatprep.subr.bf16.mxu0 %v3726
        %5131 = vmatpush1.bf16.msra.mxu0 %v3725
        %5132 = vmatprep.subr.bf16.mxu0 %v3734
        %5133 = vmatpush1.bf16.msra.mxu0 %v3733
        %5134 = vmatprep.subr.bf16.mxu0 %v3742
        %5135 = vmatpush1.bf16.msra.mxu0 %v3741
        %5136 = vmatprep.subr.bf16.mxu0 %v3750
        %5137 = vmatpush1.bf16.msra.mxu0 %v3749
        %5138 = vmatprep.subr.bf16.mxu0 %v3758
        %5139 = vmatpush1.bf16.msra.mxu0 %v3757
        %5140 = vmatprep.subr.bf16.mxu0 %v3766
        %5141 = vmatpush1.bf16.msra.mxu0 %v3765
        %5142 = vmatprep.subr.bf16.mxu0 %v3774
        %5143 = vmatpush1.bf16.msra.mxu0 %v3773
        %5144 = vmatprep.subr.bf16.mxu0 %v3782
        %5145 = vmatpush1.bf16.msra.mxu0 %v3781
        %5146 = vmatprep.subr.bf16.mxu0 %v3790
        %5147 = vmatpush1.bf16.msra.mxu0 %v3789
        %5148 = vmatprep.subr.bf16.mxu0 %v3798
        %5149 = vmatpush1.bf16.msra.mxu0 %v3797
        %5150 = vmatprep.subr.bf16.mxu0 %v3806
        %5151 = vmatpush1.bf16.msra.mxu0 %v3805
        %5152 = vmatprep.subr.bf16.mxu0 %v3814
        %5153 = vmatpush1.bf16.msra.mxu0 %v3813
        %5154 = vmatprep.subr.bf16.mxu0 %v3822
        %5155 = vmatpush1.bf16.msra.mxu0 %v3821
        %5156 = vmatprep.mubr.bf16.mxu0 %v1514
        %5157 = vmatmul.mubr.bf16.gmra.mrb[0].mxu0 %v1513
        %v5158 = vpop.f32.mrb[0].mxu0
        %v5159 = vadd.f32 %v5118, %v5158
        %v5160 = vpop.f32.mrb[0].mxu0
        %v5161 = vadd.f32 %v5120, %v5160
        %v5162 = vpop.f32.mrb[0].mxu0
        %v5163 = vpop.f32.mrb[0].mxu0
        %5164 = vdwg.mxu0
        %5165 = vmatprep.subr.bf16.mxu0 %v3830
        %5166 = vmatpush1.bf16.msra.mxu0 %v3829
        %5167 = vmatprep.subr.bf16.mxu0 %v3838
        %5168 = vmatpush1.bf16.msra.mxu0 %v3837
        %5169 = vmatprep.subr.bf16.mxu0 %v3846
        %5170 = vmatpush1.bf16.msra.mxu0 %v3845
        %5171 = vmatprep.subr.bf16.mxu0 %v3854
        %5172 = vmatpush1.bf16.msra.mxu0 %v3853
        %5173 = vmatprep.subr.bf16.mxu0 %v3862
        %5174 = vmatpush1.bf16.msra.mxu0 %v3861
        %5175 = vmatprep.subr.bf16.mxu0 %v3870
        %5176 = vmatpush1.bf16.msra.mxu0 %v3869
        %5177 = vmatprep.subr.bf16.mxu0 %v3878
        %5178 = vmatpush1.bf16.msra.mxu0 %v3877
        %5179 = vmatprep.subr.bf16.mxu0 %v3886
        %5180 = vmatpush1.bf16.msra.mxu0 %v3885
        %5181 = vmatprep.subr.bf16.mxu0 %v3894
        %5182 = vmatpush1.bf16.msra.mxu0 %v3893
        %5183 = vmatprep.subr.bf16.mxu0 %v3902
        %5184 = vmatpush1.bf16.msra.mxu0 %v3901
        %5185 = vmatprep.subr.bf16.mxu0 %v3910
        %5186 = vmatpush1.bf16.msra.mxu0 %v3909
        %5187 = vmatprep.subr.bf16.mxu0 %v3918
        %5188 = vmatpush1.bf16.msra.mxu0 %v3917
        %5189 = vmatprep.subr.bf16.mxu0 %v3926
        %5190 = vmatpush1.bf16.msra.mxu0 %v3925
        %5191 = vmatprep.subr.bf16.mxu0 %v3934
        %5192 = vmatpush1.bf16.msra.mxu0 %v3933
        %5193 = vmatprep.subr.bf16.mxu0 %v3942
        %5194 = vmatpush1.bf16.msra.mxu0 %v3941
        %5195 = vmatprep.subr.bf16.mxu0 %v3950
        %5196 = vmatpush1.bf16.msra.mxu0 %v3949
        %5197 = vmatprep.mubr.bf16.mxu0 %v1516
        %5198 = vmatmul.mubr.bf16.gmra.mrb[0].mxu0 %v1515
        %v5199 = vpop.f32.mrb[0].mxu0
        %v5200 = vadd.f32 %v5159, %v5199
        %v5201 = vpop.f32.mrb[0].mxu0
        %v5202 = vadd.f32 %v5161, %v5201
        %v5203 = vpop.f32.mrb[0].mxu0
        %v5204 = vpop.f32.mrb[0].mxu0
        %5205 = vdwg.mxu0
        %5206 = vmatprep.subr.bf16.mxu0 %v3958
        %5207 = vmatpush1.bf16.msra.mxu0 %v3957
        %5208 = vmatprep.subr.bf16.mxu0 %v3966
        %5209 = vmatpush1.bf16.msra.mxu0 %v3965
        %5210 = vmatprep.subr.bf16.mxu0 %v3974
        %5211 = vmatpush1.bf16.msra.mxu0 %v3973
        %5212 = vmatprep.subr.bf16.mxu0 %v3982
        %5213 = vmatpush1.bf16.msra.mxu0 %v3981
        %5214 = vmatprep.subr.bf16.mxu0 %v3990
        %5215 = vmatpush1.bf16.msra.mxu0 %v3989
        %5216 = vmatprep.subr.bf16.mxu0 %v3998
        %5217 = vmatpush1.bf16.msra.mxu0 %v3997
        %5218 = vmatprep.subr.bf16.mxu0 %v4006
        %5219 = vmatpush1.bf16.msra.mxu0 %v4005
        %5220 = vmatprep.subr.bf16.mxu0 %v4014
        %5221 = vmatpush1.bf16.msra.mxu0 %v4013
        %5222 = vmatprep.subr.bf16.mxu0 %v4022
        %5223 = vmatpush1.bf16.msra.mxu0 %v4021
        %5224 = vmatprep.subr.bf16.mxu0 %v4030
        %5225 = vmatpush1.bf16.msra.mxu0 %v4029
        %5226 = vmatprep.subr.bf16.mxu0 %v4038
        %5227 = vmatpush1.bf16.msra.mxu0 %v4037
        %5228 = vmatprep.subr.bf16.mxu0 %v4046
        %5229 = vmatpush1.bf16.msra.mxu0 %v4045
        %5230 = vmatprep.subr.bf16.mxu0 %v4054
        %5231 = vmatpush1.bf16.msra.mxu0 %v4053
        %5232 = vmatprep.subr.bf16.mxu0 %v4062
        %5233 = vmatpush1.bf16.msra.mxu0 %v4061
        %5234 = vmatprep.subr.bf16.mxu0 %v4070
        %5235 = vmatpush1.bf16.msra.mxu0 %v4069
        %5236 = vmatprep.subr.bf16.mxu0 %v4078
        %5237 = vmatpush1.bf16.msra.mxu0 %v4077
        %5238 = vmatprep.mubr.bf16.mxu0 %v1518
        %5239 = vmatmul.mubr.bf16.gmra.mrb[0].mxu0 %v1517
        %v5240 = vpop.f32.mrb[0].mxu0
        %v5241 = vadd.f32 %v5200, %v5240
        %v5242 = vpop.f32.mrb[0].mxu0
        %v5243 = vadd.f32 %v5202, %v5242
        %v5244 = vpop.f32.mrb[0].mxu0
        %v5245 = vpop.f32.mrb[0].mxu0
        %5246 = vdwg.mxu0
        %vm5247 = vcmp.ge.f32.partialorder %v4749, 0.0
        %vm5248 = vcmp.ge.f32.partialorder %v4751, 0.0
        %vm5249 = vcmp.ge.f32.partialorder %v4913, 0.0
        %vm5250 = vcmp.ge.f32.partialorder %v4915, 0.0
        %vm5251 = vcmp.ge.f32.partialorder %v5077, 0.0
        %vm5252 = vcmp.ge.f32.partialorder %v5079, 0.0
        %vm5253 = vcmp.ge.f32.partialorder %v5241, 0.0
        %vm5254 = vcmp.ge.f32.partialorder %v5243, 0.0
        %v5255 = vmul.f32 %v4749, 0.2
        %v5256 = vmul.f32 %v4751, 0.2
        %v5257 = vmul.f32 %v4913, 0.2
        %v5258 = vmul.f32 %v4915, 0.2
        %v5259 = vmul.f32 %v5077, 0.2
        %v5260 = vmul.f32 %v5079, 0.2
        %v5261 = vmul.f32 %v5241, 0.2
        %v5262 = vmul.f32 %v5243, 0.2
        %v5263 = vsel %vm5247, %v4749, %v5255
        %v5264 = vsel %vm5248, %v4751, %v5256
        %v5265 = vsel %vm5249, %v4913, %v5257
        %v5266 = vsel %vm5250, %v4915, %v5258
        %v5267 = vsel %vm5251, %v5077, %v5259
        %v5268 = vsel %vm5252, %v5079, %v5260
        %v5269 = vsel %vm5253, %v5241, %v5261
        %v5270 = vsel %vm5254, %v5243, %v5262
        %v5271 = vpack.c.bf16 %v5263, %v5263
        %v5272 = vpack.c.bf16 %v5264, %v5264
        %v5273 = vpack.c.bf16 %v5265, %v5265
        %v5274 = vpack.c.bf16 %v5266, %v5266
        %v5275 = vpack.c.bf16 %v5267, %v5267
        %v5276 = vpack.c.bf16 %v5268, %v5268
        %v5277 = vpack.c.bf16 %v5269, %v5269
        %v5278 = vpack.c.bf16 %v5270, %v5270
        %v5287 = vcombine.low %v5271, %v5272
        %v5288 = vcombine.low %v5273, %v5274
        %v5289 = vcombine.low %v5275, %v5276
        %v5290 = vcombine.low %v5277, %v5278
        %v5292 = vunpack.c.l.s4 1966171168
        %v5293 = vunpack.c.0.s8 %v5292
        %v5294 = vlaneseq
        %v5295 = vshrl.u32 %v5294, 7
        %v5296 = vsub.s32 %v5293, %v5295
        %v5297 = vrot.slane %v5287, %v5296
        %v5299 = vunpack.c.l.s4 1966171168
        %v5300 = vunpack.c.0.s8 %v5299
        %v5301 = vlaneseq
        %v5302 = vshrl.u32 %v5301, 7
        %v5303 = vsub.s32 %v5300, %v5302
        %v5304 = vrot.slane %v5288, %v5303
        %v5306 = vunpack.c.l.s4 1966171168
        %v5307 = vunpack.c.0.s8 %v5306
        %v5308 = vlaneseq
        %v5309 = vshrl.u32 %v5308, 7
        %v5310 = vsub.s32 %v5307, %v5309
        %v5311 = vrot.slane %v5289, %v5310
        %v5313 = vunpack.c.l.s4 1966171168
        %v5314 = vunpack.c.0.s8 %v5313
        %v5315 = vlaneseq
        %v5316 = vshrl.u32 %v5315, 7
        %v5317 = vsub.s32 %v5314, %v5316
        %v5318 = vrot.slane %v5290, %v5317
        %v5319 = vcombine.low %v5297, %v5304
        %v5320 = vcombine.low %v5311, %v5318
        %v5322 = vunpack.c.l.s4 1966171168
        %v5323 = vunpack.c.0.s8 %v5322
        %v5324 = vlaneseq
        %v5325 = vshrl.u32 %v5324, 7
        %v5326 = vsub.s32 %v5323, %v5325
        %v5327 = vrot.slane %v5319, %v5326
        %v5329 = vunpack.c.l.s4 1966171168
        %v5330 = vunpack.c.0.s8 %v5329
        %v5331 = vlaneseq
        %v5332 = vshrl.u32 %v5331, 7
        %v5333 = vsub.s32 %v5330, %v5332
        %v5334 = vrot.slane %v5320, %v5333
        %v5335 = vcombine.low %v5327, %v5334
        %5337 = vst [vmem:[%s1211] sm:$0xff] %v5335
        %s5338 = smul.u32 8, %s14
        %p5339 = scmp.lt.s32.totalorder %s5338, 15
        %s5340 = scalar_select %p5339, %s5338, 15
        %s5341 = scalar_lea.vmem %s3, %s5340
        // Predicated region
        $region56: #{netg_forward.3} parent=50 // pred_check
          %p5342 = pneg %p100
        $region57: #{netg_forward.3} parent=50 // pred_check_branch
          %5344 = sbr.rel (%p5342) target = $region59
        $region58: #{netg_forward.3} parent=50 // pred_region
          %s5345 = smul.u32 8, %s14
        $region59: #{netg_forward.3} parent=50 // pred_fallthru
          _
      $region51: #{netg_forward.3} parent=5 // pred_fallthru
        _
      %p5346 = scmp.le.s32.totalorder 2, %s9
      // Predicated region
      $region60: #{netg_forward.3} parent=5 // pred_check
        %p5347 = pneg %p5346
      $region61: #{netg_forward.3} parent=5 // pred_check_branch
        %5349 = sbr.rel (%p5347) target = $region63
      $region62: #{netg_forward.3} parent=5 // pred_region
        %s5350 = ssub.s32 %s9, 2
        // Predicated region
        $region64: #{netg_forward.3} parent=62 // pred_check
          %p5351 = pneg %p106
        $region65: #{netg_forward.3} parent=62 // pred_check_branch
          %5353 = sbr.rel (%p5351) target = $region67
        $region66: #{netg_forward.3} parent=62 // pred_region
          %s5354 = smul.u32 8, %s15
          %p5355 = scmp.lt.s32.totalorder %s5354, 15
          %s5356 = scalar_select %p5355, %s5354, 15
          %s5357 = scalar_lea.vmem %s3, %s5356
        $region67: #{netg_forward.3} parent=62 // pred_fallthru
          _
      $region63: #{netg_forward.3} parent=5 // pred_fallthru
        _
    $region6: #{netg_forward.3} parent=1 // loop_footer
      %s13 = sadd.s32 1, %s9
    $region7: #{netg_forward.3} parent=1 // loop_footer_branch
      %8 = sbr.rel target = $region3
    $region8: #{netg_forward.3} parent=1 // loop_exit
      _

// kernel: netg_forward.4
$region0: #{netg_forward.4}
  #allocation0 [shape = 'u32[]', space=smem, size = 0x4, offset = 0x4, fixed_abs, tag = 'smem constant byte address 0x4 - core index']
  #allocation1 [shape = 'u32[144,128]{1,0:T(1,128)}', space=vmem, size = 0x12000, scoped, tag = 'internal scratch']
  %s0 = inlined_call_operand.vmem [shape: bf16[2,6,6,128], index: 0, kind: input, shape index: {}]
  %s1 = inlined_call_operand.vmem [shape: bf16[4,4,128,128], index: 1, kind: input, shape index: {}]
  %s2 = inlined_call_operand.vmem [shape: f32[1,128], index: 2, kind: input, shape index: {}]
  %s3 = inlined_call_operand.vmem [shape: bf16[32,512], index: 3, kind: output, shape index: {}]
  %s4 = sld [smem:[#allocation0]]
  $region45: #{netg_forward.4} parent=0
    _
  %s6 = ssub.s32 1, %s4
  %s7 = scalar_select 0, %s6, %s4
  loop: start=0, step=1, limit=4
  $region2: #{netg_forward.4} parent=0 // loop_pre_header
    _
  $region3: #{netg_forward.4} parent=0 // loop_header
    %s9 = sphi 0, %s13
    %p10 = scmp.ge.s32.totalorder %s9, 4
    %s19 = sphi 0, %s21
    %s22 = sphi 0, %s19
    %s23 = sphi 0, %s22
    %s39 = sphi 0, %s23
    %s43 = sphi 0, %s43
    %s45 = sphi 0, %s43
    %s46 = sphi 0, %s45
    %s60 = sphi 0, %s46
    %s64 = sphi 0, %s64
    %s66 = sphi 0, %s64
    %s67 = sphi 0, %s66
    %s81 = sphi 0, %s67
    %s87 = sphi 0, %s89
    %s90 = sphi 0, %s87
    %s91 = sphi 0, %s90
    %s107 = sphi 0, %s91
  $region4: #{netg_forward.4} parent=0 // loop_header_branch
    %12 = sbr.rel (%p10) target = $region8
  $region5: #{netg_forward.4} parent=0 // loop_body
    %s14 = ssub.s32 %s9, 1
    %s15 = ssub.s32 %s9, 2
    %s16 = sadd.s32 %s9, 1
    %s17 = ssub.s32 %s9, %s16
    %p18 = scmp.eq.s32.totalorder %s17, 0
    %s20 = sadd.s32 %s19, 1
    %s21 = scalar_select %p18, %s19, %s20
    %p24 = pneg %p18
    %p25 = scmp.eq.s32.totalorder %s9, 1
    %p26 = por %p24, %p25
    %p27 = scmp.ne.s32.totalorder %s19, %s22
    %p28 = scmp.eq.s32.totalorder %s9, 0
    %p29 = por %p27, %p28
    %p30 = scmp.ne.s32.totalorder %s19, %s22
    %p31 = scmp.eq.s32.totalorder %s14, 1
    %p32 = por %p30, %p31
    %p33 = scmp.ne.s32.totalorder %s22, %s23
    %p34 = scmp.eq.s32.totalorder %s14, 0
    %p35 = por %p33, %p34
    %p36 = scmp.ne.s32.totalorder %s22, %s23
    %p37 = scmp.eq.s32.totalorder %s15, 1
    %p38 = por %p36, %p37
    %p40 = scmp.ne.s32.totalorder %s23, %s39
    %p41 = scmp.eq.s32.totalorder %s15, 0
    %p42 = por %p40, %p41
    %s44 = sadd.s32 %s43, 1
    %p47 = scmp.eq.s32.totalorder %s9, 1
    %p48 = scmp.ne.s32.totalorder %s43, %s45
    %p49 = scmp.eq.s32.totalorder %s9, 0
    %p50 = por %p48, %p49
    %p51 = scmp.ne.s32.totalorder %s43, %s45
    %p52 = scmp.eq.s32.totalorder %s14, 1
    %p53 = por %p51, %p52
    %p54 = scmp.ne.s32.totalorder %s45, %s46
    %p55 = scmp.eq.s32.totalorder %s14, 0
    %p56 = por %p54, %p55
    %p57 = scmp.ne.s32.totalorder %s45, %s46
    %p58 = scmp.eq.s32.totalorder %s15, 1
    %p59 = por %p57, %p58
    %p61 = scmp.ne.s32.totalorder %s46, %s60
    %p62 = scmp.eq.s32.totalorder %s15, 0
    %p63 = por %p61, %p62
    %s65 = sadd.s32 %s64, 1
    %p68 = scmp.eq.s32.totalorder %s9, 1
    %p69 = scmp.ne.s32.totalorder %s64, %s66
    %p70 = scmp.eq.s32.totalorder %s9, 0
    %p71 = por %p69, %p70
    %p72 = scmp.ne.s32.totalorder %s64, %s66
    %p73 = scmp.eq.s32.totalorder %s14, 1
    %p74 = por %p72, %p73
    %p75 = scmp.ne.s32.totalorder %s66, %s67
    %p76 = scmp.eq.s32.totalorder %s14, 0
    %p77 = por %p75, %p76
    %p78 = scmp.ne.s32.totalorder %s66, %s67
    %p79 = scmp.eq.s32.totalorder %s15, 1
    %p80 = por %p78, %p79
    %p82 = scmp.ne.s32.totalorder %s67, %s81
    %p83 = scmp.eq.s32.totalorder %s15, 0
    %p84 = por %p82, %p83
    %s85 = ssub.s32 %s9, %s16
    %p86 = scmp.eq.s32.totalorder %s85, 0
    %s88 = sadd.s32 %s87, 1
    %s89 = scalar_select %p86, %s87, %s88
    %p92 = pneg %p86
    %p93 = scmp.eq.s32.totalorder %s9, 1
    %p94 = por %p92, %p93
    %p95 = scmp.ne.s32.totalorder %s87, %s90
    %p96 = scmp.eq.s32.totalorder %s9, 0
    %p97 = por %p95, %p96
    %p98 = scmp.ne.s32.totalorder %s87, %s90
    %p99 = scmp.eq.s32.totalorder %s14, 1
    %p100 = por %p98, %p99
    %p101 = scmp.ne.s32.totalorder %s90, %s91
    %p102 = scmp.eq.s32.totalorder %s14, 0
    %p103 = por %p101, %p102
    %p104 = scmp.ne.s32.totalorder %s90, %s91
    %p105 = scmp.eq.s32.totalorder %s15, 1
    %p106 = por %p104, %p105
    %p108 = scmp.ne.s32.totalorder %s91, %s107
    %p109 = scmp.eq.s32.totalorder %s15, 0
    %p110 = por %p108, %p109
    %p111 = scmp.le.s32.totalorder 1, %s9
    %p112 = scmp.lt.s32.totalorder %s9, 3
    %p113 = pnand %p111, %p112
    %p114 = pneg %p113
    // Predicated region
    $region9: #{netg_forward.4} parent=5 // pred_check
      _
    $region10: #{netg_forward.4} parent=5 // pred_check_branch
      %116 = sbr.rel (%p113) target = $region12
    $region11: #{netg_forward.4} parent=5 // pred_region
      %s117 = ssub.s32 %s9, 1
      // Predicated region
      $region13: #{netg_forward.4} parent=11 // pred_check
        %p118 = pneg %p56
      $region14: #{netg_forward.4} parent=11 // pred_check_branch
        %120 = sbr.rel (%p118) target = $region16
      $region15: #{netg_forward.4} parent=11 // pred_region
        _
      $region16: #{netg_forward.4} parent=11 // pred_fallthru
        _
      // Predicated region
      $region17: #{netg_forward.4} parent=11 // pred_check
        %p121 = pneg %p77
      $region18: #{netg_forward.4} parent=11 // pred_check_branch
        %123 = sbr.rel (%p121) target = $region20
      $region19: #{netg_forward.4} parent=11 // pred_region
        _
      $region20: #{netg_forward.4} parent=11 // pred_fallthru
        _
    $region12: #{netg_forward.4} parent=5 // pred_fallthru
      _
    %p124 = scmp.lt.s32.totalorder %s9, 2
    // Predicated region
    $region21: #{netg_forward.4} parent=5 // pred_check
      %p125 = pneg %p124
    $region22: #{netg_forward.4} parent=5 // pred_check_branch
      %127 = sbr.rel (%p125) target = $region24
    $region23: #{netg_forward.4} parent=5 // pred_region
      // Predicated region
      $region25: #{netg_forward.4} parent=23 // pred_check
        %p128 = pneg %p29
      $region26: #{netg_forward.4} parent=23 // pred_check_branch
        %130 = sbr.rel (%p128) target = $region28
      $region27: #{netg_forward.4} parent=23 // pred_region
        %p131 = scmp.lt.s32.totalorder %s9, 1
        %s132 = scalar_select %p131, %s9, 1
        %s133 = smul.addr %s132, 6
        %s134 = smul.addr %s133, 4
        %s135 = scalar_lea.vmem %s0, %s134
      $region28: #{netg_forward.4} parent=23 // pred_fallthru
        _
    $region24: #{netg_forward.4} parent=5 // pred_fallthru
      _
    %p136 = scmp.le.s32.totalorder 1, %s9
    %p137 = scmp.lt.s32.totalorder %s9, 3
    %p138 = pnand %p136, %p137
    %p139 = pneg %p138
    // Predicated region
    $region29: #{netg_forward.4} parent=5 // pred_check
      _
    $region30: #{netg_forward.4} parent=5 // pred_check_branch
      %141 = sbr.rel (%p138) target = $region32
    $region31: #{netg_forward.4} parent=5 // pred_region
      %s142 = ssub.s32 %s9, 1
      %p143 = scmp.lt.s32.totalorder %s14, 1
      %s144 = scalar_select %p143, %s14, 1
      %s145 = smul.addr %s144, 6
      %s146 = smul.addr %s145, 4
      %s147 = scalar_lea.vmem %s0, %s146
      %p148 = pneg %p35
      %p149 = pneg %p32
      %p150 = pneg %p56
      %p151 = pneg %p53
      %p152 = pneg %p77
      %p153 = pneg %p74
      %p154 = pneg %p103
      %p155 = pneg %p100
      %s156 = smul.u32 2, %s14
      %p157 = scmp.lt.s32.totalorder %s156, 3
      %s158 = scalar_select %p157, %s156, 3
      %s159 = smul.addr %s158, 4
      %s160 = smul.addr %s159, 4
      %s161 = scalar_lea.vmem %s3, %s160
      %p162 = scmp.lt.s32.totalorder %s14, 1
      %s163 = scalar_select %p162, %s14, 1
      %s164 = smul.addr %s163, 6
      %s165 = smul.addr %s164, 4
      %s166 = scalar_lea.vmem %s0, %s165
      %s167 = smul.u32 2, %s14
      %p168 = scmp.lt.s32.totalorder %s167, 3
      %s169 = scalar_select %p168, %s167, 3
      %s170 = smul.addr %s169, 4
      %s171 = smul.addr %s170, 4
      %s172 = scalar_lea.vmem %s3, %s171
      %s173 = smul.u32 2, %s14
      %v175 = vld [vmem:[%s2] sm:$0x1]
      %v176 = vld [vmem:[%s166] sm:$0x3]
      %v177 = vld [vmem:[%s166 + $0x4] sm:$0x3]
      %v178 = vld [vmem:[%s166 + $0x8] sm:$0x3]
      %v179 = vld [vmem:[%s166 + $0xc] sm:$0x3]
      %v180 = vld [vmem:[%s166] sm:$0x7]
      %v181 = vld [vmem:[%s166 + $0x4] sm:$0x7]
      %v182 = vld [vmem:[%s166 + $0x8] sm:$0x7]
      %v183 = vld [vmem:[%s166 + $0xc] sm:$0x7]
      %v189 = vunpack.c.l.s4 1983009808
      %v190 = vunpack.c.0.s8 %v189
      %v191 = vlaneseq
      %v192 = vshrl.u32 %v191, 7
      %v193 = vsub.s32 %v190, %v192
      %v194 = vrot.slane %v180, %v193
      %v195 = vcombine.high %v194, %v194
      %v197 = vunpack.c.l.s4 1983009808
      %v198 = vunpack.c.0.s8 %v197
      %v199 = vlaneseq
      %v200 = vshrl.u32 %v199, 7
      %v201 = vsub.s32 %v198, %v200
      %v202 = vrot.slane %v181, %v201
      %v203 = vcombine.high %v202, %v202
      %v205 = vunpack.c.l.s4 1983009808
      %v206 = vunpack.c.0.s8 %v205
      %v207 = vlaneseq
      %v208 = vshrl.u32 %v207, 7
      %v209 = vsub.s32 %v206, %v208
      %v210 = vrot.slane %v182, %v209
      %v211 = vcombine.high %v210, %v210
      %v213 = vunpack.c.l.s4 1983009808
      %v214 = vunpack.c.0.s8 %v213
      %v215 = vlaneseq
      %v216 = vshrl.u32 %v215, 7
      %v217 = vsub.s32 %v214, %v216
      %v218 = vrot.slane %v183, %v217
      %v219 = vcombine.high %v218, %v218
      %vm220 = vsmask.f32 1280
      %vm221 = vsmask.f32 3336
      %vm222 = vmor %vm220, %vm221
      %vm223 = vsmask.f32 5392
      %vm224 = vmor %vm222, %vm223
      %vm225 = vsmask.f32 7448
      %vm226 = vmor %vm224, %vm225
      %v228 = vshrl.u32 %v194, 16
      %v230 = vrot.slane %v228, 6
      %v231 = vshll.u32 %v194, 16
      %v233 = vrot.slane %v231, 7
      %v234 = vor.u32 %v230, %v233
      %v235 = vrot.slane %v234, 2
      %v237 = vshll.u32 %v195, 16
      %v239 = vrot.slane %v237, 7
      %v240 = vsel %vm226, %v235, %v239
      %v242 = vshrl.u32 %v202, 16
      %v244 = vrot.slane %v242, 6
      %v245 = vshll.u32 %v202, 16
      %v247 = vrot.slane %v245, 7
      %v248 = vor.u32 %v244, %v247
      %v249 = vrot.slane %v248, 2
      %v251 = vshll.u32 %v203, 16
      %v253 = vrot.slane %v251, 7
      %v254 = vsel %vm226, %v249, %v253
      %v256 = vshrl.u32 %v210, 16
      %v258 = vrot.slane %v256, 6
      %v259 = vshll.u32 %v210, 16
      %v261 = vrot.slane %v259, 7
      %v262 = vor.u32 %v258, %v261
      %v263 = vrot.slane %v262, 2
      %v265 = vshll.u32 %v211, 16
      %v267 = vrot.slane %v265, 7
      %v268 = vsel %vm226, %v263, %v267
      %v270 = vshrl.u32 %v218, 16
      %v272 = vrot.slane %v270, 6
      %v273 = vshll.u32 %v218, 16
      %v275 = vrot.slane %v273, 7
      %v276 = vor.u32 %v272, %v275
      %v277 = vrot.slane %v276, 2
      %v279 = vshll.u32 %v219, 16
      %v281 = vrot.slane %v279, 7
      %v282 = vsel %vm226, %v277, %v281
      %v283 = vld [vmem:[%s166] sm:$0x6]
      %v284 = vld [vmem:[%s166 + $0x4] sm:$0x6]
      %v285 = vld [vmem:[%s166 + $0x8] sm:$0x6]
      %v286 = vld [vmem:[%s166 + $0xc] sm:$0x6]
      %v292 = vunpack.c.l.s4 1983009808
      %v293 = vunpack.c.0.s8 %v292
      %v294 = vlaneseq
      %v295 = vshrl.u32 %v294, 7
      %v296 = vsub.s32 %v293, %v295
      %v297 = vrot.slane %v283, %v296
      %v298 = vcombine.high %v297, %v297
      %v300 = vunpack.c.l.s4 1983009808
      %v301 = vunpack.c.0.s8 %v300
      %v302 = vlaneseq
      %v303 = vshrl.u32 %v302, 7
      %v304 = vsub.s32 %v301, %v303
      %v305 = vrot.slane %v284, %v304
      %v306 = vcombine.high %v305, %v305
      %v308 = vunpack.c.l.s4 1983009808
      %v309 = vunpack.c.0.s8 %v308
      %v310 = vlaneseq
      %v311 = vshrl.u32 %v310, 7
      %v312 = vsub.s32 %v309, %v311
      %v313 = vrot.slane %v285, %v312
      %v314 = vcombine.high %v313, %v313
      %v316 = vunpack.c.l.s4 1983009808
      %v317 = vunpack.c.0.s8 %v316
      %v318 = vlaneseq
      %v319 = vshrl.u32 %v318, 7
      %v320 = vsub.s32 %v317, %v319
      %v321 = vrot.slane %v286, %v320
      %v322 = vcombine.high %v321, %v321
      %vm323 = vcmask 1040384
      %vm324 = vcmask 1042434
      %vm325 = vmor %vm323, %vm324
      %vm326 = vcmask 1044484
      %vm327 = vmor %vm325, %vm326
      %vm328 = vcmask 1046534
      %vm329 = vmor %vm327, %vm328
      %v330 = vrot.slane %v297, 7
      %v331 = vrot.slane %v330, 2
      %v332 = vrot.slane %v298, 7
      %v333 = vsel %vm329, %v331, %v332
      %v334 = vrot.slane %v305, 7
      %v335 = vrot.slane %v334, 2
      %v336 = vrot.slane %v306, 7
      %v337 = vsel %vm329, %v335, %v336
      %v338 = vrot.slane %v313, 7
      %v339 = vrot.slane %v338, 2
      %v340 = vrot.slane %v314, 7
      %v341 = vsel %vm329, %v339, %v340
      %v342 = vrot.slane %v321, 7
      %v343 = vrot.slane %v342, 2
      %v344 = vrot.slane %v322, 7
      %v345 = vsel %vm329, %v343, %v344
      %s346 = scalar_lea.vmem %s166, 4
      %v347 = vld [vmem:[%s346] sm:$0x3]
      %v348 = vld [vmem:[%s346 + $0x4] sm:$0x3]
      %v349 = vld [vmem:[%s346 + $0x8] sm:$0x3]
      %v350 = vld [vmem:[%s346 + $0xc] sm:$0x3]
      %v351 = vld [vmem:[%s346] sm:$0x7]
      %v352 = vld [vmem:[%s346 + $0x4] sm:$0x7]
      %v353 = vld [vmem:[%s346 + $0x8] sm:$0x7]
      %v354 = vld [vmem:[%s346 + $0xc] sm:$0x7]
      %v360 = vunpack.c.l.s4 1983009808
      %v361 = vunpack.c.0.s8 %v360
      %v362 = vlaneseq
      %v363 = vshrl.u32 %v362, 7
      %v364 = vsub.s32 %v361, %v363
      %v365 = vrot.slane %v351, %v364
      %v366 = vcombine.high %v365, %v365
      %v368 = vunpack.c.l.s4 1983009808
      %v369 = vunpack.c.0.s8 %v368
      %v370 = vlaneseq
      %v371 = vshrl.u32 %v370, 7
      %v372 = vsub.s32 %v369, %v371
      %v373 = vrot.slane %v352, %v372
      %v374 = vcombine.high %v373, %v373
      %v376 = vunpack.c.l.s4 1983009808
      %v377 = vunpack.c.0.s8 %v376
      %v378 = vlaneseq
      %v379 = vshrl.u32 %v378, 7
      %v380 = vsub.s32 %v377, %v379
      %v381 = vrot.slane %v353, %v380
      %v382 = vcombine.high %v381, %v381
      %v384 = vunpack.c.l.s4 1983009808
      %v385 = vunpack.c.0.s8 %v384
      %v386 = vlaneseq
      %v387 = vshrl.u32 %v386, 7
      %v388 = vsub.s32 %v385, %v387
      %v389 = vrot.slane %v354, %v388
      %v390 = vcombine.high %v389, %v389
      %v392 = vshrl.u32 %v365, 16
      %v394 = vrot.slane %v392, 6
      %v395 = vshll.u32 %v365, 16
      %v397 = vrot.slane %v395, 7
      %v398 = vor.u32 %v394, %v397
      %v399 = vrot.slane %v398, 2
      %v401 = vshll.u32 %v366, 16
      %v403 = vrot.slane %v401, 7
      %v404 = vsel %vm226, %v399, %v403
      %v406 = vshrl.u32 %v373, 16
      %v408 = vrot.slane %v406, 6
      %v409 = vshll.u32 %v373, 16
      %v411 = vrot.slane %v409, 7
      %v412 = vor.u32 %v408, %v411
      %v413 = vrot.slane %v412, 2
      %v415 = vshll.u32 %v374, 16
      %v417 = vrot.slane %v415, 7
      %v418 = vsel %vm226, %v413, %v417
      %v420 = vshrl.u32 %v381, 16
      %v422 = vrot.slane %v420, 6
      %v423 = vshll.u32 %v381, 16
      %v425 = vrot.slane %v423, 7
      %v426 = vor.u32 %v422, %v425
      %v427 = vrot.slane %v426, 2
      %v429 = vshll.u32 %v382, 16
      %v431 = vrot.slane %v429, 7
      %v432 = vsel %vm226, %v427, %v431
      %v434 = vshrl.u32 %v389, 16
      %v436 = vrot.slane %v434, 6
      %v437 = vshll.u32 %v389, 16
      %v439 = vrot.slane %v437, 7
      %v440 = vor.u32 %v436, %v439
      %v441 = vrot.slane %v440, 2
      %v443 = vshll.u32 %v390, 16
      %v445 = vrot.slane %v443, 7
      %v446 = vsel %vm226, %v441, %v445
      %v447 = vld [vmem:[%s346] sm:$0x6]
      %v448 = vld [vmem:[%s346 + $0x4] sm:$0x6]
      %v449 = vld [vmem:[%s346 + $0x8] sm:$0x6]
      %v450 = vld [vmem:[%s346 + $0xc] sm:$0x6]
      %v456 = vunpack.c.l.s4 1983009808
      %v457 = vunpack.c.0.s8 %v456
      %v458 = vlaneseq
      %v459 = vshrl.u32 %v458, 7
      %v460 = vsub.s32 %v457, %v459
      %v461 = vrot.slane %v447, %v460
      %v462 = vcombine.high %v461, %v461
      %v464 = vunpack.c.l.s4 1983009808
      %v465 = vunpack.c.0.s8 %v464
      %v466 = vlaneseq
      %v467 = vshrl.u32 %v466, 7
      %v468 = vsub.s32 %v465, %v467
      %v469 = vrot.slane %v448, %v468
      %v470 = vcombine.high %v469, %v469
      %v472 = vunpack.c.l.s4 1983009808
      %v473 = vunpack.c.0.s8 %v472
      %v474 = vlaneseq
      %v475 = vshrl.u32 %v474, 7
      %v476 = vsub.s32 %v473, %v475
      %v477 = vrot.slane %v449, %v476
      %v478 = vcombine.high %v477, %v477
      %v480 = vunpack.c.l.s4 1983009808
      %v481 = vunpack.c.0.s8 %v480
      %v482 = vlaneseq
      %v483 = vshrl.u32 %v482, 7
      %v484 = vsub.s32 %v481, %v483
      %v485 = vrot.slane %v450, %v484
      %v486 = vcombine.high %v485, %v485
      %v487 = vrot.slane %v461, 7
      %v488 = vrot.slane %v487, 2
      %v489 = vrot.slane %v462, 7
      %v490 = vsel %vm329, %v488, %v489
      %v491 = vrot.slane %v469, 7
      %v492 = vrot.slane %v491, 2
      %v493 = vrot.slane %v470, 7
      %v494 = vsel %vm329, %v492, %v493
      %v495 = vrot.slane %v477, 7
      %v496 = vrot.slane %v495, 2
      %v497 = vrot.slane %v478, 7
      %v498 = vsel %vm329, %v496, %v497
      %v499 = vrot.slane %v485, 7
      %v500 = vrot.slane %v499, 2
      %v501 = vrot.slane %v486, 7
      %v502 = vsel %vm329, %v500, %v501
      %s503 = scalar_lea.vmem %s166, 8
      %v504 = vld [vmem:[%s503] sm:$0x3]
      %v505 = vld [vmem:[%s503 + $0x4] sm:$0x3]
      %v506 = vld [vmem:[%s503 + $0x8] sm:$0x3]
      %v507 = vld [vmem:[%s503 + $0xc] sm:$0x3]
      %v508 = vld [vmem:[%s503] sm:$0x7]
      %v509 = vld [vmem:[%s503 + $0x4] sm:$0x7]
      %v510 = vld [vmem:[%s503 + $0x8] sm:$0x7]
      %v511 = vld [vmem:[%s503 + $0xc] sm:$0x7]
      %v517 = vunpack.c.l.s4 1983009808
      %v518 = vunpack.c.0.s8 %v517
      %v519 = vlaneseq
      %v520 = vshrl.u32 %v519, 7
      %v521 = vsub.s32 %v518, %v520
      %v522 = vrot.slane %v508, %v521
      %v523 = vcombine.high %v522, %v522
      %v525 = vunpack.c.l.s4 1983009808
      %v526 = vunpack.c.0.s8 %v525
      %v527 = vlaneseq
      %v528 = vshrl.u32 %v527, 7
      %v529 = vsub.s32 %v526, %v528
      %v530 = vrot.slane %v509, %v529
      %v531 = vcombine.high %v530, %v530
      %v533 = vunpack.c.l.s4 1983009808
      %v534 = vunpack.c.0.s8 %v533
      %v535 = vlaneseq
      %v536 = vshrl.u32 %v535, 7
      %v537 = vsub.s32 %v534, %v536
      %v538 = vrot.slane %v510, %v537
      %v539 = vcombine.high %v538, %v538
      %v541 = vunpack.c.l.s4 1983009808
      %v542 = vunpack.c.0.s8 %v541
      %v543 = vlaneseq
      %v544 = vshrl.u32 %v543, 7
      %v545 = vsub.s32 %v542, %v544
      %v546 = vrot.slane %v511, %v545
      %v547 = vcombine.high %v546, %v546
      %v549 = vshrl.u32 %v522, 16
      %v551 = vrot.slane %v549, 6
      %v552 = vshll.u32 %v522, 16
      %v554 = vrot.slane %v552, 7
      %v555 = vor.u32 %v551, %v554
      %v556 = vrot.slane %v555, 2
      %v558 = vshll.u32 %v523, 16
      %v560 = vrot.slane %v558, 7
      %v561 = vsel %vm226, %v556, %v560
      %v563 = vshrl.u32 %v530, 16
      %v565 = vrot.slane %v563, 6
      %v566 = vshll.u32 %v530, 16
      %v568 = vrot.slane %v566, 7
      %v569 = vor.u32 %v565, %v568
      %v570 = vrot.slane %v569, 2
      %v572 = vshll.u32 %v531, 16
      %v574 = vrot.slane %v572, 7
      %v575 = vsel %vm226, %v570, %v574
      %v577 = vshrl.u32 %v538, 16
      %v579 = vrot.slane %v577, 6
      %v580 = vshll.u32 %v538, 16
      %v582 = vrot.slane %v580, 7
      %v583 = vor.u32 %v579, %v582
      %v584 = vrot.slane %v583, 2
      %v586 = vshll.u32 %v539, 16
      %v588 = vrot.slane %v586, 7
      %v589 = vsel %vm226, %v584, %v588
      %v591 = vshrl.u32 %v546, 16
      %v593 = vrot.slane %v591, 6
      %v594 = vshll.u32 %v546, 16
      %v596 = vrot.slane %v594, 7
      %v597 = vor.u32 %v593, %v596
      %v598 = vrot.slane %v597, 2
      %v600 = vshll.u32 %v547, 16
      %v602 = vrot.slane %v600, 7
      %v603 = vsel %vm226, %v598, %v602
      %v604 = vld [vmem:[%s503] sm:$0x6]
      %v605 = vld [vmem:[%s503 + $0x4] sm:$0x6]
      %v606 = vld [vmem:[%s503 + $0x8] sm:$0x6]
      %v607 = vld [vmem:[%s503 + $0xc] sm:$0x6]
      %v613 = vunpack.c.l.s4 1983009808
      %v614 = vunpack.c.0.s8 %v613
      %v615 = vlaneseq
      %v616 = vshrl.u32 %v615, 7
      %v617 = vsub.s32 %v614, %v616
      %v618 = vrot.slane %v604, %v617
      %v619 = vcombine.high %v618, %v618
      %v621 = vunpack.c.l.s4 1983009808
      %v622 = vunpack.c.0.s8 %v621
      %v623 = vlaneseq
      %v624 = vshrl.u32 %v623, 7
      %v625 = vsub.s32 %v622, %v624
      %v626 = vrot.slane %v605, %v625
      %v627 = vcombine.high %v626, %v626
      %v629 = vunpack.c.l.s4 1983009808
      %v630 = vunpack.c.0.s8 %v629
      %v631 = vlaneseq
      %v632 = vshrl.u32 %v631, 7
      %v633 = vsub.s32 %v630, %v632
      %v634 = vrot.slane %v606, %v633
      %v635 = vcombine.high %v634, %v634
      %v637 = vunpack.c.l.s4 1983009808
      %v638 = vunpack.c.0.s8 %v637
      %v639 = vlaneseq
      %v640 = vshrl.u32 %v639, 7
      %v641 = vsub.s32 %v638, %v640
      %v642 = vrot.slane %v607, %v641
      %v643 = vcombine.high %v642, %v642
      %v644 = vrot.slane %v618, 7
      %v645 = vrot.slane %v644, 2
      %v646 = vrot.slane %v619, 7
      %v647 = vsel %vm329, %v645, %v646
      %v648 = vrot.slane %v626, 7
      %v649 = vrot.slane %v648, 2
      %v650 = vrot.slane %v627, 7
      %v651 = vsel %vm329, %v649, %v650
      %v652 = vrot.slane %v634, 7
      %v653 = vrot.slane %v652, 2
      %v654 = vrot.slane %v635, 7
      %v655 = vsel %vm329, %v653, %v654
      %v656 = vrot.slane %v642, 7
      %v657 = vrot.slane %v656, 2
      %v658 = vrot.slane %v643, 7
      %v659 = vsel %vm329, %v657, %v658
      %s660 = scalar_lea.vmem %s1, 960
      %v661 = vld [vmem:[%s660] sm:$0xf]
      %v662 = vld [vmem:[%s660 + $0x4] sm:$0xf]
      %v663 = vld [vmem:[%s660 + $0x8] sm:$0xf]
      %v664 = vld [vmem:[%s660 + $0xc] sm:$0xf]
      %v665 = vld [vmem:[%s660 + $0x10] sm:$0xf]
      %v666 = vld [vmem:[%s660 + $0x14] sm:$0xf]
      %v667 = vld [vmem:[%s660 + $0x18] sm:$0xf]
      %v668 = vld [vmem:[%s660 + $0x1c] sm:$0xf]
      %v669 = vld [vmem:[%s660 + $0x20] sm:$0xf]
      %v670 = vld [vmem:[%s660 + $0x24] sm:$0xf]
      %v671 = vld [vmem:[%s660 + $0x28] sm:$0xf]
      %v672 = vld [vmem:[%s660 + $0x2c] sm:$0xf]
      %v673 = vld [vmem:[%s660 + $0x30] sm:$0xf]
      %v674 = vld [vmem:[%s660 + $0x34] sm:$0xf]
      %v675 = vld [vmem:[%s660 + $0x38] sm:$0xf]
      %v676 = vld [vmem:[%s660 + $0x3c] sm:$0xf]
      %s677 = scalar_lea.vmem %s1, 832
      %v678 = vld [vmem:[%s677] sm:$0xf]
      %v679 = vld [vmem:[%s677 + $0x4] sm:$0xf]
      %v680 = vld [vmem:[%s677 + $0x8] sm:$0xf]
      %v681 = vld [vmem:[%s677 + $0xc] sm:$0xf]
      %v682 = vld [vmem:[%s677 + $0x10] sm:$0xf]
      %v683 = vld [vmem:[%s677 + $0x14] sm:$0xf]
      %v684 = vld [vmem:[%s677 + $0x18] sm:$0xf]
      %v685 = vld [vmem:[%s677 + $0x1c] sm:$0xf]
      %v686 = vld [vmem:[%s677 + $0x20] sm:$0xf]
      %v687 = vld [vmem:[%s677 + $0x24] sm:$0xf]
      %v688 = vld [vmem:[%s677 + $0x28] sm:$0xf]
      %v689 = vld [vmem:[%s677 + $0x2c] sm:$0xf]
      %v690 = vld [vmem:[%s677 + $0x30] sm:$0xf]
      %v691 = vld [vmem:[%s677 + $0x34] sm:$0xf]
      %v692 = vld [vmem:[%s677 + $0x38] sm:$0xf]
      %v693 = vld [vmem:[%s677 + $0x3c] sm:$0xf]
      %v694 = vcombine.low %v240, %v254
      %v695 = vcombine.low %v268, %v282
      %v697 = vunpack.c.l.s4 1983009808
      %v698 = vunpack.c.0.s8 %v697
      %v699 = vlaneseq
      %v700 = vshrl.u32 %v699, 7
      %v701 = vsub.s32 %v698, %v700
      %v702 = vrot.slane %v694, %v701
      %v704 = vunpack.c.l.s4 1983009808
      %v705 = vunpack.c.0.s8 %v704
      %v706 = vlaneseq
      %v707 = vshrl.u32 %v706, 7
      %v708 = vsub.s32 %v705, %v707
      %v709 = vrot.slane %v695, %v708
      %v710 = vcombine.low %v702, %v709
      %v728 = vunpack.c.l.b16 %v678
      %v729 = vunpack.c.l.b16 %v679
      %v730 = vunpack.c.l.b16 %v680
      %v731 = vunpack.c.l.b16 %v681
      %v732 = vunpack.c.l.b16 %v682
      %v733 = vunpack.c.l.b16 %v683
      %v734 = vunpack.c.l.b16 %v684
      %v735 = vunpack.c.l.b16 %v685
      %v736 = vunpack.c.l.b16 %v686
      %v737 = vunpack.c.l.b16 %v687
      %v738 = vunpack.c.l.b16 %v688
      %v739 = vunpack.c.l.b16 %v689
      %v740 = vunpack.c.l.b16 %v690
      %v741 = vunpack.c.l.b16 %v691
      %v742 = vunpack.c.l.b16 %v692
      %v743 = vunpack.c.l.b16 %v693
      %v744 = vpack.c.b16 %v729, %v728
      %v745 = vpack.c.b16 %v731, %v730
      %v746 = vpack.c.b16 %v733, %v732
      %v747 = vpack.c.b16 %v735, %v734
      %v748 = vpack.c.b16 %v737, %v736
      %v749 = vpack.c.b16 %v739, %v738
      %v750 = vpack.c.b16 %v741, %v740
      %v751 = vpack.c.b16 %v743, %v742
      %760 = vmatprep.subr.bf16.mxu0 0
      %761 = vmatpush1.bf16.msra.mxu0 %v744
      %762 = vmatprep.subr.bf16.mxu0 0
      %763 = vmatpush1.bf16.msra.mxu0 %v745
      %764 = vmatprep.subr.bf16.mxu0 0
      %765 = vmatpush1.bf16.msra.mxu0 %v746
      %766 = vmatprep.subr.bf16.mxu0 0
      %767 = vmatpush1.bf16.msra.mxu0 %v747
      %768 = vmatprep.subr.bf16.mxu0 0
      %769 = vmatpush1.bf16.msra.mxu0 %v748
      %770 = vmatprep.subr.bf16.mxu0 0
      %771 = vmatpush1.bf16.msra.mxu0 %v749
      %772 = vmatprep.subr.bf16.mxu0 0
      %773 = vmatpush1.bf16.msra.mxu0 %v750
      %774 = vmatprep.subr.bf16.mxu0 0
      %775 = vmatpush1.bf16.msra.mxu0 %v751
      %776 = vmatprep.subr.bf16.mxu0 0
      %777 = vmatpush1.bf16.msra.mxu0 0
      %778 = vmatprep.subr.bf16.mxu0 0
      %779 = vmatpush1.bf16.msra.mxu0 0
      %780 = vmatprep.subr.bf16.mxu0 0
      %781 = vmatpush1.bf16.msra.mxu0 0
      %782 = vmatprep.subr.bf16.mxu0 0
      %783 = vmatpush1.bf16.msra.mxu0 0
      %784 = vmatprep.subr.bf16.mxu0 0
      %785 = vmatpush1.bf16.msra.mxu0 0
      %786 = vmatprep.subr.bf16.mxu0 0
      %787 = vmatpush1.bf16.msra.mxu0 0
      %788 = vmatprep.subr.bf16.mxu0 0
      %789 = vmatpush1.bf16.msra.mxu0 0
      %790 = vmatprep.subr.bf16.mxu0 0
      %791 = vmatpush1.bf16.msra.mxu0 0
      %792 = vmatprep.mubr.bf16.mxu0 0
      %793 = vmatmul.mubr.bf16.gmra.mrb[0].mxu0 %v710
      %v794 = vpop.f32.mrb[0].mxu0
      %v795 = vadd.f32 0.0, %v794
      %v796 = vpop.f32.mrb[0].mxu0
      %v797 = vpop.f32.mrb[0].mxu0
      %v798 = vadd.f32 0.0, %v797
      %v799 = vpop.f32.mrb[0].mxu0
      %800 = vdwg.mxu0
      %v805 = vcombine.low %v176, %v177
      %v806 = vcombine.low %v178, %v179
      %v808 = vunpack.c.l.s4 1983009808
      %v809 = vunpack.c.0.s8 %v808
      %v810 = vlaneseq
      %v811 = vshrl.u32 %v810, 7
      %v812 = vsub.s32 %v809, %v811
      %v813 = vrot.slane %v805, %v812
      %v815 = vunpack.c.l.s4 1983009808
      %v816 = vunpack.c.0.s8 %v815
      %v817 = vlaneseq
      %v818 = vshrl.u32 %v817, 7
      %v819 = vsub.s32 %v816, %v818
      %v820 = vrot.slane %v806, %v819
      %v821 = vcombine.low %v813, %v820
      %v839 = vunpack.c.l.b16 %v661
      %v840 = vunpack.c.l.b16 %v662
      %v841 = vunpack.c.l.b16 %v663
      %v842 = vunpack.c.l.b16 %v664
      %v843 = vunpack.c.l.b16 %v665
      %v844 = vunpack.c.l.b16 %v666
      %v845 = vunpack.c.l.b16 %v667
      %v846 = vunpack.c.l.b16 %v668
      %v847 = vunpack.c.l.b16 %v669
      %v848 = vunpack.c.l.b16 %v670
      %v849 = vunpack.c.l.b16 %v671
      %v850 = vunpack.c.l.b16 %v672
      %v851 = vunpack.c.l.b16 %v673
      %v852 = vunpack.c.l.b16 %v674
      %v853 = vunpack.c.l.b16 %v675
      %v854 = vunpack.c.l.b16 %v676
      %v855 = vpack.c.b16 %v840, %v839
      %v856 = vpack.c.b16 %v842, %v841
      %v857 = vpack.c.b16 %v844, %v843
      %v858 = vpack.c.b16 %v846, %v845
      %v859 = vpack.c.b16 %v848, %v847
      %v860 = vpack.c.b16 %v850, %v849
      %v861 = vpack.c.b16 %v852, %v851
      %v862 = vpack.c.b16 %v854, %v853
      %871 = vmatprep.subr.bf16.mxu0 0
      %872 = vmatpush1.bf16.msra.mxu0 %v855
      %873 = vmatprep.subr.bf16.mxu0 0
      %874 = vmatpush1.bf16.msra.mxu0 %v856
      %875 = vmatprep.subr.bf16.mxu0 0
      %876 = vmatpush1.bf16.msra.mxu0 %v857
      %877 = vmatprep.subr.bf16.mxu0 0
      %878 = vmatpush1.bf16.msra.mxu0 %v858
      %879 = vmatprep.subr.bf16.mxu0 0
      %880 = vmatpush1.bf16.msra.mxu0 %v859
      %881 = vmatprep.subr.bf16.mxu0 0
      %882 = vmatpush1.bf16.msra.mxu0 %v860
      %883 = vmatprep.subr.bf16.mxu0 0
      %884 = vmatpush1.bf16.msra.mxu0 %v861
      %885 = vmatprep.subr.bf16.mxu0 0
      %886 = vmatpush1.bf16.msra.mxu0 %v862
      %887 = vmatprep.subr.bf16.mxu0 0
      %888 = vmatpush1.bf16.msra.mxu0 0
      %889 = vmatprep.subr.bf16.mxu0 0
      %890 = vmatpush1.bf16.msra.mxu0 0
      %891 = vmatprep.subr.bf16.mxu0 0
      %892 = vmatpush1.bf16.msra.mxu0 0
      %893 = vmatprep.subr.bf16.mxu0 0
      %894 = vmatpush1.bf16.msra.mxu0 0
      %895 = vmatprep.subr.bf16.mxu0 0
      %896 = vmatpush1.bf16.msra.mxu0 0
      %897 = vmatprep.subr.bf16.mxu0 0
      %898 = vmatpush1.bf16.msra.mxu0 0
      %899 = vmatprep.subr.bf16.mxu0 0
      %900 = vmatpush1.bf16.msra.mxu0 0
      %901 = vmatprep.subr.bf16.mxu0 0
      %902 = vmatpush1.bf16.msra.mxu0 0
      %903 = vmatprep.mubr.bf16.mxu0 0
      %904 = vmatmul.mubr.bf16.gmra.mrb[0].mxu0 %v821
      %v905 = vpop.f32.mrb[0].mxu0
      %v906 = vadd.f32 %v795, %v905
      %v907 = vpop.f32.mrb[0].mxu0
      %v908 = vpop.f32.mrb[0].mxu0
      %v909 = vadd.f32 %v798, %v908
      %v910 = vpop.f32.mrb[0].mxu0
      %911 = vdwg.mxu0
      %s912 = scalar_lea.vmem %s1, 448
      %v913 = vld [vmem:[%s912] sm:$0xf]
      %v914 = vld [vmem:[%s912 + $0x4] sm:$0xf]
      %v915 = vld [vmem:[%s912 + $0x8] sm:$0xf]
      %v916 = vld [vmem:[%s912 + $0xc] sm:$0xf]
      %v917 = vld [vmem:[%s912 + $0x10] sm:$0xf]
      %v918 = vld [vmem:[%s912 + $0x14] sm:$0xf]
      %v919 = vld [vmem:[%s912 + $0x18] sm:$0xf]
      %v920 = vld [vmem:[%s912 + $0x1c] sm:$0xf]
      %v921 = vld [vmem:[%s912 + $0x20] sm:$0xf]
      %v922 = vld [vmem:[%s912 + $0x24] sm:$0xf]
      %v923 = vld [vmem:[%s912 + $0x28] sm:$0xf]
      %v924 = vld [vmem:[%s912 + $0x2c] sm:$0xf]
      %v925 = vld [vmem:[%s912 + $0x30] sm:$0xf]
      %v926 = vld [vmem:[%s912 + $0x34] sm:$0xf]
      %v927 = vld [vmem:[%s912 + $0x38] sm:$0xf]
      %v928 = vld [vmem:[%s912 + $0x3c] sm:$0xf]
      %v933 = vcombine.low %v347, %v348
      %v934 = vcombine.low %v349, %v350
      %v936 = vunpack.c.l.s4 1983009808
      %v937 = vunpack.c.0.s8 %v936
      %v938 = vlaneseq
      %v939 = vshrl.u32 %v938, 7
      %v940 = vsub.s32 %v937, %v939
      %v941 = vrot.slane %v933, %v940
      %v943 = vunpack.c.l.s4 1983009808
      %v944 = vunpack.c.0.s8 %v943
      %v945 = vlaneseq
      %v946 = vshrl.u32 %v945, 7
      %v947 = vsub.s32 %v944, %v946
      %v948 = vrot.slane %v934, %v947
      %v949 = vcombine.low %v941, %v948
      %v967 = vunpack.c.l.b16 %v913
      %v968 = vunpack.c.l.b16 %v914
      %v969 = vunpack.c.l.b16 %v915
      %v970 = vunpack.c.l.b16 %v916
      %v971 = vunpack.c.l.b16 %v917
      %v972 = vunpack.c.l.b16 %v918
      %v973 = vunpack.c.l.b16 %v919
      %v974 = vunpack.c.l.b16 %v920
      %v975 = vunpack.c.l.b16 %v921
      %v976 = vunpack.c.l.b16 %v922
      %v977 = vunpack.c.l.b16 %v923
      %v978 = vunpack.c.l.b16 %v924
      %v979 = vunpack.c.l.b16 %v925
      %v980 = vunpack.c.l.b16 %v926
      %v981 = vunpack.c.l.b16 %v927
      %v982 = vunpack.c.l.b16 %v928
      %v983 = vpack.c.b16 %v968, %v967
      %v984 = vpack.c.b16 %v970, %v969
      %v985 = vpack.c.b16 %v972, %v971
      %v986 = vpack.c.b16 %v974, %v973
      %v987 = vpack.c.b16 %v976, %v975
      %v988 = vpack.c.b16 %v978, %v977
      %v989 = vpack.c.b16 %v980, %v979
      %v990 = vpack.c.b16 %v982, %v981
      %999 = vmatprep.subr.bf16.mxu0 0
      %1000 = vmatpush1.bf16.msra.mxu0 %v983
      %1001 = vmatprep.subr.bf16.mxu0 0
      %1002 = vmatpush1.bf16.msra.mxu0 %v984
      %1003 = vmatprep.subr.bf16.mxu0 0
      %1004 = vmatpush1.bf16.msra.mxu0 %v985
      %1005 = vmatprep.subr.bf16.mxu0 0
      %1006 = vmatpush1.bf16.msra.mxu0 %v986
      %1007 = vmatprep.subr.bf16.mxu0 0
      %1008 = vmatpush1.bf16.msra.mxu0 %v987
      %1009 = vmatprep.subr.bf16.mxu0 0
      %1010 = vmatpush1.bf16.msra.mxu0 %v988
      %1011 = vmatprep.subr.bf16.mxu0 0
      %1012 = vmatpush1.bf16.msra.mxu0 %v989
      %1013 = vmatprep.subr.bf16.mxu0 0
      %1014 = vmatpush1.bf16.msra.mxu0 %v990
      %1015 = vmatprep.subr.bf16.mxu0 0
      %1016 = vmatpush1.bf16.msra.mxu0 0
      %1017 = vmatprep.subr.bf16.mxu0 0
      %1018 = vmatpush1.bf16.msra.mxu0 0
      %1019 = vmatprep.subr.bf16.mxu0 0
      %1020 = vmatpush1.bf16.msra.mxu0 0
      %1021 = vmatprep.subr.bf16.mxu0 0
      %1022 = vmatpush1.bf16.msra.mxu0 0
      %1023 = vmatprep.subr.bf16.mxu0 0
      %1024 = vmatpush1.bf16.msra.mxu0 0
      %1025 = vmatprep.subr.bf16.mxu0 0
      %1026 = vmatpush1.bf16.msra.mxu0 0
      %1027 = vmatprep.subr.bf16.mxu0 0
      %1028 = vmatpush1.bf16.msra.mxu0 0
      %1029 = vmatprep.subr.bf16.mxu0 0
      %1030 = vmatpush1.bf16.msra.mxu0 0
      %1031 = vmatprep.mubr.bf16.mxu0 0
      %1032 = vmatmul.mubr.bf16.gmra.mrb[0].mxu0 %v949
      %v1033 = vpop.f32.mrb[0].mxu0
      %v1034 = vadd.f32 0.0, %v1033
      %v1035 = vpop.f32.mrb[0].mxu0
      %v1036 = vpop.f32.mrb[0].mxu0
      %v1037 = vadd.f32 0.0, %v1036
      %v1038 = vpop.f32.mrb[0].mxu0
      %1039 = vdwg.mxu0
      %v1040 = vadd.f32 %v906, %v1034
      %v1041 = vadd.f32 %v909, %v1037
      %s1042 = scalar_lea.vmem %s1, 320
      %v1043 = vld [vmem:[%s1042] sm:$0xf]
      %v1044 = vld [vmem:[%s1042 + $0x4] sm:$0xf]
      %v1045 = vld [vmem:[%s1042 + $0x8] sm:$0xf]
      %v1046 = vld [vmem:[%s1042 + $0xc] sm:$0xf]
      %v1047 = vld [vmem:[%s1042 + $0x10] sm:$0xf]
      %v1048 = vld [vmem:[%s1042 + $0x14] sm:$0xf]
      %v1049 = vld [vmem:[%s1042 + $0x18] sm:$0xf]
      %v1050 = vld [vmem:[%s1042 + $0x1c] sm:$0xf]
      %v1051 = vld [vmem:[%s1042 + $0x20] sm:$0xf]
      %v1052 = vld [vmem:[%s1042 + $0x24] sm:$0xf]
      %v1053 = vld [vmem:[%s1042 + $0x28] sm:$0xf]
      %v1054 = vld [vmem:[%s1042 + $0x2c] sm:$0xf]
      %v1055 = vld [vmem:[%s1042 + $0x30] sm:$0xf]
      %v1056 = vld [vmem:[%s1042 + $0x34] sm:$0xf]
      %v1057 = vld [vmem:[%s1042 + $0x38] sm:$0xf]
      %v1058 = vld [vmem:[%s1042 + $0x3c] sm:$0xf]
      %v1059 = vcombine.low %v404, %v418
      %v1060 = vcombine.low %v432, %v446
      %v1062 = vunpack.c.l.s4 1983009808
      %v1063 = vunpack.c.0.s8 %v1062
      %v1064 = vlaneseq
      %v1065 = vshrl.u32 %v1064, 7
      %v1066 = vsub.s32 %v1063, %v1065
      %v1067 = vrot.slane %v1059, %v1066
      %v1069 = vunpack.c.l.s4 1983009808
      %v1070 = vunpack.c.0.s8 %v1069
      %v1071 = vlaneseq
      %v1072 = vshrl.u32 %v1071, 7
      %v1073 = vsub.s32 %v1070, %v1072
      %v1074 = vrot.slane %v1060, %v1073
      %v1075 = vcombine.low %v1067, %v1074
      %v1093 = vunpack.c.l.b16 %v1043
      %v1094 = vunpack.c.l.b16 %v1044
      %v1095 = vunpack.c.l.b16 %v1045
      %v1096 = vunpack.c.l.b16 %v1046
      %v1097 = vunpack.c.l.b16 %v1047
      %v1098 = vunpack.c.l.b16 %v1048
      %v1099 = vunpack.c.l.b16 %v1049
      %v1100 = vunpack.c.l.b16 %v1050
      %v1101 = vunpack.c.l.b16 %v1051
      %v1102 = vunpack.c.l.b16 %v1052
      %v1103 = vunpack.c.l.b16 %v1053
      %v1104 = vunpack.c.l.b16 %v1054
      %v1105 = vunpack.c.l.b16 %v1055
      %v1106 = vunpack.c.l.b16 %v1056
      %v1107 = vunpack.c.l.b16 %v1057
      %v1108 = vunpack.c.l.b16 %v1058
      %v1109 = vpack.c.b16 %v1094, %v1093
      %v1110 = vpack.c.b16 %v1096, %v1095
      %v1111 = vpack.c.b16 %v1098, %v1097
      %v1112 = vpack.c.b16 %v1100, %v1099
      %v1113 = vpack.c.b16 %v1102, %v1101
      %v1114 = vpack.c.b16 %v1104, %v1103
      %v1115 = vpack.c.b16 %v1106, %v1105
      %v1116 = vpack.c.b16 %v1108, %v1107
      %1125 = vmatprep.subr.bf16.mxu0 0
      %1126 = vmatpush1.bf16.msra.mxu0 %v1109
      %1127 = vmatprep.subr.bf16.mxu0 0
      %1128 = vmatpush1.bf16.msra.mxu0 %v1110
      %1129 = vmatprep.subr.bf16.mxu0 0
      %1130 = vmatpush1.bf16.msra.mxu0 %v1111
      %1131 = vmatprep.subr.bf16.mxu0 0
      %1132 = vmatpush1.bf16.msra.mxu0 %v1112
      %1133 = vmatprep.subr.bf16.mxu0 0
      %1134 = vmatpush1.bf16.msra.mxu0 %v1113
      %1135 = vmatprep.subr.bf16.mxu0 0
      %1136 = vmatpush1.bf16.msra.mxu0 %v1114
      %1137 = vmatprep.subr.bf16.mxu0 0
      %1138 = vmatpush1.bf16.msra.mxu0 %v1115
      %1139 = vmatprep.subr.bf16.mxu0 0
      %1140 = vmatpush1.bf16.msra.mxu0 %v1116
      %1141 = vmatprep.subr.bf16.mxu0 0
      %1142 = vmatpush1.bf16.msra.mxu0 0
      %1143 = vmatprep.subr.bf16.mxu0 0
      %1144 = vmatpush1.bf16.msra.mxu0 0
      %1145 = vmatprep.subr.bf16.mxu0 0
      %1146 = vmatpush1.bf16.msra.mxu0 0
      %1147 = vmatprep.subr.bf16.mxu0 0
      %1148 = vmatpush1.bf16.msra.mxu0 0
      %1149 = vmatprep.subr.bf16.mxu0 0
      %1150 = vmatpush1.bf16.msra.mxu0 0
      %1151 = vmatprep.subr.bf16.mxu0 0
      %1152 = vmatpush1.bf16.msra.mxu0 0
      %1153 = vmatprep.subr.bf16.mxu0 0
      %1154 = vmatpush1.bf16.msra.mxu0 0
      %1155 = vmatprep.subr.bf16.mxu0 0
      %1156 = vmatpush1.bf16.msra.mxu0 0
      %1157 = vmatprep.mubr.bf16.mxu0 0
      %1158 = vmatmul.mubr.bf16.gmra.mrb[0].mxu0 %v1075
      %v1159 = vpop.f32.mrb[0].mxu0
      %v1160 = vadd.f32 0.0, %v1159
      %v1161 = vpop.f32.mrb[0].mxu0
      %v1162 = vpop.f32.mrb[0].mxu0
      %v1163 = vadd.f32 0.0, %v1162
      %v1164 = vpop.f32.mrb[0].mxu0
      %1165 = vdwg.mxu0
      %v1166 = vadd.f32 %v1040, %v1160
      %v1167 = vadd.f32 %v1041, %v1163
      %v1169 = vlaneseq
      %v1170 = vshrl.u32 %v1169, 7
      %v1171 = vsub.s32 0, %v1170
      %v1172 = vrot.slane %v175, %v1171
      %v1174 = vadd.f32 %v1166, %v1172
      %v1175 = vadd.f32 %v1167, %v1172
      %vm1176 = vcmp.ge.f32.partialorder %v1174, 0.0
      %vm1177 = vcmp.ge.f32.partialorder %v1175, 0.0
      %v1178 = vmul.f32 %v1174, 0.2
      %v1179 = vmul.f32 %v1175, 0.2
      %v1180 = vsel %vm1176, %v1174, %v1178
      %v1181 = vsel %vm1177, %v1175, %v1179
      %v1182 = vpack.c.bf16 %v1181, %v1180
      %v1184 = vunpack.c.l.b16 %v1182
      %v1185 = vunpack.c.h.b16 %v1182
      %v1186 = vpack.c.b16 %v1184, %v1184
      %v1187 = vpack.c.b16 %v1185, %v1185
      %1190 = vst [vmem:[%s172] sm:$0xf] %v1186
      %1191 = vst [vmem:[%s172 + $0x10] sm:$0xf] %v1187
      %s1192 = scalar_lea.vmem %s1, 896
      %v1193 = vld [vmem:[%s1192] sm:$0xf]
      %v1194 = vld [vmem:[%s1192 + $0x4] sm:$0xf]
      %v1195 = vld [vmem:[%s1192 + $0x8] sm:$0xf]
      %v1196 = vld [vmem:[%s1192 + $0xc] sm:$0xf]
      %v1197 = vld [vmem:[%s1192 + $0x10] sm:$0xf]
      %v1198 = vld [vmem:[%s1192 + $0x14] sm:$0xf]
      %v1199 = vld [vmem:[%s1192 + $0x18] sm:$0xf]
      %v1200 = vld [vmem:[%s1192 + $0x1c] sm:$0xf]
      %v1201 = vld [vmem:[%s1192 + $0x20] sm:$0xf]
      %v1202 = vld [vmem:[%s1192 + $0x24] sm:$0xf]
      %v1203 = vld [vmem:[%s1192 + $0x28] sm:$0xf]
      %v1204 = vld [vmem:[%s1192 + $0x2c] sm:$0xf]
      %v1205 = vld [vmem:[%s1192 + $0x30] sm:$0xf]
      %v1206 = vld [vmem:[%s1192 + $0x34] sm:$0xf]
      %v1207 = vld [vmem:[%s1192 + $0x38] sm:$0xf]
      %v1208 = vld [vmem:[%s1192 + $0x3c] sm:$0xf]
      %s1209 = scalar_lea.vmem %s1, 768
      %v1210 = vld [vmem:[%s1209] sm:$0xf]
      %v1211 = vld [vmem:[%s1209 + $0x4] sm:$0xf]
      %v1212 = vld [vmem:[%s1209 + $0x8] sm:$0xf]
      %v1213 = vld [vmem:[%s1209 + $0xc] sm:$0xf]
      %v1214 = vld [vmem:[%s1209 + $0x10] sm:$0xf]
      %v1215 = vld [vmem:[%s1209 + $0x14] sm:$0xf]
      %v1216 = vld [vmem:[%s1209 + $0x18] sm:$0xf]
      %v1217 = vld [vmem:[%s1209 + $0x1c] sm:$0xf]
      %v1218 = vld [vmem:[%s1209 + $0x20] sm:$0xf]
      %v1219 = vld [vmem:[%s1209 + $0x24] sm:$0xf]
      %v1220 = vld [vmem:[%s1209 + $0x28] sm:$0xf]
      %v1221 = vld [vmem:[%s1209 + $0x2c] sm:$0xf]
      %v1222 = vld [vmem:[%s1209 + $0x30] sm:$0xf]
      %v1223 = vld [vmem:[%s1209 + $0x34] sm:$0xf]
      %v1224 = vld [vmem:[%s1209 + $0x38] sm:$0xf]
      %v1225 = vld [vmem:[%s1209 + $0x3c] sm:$0xf]
      %v1226 = vcombine.low %v333, %v337
      %v1227 = vcombine.low %v341, %v345
      %v1229 = vunpack.c.l.s4 1983009808
      %v1230 = vunpack.c.0.s8 %v1229
      %v1231 = vlaneseq
      %v1232 = vshrl.u32 %v1231, 7
      %v1233 = vsub.s32 %v1230, %v1232
      %v1234 = vrot.slane %v1226, %v1233
      %v1236 = vunpack.c.l.s4 1983009808
      %v1237 = vunpack.c.0.s8 %v1236
      %v1238 = vlaneseq
      %v1239 = vshrl.u32 %v1238, 7
      %v1240 = vsub.s32 %v1237, %v1239
      %v1241 = vrot.slane %v1227, %v1240
      %v1242 = vcombine.low %v1234, %v1241
      %v1260 = vunpack.c.l.b16 %v1210
      %v1261 = vunpack.c.l.b16 %v1211
      %v1262 = vunpack.c.l.b16 %v1212
      %v1263 = vunpack.c.l.b16 %v1213
      %v1264 = vunpack.c.l.b16 %v1214
      %v1265 = vunpack.c.l.b16 %v1215
      %v1266 = vunpack.c.l.b16 %v1216
      %v1267 = vunpack.c.l.b16 %v1217
      %v1268 = vunpack.c.l.b16 %v1218
      %v1269 = vunpack.c.l.b16 %v1219
      %v1270 = vunpack.c.l.b16 %v1220
      %v1271 = vunpack.c.l.b16 %v1221
      %v1272 = vunpack.c.l.b16 %v1222
      %v1273 = vunpack.c.l.b16 %v1223
      %v1274 = vunpack.c.l.b16 %v1224
      %v1275 = vunpack.c.l.b16 %v1225
      %v1276 = vpack.c.b16 %v1261, %v1260
      %v1277 = vpack.c.b16 %v1263, %v1262
      %v1278 = vpack.c.b16 %v1265, %v1264
      %v1279 = vpack.c.b16 %v1267, %v1266
      %v1280 = vpack.c.b16 %v1269, %v1268
      %v1281 = vpack.c.b16 %v1271, %v1270
      %v1282 = vpack.c.b16 %v1273, %v1272
      %v1283 = vpack.c.b16 %v1275, %v1274
      %1292 = vmatprep.subr.bf16.mxu0 0
      %1293 = vmatpush1.bf16.msra.mxu0 %v1276
      %1294 = vmatprep.subr.bf16.mxu0 0
      %1295 = vmatpush1.bf16.msra.mxu0 %v1277
      %1296 = vmatprep.subr.bf16.mxu0 0
      %1297 = vmatpush1.bf16.msra.mxu0 %v1278
      %1298 = vmatprep.subr.bf16.mxu0 0
      %1299 = vmatpush1.bf16.msra.mxu0 %v1279
      %1300 = vmatprep.subr.bf16.mxu0 0
      %1301 = vmatpush1.bf16.msra.mxu0 %v1280
      %1302 = vmatprep.subr.bf16.mxu0 0
      %1303 = vmatpush1.bf16.msra.mxu0 %v1281
      %1304 = vmatprep.subr.bf16.mxu0 0
      %1305 = vmatpush1.bf16.msra.mxu0 %v1282
      %1306 = vmatprep.subr.bf16.mxu0 0
      %1307 = vmatpush1.bf16.msra.mxu0 %v1283
      %1308 = vmatprep.subr.bf16.mxu0 0
      %1309 = vmatpush1.bf16.msra.mxu0 0
      %1310 = vmatprep.subr.bf16.mxu0 0
      %1311 = vmatpush1.bf16.msra.mxu0 0
      %1312 = vmatprep.subr.bf16.mxu0 0
      %1313 = vmatpush1.bf16.msra.mxu0 0
      %1314 = vmatprep.subr.bf16.mxu0 0
      %1315 = vmatpush1.bf16.msra.mxu0 0
      %1316 = vmatprep.subr.bf16.mxu0 0
      %1317 = vmatpush1.bf16.msra.mxu0 0
      %1318 = vmatprep.subr.bf16.mxu0 0
      %1319 = vmatpush1.bf16.msra.mxu0 0
      %1320 = vmatprep.subr.bf16.mxu0 0
      %1321 = vmatpush1.bf16.msra.mxu0 0
      %1322 = vmatprep.subr.bf16.mxu0 0
      %1323 = vmatpush1.bf16.msra.mxu0 0
      %1324 = vmatprep.mubr.bf16.mxu0 0
      %1325 = vmatmul.mubr.bf16.gmra.mrb[0].mxu0 %v1242
      %v1326 = vpop.f32.mrb[0].mxu0
      %v1327 = vadd.f32 0.0, %v1326
      %v1328 = vpop.f32.mrb[0].mxu0
      %v1329 = vpop.f32.mrb[0].mxu0
      %v1330 = vadd.f32 0.0, %v1329
      %v1331 = vpop.f32.mrb[0].mxu0
      %1332 = vdwg.mxu0
      %v1349 = vunpack.c.l.b16 %v1193
      %v1350 = vunpack.c.l.b16 %v1194
      %v1351 = vunpack.c.l.b16 %v1195
      %v1352 = vunpack.c.l.b16 %v1196
      %v1353 = vunpack.c.l.b16 %v1197
      %v1354 = vunpack.c.l.b16 %v1198
      %v1355 = vunpack.c.l.b16 %v1199
      %v1356 = vunpack.c.l.b16 %v1200
      %v1357 = vunpack.c.l.b16 %v1201
      %v1358 = vunpack.c.l.b16 %v1202
      %v1359 = vunpack.c.l.b16 %v1203
      %v1360 = vunpack.c.l.b16 %v1204
      %v1361 = vunpack.c.l.b16 %v1205
      %v1362 = vunpack.c.l.b16 %v1206
      %v1363 = vunpack.c.l.b16 %v1207
      %v1364 = vunpack.c.l.b16 %v1208
      %v1365 = vpack.c.b16 %v1350, %v1349
      %v1366 = vpack.c.b16 %v1352, %v1351
      %v1367 = vpack.c.b16 %v1354, %v1353
      %v1368 = vpack.c.b16 %v1356, %v1355
      %v1369 = vpack.c.b16 %v1358, %v1357
      %v1370 = vpack.c.b16 %v1360, %v1359
      %v1371 = vpack.c.b16 %v1362, %v1361
      %v1372 = vpack.c.b16 %v1364, %v1363
      %1381 = vmatprep.subr.bf16.mxu0 0
      %1382 = vmatpush1.bf16.msra.mxu0 %v1365
      %1383 = vmatprep.subr.bf16.mxu0 0
      %1384 = vmatpush1.bf16.msra.mxu0 %v1366
      %1385 = vmatprep.subr.bf16.mxu0 0
      %1386 = vmatpush1.bf16.msra.mxu0 %v1367
      %1387 = vmatprep.subr.bf16.mxu0 0
      %1388 = vmatpush1.bf16.msra.mxu0 %v1368
      %1389 = vmatprep.subr.bf16.mxu0 0
      %1390 = vmatpush1.bf16.msra.mxu0 %v1369
      %1391 = vmatprep.subr.bf16.mxu0 0
      %1392 = vmatpush1.bf16.msra.mxu0 %v1370
      %1393 = vmatprep.subr.bf16.mxu0 0
      %1394 = vmatpush1.bf16.msra.mxu0 %v1371
      %1395 = vmatprep.subr.bf16.mxu0 0
      %1396 = vmatpush1.bf16.msra.mxu0 %v1372
      %1397 = vmatprep.subr.bf16.mxu0 0
      %1398 = vmatpush1.bf16.msra.mxu0 0
      %1399 = vmatprep.subr.bf16.mxu0 0
      %1400 = vmatpush1.bf16.msra.mxu0 0
      %1401 = vmatprep.subr.bf16.mxu0 0
      %1402 = vmatpush1.bf16.msra.mxu0 0
      %1403 = vmatprep.subr.bf16.mxu0 0
      %1404 = vmatpush1.bf16.msra.mxu0 0
      %1405 = vmatprep.subr.bf16.mxu0 0
      %1406 = vmatpush1.bf16.msra.mxu0 0
      %1407 = vmatprep.subr.bf16.mxu0 0
      %1408 = vmatpush1.bf16.msra.mxu0 0
      %1409 = vmatprep.subr.bf16.mxu0 0
      %1410 = vmatpush1.bf16.msra.mxu0 0
      %1411 = vmatprep.subr.bf16.mxu0 0
      %1412 = vmatpush1.bf16.msra.mxu0 0
      %1413 = vmatprep.mubr.bf16.mxu0 0
      %1414 = vmatmul.mubr.bf16.gmra.mrb[0].mxu0 %v710
      %v1415 = vpop.f32.mrb[0].mxu0
      %v1416 = vadd.f32 %v1327, %v1415
      %v1417 = vpop.f32.mrb[0].mxu0
      %v1418 = vpop.f32.mrb[0].mxu0
      %v1419 = vadd.f32 %v1330, %v1418
      %v1420 = vpop.f32.mrb[0].mxu0
      %1421 = vdwg.mxu0
      %s1422 = scalar_lea.vmem %s1, 384
      %v1423 = vld [vmem:[%s1422] sm:$0xf]
      %v1424 = vld [vmem:[%s1422 + $0x4] sm:$0xf]
      %v1425 = vld [vmem:[%s1422 + $0x8] sm:$0xf]
      %v1426 = vld [vmem:[%s1422 + $0xc] sm:$0xf]
      %v1427 = vld [vmem:[%s1422 + $0x10] sm:$0xf]
      %v1428 = vld [vmem:[%s1422 + $0x14] sm:$0xf]
      %v1429 = vld [vmem:[%s1422 + $0x18] sm:$0xf]
      %v1430 = vld [vmem:[%s1422 + $0x1c] sm:$0xf]
      %v1431 = vld [vmem:[%s1422 + $0x20] sm:$0xf]
      %v1432 = vld [vmem:[%s1422 + $0x24] sm:$0xf]
      %v1433 = vld [vmem:[%s1422 + $0x28] sm:$0xf]
      %v1434 = vld [vmem:[%s1422 + $0x2c] sm:$0xf]
      %v1435 = vld [vmem:[%s1422 + $0x30] sm:$0xf]
      %v1436 = vld [vmem:[%s1422 + $0x34] sm:$0xf]
      %v1437 = vld [vmem:[%s1422 + $0x38] sm:$0xf]
      %v1438 = vld [vmem:[%s1422 + $0x3c] sm:$0xf]
      %v1455 = vunpack.c.l.b16 %v1423
      %v1456 = vunpack.c.l.b16 %v1424
      %v1457 = vunpack.c.l.b16 %v1425
      %v1458 = vunpack.c.l.b16 %v1426
      %v1459 = vunpack.c.l.b16 %v1427
      %v1460 = vunpack.c.l.b16 %v1428
      %v1461 = vunpack.c.l.b16 %v1429
      %v1462 = vunpack.c.l.b16 %v1430
      %v1463 = vunpack.c.l.b16 %v1431
      %v1464 = vunpack.c.l.b16 %v1432
      %v1465 = vunpack.c.l.b16 %v1433
      %v1466 = vunpack.c.l.b16 %v1434
      %v1467 = vunpack.c.l.b16 %v1435
      %v1468 = vunpack.c.l.b16 %v1436
      %v1469 = vunpack.c.l.b16 %v1437
      %v1470 = vunpack.c.l.b16 %v1438
      %v1471 = vpack.c.b16 %v1456, %v1455
      %v1472 = vpack.c.b16 %v1458, %v1457
      %v1473 = vpack.c.b16 %v1460, %v1459
      %v1474 = vpack.c.b16 %v1462, %v1461
      %v1475 = vpack.c.b16 %v1464, %v1463
      %v1476 = vpack.c.b16 %v1466, %v1465
      %v1477 = vpack.c.b16 %v1468, %v1467
      %v1478 = vpack.c.b16 %v1470, %v1469
      %1487 = vmatprep.subr.bf16.mxu0 0
      %1488 = vmatpush1.bf16.msra.mxu0 %v1471
      %1489 = vmatprep.subr.bf16.mxu0 0
      %1490 = vmatpush1.bf16.msra.mxu0 %v1472
      %1491 = vmatprep.subr.bf16.mxu0 0
      %1492 = vmatpush1.bf16.msra.mxu0 %v1473
      %1493 = vmatprep.subr.bf16.mxu0 0
      %1494 = vmatpush1.bf16.msra.mxu0 %v1474
      %1495 = vmatprep.subr.bf16.mxu0 0
      %1496 = vmatpush1.bf16.msra.mxu0 %v1475
      %1497 = vmatprep.subr.bf16.mxu0 0
      %1498 = vmatpush1.bf16.msra.mxu0 %v1476
      %1499 = vmatprep.subr.bf16.mxu0 0
      %1500 = vmatpush1.bf16.msra.mxu0 %v1477
      %1501 = vmatprep.subr.bf16.mxu0 0
      %1502 = vmatpush1.bf16.msra.mxu0 %v1478
      %1503 = vmatprep.subr.bf16.mxu0 0
      %1504 = vmatpush1.bf16.msra.mxu0 0
      %1505 = vmatprep.subr.bf16.mxu0 0
      %1506 = vmatpush1.bf16.msra.mxu0 0
      %1507 = vmatprep.subr.bf16.mxu0 0
      %1508 = vmatpush1.bf16.msra.mxu0 0
      %1509 = vmatprep.subr.bf16.mxu0 0
      %1510 = vmatpush1.bf16.msra.mxu0 0
      %1511 = vmatprep.subr.bf16.mxu0 0
      %1512 = vmatpush1.bf16.msra.mxu0 0
      %1513 = vmatprep.subr.bf16.mxu0 0
      %1514 = vmatpush1.bf16.msra.mxu0 0
      %1515 = vmatprep.subr.bf16.mxu0 0
      %1516 = vmatpush1.bf16.msra.mxu0 0
      %1517 = vmatprep.subr.bf16.mxu0 0
      %1518 = vmatpush1.bf16.msra.mxu0 0
      %1519 = vmatprep.mubr.bf16.mxu0 0
      %1520 = vmatmul.mubr.bf16.gmra.mrb[0].mxu0 %v1075
      %v1521 = vpop.f32.mrb[0].mxu0
      %v1522 = vadd.f32 0.0, %v1521
      %v1523 = vpop.f32.mrb[0].mxu0
      %v1524 = vpop.f32.mrb[0].mxu0
      %v1525 = vadd.f32 0.0, %v1524
      %v1526 = vpop.f32.mrb[0].mxu0
      %1527 = vdwg.mxu0
      %v1528 = vadd.f32 %v1416, %v1522
      %v1529 = vadd.f32 %v1419, %v1525
      %s1530 = scalar_lea.vmem %s1, 256
      %v1531 = vld [vmem:[%s1530] sm:$0xf]
      %v1532 = vld [vmem:[%s1530 + $0x4] sm:$0xf]
      %v1533 = vld [vmem:[%s1530 + $0x8] sm:$0xf]
      %v1534 = vld [vmem:[%s1530 + $0xc] sm:$0xf]
      %v1535 = vld [vmem:[%s1530 + $0x10] sm:$0xf]
      %v1536 = vld [vmem:[%s1530 + $0x14] sm:$0xf]
      %v1537 = vld [vmem:[%s1530 + $0x18] sm:$0xf]
      %v1538 = vld [vmem:[%s1530 + $0x1c] sm:$0xf]
      %v1539 = vld [vmem:[%s1530 + $0x20] sm:$0xf]
      %v1540 = vld [vmem:[%s1530 + $0x24] sm:$0xf]
      %v1541 = vld [vmem:[%s1530 + $0x28] sm:$0xf]
      %v1542 = vld [vmem:[%s1530 + $0x2c] sm:$0xf]
      %v1543 = vld [vmem:[%s1530 + $0x30] sm:$0xf]
      %v1544 = vld [vmem:[%s1530 + $0x34] sm:$0xf]
      %v1545 = vld [vmem:[%s1530 + $0x38] sm:$0xf]
      %v1546 = vld [vmem:[%s1530 + $0x3c] sm:$0xf]
      %v1547 = vcombine.low %v490, %v494
      %v1548 = vcombine.low %v498, %v502
      %v1550 = vunpack.c.l.s4 1983009808
      %v1551 = vunpack.c.0.s8 %v1550
      %v1552 = vlaneseq
      %v1553 = vshrl.u32 %v1552, 7
      %v1554 = vsub.s32 %v1551, %v1553
      %v1555 = vrot.slane %v1547, %v1554
      %v1557 = vunpack.c.l.s4 1983009808
      %v1558 = vunpack.c.0.s8 %v1557
      %v1559 = vlaneseq
      %v1560 = vshrl.u32 %v1559, 7
      %v1561 = vsub.s32 %v1558, %v1560
      %v1562 = vrot.slane %v1548, %v1561
      %v1563 = vcombine.low %v1555, %v1562
      %v1581 = vunpack.c.l.b16 %v1531
      %v1582 = vunpack.c.l.b16 %v1532
      %v1583 = vunpack.c.l.b16 %v1533
      %v1584 = vunpack.c.l.b16 %v1534
      %v1585 = vunpack.c.l.b16 %v1535
      %v1586 = vunpack.c.l.b16 %v1536
      %v1587 = vunpack.c.l.b16 %v1537
      %v1588 = vunpack.c.l.b16 %v1538
      %v1589 = vunpack.c.l.b16 %v1539
      %v1590 = vunpack.c.l.b16 %v1540
      %v1591 = vunpack.c.l.b16 %v1541
      %v1592 = vunpack.c.l.b16 %v1542
      %v1593 = vunpack.c.l.b16 %v1543
      %v1594 = vunpack.c.l.b16 %v1544
      %v1595 = vunpack.c.l.b16 %v1545
      %v1596 = vunpack.c.l.b16 %v1546
      %v1597 = vpack.c.b16 %v1582, %v1581
      %v1598 = vpack.c.b16 %v1584, %v1583
      %v1599 = vpack.c.b16 %v1586, %v1585
      %v1600 = vpack.c.b16 %v1588, %v1587
      %v1601 = vpack.c.b16 %v1590, %v1589
      %v1602 = vpack.c.b16 %v1592, %v1591
      %v1603 = vpack.c.b16 %v1594, %v1593
      %v1604 = vpack.c.b16 %v1596, %v1595
      %1613 = vmatprep.subr.bf16.mxu0 0
      %1614 = vmatpush1.bf16.msra.mxu0 %v1597
      %1615 = vmatprep.subr.bf16.mxu0 0
      %1616 = vmatpush1.bf16.msra.mxu0 %v1598
      %1617 = vmatprep.subr.bf16.mxu0 0
      %1618 = vmatpush1.bf16.msra.mxu0 %v1599
      %1619 = vmatprep.subr.bf16.mxu0 0
      %1620 = vmatpush1.bf16.msra.mxu0 %v1600
      %1621 = vmatprep.subr.bf16.mxu0 0
      %1622 = vmatpush1.bf16.msra.mxu0 %v1601
      %1623 = vmatprep.subr.bf16.mxu0 0
      %1624 = vmatpush1.bf16.msra.mxu0 %v1602
      %1625 = vmatprep.subr.bf16.mxu0 0
      %1626 = vmatpush1.bf16.msra.mxu0 %v1603
      %1627 = vmatprep.subr.bf16.mxu0 0
      %1628 = vmatpush1.bf16.msra.mxu0 %v1604
      %1629 = vmatprep.subr.bf16.mxu0 0
      %1630 = vmatpush1.bf16.msra.mxu0 0
      %1631 = vmatprep.subr.bf16.mxu0 0
      %1632 = vmatpush1.bf16.msra.mxu0 0
      %1633 = vmatprep.subr.bf16.mxu0 0
      %1634 = vmatpush1.bf16.msra.mxu0 0
      %1635 = vmatprep.subr.bf16.mxu0 0
      %1636 = vmatpush1.bf16.msra.mxu0 0
      %1637 = vmatprep.subr.bf16.mxu0 0
      %1638 = vmatpush1.bf16.msra.mxu0 0
      %1639 = vmatprep.subr.bf16.mxu0 0
      %1640 = vmatpush1.bf16.msra.mxu0 0
      %1641 = vmatprep.subr.bf16.mxu0 0
      %1642 = vmatpush1.bf16.msra.mxu0 0
      %1643 = vmatprep.subr.bf16.mxu0 0
      %1644 = vmatpush1.bf16.msra.mxu0 0
      %1645 = vmatprep.mubr.bf16.mxu0 0
      %1646 = vmatmul.mubr.bf16.gmra.mrb[0].mxu0 %v1563
      %v1647 = vpop.f32.mrb[0].mxu0
      %v1648 = vadd.f32 0.0, %v1647
      %v1649 = vpop.f32.mrb[0].mxu0
      %v1650 = vpop.f32.mrb[0].mxu0
      %v1651 = vadd.f32 0.0, %v1650
      %v1652 = vpop.f32.mrb[0].mxu0
      %1653 = vdwg.mxu0
      %v1654 = vadd.f32 %v1528, %v1648
      %v1655 = vadd.f32 %v1529, %v1651
      %v1656 = vadd.f32 %v1654, %v1172
      %v1657 = vadd.f32 %v1655, %v1172
      %vm1658 = vcmp.ge.f32.partialorder %v1656, 0.0
      %vm1659 = vcmp.ge.f32.partialorder %v1657, 0.0
      %v1660 = vmul.f32 %v1656, 0.2
      %v1661 = vmul.f32 %v1657, 0.2
      %v1662 = vsel %vm1658, %v1656, %v1660
      %v1663 = vsel %vm1659, %v1657, %v1661
      %v1664 = vpack.c.bf16 %v1663, %v1662
      %v1666 = vunpack.c.l.b16 %v1664
      %v1667 = vunpack.c.h.b16 %v1664
      %v1668 = vpack.c.b16 %v1666, %v1666
      %v1669 = vpack.c.b16 %v1667, %v1667
      %1672 = vst [vmem:[%s172 + $0x4] sm:$0xf] %v1668
      %1673 = vst [vmem:[%s172 + $0x14] sm:$0xf] %v1669
      %s1674 = scalar_lea.vmem %s1, 704
      %v1675 = vld [vmem:[%s1674] sm:$0xf]
      %v1676 = vld [vmem:[%s1674 + $0x4] sm:$0xf]
      %v1677 = vld [vmem:[%s1674 + $0x8] sm:$0xf]
      %v1678 = vld [vmem:[%s1674 + $0xc] sm:$0xf]
      %v1679 = vld [vmem:[%s1674 + $0x10] sm:$0xf]
      %v1680 = vld [vmem:[%s1674 + $0x14] sm:$0xf]
      %v1681 = vld [vmem:[%s1674 + $0x18] sm:$0xf]
      %v1682 = vld [vmem:[%s1674 + $0x1c] sm:$0xf]
      %v1683 = vld [vmem:[%s1674 + $0x20] sm:$0xf]
      %v1684 = vld [vmem:[%s1674 + $0x24] sm:$0xf]
      %v1685 = vld [vmem:[%s1674 + $0x28] sm:$0xf]
      %v1686 = vld [vmem:[%s1674 + $0x2c] sm:$0xf]
      %v1687 = vld [vmem:[%s1674 + $0x30] sm:$0xf]
      %v1688 = vld [vmem:[%s1674 + $0x34] sm:$0xf]
      %v1689 = vld [vmem:[%s1674 + $0x38] sm:$0xf]
      %v1690 = vld [vmem:[%s1674 + $0x3c] sm:$0xf]
      %s1691 = scalar_lea.vmem %s1, 576
      %v1692 = vld [vmem:[%s1691] sm:$0xf]
      %v1693 = vld [vmem:[%s1691 + $0x4] sm:$0xf]
      %v1694 = vld [vmem:[%s1691 + $0x8] sm:$0xf]
      %v1695 = vld [vmem:[%s1691 + $0xc] sm:$0xf]
      %v1696 = vld [vmem:[%s1691 + $0x10] sm:$0xf]
      %v1697 = vld [vmem:[%s1691 + $0x14] sm:$0xf]
      %v1698 = vld [vmem:[%s1691 + $0x18] sm:$0xf]
      %v1699 = vld [vmem:[%s1691 + $0x1c] sm:$0xf]
      %v1700 = vld [vmem:[%s1691 + $0x20] sm:$0xf]
      %v1701 = vld [vmem:[%s1691 + $0x24] sm:$0xf]
      %v1702 = vld [vmem:[%s1691 + $0x28] sm:$0xf]
      %v1703 = vld [vmem:[%s1691 + $0x2c] sm:$0xf]
      %v1704 = vld [vmem:[%s1691 + $0x30] sm:$0xf]
      %v1705 = vld [vmem:[%s1691 + $0x34] sm:$0xf]
      %v1706 = vld [vmem:[%s1691 + $0x38] sm:$0xf]
      %v1707 = vld [vmem:[%s1691 + $0x3c] sm:$0xf]
      %v1724 = vunpack.c.l.b16 %v1692
      %v1725 = vunpack.c.l.b16 %v1693
      %v1726 = vunpack.c.l.b16 %v1694
      %v1727 = vunpack.c.l.b16 %v1695
      %v1728 = vunpack.c.l.b16 %v1696
      %v1729 = vunpack.c.l.b16 %v1697
      %v1730 = vunpack.c.l.b16 %v1698
      %v1731 = vunpack.c.l.b16 %v1699
      %v1732 = vunpack.c.l.b16 %v1700
      %v1733 = vunpack.c.l.b16 %v1701
      %v1734 = vunpack.c.l.b16 %v1702
      %v1735 = vunpack.c.l.b16 %v1703
      %v1736 = vunpack.c.l.b16 %v1704
      %v1737 = vunpack.c.l.b16 %v1705
      %v1738 = vunpack.c.l.b16 %v1706
      %v1739 = vunpack.c.l.b16 %v1707
      %v1740 = vpack.c.b16 %v1725, %v1724
      %v1741 = vpack.c.b16 %v1727, %v1726
      %v1742 = vpack.c.b16 %v1729, %v1728
      %v1743 = vpack.c.b16 %v1731, %v1730
      %v1744 = vpack.c.b16 %v1733, %v1732
      %v1745 = vpack.c.b16 %v1735, %v1734
      %v1746 = vpack.c.b16 %v1737, %v1736
      %v1747 = vpack.c.b16 %v1739, %v1738
      %1756 = vmatprep.subr.bf16.mxu0 0
      %1757 = vmatpush1.bf16.msra.mxu0 %v1740
      %1758 = vmatprep.subr.bf16.mxu0 0
      %1759 = vmatpush1.bf16.msra.mxu0 %v1741
      %1760 = vmatprep.subr.bf16.mxu0 0
      %1761 = vmatpush1.bf16.msra.mxu0 %v1742
      %1762 = vmatprep.subr.bf16.mxu0 0
      %1763 = vmatpush1.bf16.msra.mxu0 %v1743
      %1764 = vmatprep.subr.bf16.mxu0 0
      %1765 = vmatpush1.bf16.msra.mxu0 %v1744
      %1766 = vmatprep.subr.bf16.mxu0 0
      %1767 = vmatpush1.bf16.msra.mxu0 %v1745
      %1768 = vmatprep.subr.bf16.mxu0 0
      %1769 = vmatpush1.bf16.msra.mxu0 %v1746
      %1770 = vmatprep.subr.bf16.mxu0 0
      %1771 = vmatpush1.bf16.msra.mxu0 %v1747
      %1772 = vmatprep.subr.bf16.mxu0 0
      %1773 = vmatpush1.bf16.msra.mxu0 0
      %1774 = vmatprep.subr.bf16.mxu0 0
      %1775 = vmatpush1.bf16.msra.mxu0 0
      %1776 = vmatprep.subr.bf16.mxu0 0
      %1777 = vmatpush1.bf16.msra.mxu0 0
      %1778 = vmatprep.subr.bf16.mxu0 0
      %1779 = vmatpush1.bf16.msra.mxu0 0
      %1780 = vmatprep.subr.bf16.mxu0 0
      %1781 = vmatpush1.bf16.msra.mxu0 0
      %1782 = vmatprep.subr.bf16.mxu0 0
      %1783 = vmatpush1.bf16.msra.mxu0 0
      %1784 = vmatprep.subr.bf16.mxu0 0
      %1785 = vmatpush1.bf16.msra.mxu0 0
      %1786 = vmatprep.subr.bf16.mxu0 0
      %1787 = vmatpush1.bf16.msra.mxu0 0
      %1788 = vmatprep.mubr.bf16.mxu0 0
      %1789 = vmatmul.mubr.bf16.gmra.mrb[0].mxu0 %v1075
      %v1790 = vpop.f32.mrb[0].mxu0
      %v1791 = vadd.f32 0.0, %v1790
      %v1792 = vpop.f32.mrb[0].mxu0
      %v1793 = vpop.f32.mrb[0].mxu0
      %v1794 = vadd.f32 0.0, %v1793
      %v1795 = vpop.f32.mrb[0].mxu0
      %1796 = vdwg.mxu0
      %v1813 = vunpack.c.l.b16 %v1675
      %v1814 = vunpack.c.l.b16 %v1676
      %v1815 = vunpack.c.l.b16 %v1677
      %v1816 = vunpack.c.l.b16 %v1678
      %v1817 = vunpack.c.l.b16 %v1679
      %v1818 = vunpack.c.l.b16 %v1680
      %v1819 = vunpack.c.l.b16 %v1681
      %v1820 = vunpack.c.l.b16 %v1682
      %v1821 = vunpack.c.l.b16 %v1683
      %v1822 = vunpack.c.l.b16 %v1684
      %v1823 = vunpack.c.l.b16 %v1685
      %v1824 = vunpack.c.l.b16 %v1686
      %v1825 = vunpack.c.l.b16 %v1687
      %v1826 = vunpack.c.l.b16 %v1688
      %v1827 = vunpack.c.l.b16 %v1689
      %v1828 = vunpack.c.l.b16 %v1690
      %v1829 = vpack.c.b16 %v1814, %v1813
      %v1830 = vpack.c.b16 %v1816, %v1815
      %v1831 = vpack.c.b16 %v1818, %v1817
      %v1832 = vpack.c.b16 %v1820, %v1819
      %v1833 = vpack.c.b16 %v1822, %v1821
      %v1834 = vpack.c.b16 %v1824, %v1823
      %v1835 = vpack.c.b16 %v1826, %v1825
      %v1836 = vpack.c.b16 %v1828, %v1827
      %1845 = vmatprep.subr.bf16.mxu0 0
      %1846 = vmatpush1.bf16.msra.mxu0 %v1829
      %1847 = vmatprep.subr.bf16.mxu0 0
      %1848 = vmatpush1.bf16.msra.mxu0 %v1830
      %1849 = vmatprep.subr.bf16.mxu0 0
      %1850 = vmatpush1.bf16.msra.mxu0 %v1831
      %1851 = vmatprep.subr.bf16.mxu0 0
      %1852 = vmatpush1.bf16.msra.mxu0 %v1832
      %1853 = vmatprep.subr.bf16.mxu0 0
      %1854 = vmatpush1.bf16.msra.mxu0 %v1833
      %1855 = vmatprep.subr.bf16.mxu0 0
      %1856 = vmatpush1.bf16.msra.mxu0 %v1834
      %1857 = vmatprep.subr.bf16.mxu0 0
      %1858 = vmatpush1.bf16.msra.mxu0 %v1835
      %1859 = vmatprep.subr.bf16.mxu0 0
      %1860 = vmatpush1.bf16.msra.mxu0 %v1836
      %1861 = vmatprep.subr.bf16.mxu0 0
      %1862 = vmatpush1.bf16.msra.mxu0 0
      %1863 = vmatprep.subr.bf16.mxu0 0
      %1864 = vmatpush1.bf16.msra.mxu0 0
      %1865 = vmatprep.subr.bf16.mxu0 0
      %1866 = vmatpush1.bf16.msra.mxu0 0
      %1867 = vmatprep.subr.bf16.mxu0 0
      %1868 = vmatpush1.bf16.msra.mxu0 0
      %1869 = vmatprep.subr.bf16.mxu0 0
      %1870 = vmatpush1.bf16.msra.mxu0 0
      %1871 = vmatprep.subr.bf16.mxu0 0
      %1872 = vmatpush1.bf16.msra.mxu0 0
      %1873 = vmatprep.subr.bf16.mxu0 0
      %1874 = vmatpush1.bf16.msra.mxu0 0
      %1875 = vmatprep.subr.bf16.mxu0 0
      %1876 = vmatpush1.bf16.msra.mxu0 0
      %1877 = vmatprep.mubr.bf16.mxu0 0
      %1878 = vmatmul.mubr.bf16.gmra.mrb[0].mxu0 %v949
      %v1879 = vpop.f32.mrb[0].mxu0
      %v1880 = vadd.f32 %v1791, %v1879
      %v1881 = vpop.f32.mrb[0].mxu0
      %v1882 = vpop.f32.mrb[0].mxu0
      %v1883 = vadd.f32 %v1794, %v1882
      %v1884 = vpop.f32.mrb[0].mxu0
      %1885 = vdwg.mxu0
      %s1886 = scalar_lea.vmem %s1, 192
      %v1887 = vld [vmem:[%s1886] sm:$0xf]
      %v1888 = vld [vmem:[%s1886 + $0x4] sm:$0xf]
      %v1889 = vld [vmem:[%s1886 + $0x8] sm:$0xf]
      %v1890 = vld [vmem:[%s1886 + $0xc] sm:$0xf]
      %v1891 = vld [vmem:[%s1886 + $0x10] sm:$0xf]
      %v1892 = vld [vmem:[%s1886 + $0x14] sm:$0xf]
      %v1893 = vld [vmem:[%s1886 + $0x18] sm:$0xf]
      %v1894 = vld [vmem:[%s1886 + $0x1c] sm:$0xf]
      %v1895 = vld [vmem:[%s1886 + $0x20] sm:$0xf]
      %v1896 = vld [vmem:[%s1886 + $0x24] sm:$0xf]
      %v1897 = vld [vmem:[%s1886 + $0x28] sm:$0xf]
      %v1898 = vld [vmem:[%s1886 + $0x2c] sm:$0xf]
      %v1899 = vld [vmem:[%s1886 + $0x30] sm:$0xf]
      %v1900 = vld [vmem:[%s1886 + $0x34] sm:$0xf]
      %v1901 = vld [vmem:[%s1886 + $0x38] sm:$0xf]
      %v1902 = vld [vmem:[%s1886 + $0x3c] sm:$0xf]
      %v1907 = vcombine.low %v504, %v505
      %v1908 = vcombine.low %v506, %v507
      %v1910 = vunpack.c.l.s4 1983009808
      %v1911 = vunpack.c.0.s8 %v1910
      %v1912 = vlaneseq
      %v1913 = vshrl.u32 %v1912, 7
      %v1914 = vsub.s32 %v1911, %v1913
      %v1915 = vrot.slane %v1907, %v1914
      %v1917 = vunpack.c.l.s4 1983009808
      %v1918 = vunpack.c.0.s8 %v1917
      %v1919 = vlaneseq
      %v1920 = vshrl.u32 %v1919, 7
      %v1921 = vsub.s32 %v1918, %v1920
      %v1922 = vrot.slane %v1908, %v1921
      %v1923 = vcombine.low %v1915, %v1922
      %v1941 = vunpack.c.l.b16 %v1887
      %v1942 = vunpack.c.l.b16 %v1888
      %v1943 = vunpack.c.l.b16 %v1889
      %v1944 = vunpack.c.l.b16 %v1890
      %v1945 = vunpack.c.l.b16 %v1891
      %v1946 = vunpack.c.l.b16 %v1892
      %v1947 = vunpack.c.l.b16 %v1893
      %v1948 = vunpack.c.l.b16 %v1894
      %v1949 = vunpack.c.l.b16 %v1895
      %v1950 = vunpack.c.l.b16 %v1896
      %v1951 = vunpack.c.l.b16 %v1897
      %v1952 = vunpack.c.l.b16 %v1898
      %v1953 = vunpack.c.l.b16 %v1899
      %v1954 = vunpack.c.l.b16 %v1900
      %v1955 = vunpack.c.l.b16 %v1901
      %v1956 = vunpack.c.l.b16 %v1902
      %v1957 = vpack.c.b16 %v1942, %v1941
      %v1958 = vpack.c.b16 %v1944, %v1943
      %v1959 = vpack.c.b16 %v1946, %v1945
      %v1960 = vpack.c.b16 %v1948, %v1947
      %v1961 = vpack.c.b16 %v1950, %v1949
      %v1962 = vpack.c.b16 %v1952, %v1951
      %v1963 = vpack.c.b16 %v1954, %v1953
      %v1964 = vpack.c.b16 %v1956, %v1955
      %1973 = vmatprep.subr.bf16.mxu0 0
      %1974 = vmatpush1.bf16.msra.mxu0 %v1957
      %1975 = vmatprep.subr.bf16.mxu0 0
      %1976 = vmatpush1.bf16.msra.mxu0 %v1958
      %1977 = vmatprep.subr.bf16.mxu0 0
      %1978 = vmatpush1.bf16.msra.mxu0 %v1959
      %1979 = vmatprep.subr.bf16.mxu0 0
      %1980 = vmatpush1.bf16.msra.mxu0 %v1960
      %1981 = vmatprep.subr.bf16.mxu0 0
      %1982 = vmatpush1.bf16.msra.mxu0 %v1961
      %1983 = vmatprep.subr.bf16.mxu0 0
      %1984 = vmatpush1.bf16.msra.mxu0 %v1962
      %1985 = vmatprep.subr.bf16.mxu0 0
      %1986 = vmatpush1.bf16.msra.mxu0 %v1963
      %1987 = vmatprep.subr.bf16.mxu0 0
      %1988 = vmatpush1.bf16.msra.mxu0 %v1964
      %1989 = vmatprep.subr.bf16.mxu0 0
      %1990 = vmatpush1.bf16.msra.mxu0 0
      %1991 = vmatprep.subr.bf16.mxu0 0
      %1992 = vmatpush1.bf16.msra.mxu0 0
      %1993 = vmatprep.subr.bf16.mxu0 0
      %1994 = vmatpush1.bf16.msra.mxu0 0
      %1995 = vmatprep.subr.bf16.mxu0 0
      %1996 = vmatpush1.bf16.msra.mxu0 0
      %1997 = vmatprep.subr.bf16.mxu0 0
      %1998 = vmatpush1.bf16.msra.mxu0 0
      %1999 = vmatprep.subr.bf16.mxu0 0
      %2000 = vmatpush1.bf16.msra.mxu0 0
      %2001 = vmatprep.subr.bf16.mxu0 0
      %2002 = vmatpush1.bf16.msra.mxu0 0
      %2003 = vmatprep.subr.bf16.mxu0 0
      %2004 = vmatpush1.bf16.msra.mxu0 0
      %2005 = vmatprep.mubr.bf16.mxu0 0
      %2006 = vmatmul.mubr.bf16.gmra.mrb[0].mxu0 %v1923
      %v2007 = vpop.f32.mrb[0].mxu0
      %v2008 = vadd.f32 0.0, %v2007
      %v2009 = vpop.f32.mrb[0].mxu0
      %v2010 = vpop.f32.mrb[0].mxu0
      %v2011 = vadd.f32 0.0, %v2010
      %v2012 = vpop.f32.mrb[0].mxu0
      %2013 = vdwg.mxu0
      %v2014 = vadd.f32 %v1880, %v2008
      %v2015 = vadd.f32 %v1883, %v2011
      %s2016 = scalar_lea.vmem %s1, 64
      %v2017 = vld [vmem:[%s2016] sm:$0xf]
      %v2018 = vld [vmem:[%s2016 + $0x4] sm:$0xf]
      %v2019 = vld [vmem:[%s2016 + $0x8] sm:$0xf]
      %v2020 = vld [vmem:[%s2016 + $0xc] sm:$0xf]
      %v2021 = vld [vmem:[%s2016 + $0x10] sm:$0xf]
      %v2022 = vld [vmem:[%s2016 + $0x14] sm:$0xf]
      %v2023 = vld [vmem:[%s2016 + $0x18] sm:$0xf]
      %v2024 = vld [vmem:[%s2016 + $0x1c] sm:$0xf]
      %v2025 = vld [vmem:[%s2016 + $0x20] sm:$0xf]
      %v2026 = vld [vmem:[%s2016 + $0x24] sm:$0xf]
      %v2027 = vld [vmem:[%s2016 + $0x28] sm:$0xf]
      %v2028 = vld [vmem:[%s2016 + $0x2c] sm:$0xf]
      %v2029 = vld [vmem:[%s2016 + $0x30] sm:$0xf]
      %v2030 = vld [vmem:[%s2016 + $0x34] sm:$0xf]
      %v2031 = vld [vmem:[%s2016 + $0x38] sm:$0xf]
      %v2032 = vld [vmem:[%s2016 + $0x3c] sm:$0xf]
      %v2033 = vcombine.low %v561, %v575
      %v2034 = vcombine.low %v589, %v603
      %v2036 = vunpack.c.l.s4 1983009808
      %v2037 = vunpack.c.0.s8 %v2036
      %v2038 = vlaneseq
      %v2039 = vshrl.u32 %v2038, 7
      %v2040 = vsub.s32 %v2037, %v2039
      %v2041 = vrot.slane %v2033, %v2040
      %v2043 = vunpack.c.l.s4 1983009808
      %v2044 = vunpack.c.0.s8 %v2043
      %v2045 = vlaneseq
      %v2046 = vshrl.u32 %v2045, 7
      %v2047 = vsub.s32 %v2044, %v2046
      %v2048 = vrot.slane %v2034, %v2047
      %v2049 = vcombine.low %v2041, %v2048
      %v2067 = vunpack.c.l.b16 %v2017
      %v2068 = vunpack.c.l.b16 %v2018
      %v2069 = vunpack.c.l.b16 %v2019
      %v2070 = vunpack.c.l.b16 %v2020
      %v2071 = vunpack.c.l.b16 %v2021
      %v2072 = vunpack.c.l.b16 %v2022
      %v2073 = vunpack.c.l.b16 %v2023
      %v2074 = vunpack.c.l.b16 %v2024
      %v2075 = vunpack.c.l.b16 %v2025
      %v2076 = vunpack.c.l.b16 %v2026
      %v2077 = vunpack.c.l.b16 %v2027
      %v2078 = vunpack.c.l.b16 %v2028
      %v2079 = vunpack.c.l.b16 %v2029
      %v2080 = vunpack.c.l.b16 %v2030
      %v2081 = vunpack.c.l.b16 %v2031
      %v2082 = vunpack.c.l.b16 %v2032
      %v2083 = vpack.c.b16 %v2068, %v2067
      %v2084 = vpack.c.b16 %v2070, %v2069
      %v2085 = vpack.c.b16 %v2072, %v2071
      %v2086 = vpack.c.b16 %v2074, %v2073
      %v2087 = vpack.c.b16 %v2076, %v2075
      %v2088 = vpack.c.b16 %v2078, %v2077
      %v2089 = vpack.c.b16 %v2080, %v2079
      %v2090 = vpack.c.b16 %v2082, %v2081
      %2099 = vmatprep.subr.bf16.mxu0 0
      %2100 = vmatpush1.bf16.msra.mxu0 %v2083
      %2101 = vmatprep.subr.bf16.mxu0 0
      %2102 = vmatpush1.bf16.msra.mxu0 %v2084
      %2103 = vmatprep.subr.bf16.mxu0 0
      %2104 = vmatpush1.bf16.msra.mxu0 %v2085
      %2105 = vmatprep.subr.bf16.mxu0 0
      %2106 = vmatpush1.bf16.msra.mxu0 %v2086
      %2107 = vmatprep.subr.bf16.mxu0 0
      %2108 = vmatpush1.bf16.msra.mxu0 %v2087
      %2109 = vmatprep.subr.bf16.mxu0 0
      %2110 = vmatpush1.bf16.msra.mxu0 %v2088
      %2111 = vmatprep.subr.bf16.mxu0 0
      %2112 = vmatpush1.bf16.msra.mxu0 %v2089
      %2113 = vmatprep.subr.bf16.mxu0 0
      %2114 = vmatpush1.bf16.msra.mxu0 %v2090
      %2115 = vmatprep.subr.bf16.mxu0 0
      %2116 = vmatpush1.bf16.msra.mxu0 0
      %2117 = vmatprep.subr.bf16.mxu0 0
      %2118 = vmatpush1.bf16.msra.mxu0 0
      %2119 = vmatprep.subr.bf16.mxu0 0
      %2120 = vmatpush1.bf16.msra.mxu0 0
      %2121 = vmatprep.subr.bf16.mxu0 0
      %2122 = vmatpush1.bf16.msra.mxu0 0
      %2123 = vmatprep.subr.bf16.mxu0 0
      %2124 = vmatpush1.bf16.msra.mxu0 0
      %2125 = vmatprep.subr.bf16.mxu0 0
      %2126 = vmatpush1.bf16.msra.mxu0 0
      %2127 = vmatprep.subr.bf16.mxu0 0
      %2128 = vmatpush1.bf16.msra.mxu0 0
      %2129 = vmatprep.subr.bf16.mxu0 0
      %2130 = vmatpush1.bf16.msra.mxu0 0
      %2131 = vmatprep.mubr.bf16.mxu0 0
      %2132 = vmatmul.mubr.bf16.gmra.mrb[0].mxu0 %v2049
      %v2133 = vpop.f32.mrb[0].mxu0
      %v2134 = vadd.f32 0.0, %v2133
      %v2135 = vpop.f32.mrb[0].mxu0
      %v2136 = vpop.f32.mrb[0].mxu0
      %v2137 = vadd.f32 0.0, %v2136
      %v2138 = vpop.f32.mrb[0].mxu0
      %2139 = vdwg.mxu0
      %v2140 = vadd.f32 %v2014, %v2134
      %v2141 = vadd.f32 %v2015, %v2137
      %v2142 = vadd.f32 %v2140, %v1172
      %v2143 = vadd.f32 %v2141, %v1172
      %vm2144 = vcmp.ge.f32.partialorder %v2142, 0.0
      %vm2145 = vcmp.ge.f32.partialorder %v2143, 0.0
      %v2146 = vmul.f32 %v2142, 0.2
      %v2147 = vmul.f32 %v2143, 0.2
      %v2148 = vsel %vm2144, %v2142, %v2146
      %v2149 = vsel %vm2145, %v2143, %v2147
      %v2150 = vpack.c.bf16 %v2149, %v2148
      %v2152 = vunpack.c.l.b16 %v2150
      %v2153 = vunpack.c.h.b16 %v2150
      %v2154 = vpack.c.b16 %v2152, %v2152
      %v2155 = vpack.c.b16 %v2153, %v2153
      %2158 = vst [vmem:[%s172 + $0x8] sm:$0xf] %v2154
      %2159 = vst [vmem:[%s172 + $0x18] sm:$0xf] %v2155
      %s2160 = scalar_lea.vmem %s1, 640
      %v2161 = vld [vmem:[%s2160] sm:$0xf]
      %v2162 = vld [vmem:[%s2160 + $0x4] sm:$0xf]
      %v2163 = vld [vmem:[%s2160 + $0x8] sm:$0xf]
      %v2164 = vld [vmem:[%s2160 + $0xc] sm:$0xf]
      %v2165 = vld [vmem:[%s2160 + $0x10] sm:$0xf]
      %v2166 = vld [vmem:[%s2160 + $0x14] sm:$0xf]
      %v2167 = vld [vmem:[%s2160 + $0x18] sm:$0xf]
      %v2168 = vld [vmem:[%s2160 + $0x1c] sm:$0xf]
      %v2169 = vld [vmem:[%s2160 + $0x20] sm:$0xf]
      %v2170 = vld [vmem:[%s2160 + $0x24] sm:$0xf]
      %v2171 = vld [vmem:[%s2160 + $0x28] sm:$0xf]
      %v2172 = vld [vmem:[%s2160 + $0x2c] sm:$0xf]
      %v2173 = vld [vmem:[%s2160 + $0x30] sm:$0xf]
      %v2174 = vld [vmem:[%s2160 + $0x34] sm:$0xf]
      %v2175 = vld [vmem:[%s2160 + $0x38] sm:$0xf]
      %v2176 = vld [vmem:[%s2160 + $0x3c] sm:$0xf]
      %s2177 = scalar_lea.vmem %s1, 512
      %v2178 = vld [vmem:[%s2177] sm:$0xf]
      %v2179 = vld [vmem:[%s2177 + $0x4] sm:$0xf]
      %v2180 = vld [vmem:[%s2177 + $0x8] sm:$0xf]
      %v2181 = vld [vmem:[%s2177 + $0xc] sm:$0xf]
      %v2182 = vld [vmem:[%s2177 + $0x10] sm:$0xf]
      %v2183 = vld [vmem:[%s2177 + $0x14] sm:$0xf]
      %v2184 = vld [vmem:[%s2177 + $0x18] sm:$0xf]
      %v2185 = vld [vmem:[%s2177 + $0x1c] sm:$0xf]
      %v2186 = vld [vmem:[%s2177 + $0x20] sm:$0xf]
      %v2187 = vld [vmem:[%s2177 + $0x24] sm:$0xf]
      %v2188 = vld [vmem:[%s2177 + $0x28] sm:$0xf]
      %v2189 = vld [vmem:[%s2177 + $0x2c] sm:$0xf]
      %v2190 = vld [vmem:[%s2177 + $0x30] sm:$0xf]
      %v2191 = vld [vmem:[%s2177 + $0x34] sm:$0xf]
      %v2192 = vld [vmem:[%s2177 + $0x38] sm:$0xf]
      %v2193 = vld [vmem:[%s2177 + $0x3c] sm:$0xf]
      %v2210 = vunpack.c.l.b16 %v2178
      %v2211 = vunpack.c.l.b16 %v2179
      %v2212 = vunpack.c.l.b16 %v2180
      %v2213 = vunpack.c.l.b16 %v2181
      %v2214 = vunpack.c.l.b16 %v2182
      %v2215 = vunpack.c.l.b16 %v2183
      %v2216 = vunpack.c.l.b16 %v2184
      %v2217 = vunpack.c.l.b16 %v2185
      %v2218 = vunpack.c.l.b16 %v2186
      %v2219 = vunpack.c.l.b16 %v2187
      %v2220 = vunpack.c.l.b16 %v2188
      %v2221 = vunpack.c.l.b16 %v2189
      %v2222 = vunpack.c.l.b16 %v2190
      %v2223 = vunpack.c.l.b16 %v2191
      %v2224 = vunpack.c.l.b16 %v2192
      %v2225 = vunpack.c.l.b16 %v2193
      %v2226 = vpack.c.b16 %v2211, %v2210
      %v2227 = vpack.c.b16 %v2213, %v2212
      %v2228 = vpack.c.b16 %v2215, %v2214
      %v2229 = vpack.c.b16 %v2217, %v2216
      %v2230 = vpack.c.b16 %v2219, %v2218
      %v2231 = vpack.c.b16 %v2221, %v2220
      %v2232 = vpack.c.b16 %v2223, %v2222
      %v2233 = vpack.c.b16 %v2225, %v2224
      %2242 = vmatprep.subr.bf16.mxu0 0
      %2243 = vmatpush1.bf16.msra.mxu0 %v2226
      %2244 = vmatprep.subr.bf16.mxu0 0
      %2245 = vmatpush1.bf16.msra.mxu0 %v2227
      %2246 = vmatprep.subr.bf16.mxu0 0
      %2247 = vmatpush1.bf16.msra.mxu0 %v2228
      %2248 = vmatprep.subr.bf16.mxu0 0
      %2249 = vmatpush1.bf16.msra.mxu0 %v2229
      %2250 = vmatprep.subr.bf16.mxu0 0
      %2251 = vmatpush1.bf16.msra.mxu0 %v2230
      %2252 = vmatprep.subr.bf16.mxu0 0
      %2253 = vmatpush1.bf16.msra.mxu0 %v2231
      %2254 = vmatprep.subr.bf16.mxu0 0
      %2255 = vmatpush1.bf16.msra.mxu0 %v2232
      %2256 = vmatprep.subr.bf16.mxu0 0
      %2257 = vmatpush1.bf16.msra.mxu0 %v2233
      %2258 = vmatprep.subr.bf16.mxu0 0
      %2259 = vmatpush1.bf16.msra.mxu0 0
      %2260 = vmatprep.subr.bf16.mxu0 0
      %2261 = vmatpush1.bf16.msra.mxu0 0
      %2262 = vmatprep.subr.bf16.mxu0 0
      %2263 = vmatpush1.bf16.msra.mxu0 0
      %2264 = vmatprep.subr.bf16.mxu0 0
      %2265 = vmatpush1.bf16.msra.mxu0 0
      %2266 = vmatprep.subr.bf16.mxu0 0
      %2267 = vmatpush1.bf16.msra.mxu0 0
      %2268 = vmatprep.subr.bf16.mxu0 0
      %2269 = vmatpush1.bf16.msra.mxu0 0
      %2270 = vmatprep.subr.bf16.mxu0 0
      %2271 = vmatpush1.bf16.msra.mxu0 0
      %2272 = vmatprep.subr.bf16.mxu0 0
      %2273 = vmatpush1.bf16.msra.mxu0 0
      %2274 = vmatprep.mubr.bf16.mxu0 0
      %2275 = vmatmul.mubr.bf16.gmra.mrb[0].mxu0 %v1563
      %v2276 = vpop.f32.mrb[0].mxu0
      %v2277 = vadd.f32 0.0, %v2276
      %v2278 = vpop.f32.mrb[0].mxu0
      %v2279 = vpop.f32.mrb[0].mxu0
      %v2280 = vadd.f32 0.0, %v2279
      %v2281 = vpop.f32.mrb[0].mxu0
      %2282 = vdwg.mxu0
      %v2299 = vunpack.c.l.b16 %v2161
      %v2300 = vunpack.c.l.b16 %v2162
      %v2301 = vunpack.c.l.b16 %v2163
      %v2302 = vunpack.c.l.b16 %v2164
      %v2303 = vunpack.c.l.b16 %v2165
      %v2304 = vunpack.c.l.b16 %v2166
      %v2305 = vunpack.c.l.b16 %v2167
      %v2306 = vunpack.c.l.b16 %v2168
      %v2307 = vunpack.c.l.b16 %v2169
      %v2308 = vunpack.c.l.b16 %v2170
      %v2309 = vunpack.c.l.b16 %v2171
      %v2310 = vunpack.c.l.b16 %v2172
      %v2311 = vunpack.c.l.b16 %v2173
      %v2312 = vunpack.c.l.b16 %v2174
      %v2313 = vunpack.c.l.b16 %v2175
      %v2314 = vunpack.c.l.b16 %v2176
      %v2315 = vpack.c.b16 %v2300, %v2299
      %v2316 = vpack.c.b16 %v2302, %v2301
      %v2317 = vpack.c.b16 %v2304, %v2303
      %v2318 = vpack.c.b16 %v2306, %v2305
      %v2319 = vpack.c.b16 %v2308, %v2307
      %v2320 = vpack.c.b16 %v2310, %v2309
      %v2321 = vpack.c.b16 %v2312, %v2311
      %v2322 = vpack.c.b16 %v2314, %v2313
      %2331 = vmatprep.subr.bf16.mxu0 0
      %2332 = vmatpush1.bf16.msra.mxu0 %v2315
      %2333 = vmatprep.subr.bf16.mxu0 0
      %2334 = vmatpush1.bf16.msra.mxu0 %v2316
      %2335 = vmatprep.subr.bf16.mxu0 0
      %2336 = vmatpush1.bf16.msra.mxu0 %v2317
      %2337 = vmatprep.subr.bf16.mxu0 0
      %2338 = vmatpush1.bf16.msra.mxu0 %v2318
      %2339 = vmatprep.subr.bf16.mxu0 0
      %2340 = vmatpush1.bf16.msra.mxu0 %v2319
      %2341 = vmatprep.subr.bf16.mxu0 0
      %2342 = vmatpush1.bf16.msra.mxu0 %v2320
      %2343 = vmatprep.subr.bf16.mxu0 0
      %2344 = vmatpush1.bf16.msra.mxu0 %v2321
      %2345 = vmatprep.subr.bf16.mxu0 0
      %2346 = vmatpush1.bf16.msra.mxu0 %v2322
      %2347 = vmatprep.subr.bf16.mxu0 0
      %2348 = vmatpush1.bf16.msra.mxu0 0
      %2349 = vmatprep.subr.bf16.mxu0 0
      %2350 = vmatpush1.bf16.msra.mxu0 0
      %2351 = vmatprep.subr.bf16.mxu0 0
      %2352 = vmatpush1.bf16.msra.mxu0 0
      %2353 = vmatprep.subr.bf16.mxu0 0
      %2354 = vmatpush1.bf16.msra.mxu0 0
      %2355 = vmatprep.subr.bf16.mxu0 0
      %2356 = vmatpush1.bf16.msra.mxu0 0
      %2357 = vmatprep.subr.bf16.mxu0 0
      %2358 = vmatpush1.bf16.msra.mxu0 0
      %2359 = vmatprep.subr.bf16.mxu0 0
      %2360 = vmatpush1.bf16.msra.mxu0 0
      %2361 = vmatprep.subr.bf16.mxu0 0
      %2362 = vmatpush1.bf16.msra.mxu0 0
      %2363 = vmatprep.mubr.bf16.mxu0 0
      %2364 = vmatmul.mubr.bf16.gmra.mrb[0].mxu0 %v1075
      %v2365 = vpop.f32.mrb[0].mxu0
      %v2366 = vadd.f32 %v2277, %v2365
      %v2367 = vpop.f32.mrb[0].mxu0
      %v2368 = vpop.f32.mrb[0].mxu0
      %v2369 = vadd.f32 %v2280, %v2368
      %v2370 = vpop.f32.mrb[0].mxu0
      %2371 = vdwg.mxu0
      %s2372 = scalar_lea.vmem %s1, 128
      %v2373 = vld [vmem:[%s2372] sm:$0xf]
      %v2374 = vld [vmem:[%s2372 + $0x4] sm:$0xf]
      %v2375 = vld [vmem:[%s2372 + $0x8] sm:$0xf]
      %v2376 = vld [vmem:[%s2372 + $0xc] sm:$0xf]
      %v2377 = vld [vmem:[%s2372 + $0x10] sm:$0xf]
      %v2378 = vld [vmem:[%s2372 + $0x14] sm:$0xf]
      %v2379 = vld [vmem:[%s2372 + $0x18] sm:$0xf]
      %v2380 = vld [vmem:[%s2372 + $0x1c] sm:$0xf]
      %v2381 = vld [vmem:[%s2372 + $0x20] sm:$0xf]
      %v2382 = vld [vmem:[%s2372 + $0x24] sm:$0xf]
      %v2383 = vld [vmem:[%s2372 + $0x28] sm:$0xf]
      %v2384 = vld [vmem:[%s2372 + $0x2c] sm:$0xf]
      %v2385 = vld [vmem:[%s2372 + $0x30] sm:$0xf]
      %v2386 = vld [vmem:[%s2372 + $0x34] sm:$0xf]
      %v2387 = vld [vmem:[%s2372 + $0x38] sm:$0xf]
      %v2388 = vld [vmem:[%s2372 + $0x3c] sm:$0xf]
      %v2405 = vunpack.c.l.b16 %v2373
      %v2406 = vunpack.c.l.b16 %v2374
      %v2407 = vunpack.c.l.b16 %v2375
      %v2408 = vunpack.c.l.b16 %v2376
      %v2409 = vunpack.c.l.b16 %v2377
      %v2410 = vunpack.c.l.b16 %v2378
      %v2411 = vunpack.c.l.b16 %v2379
      %v2412 = vunpack.c.l.b16 %v2380
      %v2413 = vunpack.c.l.b16 %v2381
      %v2414 = vunpack.c.l.b16 %v2382
      %v2415 = vunpack.c.l.b16 %v2383
      %v2416 = vunpack.c.l.b16 %v2384
      %v2417 = vunpack.c.l.b16 %v2385
      %v2418 = vunpack.c.l.b16 %v2386
      %v2419 = vunpack.c.l.b16 %v2387
      %v2420 = vunpack.c.l.b16 %v2388
      %v2421 = vpack.c.b16 %v2406, %v2405
      %v2422 = vpack.c.b16 %v2408, %v2407
      %v2423 = vpack.c.b16 %v2410, %v2409
      %v2424 = vpack.c.b16 %v2412, %v2411
      %v2425 = vpack.c.b16 %v2414, %v2413
      %v2426 = vpack.c.b16 %v2416, %v2415
      %v2427 = vpack.c.b16 %v2418, %v2417
      %v2428 = vpack.c.b16 %v2420, %v2419
      %2437 = vmatprep.subr.bf16.mxu0 0
      %2438 = vmatpush1.bf16.msra.mxu0 %v2421
      %2439 = vmatprep.subr.bf16.mxu0 0
      %2440 = vmatpush1.bf16.msra.mxu0 %v2422
      %2441 = vmatprep.subr.bf16.mxu0 0
      %2442 = vmatpush1.bf16.msra.mxu0 %v2423
      %2443 = vmatprep.subr.bf16.mxu0 0
      %2444 = vmatpush1.bf16.msra.mxu0 %v2424
      %2445 = vmatprep.subr.bf16.mxu0 0
      %2446 = vmatpush1.bf16.msra.mxu0 %v2425
      %2447 = vmatprep.subr.bf16.mxu0 0
      %2448 = vmatpush1.bf16.msra.mxu0 %v2426
      %2449 = vmatprep.subr.bf16.mxu0 0
      %2450 = vmatpush1.bf16.msra.mxu0 %v2427
      %2451 = vmatprep.subr.bf16.mxu0 0
      %2452 = vmatpush1.bf16.msra.mxu0 %v2428
      %2453 = vmatprep.subr.bf16.mxu0 0
      %2454 = vmatpush1.bf16.msra.mxu0 0
      %2455 = vmatprep.subr.bf16.mxu0 0
      %2456 = vmatpush1.bf16.msra.mxu0 0
      %2457 = vmatprep.subr.bf16.mxu0 0
      %2458 = vmatpush1.bf16.msra.mxu0 0
      %2459 = vmatprep.subr.bf16.mxu0 0
      %2460 = vmatpush1.bf16.msra.mxu0 0
      %2461 = vmatprep.subr.bf16.mxu0 0
      %2462 = vmatpush1.bf16.msra.mxu0 0
      %2463 = vmatprep.subr.bf16.mxu0 0
      %2464 = vmatpush1.bf16.msra.mxu0 0
      %2465 = vmatprep.subr.bf16.mxu0 0
      %2466 = vmatpush1.bf16.msra.mxu0 0
      %2467 = vmatprep.subr.bf16.mxu0 0
      %2468 = vmatpush1.bf16.msra.mxu0 0
      %2469 = vmatprep.mubr.bf16.mxu0 0
      %2470 = vmatmul.mubr.bf16.gmra.mrb[0].mxu0 %v2049
      %v2471 = vpop.f32.mrb[0].mxu0
      %v2472 = vadd.f32 0.0, %v2471
      %v2473 = vpop.f32.mrb[0].mxu0
      %v2474 = vpop.f32.mrb[0].mxu0
      %v2475 = vadd.f32 0.0, %v2474
      %v2476 = vpop.f32.mrb[0].mxu0
      %2477 = vdwg.mxu0
      %v2478 = vadd.f32 %v2366, %v2472
      %v2479 = vadd.f32 %v2369, %v2475
      %v2480 = vld [vmem:[%s1] sm:$0xf]
      %v2481 = vld [vmem:[%s1 + $0x4] sm:$0xf]
      %v2482 = vld [vmem:[%s1 + $0x8] sm:$0xf]
      %v2483 = vld [vmem:[%s1 + $0xc] sm:$0xf]
      %v2484 = vld [vmem:[%s1 + $0x10] sm:$0xf]
      %v2485 = vld [vmem:[%s1 + $0x14] sm:$0xf]
      %v2486 = vld [vmem:[%s1 + $0x18] sm:$0xf]
      %v2487 = vld [vmem:[%s1 + $0x1c] sm:$0xf]
      %v2488 = vld [vmem:[%s1 + $0x20] sm:$0xf]
      %v2489 = vld [vmem:[%s1 + $0x24] sm:$0xf]
      %v2490 = vld [vmem:[%s1 + $0x28] sm:$0xf]
      %v2491 = vld [vmem:[%s1 + $0x2c] sm:$0xf]
      %v2492 = vld [vmem:[%s1 + $0x30] sm:$0xf]
      %v2493 = vld [vmem:[%s1 + $0x34] sm:$0xf]
      %v2494 = vld [vmem:[%s1 + $0x38] sm:$0xf]
      %v2495 = vld [vmem:[%s1 + $0x3c] sm:$0xf]
      %v2496 = vcombine.low %v647, %v651
      %v2497 = vcombine.low %v655, %v659
      %v2499 = vunpack.c.l.s4 1983009808
      %v2500 = vunpack.c.0.s8 %v2499
      %v2501 = vlaneseq
      %v2502 = vshrl.u32 %v2501, 7
      %v2503 = vsub.s32 %v2500, %v2502
      %v2504 = vrot.slane %v2496, %v2503
      %v2506 = vunpack.c.l.s4 1983009808
      %v2507 = vunpack.c.0.s8 %v2506
      %v2508 = vlaneseq
      %v2509 = vshrl.u32 %v2508, 7
      %v2510 = vsub.s32 %v2507, %v2509
      %v2511 = vrot.slane %v2497, %v2510
      %v2512 = vcombine.low %v2504, %v2511
      %v2530 = vunpack.c.l.b16 %v2480
      %v2531 = vunpack.c.l.b16 %v2481
      %v2532 = vunpack.c.l.b16 %v2482
      %v2533 = vunpack.c.l.b16 %v2483
      %v2534 = vunpack.c.l.b16 %v2484
      %v2535 = vunpack.c.l.b16 %v2485
      %v2536 = vunpack.c.l.b16 %v2486
      %v2537 = vunpack.c.l.b16 %v2487
      %v2538 = vunpack.c.l.b16 %v2488
      %v2539 = vunpack.c.l.b16 %v2489
      %v2540 = vunpack.c.l.b16 %v2490
      %v2541 = vunpack.c.l.b16 %v2491
      %v2542 = vunpack.c.l.b16 %v2492
      %v2543 = vunpack.c.l.b16 %v2493
      %v2544 = vunpack.c.l.b16 %v2494
      %v2545 = vunpack.c.l.b16 %v2495
      %v2546 = vpack.c.b16 %v2531, %v2530
      %v2547 = vpack.c.b16 %v2533, %v2532
      %v2548 = vpack.c.b16 %v2535, %v2534
      %v2549 = vpack.c.b16 %v2537, %v2536
      %v2550 = vpack.c.b16 %v2539, %v2538
      %v2551 = vpack.c.b16 %v2541, %v2540
      %v2552 = vpack.c.b16 %v2543, %v2542
      %v2553 = vpack.c.b16 %v2545, %v2544
      %2562 = vmatprep.subr.bf16.mxu0 0
      %2563 = vmatpush1.bf16.msra.mxu0 %v2546
      %2564 = vmatprep.subr.bf16.mxu0 0
      %2565 = vmatpush1.bf16.msra.mxu0 %v2547
      %2566 = vmatprep.subr.bf16.mxu0 0
      %2567 = vmatpush1.bf16.msra.mxu0 %v2548
      %2568 = vmatprep.subr.bf16.mxu0 0
      %2569 = vmatpush1.bf16.msra.mxu0 %v2549
      %2570 = vmatprep.subr.bf16.mxu0 0
      %2571 = vmatpush1.bf16.msra.mxu0 %v2550
      %2572 = vmatprep.subr.bf16.mxu0 0
      %2573 = vmatpush1.bf16.msra.mxu0 %v2551
      %2574 = vmatprep.subr.bf16.mxu0 0
      %2575 = vmatpush1.bf16.msra.mxu0 %v2552
      %2576 = vmatprep.subr.bf16.mxu0 0
      %2577 = vmatpush1.bf16.msra.mxu0 %v2553
      %2578 = vmatprep.subr.bf16.mxu0 0
      %2579 = vmatpush1.bf16.msra.mxu0 0
      %2580 = vmatprep.subr.bf16.mxu0 0
      %2581 = vmatpush1.bf16.msra.mxu0 0
      %2582 = vmatprep.subr.bf16.mxu0 0
      %2583 = vmatpush1.bf16.msra.mxu0 0
      %2584 = vmatprep.subr.bf16.mxu0 0
      %2585 = vmatpush1.bf16.msra.mxu0 0
      %2586 = vmatprep.subr.bf16.mxu0 0
      %2587 = vmatpush1.bf16.msra.mxu0 0
      %2588 = vmatprep.subr.bf16.mxu0 0
      %2589 = vmatpush1.bf16.msra.mxu0 0
      %2590 = vmatprep.subr.bf16.mxu0 0
      %2591 = vmatpush1.bf16.msra.mxu0 0
      %2592 = vmatprep.subr.bf16.mxu0 0
      %2593 = vmatpush1.bf16.msra.mxu0 0
      %2594 = vmatprep.mubr.bf16.mxu0 0
      %2595 = vmatmul.mubr.bf16.gmra.mrb[0].mxu0 %v2512
      %v2596 = vpop.f32.mrb[0].mxu0
      %v2597 = vadd.f32 0.0, %v2596
      %v2598 = vpop.f32.mrb[0].mxu0
      %v2599 = vpop.f32.mrb[0].mxu0
      %v2600 = vadd.f32 0.0, %v2599
      %v2601 = vpop.f32.mrb[0].mxu0
      %2602 = vdwg.mxu0
      %v2603 = vadd.f32 %v2478, %v2597
      %v2604 = vadd.f32 %v2479, %v2600
      %v2605 = vadd.f32 %v2603, %v1172
      %v2606 = vadd.f32 %v2604, %v1172
      %vm2607 = vcmp.ge.f32.partialorder %v2605, 0.0
      %vm2608 = vcmp.ge.f32.partialorder %v2606, 0.0
      %v2609 = vmul.f32 %v2605, 0.2
      %v2610 = vmul.f32 %v2606, 0.2
      %v2611 = vsel %vm2607, %v2605, %v2609
      %v2612 = vsel %vm2608, %v2606, %v2610
      %v2613 = vpack.c.bf16 %v2612, %v2611
      %v2615 = vunpack.c.l.b16 %v2613
      %v2616 = vunpack.c.h.b16 %v2613
      %v2617 = vpack.c.b16 %v2615, %v2615
      %v2618 = vpack.c.b16 %v2616, %v2616
      %2621 = vst [vmem:[%s172 + $0xc] sm:$0xf] %v2617
      %2622 = vst [vmem:[%s172 + $0x1c] sm:$0xf] %v2618
      %s2623 = smul.u32 2, %s14
      %p2624 = scmp.lt.s32.totalorder %s2623, 3
      %s2625 = scalar_select %p2624, %s2623, 3
      %s2626 = smul.addr %s2625, 4
      %s2627 = smul.addr %s2626, 4
      %s2628 = scalar_lea.vmem %s3, %s2627
      // Predicated region
      $region33: #{netg_forward.4} parent=31 // pred_check
        %p2629 = pneg %p100
      $region34: #{netg_forward.4} parent=31 // pred_check_branch
        %2631 = sbr.rel (%p2629) target = $region36
      $region35: #{netg_forward.4} parent=31 // pred_region
        %s2632 = smul.u32 2, %s14
      $region36: #{netg_forward.4} parent=31 // pred_fallthru
        _
    $region32: #{netg_forward.4} parent=5 // pred_fallthru
      _
    %p2633 = scmp.le.s32.totalorder 2, %s9
    // Predicated region
    $region37: #{netg_forward.4} parent=5 // pred_check
      %p2634 = pneg %p2633
    $region38: #{netg_forward.4} parent=5 // pred_check_branch
      %2636 = sbr.rel (%p2634) target = $region40
    $region39: #{netg_forward.4} parent=5 // pred_region
      %s2637 = ssub.s32 %s9, 2
      // Predicated region
      $region41: #{netg_forward.4} parent=39 // pred_check
        %p2638 = pneg %p106
      $region42: #{netg_forward.4} parent=39 // pred_check_branch
        %2640 = sbr.rel (%p2638) target = $region44
      $region43: #{netg_forward.4} parent=39 // pred_region
        %s2641 = smul.u32 2, %s15
        %p2642 = scmp.lt.s32.totalorder %s2641, 3
        %s2643 = scalar_select %p2642, %s2641, 3
        %s2644 = smul.addr %s2643, 4
        %s2645 = smul.addr %s2644, 4
        %s2646 = scalar_lea.vmem %s3, %s2645
      $region44: #{netg_forward.4} parent=39 // pred_fallthru
        _
    $region40: #{netg_forward.4} parent=5 // pred_fallthru
      _
  $region6: #{netg_forward.4} parent=0 // loop_footer
    %s13 = sadd.s32 1, %s9
  $region7: #{netg_forward.4} parent=0 // loop_footer_branch
    %8 = sbr.rel target = $region3
  $region8: #{netg_forward.4} parent=0 // loop_exit
    _

// kernel: netg_forward.5
$region0: #{netg_forward.5}
  #allocation0 [shape = 'u32[]', space=smem, size = 0x4, offset = 0x4, fixed_abs, tag = 'smem constant byte address 0x4 - core index']
  #allocation1 [shape = 'u32[144,128]{1,0:T(1,128)}', space=vmem, size = 0x12000, scoped, tag = 'internal scratch']
  %s0 = inlined_call_operand.vmem [shape: bf16[2,10,10,64], index: 0, kind: input, shape index: {}]
  %s1 = inlined_call_operand.vmem [shape: bf16[4,4,64,128], index: 1, kind: input, shape index: {}]
  %s2 = inlined_call_operand.vmem [shape: f32[1,128], index: 2, kind: input, shape index: {}]
  %s3 = inlined_call_operand.vmem [shape: f32[128,512], index: 3, kind: output, shape index: {}]
  %s4 = sld [smem:[#allocation0]]
  $region45: #{netg_forward.5} parent=0
    _
  %s6 = ssub.s32 1, %s4
  %s7 = scalar_select 0, %s6, %s4
  loop: start=0, step=1, limit=4
  $region2: #{netg_forward.5} parent=0 // loop_pre_header
    _
  $region3: #{netg_forward.5} parent=0 // loop_header
    %s9 = sphi 0, %s13
    %p10 = scmp.ge.s32.totalorder %s9, 4
    %s19 = sphi 0, %s21
    %s22 = sphi 0, %s19
    %s23 = sphi 0, %s22
    %s39 = sphi 0, %s23
    %s43 = sphi 0, %s43
    %s45 = sphi 0, %s43
    %s46 = sphi 0, %s45
    %s60 = sphi 0, %s46
    %s64 = sphi 0, %s64
    %s66 = sphi 0, %s64
    %s67 = sphi 0, %s66
    %s81 = sphi 0, %s67
    %s87 = sphi 0, %s89
    %s90 = sphi 0, %s87
    %s91 = sphi 0, %s90
    %s107 = sphi 0, %s91
  $region4: #{netg_forward.5} parent=0 // loop_header_branch
    %12 = sbr.rel (%p10) target = $region8
  $region5: #{netg_forward.5} parent=0 // loop_body
    %s14 = ssub.s32 %s9, 1
    %s15 = ssub.s32 %s9, 2
    %s16 = sadd.s32 %s9, 1
    %s17 = ssub.s32 %s9, %s16
    %p18 = scmp.eq.s32.totalorder %s17, 0
    %s20 = sadd.s32 %s19, 1
    %s21 = scalar_select %p18, %s19, %s20
    %p24 = pneg %p18
    %p25 = scmp.eq.s32.totalorder %s9, 1
    %p26 = por %p24, %p25
    %p27 = scmp.ne.s32.totalorder %s19, %s22
    %p28 = scmp.eq.s32.totalorder %s9, 0
    %p29 = por %p27, %p28
    %p30 = scmp.ne.s32.totalorder %s19, %s22
    %p31 = scmp.eq.s32.totalorder %s14, 1
    %p32 = por %p30, %p31
    %p33 = scmp.ne.s32.totalorder %s22, %s23
    %p34 = scmp.eq.s32.totalorder %s14, 0
    %p35 = por %p33, %p34
    %p36 = scmp.ne.s32.totalorder %s22, %s23
    %p37 = scmp.eq.s32.totalorder %s15, 1
    %p38 = por %p36, %p37
    %p40 = scmp.ne.s32.totalorder %s23, %s39
    %p41 = scmp.eq.s32.totalorder %s15, 0
    %p42 = por %p40, %p41
    %s44 = sadd.s32 %s43, 1
    %p47 = scmp.eq.s32.totalorder %s9, 1
    %p48 = scmp.ne.s32.totalorder %s43, %s45
    %p49 = scmp.eq.s32.totalorder %s9, 0
    %p50 = por %p48, %p49
    %p51 = scmp.ne.s32.totalorder %s43, %s45
    %p52 = scmp.eq.s32.totalorder %s14, 1
    %p53 = por %p51, %p52
    %p54 = scmp.ne.s32.totalorder %s45, %s46
    %p55 = scmp.eq.s32.totalorder %s14, 0
    %p56 = por %p54, %p55
    %p57 = scmp.ne.s32.totalorder %s45, %s46
    %p58 = scmp.eq.s32.totalorder %s15, 1
    %p59 = por %p57, %p58
    %p61 = scmp.ne.s32.totalorder %s46, %s60
    %p62 = scmp.eq.s32.totalorder %s15, 0
    %p63 = por %p61, %p62
    %s65 = sadd.s32 %s64, 1
    %p68 = scmp.eq.s32.totalorder %s9, 1
    %p69 = scmp.ne.s32.totalorder %s64, %s66
    %p70 = scmp.eq.s32.totalorder %s9, 0
    %p71 = por %p69, %p70
    %p72 = scmp.ne.s32.totalorder %s64, %s66
    %p73 = scmp.eq.s32.totalorder %s14, 1
    %p74 = por %p72, %p73
    %p75 = scmp.ne.s32.totalorder %s66, %s67
    %p76 = scmp.eq.s32.totalorder %s14, 0
    %p77 = por %p75, %p76
    %p78 = scmp.ne.s32.totalorder %s66, %s67
    %p79 = scmp.eq.s32.totalorder %s15, 1
    %p80 = por %p78, %p79
    %p82 = scmp.ne.s32.totalorder %s67, %s81
    %p83 = scmp.eq.s32.totalorder %s15, 0
    %p84 = por %p82, %p83
    %s85 = ssub.s32 %s9, %s16
    %p86 = scmp.eq.s32.totalorder %s85, 0
    %s88 = sadd.s32 %s87, 1
    %s89 = scalar_select %p86, %s87, %s88
    %p92 = pneg %p86
    %p93 = scmp.eq.s32.totalorder %s9, 1
    %p94 = por %p92, %p93
    %p95 = scmp.ne.s32.totalorder %s87, %s90
    %p96 = scmp.eq.s32.totalorder %s9, 0
    %p97 = por %p95, %p96
    %p98 = scmp.ne.s32.totalorder %s87, %s90
    %p99 = scmp.eq.s32.totalorder %s14, 1
    %p100 = por %p98, %p99
    %p101 = scmp.ne.s32.totalorder %s90, %s91
    %p102 = scmp.eq.s32.totalorder %s14, 0
    %p103 = por %p101, %p102
    %p104 = scmp.ne.s32.totalorder %s90, %s91
    %p105 = scmp.eq.s32.totalorder %s15, 1
    %p106 = por %p104, %p105
    %p108 = scmp.ne.s32.totalorder %s91, %s107
    %p109 = scmp.eq.s32.totalorder %s15, 0
    %p110 = por %p108, %p109
    %p111 = scmp.le.s32.totalorder 1, %s9
    %p112 = scmp.lt.s32.totalorder %s9, 3
    %p113 = pnand %p111, %p112
    %p114 = pneg %p113
    // Predicated region
    $region9: #{netg_forward.5} parent=5 // pred_check
      _
    $region10: #{netg_forward.5} parent=5 // pred_check_branch
      %116 = sbr.rel (%p113) target = $region12
    $region11: #{netg_forward.5} parent=5 // pred_region
      %s117 = ssub.s32 %s9, 1
      // Predicated region
      $region13: #{netg_forward.5} parent=11 // pred_check
        %p118 = pneg %p56
      $region14: #{netg_forward.5} parent=11 // pred_check_branch
        %120 = sbr.rel (%p118) target = $region16
      $region15: #{netg_forward.5} parent=11 // pred_region
        _
      $region16: #{netg_forward.5} parent=11 // pred_fallthru
        _
      // Predicated region
      $region17: #{netg_forward.5} parent=11 // pred_check
        %p121 = pneg %p77
      $region18: #{netg_forward.5} parent=11 // pred_check_branch
        %123 = sbr.rel (%p121) target = $region20
      $region19: #{netg_forward.5} parent=11 // pred_region
        _
      $region20: #{netg_forward.5} parent=11 // pred_fallthru
        _
    $region12: #{netg_forward.5} parent=5 // pred_fallthru
      _
    %p124 = scmp.lt.s32.totalorder %s9, 2
    // Predicated region
    $region21: #{netg_forward.5} parent=5 // pred_check
      %p125 = pneg %p124
    $region22: #{netg_forward.5} parent=5 // pred_check_branch
      %127 = sbr.rel (%p125) target = $region24
    $region23: #{netg_forward.5} parent=5 // pred_region
      // Predicated region
      $region25: #{netg_forward.5} parent=23 // pred_check
        %p128 = pneg %p29
      $region26: #{netg_forward.5} parent=23 // pred_check_branch
        %130 = sbr.rel (%p128) target = $region28
      $region27: #{netg_forward.5} parent=23 // pred_region
        %p131 = scmp.lt.s32.totalorder %s9, 1
        %s132 = scalar_select %p131, %s9, 1
        %s133 = smul.addr %s132, 20
        %s134 = smul.addr %s133, 4
        %s135 = scalar_lea.vmem %s0, %s134
      $region28: #{netg_forward.5} parent=23 // pred_fallthru
        _
    $region24: #{netg_forward.5} parent=5 // pred_fallthru
      _
    %p136 = scmp.le.s32.totalorder 1, %s9
    %p137 = scmp.lt.s32.totalorder %s9, 3
    %p138 = pnand %p136, %p137
    %p139 = pneg %p138
    // Predicated region
    $region29: #{netg_forward.5} parent=5 // pred_check
      _
    $region30: #{netg_forward.5} parent=5 // pred_check_branch
      %141 = sbr.rel (%p138) target = $region32
    $region31: #{netg_forward.5} parent=5 // pred_region
      %s142 = ssub.s32 %s9, 1
      %p143 = scmp.lt.s32.totalorder %s14, 1
      %s144 = scalar_select %p143, %s14, 1
      %s145 = smul.addr %s144, 20
      %s146 = smul.addr %s145, 4
      %s147 = scalar_lea.vmem %s0, %s146
      %p148 = pneg %p35
      %p149 = pneg %p32
      %p150 = pneg %p56
      %p151 = pneg %p53
      %p152 = pneg %p77
      %p153 = pneg %p74
      %p154 = pneg %p103
      %p155 = pneg %p100
      %s156 = smul.u32 8, %s14
      %p157 = scmp.lt.s32.totalorder %s156, 15
      %s158 = scalar_select %p157, %s156, 15
      %s159 = smul.addr %s158, 4
      %s160 = smul.addr %s159, 8
      %s161 = scalar_lea.vmem %s3, %s160
      %p162 = scmp.lt.s32.totalorder %s14, 1
      %s163 = scalar_select %p162, %s14, 1
      %s164 = smul.addr %s163, 20
      %s165 = smul.addr %s164, 4
      %s166 = scalar_lea.vmem %s0, %s165
      %s167 = smul.u32 8, %s14
      %p168 = scmp.lt.s32.totalorder %s167, 15
      %s169 = scalar_select %p168, %s167, 15
      %s170 = smul.addr %s169, 4
      %s171 = smul.addr %s170, 8
      %s172 = scalar_lea.vmem %s3, %s171
      %s173 = smul.u32 8, %s14
      %v175 = vld [vmem:[%s2] sm:$0x1]
      %v176 = vld [vmem:[%s166] sm:$0xf]
      %v177 = vld [vmem:[%s166 + $0x8] sm:$0xf]
      %v178 = vld [vmem:[%s166 + $0x10] sm:$0xf]
      %v179 = vld [vmem:[%s166 + $0x18] sm:$0xf]
      %v180 = vld [vmem:[%s166 + $0x20] sm:$0xf]
      %v181 = vld [vmem:[%s166 + $0x28] sm:$0xf]
      %v182 = vld [vmem:[%s166 + $0x30] sm:$0xf]
      %v183 = vld [vmem:[%s166 + $0x38] sm:$0xf]
      %v184 = vld [vmem:[%s166 + $0x4] sm:$0x1]
      %v185 = vld [vmem:[%s166 + $0xc] sm:$0x1]
      %v186 = vld [vmem:[%s166 + $0x14] sm:$0x1]
      %v187 = vld [vmem:[%s166 + $0x1c] sm:$0x1]
      %v188 = vld [vmem:[%s166 + $0x24] sm:$0x1]
      %v189 = vld [vmem:[%s166 + $0x2c] sm:$0x1]
      %v190 = vld [vmem:[%s166 + $0x34] sm:$0x1]
      %v191 = vld [vmem:[%s166 + $0x3c] sm:$0x1]
      %vm192 = vsmask.f32 3328
      %vm193 = vsmask.f32 7440
      %vm194 = vmor %vm192, %vm193
      %v196 = vshrl.u32 %v176, 16
      %v198 = vrot.slane %v196, 4
      %v199 = vshll.u32 %v176, 16
      %v201 = vrot.slane %v199, 5
      %v202 = vor.u32 %v198, %v201
      %v203 = vrot.slane %v202, 4
      %v205 = vshll.u32 %v184, 16
      %v207 = vrot.slane %v205, 5
      %v208 = vsel %vm194, %v203, %v207
      %v210 = vshrl.u32 %v177, 16
      %v212 = vrot.slane %v210, 4
      %v213 = vshll.u32 %v177, 16
      %v215 = vrot.slane %v213, 5
      %v216 = vor.u32 %v212, %v215
      %v217 = vrot.slane %v216, 4
      %v219 = vshll.u32 %v185, 16
      %v221 = vrot.slane %v219, 5
      %v222 = vsel %vm194, %v217, %v221
      %v224 = vshrl.u32 %v178, 16
      %v226 = vrot.slane %v224, 4
      %v227 = vshll.u32 %v178, 16
      %v229 = vrot.slane %v227, 5
      %v230 = vor.u32 %v226, %v229
      %v231 = vrot.slane %v230, 4
      %v233 = vshll.u32 %v186, 16
      %v235 = vrot.slane %v233, 5
      %v236 = vsel %vm194, %v231, %v235
      %v238 = vshrl.u32 %v179, 16
      %v240 = vrot.slane %v238, 4
      %v241 = vshll.u32 %v179, 16
      %v243 = vrot.slane %v241, 5
      %v244 = vor.u32 %v240, %v243
      %v245 = vrot.slane %v244, 4
      %v247 = vshll.u32 %v187, 16
      %v249 = vrot.slane %v247, 5
      %v250 = vsel %vm194, %v245, %v249
      %v252 = vshrl.u32 %v180, 16
      %v254 = vrot.slane %v252, 4
      %v255 = vshll.u32 %v180, 16
      %v257 = vrot.slane %v255, 5
      %v258 = vor.u32 %v254, %v257
      %v259 = vrot.slane %v258, 4
      %v261 = vshll.u32 %v188, 16
      %v263 = vrot.slane %v261, 5
      %v264 = vsel %vm194, %v259, %v263
      %v266 = vshrl.u32 %v181, 16
      %v268 = vrot.slane %v266, 4
      %v269 = vshll.u32 %v181, 16
      %v271 = vrot.slane %v269, 5
      %v272 = vor.u32 %v268, %v271
      %v273 = vrot.slane %v272, 4
      %v275 = vshll.u32 %v189, 16
      %v277 = vrot.slane %v275, 5
      %v278 = vsel %vm194, %v273, %v277
      %v280 = vshrl.u32 %v182, 16
      %v282 = vrot.slane %v280, 4
      %v283 = vshll.u32 %v182, 16
      %v285 = vrot.slane %v283, 5
      %v286 = vor.u32 %v282, %v285
      %v287 = vrot.slane %v286, 4
      %v289 = vshll.u32 %v190, 16
      %v291 = vrot.slane %v289, 5
      %v292 = vsel %vm194, %v287, %v291
      %v294 = vshrl.u32 %v183, 16
      %v296 = vrot.slane %v294, 4
      %v297 = vshll.u32 %v183, 16
      %v299 = vrot.slane %v297, 5
      %v300 = vor.u32 %v296, %v299
      %v301 = vrot.slane %v300, 4
      %v303 = vshll.u32 %v191, 16
      %v305 = vrot.slane %v303, 5
      %v306 = vsel %vm194, %v301, %v305
      %v307 = vld [vmem:[%s166] sm:$0xe]
      %v308 = vld [vmem:[%s166 + $0x8] sm:$0xe]
      %v309 = vld [vmem:[%s166 + $0x10] sm:$0xe]
      %v310 = vld [vmem:[%s166 + $0x18] sm:$0xe]
      %v311 = vld [vmem:[%s166 + $0x20] sm:$0xe]
      %v312 = vld [vmem:[%s166 + $0x28] sm:$0xe]
      %v313 = vld [vmem:[%s166 + $0x30] sm:$0xe]
      %v314 = vld [vmem:[%s166 + $0x38] sm:$0xe]
      %vm331 = vcmask 1042432
      %vm332 = vcmask 1046532
      %vm333 = vmor %vm331, %vm332
      %v334 = vrot.slane %v307, 5
      %v335 = vrot.slane %v334, 4
      %v336 = vrot.slane %v184, 5
      %v337 = vsel %vm333, %v335, %v336
      %v338 = vrot.slane %v308, 5
      %v339 = vrot.slane %v338, 4
      %v340 = vrot.slane %v185, 5
      %v341 = vsel %vm333, %v339, %v340
      %v342 = vrot.slane %v309, 5
      %v343 = vrot.slane %v342, 4
      %v344 = vrot.slane %v186, 5
      %v345 = vsel %vm333, %v343, %v344
      %v346 = vrot.slane %v310, 5
      %v347 = vrot.slane %v346, 4
      %v348 = vrot.slane %v187, 5
      %v349 = vsel %vm333, %v347, %v348
      %v350 = vrot.slane %v311, 5
      %v351 = vrot.slane %v350, 4
      %v352 = vrot.slane %v188, 5
      %v353 = vsel %vm333, %v351, %v352
      %v354 = vrot.slane %v312, 5
      %v355 = vrot.slane %v354, 4
      %v356 = vrot.slane %v189, 5
      %v357 = vsel %vm333, %v355, %v356
      %v358 = vrot.slane %v313, 5
      %v359 = vrot.slane %v358, 4
      %v360 = vrot.slane %v190, 5
      %v361 = vsel %vm333, %v359, %v360
      %v362 = vrot.slane %v314, 5
      %v363 = vrot.slane %v362, 4
      %v364 = vrot.slane %v191, 5
      %v365 = vsel %vm333, %v363, %v364
      %s366 = scalar_lea.vmem %s166, 8
      %v367 = vld [vmem:[%s366] sm:$0xf]
      %v368 = vld [vmem:[%s366 + $0x8] sm:$0xf]
      %v369 = vld [vmem:[%s366 + $0x10] sm:$0xf]
      %v370 = vld [vmem:[%s366 + $0x18] sm:$0xf]
      %v371 = vld [vmem:[%s366 + $0x20] sm:$0xf]
      %v372 = vld [vmem:[%s366 + $0x28] sm:$0xf]
      %v373 = vld [vmem:[%s366 + $0x30] sm:$0xf]
      %v374 = vld [vmem:[%s366 + $0x38] sm:$0xf]
      %v375 = vld [vmem:[%s366 + $0x4] sm:$0x1]
      %v376 = vld [vmem:[%s366 + $0xc] sm:$0x1]
      %v377 = vld [vmem:[%s366 + $0x14] sm:$0x1]
      %v378 = vld [vmem:[%s366 + $0x1c] sm:$0x1]
      %v379 = vld [vmem:[%s366 + $0x24] sm:$0x1]
      %v380 = vld [vmem:[%s366 + $0x2c] sm:$0x1]
      %v381 = vld [vmem:[%s366 + $0x34] sm:$0x1]
      %v382 = vld [vmem:[%s366 + $0x3c] sm:$0x1]
      %v384 = vshrl.u32 %v367, 16
      %v386 = vrot.slane %v384, 4
      %v387 = vshll.u32 %v367, 16
      %v389 = vrot.slane %v387, 5
      %v390 = vor.u32 %v386, %v389
      %v391 = vrot.slane %v390, 4
      %v393 = vshll.u32 %v375, 16
      %v395 = vrot.slane %v393, 5
      %v396 = vsel %vm194, %v391, %v395
      %v398 = vshrl.u32 %v368, 16
      %v400 = vrot.slane %v398, 4
      %v401 = vshll.u32 %v368, 16
      %v403 = vrot.slane %v401, 5
      %v404 = vor.u32 %v400, %v403
      %v405 = vrot.slane %v404, 4
      %v407 = vshll.u32 %v376, 16
      %v409 = vrot.slane %v407, 5
      %v410 = vsel %vm194, %v405, %v409
      %v412 = vshrl.u32 %v369, 16
      %v414 = vrot.slane %v412, 4
      %v415 = vshll.u32 %v369, 16
      %v417 = vrot.slane %v415, 5
      %v418 = vor.u32 %v414, %v417
      %v419 = vrot.slane %v418, 4
      %v421 = vshll.u32 %v377, 16
      %v423 = vrot.slane %v421, 5
      %v424 = vsel %vm194, %v419, %v423
      %v426 = vshrl.u32 %v370, 16
      %v428 = vrot.slane %v426, 4
      %v429 = vshll.u32 %v370, 16
      %v431 = vrot.slane %v429, 5
      %v432 = vor.u32 %v428, %v431
      %v433 = vrot.slane %v432, 4
      %v435 = vshll.u32 %v378, 16
      %v437 = vrot.slane %v435, 5
      %v438 = vsel %vm194, %v433, %v437
      %v440 = vshrl.u32 %v371, 16
      %v442 = vrot.slane %v440, 4
      %v443 = vshll.u32 %v371, 16
      %v445 = vrot.slane %v443, 5
      %v446 = vor.u32 %v442, %v445
      %v447 = vrot.slane %v446, 4
      %v449 = vshll.u32 %v379, 16
      %v451 = vrot.slane %v449, 5
      %v452 = vsel %vm194, %v447, %v451
      %v454 = vshrl.u32 %v372, 16
      %v456 = vrot.slane %v454, 4
      %v457 = vshll.u32 %v372, 16
      %v459 = vrot.slane %v457, 5
      %v460 = vor.u32 %v456, %v459
      %v461 = vrot.slane %v460, 4
      %v463 = vshll.u32 %v380, 16
      %v465 = vrot.slane %v463, 5
      %v466 = vsel %vm194, %v461, %v465
      %v468 = vshrl.u32 %v373, 16
      %v470 = vrot.slane %v468, 4
      %v471 = vshll.u32 %v373, 16
      %v473 = vrot.slane %v471, 5
      %v474 = vor.u32 %v470, %v473
      %v475 = vrot.slane %v474, 4
      %v477 = vshll.u32 %v381, 16
      %v479 = vrot.slane %v477, 5
      %v480 = vsel %vm194, %v475, %v479
      %v482 = vshrl.u32 %v374, 16
      %v484 = vrot.slane %v482, 4
      %v485 = vshll.u32 %v374, 16
      %v487 = vrot.slane %v485, 5
      %v488 = vor.u32 %v484, %v487
      %v489 = vrot.slane %v488, 4
      %v491 = vshll.u32 %v382, 16
      %v493 = vrot.slane %v491, 5
      %v494 = vsel %vm194, %v489, %v493
      %v495 = vld [vmem:[%s366] sm:$0xe]
      %v496 = vld [vmem:[%s366 + $0x8] sm:$0xe]
      %v497 = vld [vmem:[%s366 + $0x10] sm:$0xe]
      %v498 = vld [vmem:[%s366 + $0x18] sm:$0xe]
      %v499 = vld [vmem:[%s366 + $0x20] sm:$0xe]
      %v500 = vld [vmem:[%s366 + $0x28] sm:$0xe]
      %v501 = vld [vmem:[%s366 + $0x30] sm:$0xe]
      %v502 = vld [vmem:[%s366 + $0x38] sm:$0xe]
      %v519 = vrot.slane %v495, 5
      %v520 = vrot.slane %v519, 4
      %v521 = vrot.slane %v375, 5
      %v522 = vsel %vm333, %v520, %v521
      %v523 = vrot.slane %v496, 5
      %v524 = vrot.slane %v523, 4
      %v525 = vrot.slane %v376, 5
      %v526 = vsel %vm333, %v524, %v525
      %v527 = vrot.slane %v497, 5
      %v528 = vrot.slane %v527, 4
      %v529 = vrot.slane %v377, 5
      %v530 = vsel %vm333, %v528, %v529
      %v531 = vrot.slane %v498, 5
      %v532 = vrot.slane %v531, 4
      %v533 = vrot.slane %v378, 5
      %v534 = vsel %vm333, %v532, %v533
      %v535 = vrot.slane %v499, 5
      %v536 = vrot.slane %v535, 4
      %v537 = vrot.slane %v379, 5
      %v538 = vsel %vm333, %v536, %v537
      %v539 = vrot.slane %v500, 5
      %v540 = vrot.slane %v539, 4
      %v541 = vrot.slane %v380, 5
      %v542 = vsel %vm333, %v540, %v541
      %v543 = vrot.slane %v501, 5
      %v544 = vrot.slane %v543, 4
      %v545 = vrot.slane %v381, 5
      %v546 = vsel %vm333, %v544, %v545
      %v547 = vrot.slane %v502, 5
      %v548 = vrot.slane %v547, 4
      %v549 = vrot.slane %v382, 5
      %v550 = vsel %vm333, %v548, %v549
      %s551 = scalar_lea.vmem %s166, 16
      %v552 = vld [vmem:[%s551] sm:$0xf]
      %v553 = vld [vmem:[%s551 + $0x8] sm:$0xf]
      %v554 = vld [vmem:[%s551 + $0x10] sm:$0xf]
      %v555 = vld [vmem:[%s551 + $0x18] sm:$0xf]
      %v556 = vld [vmem:[%s551 + $0x20] sm:$0xf]
      %v557 = vld [vmem:[%s551 + $0x28] sm:$0xf]
      %v558 = vld [vmem:[%s551 + $0x30] sm:$0xf]
      %v559 = vld [vmem:[%s551 + $0x38] sm:$0xf]
      %v560 = vld [vmem:[%s551 + $0x4] sm:$0x1]
      %v561 = vld [vmem:[%s551 + $0xc] sm:$0x1]
      %v562 = vld [vmem:[%s551 + $0x14] sm:$0x1]
      %v563 = vld [vmem:[%s551 + $0x1c] sm:$0x1]
      %v564 = vld [vmem:[%s551 + $0x24] sm:$0x1]
      %v565 = vld [vmem:[%s551 + $0x2c] sm:$0x1]
      %v566 = vld [vmem:[%s551 + $0x34] sm:$0x1]
      %v567 = vld [vmem:[%s551 + $0x3c] sm:$0x1]
      %v569 = vshrl.u32 %v552, 16
      %v571 = vrot.slane %v569, 4
      %v572 = vshll.u32 %v552, 16
      %v574 = vrot.slane %v572, 5
      %v575 = vor.u32 %v571, %v574
      %v576 = vrot.slane %v575, 4
      %v578 = vshll.u32 %v560, 16
      %v580 = vrot.slane %v578, 5
      %v581 = vsel %vm194, %v576, %v580
      %v583 = vshrl.u32 %v553, 16
      %v585 = vrot.slane %v583, 4
      %v586 = vshll.u32 %v553, 16
      %v588 = vrot.slane %v586, 5
      %v589 = vor.u32 %v585, %v588
      %v590 = vrot.slane %v589, 4
      %v592 = vshll.u32 %v561, 16
      %v594 = vrot.slane %v592, 5
      %v595 = vsel %vm194, %v590, %v594
      %v597 = vshrl.u32 %v554, 16
      %v599 = vrot.slane %v597, 4
      %v600 = vshll.u32 %v554, 16
      %v602 = vrot.slane %v600, 5
      %v603 = vor.u32 %v599, %v602
      %v604 = vrot.slane %v603, 4
      %v606 = vshll.u32 %v562, 16
      %v608 = vrot.slane %v606, 5
      %v609 = vsel %vm194, %v604, %v608
      %v611 = vshrl.u32 %v555, 16
      %v613 = vrot.slane %v611, 4
      %v614 = vshll.u32 %v555, 16
      %v616 = vrot.slane %v614, 5
      %v617 = vor.u32 %v613, %v616
      %v618 = vrot.slane %v617, 4
      %v620 = vshll.u32 %v563, 16
      %v622 = vrot.slane %v620, 5
      %v623 = vsel %vm194, %v618, %v622
      %v625 = vshrl.u32 %v556, 16
      %v627 = vrot.slane %v625, 4
      %v628 = vshll.u32 %v556, 16
      %v630 = vrot.slane %v628, 5
      %v631 = vor.u32 %v627, %v630
      %v632 = vrot.slane %v631, 4
      %v634 = vshll.u32 %v564, 16
      %v636 = vrot.slane %v634, 5
      %v637 = vsel %vm194, %v632, %v636
      %v639 = vshrl.u32 %v557, 16
      %v641 = vrot.slane %v639, 4
      %v642 = vshll.u32 %v557, 16
      %v644 = vrot.slane %v642, 5
      %v645 = vor.u32 %v641, %v644
      %v646 = vrot.slane %v645, 4
      %v648 = vshll.u32 %v565, 16
      %v650 = vrot.slane %v648, 5
      %v651 = vsel %vm194, %v646, %v650
      %v653 = vshrl.u32 %v558, 16
      %v655 = vrot.slane %v653, 4
      %v656 = vshll.u32 %v558, 16
      %v658 = vrot.slane %v656, 5
      %v659 = vor.u32 %v655, %v658
      %v660 = vrot.slane %v659, 4
      %v662 = vshll.u32 %v566, 16
      %v664 = vrot.slane %v662, 5
      %v665 = vsel %vm194, %v660, %v664
      %v667 = vshrl.u32 %v559, 16
      %v669 = vrot.slane %v667, 4
      %v670 = vshll.u32 %v559, 16
      %v672 = vrot.slane %v670, 5
      %v673 = vor.u32 %v669, %v672
      %v674 = vrot.slane %v673, 4
      %v676 = vshll.u32 %v567, 16
      %v678 = vrot.slane %v676, 5
      %v679 = vsel %vm194, %v674, %v678
      %v680 = vld [vmem:[%s551] sm:$0xe]
      %v681 = vld [vmem:[%s551 + $0x8] sm:$0xe]
      %v682 = vld [vmem:[%s551 + $0x10] sm:$0xe]
      %v683 = vld [vmem:[%s551 + $0x18] sm:$0xe]
      %v684 = vld [vmem:[%s551 + $0x20] sm:$0xe]
      %v685 = vld [vmem:[%s551 + $0x28] sm:$0xe]
      %v686 = vld [vmem:[%s551 + $0x30] sm:$0xe]
      %v687 = vld [vmem:[%s551 + $0x38] sm:$0xe]
      %v704 = vrot.slane %v680, 5
      %v705 = vrot.slane %v704, 4
      %v706 = vrot.slane %v560, 5
      %v707 = vsel %vm333, %v705, %v706
      %v708 = vrot.slane %v681, 5
      %v709 = vrot.slane %v708, 4
      %v710 = vrot.slane %v561, 5
      %v711 = vsel %vm333, %v709, %v710
      %v712 = vrot.slane %v682, 5
      %v713 = vrot.slane %v712, 4
      %v714 = vrot.slane %v562, 5
      %v715 = vsel %vm333, %v713, %v714
      %v716 = vrot.slane %v683, 5
      %v717 = vrot.slane %v716, 4
      %v718 = vrot.slane %v563, 5
      %v719 = vsel %vm333, %v717, %v718
      %v720 = vrot.slane %v684, 5
      %v721 = vrot.slane %v720, 4
      %v722 = vrot.slane %v564, 5
      %v723 = vsel %vm333, %v721, %v722
      %v724 = vrot.slane %v685, 5
      %v725 = vrot.slane %v724, 4
      %v726 = vrot.slane %v565, 5
      %v727 = vsel %vm333, %v725, %v726
      %v728 = vrot.slane %v686, 5
      %v729 = vrot.slane %v728, 4
      %v730 = vrot.slane %v566, 5
      %v731 = vsel %vm333, %v729, %v730
      %v732 = vrot.slane %v687, 5
      %v733 = vrot.slane %v732, 4
      %v734 = vrot.slane %v567, 5
      %v735 = vsel %vm333, %v733, %v734
      %s736 = scalar_lea.vmem %s1, 480
      %v737 = vld [vmem:[%s736] sm:$0xf]
      %v738 = vld [vmem:[%s736 + $0x4] sm:$0xf]
      %v739 = vld [vmem:[%s736 + $0x8] sm:$0xf]
      %v740 = vld [vmem:[%s736 + $0xc] sm:$0xf]
      %v741 = vld [vmem:[%s736 + $0x10] sm:$0xf]
      %v742 = vld [vmem:[%s736 + $0x14] sm:$0xf]
      %v743 = vld [vmem:[%s736 + $0x18] sm:$0xf]
      %v744 = vld [vmem:[%s736 + $0x1c] sm:$0xf]
      %s745 = scalar_lea.vmem %s1, 416
      %v746 = vld [vmem:[%s745] sm:$0xf]
      %v747 = vld [vmem:[%s745 + $0x4] sm:$0xf]
      %v748 = vld [vmem:[%s745 + $0x8] sm:$0xf]
      %v749 = vld [vmem:[%s745 + $0xc] sm:$0xf]
      %v750 = vld [vmem:[%s745 + $0x10] sm:$0xf]
      %v751 = vld [vmem:[%s745 + $0x14] sm:$0xf]
      %v752 = vld [vmem:[%s745 + $0x18] sm:$0xf]
      %v753 = vld [vmem:[%s745 + $0x1c] sm:$0xf]
      %v754 = vunpack.c.l.b16 %v208
      %v755 = vunpack.c.l.b16 %v222
      %v756 = vunpack.c.l.b16 %v236
      %v757 = vunpack.c.l.b16 %v250
      %v758 = vunpack.c.l.b16 %v264
      %v759 = vunpack.c.l.b16 %v278
      %v760 = vunpack.c.l.b16 %v292
      %v761 = vunpack.c.l.b16 %v306
      %v762 = vpack.c.b16 %v755, %v754
      %v763 = vpack.c.b16 %v757, %v756
      %v764 = vpack.c.b16 %v759, %v758
      %v765 = vpack.c.b16 %v761, %v760
      %v774 = vunpack.c.l.b16 %v746
      %v775 = vunpack.c.l.b16 %v747
      %v776 = vunpack.c.l.b16 %v748
      %v777 = vunpack.c.l.b16 %v749
      %v778 = vunpack.c.l.b16 %v750
      %v779 = vunpack.c.l.b16 %v751
      %v780 = vunpack.c.l.b16 %v752
      %v781 = vunpack.c.l.b16 %v753
      %v782 = vpack.c.b16 %v775, %v774
      %v783 = vpack.c.b16 %v777, %v776
      %v784 = vpack.c.b16 %v779, %v778
      %v785 = vpack.c.b16 %v781, %v780
      %vm790 = vcmask 523264
      %v792 = vsel %vm790, %v762, 0
      %v795 = vsel %vm790, %v763, 0
      %v798 = vsel %vm790, %v764, 0
      %v801 = vsel %vm790, %v765, 0
      %803 = vmatprep.subr.bf16.mxu0 0
      %804 = vmatpush1.bf16.msra.mxu0 %v782
      %805 = vmatprep.subr.bf16.mxu0 0
      %806 = vmatpush1.bf16.msra.mxu0 %v783
      %807 = vmatprep.subr.bf16.mxu0 0
      %808 = vmatpush1.bf16.msra.mxu0 %v784
      %809 = vmatprep.subr.bf16.mxu0 0
      %810 = vmatpush1.bf16.msra.mxu0 %v785
      %811 = vmatprep.subr.bf16.mxu0 0
      %812 = vmatpush1.bf16.msra.mxu0 0
      %813 = vmatprep.subr.bf16.mxu0 0
      %814 = vmatpush1.bf16.msra.mxu0 0
      %815 = vmatprep.subr.bf16.mxu0 0
      %816 = vmatpush1.bf16.msra.mxu0 0
      %817 = vmatprep.subr.bf16.mxu0 0
      %818 = vmatpush1.bf16.msra.mxu0 0
      %819 = vmatprep.subr.bf16.mxu0 0
      %820 = vmatpush1.bf16.msra.mxu0 0
      %821 = vmatprep.subr.bf16.mxu0 0
      %822 = vmatpush1.bf16.msra.mxu0 0
      %823 = vmatprep.subr.bf16.mxu0 0
      %824 = vmatpush1.bf16.msra.mxu0 0
      %825 = vmatprep.subr.bf16.mxu0 0
      %826 = vmatpush1.bf16.msra.mxu0 0
      %827 = vmatprep.subr.bf16.mxu0 0
      %828 = vmatpush1.bf16.msra.mxu0 0
      %829 = vmatprep.subr.bf16.mxu0 0
      %830 = vmatpush1.bf16.msra.mxu0 0
      %831 = vmatprep.subr.bf16.mxu0 0
      %832 = vmatpush1.bf16.msra.mxu0 0
      %833 = vmatprep.subr.bf16.mxu0 0
      %834 = vmatpush1.bf16.msra.mxu0 0
      %835 = vmatprep.mubr.bf16.mxu0 0
      %836 = vmatmul.mubr.bf16.gmra.mrb[0].mxu0 %v792
      %v837 = vpop.f32.mrb[0].mxu0
      %v838 = vadd.f32 0.0, %v837
      %v839 = vpop.f32.mrb[0].mxu0
      %v840 = vpop.f32.mrb[0].mxu0
      %v841 = vadd.f32 0.0, %v840
      %v842 = vpop.f32.mrb[0].mxu0
      %843 = vmatprep.mubr.bf16.mxu0 0
      %844 = vmatmul.mubr.bf16.gmra.mrb[0].mxu0 %v795
      %v845 = vpop.f32.mrb[0].mxu0
      %v846 = vadd.f32 0.0, %v845
      %v847 = vpop.f32.mrb[0].mxu0
      %v848 = vpop.f32.mrb[0].mxu0
      %v849 = vadd.f32 0.0, %v848
      %v850 = vpop.f32.mrb[0].mxu0
      %851 = vmatprep.mubr.bf16.mxu0 0
      %852 = vmatmul.mubr.bf16.gmra.mrb[0].mxu0 %v798
      %v853 = vpop.f32.mrb[0].mxu0
      %v854 = vadd.f32 0.0, %v853
      %v855 = vpop.f32.mrb[0].mxu0
      %v856 = vpop.f32.mrb[0].mxu0
      %v857 = vadd.f32 0.0, %v856
      %v858 = vpop.f32.mrb[0].mxu0
      %859 = vmatprep.mubr.bf16.mxu0 0
      %860 = vmatmul.mubr.bf16.gmra.mrb[0].mxu0 %v801
      %v861 = vpop.f32.mrb[0].mxu0
      %v862 = vadd.f32 0.0, %v861
      %v863 = vpop.f32.mrb[0].mxu0
      %v864 = vpop.f32.mrb[0].mxu0
      %v865 = vadd.f32 0.0, %v864
      %v866 = vpop.f32.mrb[0].mxu0
      %867 = vdwg.mxu0
      %v876 = vunpack.c.l.b16 %v176
      %v877 = vunpack.c.l.b16 %v177
      %v878 = vunpack.c.l.b16 %v178
      %v879 = vunpack.c.l.b16 %v179
      %v880 = vunpack.c.l.b16 %v180
      %v881 = vunpack.c.l.b16 %v181
      %v882 = vunpack.c.l.b16 %v182
      %v883 = vunpack.c.l.b16 %v183
      %v884 = vpack.c.b16 %v877, %v876
      %v885 = vpack.c.b16 %v879, %v878
      %v886 = vpack.c.b16 %v881, %v880
      %v887 = vpack.c.b16 %v883, %v882
      %v896 = vunpack.c.l.b16 %v737
      %v897 = vunpack.c.l.b16 %v738
      %v898 = vunpack.c.l.b16 %v739
      %v899 = vunpack.c.l.b16 %v740
      %v900 = vunpack.c.l.b16 %v741
      %v901 = vunpack.c.l.b16 %v742
      %v902 = vunpack.c.l.b16 %v743
      %v903 = vunpack.c.l.b16 %v744
      %v904 = vpack.c.b16 %v897, %v896
      %v905 = vpack.c.b16 %v899, %v898
      %v906 = vpack.c.b16 %v901, %v900
      %v907 = vpack.c.b16 %v903, %v902
      %v913 = vsel %vm790, %v884, 0
      %v916 = vsel %vm790, %v885, 0
      %v919 = vsel %vm790, %v886, 0
      %v922 = vsel %vm790, %v887, 0
      %924 = vmatprep.subr.bf16.mxu0 0
      %925 = vmatpush1.bf16.msra.mxu0 %v904
      %926 = vmatprep.subr.bf16.mxu0 0
      %927 = vmatpush1.bf16.msra.mxu0 %v905
      %928 = vmatprep.subr.bf16.mxu0 0
      %929 = vmatpush1.bf16.msra.mxu0 %v906
      %930 = vmatprep.subr.bf16.mxu0 0
      %931 = vmatpush1.bf16.msra.mxu0 %v907
      %932 = vmatprep.subr.bf16.mxu0 0
      %933 = vmatpush1.bf16.msra.mxu0 0
      %934 = vmatprep.subr.bf16.mxu0 0
      %935 = vmatpush1.bf16.msra.mxu0 0
      %936 = vmatprep.subr.bf16.mxu0 0
      %937 = vmatpush1.bf16.msra.mxu0 0
      %938 = vmatprep.subr.bf16.mxu0 0
      %939 = vmatpush1.bf16.msra.mxu0 0
      %940 = vmatprep.subr.bf16.mxu0 0
      %941 = vmatpush1.bf16.msra.mxu0 0
      %942 = vmatprep.subr.bf16.mxu0 0
      %943 = vmatpush1.bf16.msra.mxu0 0
      %944 = vmatprep.subr.bf16.mxu0 0
      %945 = vmatpush1.bf16.msra.mxu0 0
      %946 = vmatprep.subr.bf16.mxu0 0
      %947 = vmatpush1.bf16.msra.mxu0 0
      %948 = vmatprep.subr.bf16.mxu0 0
      %949 = vmatpush1.bf16.msra.mxu0 0
      %950 = vmatprep.subr.bf16.mxu0 0
      %951 = vmatpush1.bf16.msra.mxu0 0
      %952 = vmatprep.subr.bf16.mxu0 0
      %953 = vmatpush1.bf16.msra.mxu0 0
      %954 = vmatprep.subr.bf16.mxu0 0
      %955 = vmatpush1.bf16.msra.mxu0 0
      %956 = vmatprep.mubr.bf16.mxu0 0
      %957 = vmatmul.mubr.bf16.gmra.mrb[0].mxu0 %v913
      %v958 = vpop.f32.mrb[0].mxu0
      %v959 = vadd.f32 %v838, %v958
      %v960 = vpop.f32.mrb[0].mxu0
      %v961 = vpop.f32.mrb[0].mxu0
      %v962 = vadd.f32 %v841, %v961
      %v963 = vpop.f32.mrb[0].mxu0
      %964 = vmatprep.mubr.bf16.mxu0 0
      %965 = vmatmul.mubr.bf16.gmra.mrb[0].mxu0 %v916
      %v966 = vpop.f32.mrb[0].mxu0
      %v967 = vadd.f32 %v846, %v966
      %v968 = vpop.f32.mrb[0].mxu0
      %v969 = vpop.f32.mrb[0].mxu0
      %v970 = vadd.f32 %v849, %v969
      %v971 = vpop.f32.mrb[0].mxu0
      %972 = vmatprep.mubr.bf16.mxu0 0
      %973 = vmatmul.mubr.bf16.gmra.mrb[0].mxu0 %v919
      %v974 = vpop.f32.mrb[0].mxu0
      %v975 = vadd.f32 %v854, %v974
      %v976 = vpop.f32.mrb[0].mxu0
      %v977 = vpop.f32.mrb[0].mxu0
      %v978 = vadd.f32 %v857, %v977
      %v979 = vpop.f32.mrb[0].mxu0
      %980 = vmatprep.mubr.bf16.mxu0 0
      %981 = vmatmul.mubr.bf16.gmra.mrb[0].mxu0 %v922
      %v982 = vpop.f32.mrb[0].mxu0
      %v983 = vadd.f32 %v862, %v982
      %v984 = vpop.f32.mrb[0].mxu0
      %v985 = vpop.f32.mrb[0].mxu0
      %v986 = vadd.f32 %v865, %v985
      %v987 = vpop.f32.mrb[0].mxu0
      %988 = vdwg.mxu0
      %s989 = scalar_lea.vmem %s1, 224
      %v990 = vld [vmem:[%s989] sm:$0xf]
      %v991 = vld [vmem:[%s989 + $0x4] sm:$0xf]
      %v992 = vld [vmem:[%s989 + $0x8] sm:$0xf]
      %v993 = vld [vmem:[%s989 + $0xc] sm:$0xf]
      %v994 = vld [vmem:[%s989 + $0x10] sm:$0xf]
      %v995 = vld [vmem:[%s989 + $0x14] sm:$0xf]
      %v996 = vld [vmem:[%s989 + $0x18] sm:$0xf]
      %v997 = vld [vmem:[%s989 + $0x1c] sm:$0xf]
      %v1006 = vunpack.c.l.b16 %v367
      %v1007 = vunpack.c.l.b16 %v368
      %v1008 = vunpack.c.l.b16 %v369
      %v1009 = vunpack.c.l.b16 %v370
      %v1010 = vunpack.c.l.b16 %v371
      %v1011 = vunpack.c.l.b16 %v372
      %v1012 = vunpack.c.l.b16 %v373
      %v1013 = vunpack.c.l.b16 %v374
      %v1014 = vpack.c.b16 %v1007, %v1006
      %v1015 = vpack.c.b16 %v1009, %v1008
      %v1016 = vpack.c.b16 %v1011, %v1010
      %v1017 = vpack.c.b16 %v1013, %v1012
      %v1026 = vunpack.c.l.b16 %v990
      %v1027 = vunpack.c.l.b16 %v991
      %v1028 = vunpack.c.l.b16 %v992
      %v1029 = vunpack.c.l.b16 %v993
      %v1030 = vunpack.c.l.b16 %v994
      %v1031 = vunpack.c.l.b16 %v995
      %v1032 = vunpack.c.l.b16 %v996
      %v1033 = vunpack.c.l.b16 %v997
      %v1034 = vpack.c.b16 %v1027, %v1026
      %v1035 = vpack.c.b16 %v1029, %v1028
      %v1036 = vpack.c.b16 %v1031, %v1030
      %v1037 = vpack.c.b16 %v1033, %v1032
      %v1043 = vsel %vm790, %v1014, 0
      %v1046 = vsel %vm790, %v1015, 0
      %v1049 = vsel %vm790, %v1016, 0
      %v1052 = vsel %vm790, %v1017, 0
      %1054 = vmatprep.subr.bf16.mxu0 0
      %1055 = vmatpush1.bf16.msra.mxu0 %v1034
      %1056 = vmatprep.subr.bf16.mxu0 0
      %1057 = vmatpush1.bf16.msra.mxu0 %v1035
      %1058 = vmatprep.subr.bf16.mxu0 0
      %1059 = vmatpush1.bf16.msra.mxu0 %v1036
      %1060 = vmatprep.subr.bf16.mxu0 0
      %1061 = vmatpush1.bf16.msra.mxu0 %v1037
      %1062 = vmatprep.subr.bf16.mxu0 0
      %1063 = vmatpush1.bf16.msra.mxu0 0
      %1064 = vmatprep.subr.bf16.mxu0 0
      %1065 = vmatpush1.bf16.msra.mxu0 0
      %1066 = vmatprep.subr.bf16.mxu0 0
      %1067 = vmatpush1.bf16.msra.mxu0 0
      %1068 = vmatprep.subr.bf16.mxu0 0
      %1069 = vmatpush1.bf16.msra.mxu0 0
      %1070 = vmatprep.subr.bf16.mxu0 0
      %1071 = vmatpush1.bf16.msra.mxu0 0
      %1072 = vmatprep.subr.bf16.mxu0 0
      %1073 = vmatpush1.bf16.msra.mxu0 0
      %1074 = vmatprep.subr.bf16.mxu0 0
      %1075 = vmatpush1.bf16.msra.mxu0 0
      %1076 = vmatprep.subr.bf16.mxu0 0
      %1077 = vmatpush1.bf16.msra.mxu0 0
      %1078 = vmatprep.subr.bf16.mxu0 0
      %1079 = vmatpush1.bf16.msra.mxu0 0
      %1080 = vmatprep.subr.bf16.mxu0 0
      %1081 = vmatpush1.bf16.msra.mxu0 0
      %1082 = vmatprep.subr.bf16.mxu0 0
      %1083 = vmatpush1.bf16.msra.mxu0 0
      %1084 = vmatprep.subr.bf16.mxu0 0
      %1085 = vmatpush1.bf16.msra.mxu0 0
      %1086 = vmatprep.mubr.bf16.mxu0 0
      %1087 = vmatmul.mubr.bf16.gmra.mrb[0].mxu0 %v1043
      %v1088 = vpop.f32.mrb[0].mxu0
      %v1089 = vadd.f32 0.0, %v1088
      %v1090 = vpop.f32.mrb[0].mxu0
      %v1091 = vpop.f32.mrb[0].mxu0
      %v1092 = vadd.f32 0.0, %v1091
      %v1093 = vpop.f32.mrb[0].mxu0
      %1094 = vmatprep.mubr.bf16.mxu0 0
      %1095 = vmatmul.mubr.bf16.gmra.mrb[0].mxu0 %v1046
      %v1096 = vpop.f32.mrb[0].mxu0
      %v1097 = vadd.f32 0.0, %v1096
      %v1098 = vpop.f32.mrb[0].mxu0
      %v1099 = vpop.f32.mrb[0].mxu0
      %v1100 = vadd.f32 0.0, %v1099
      %v1101 = vpop.f32.mrb[0].mxu0
      %1102 = vmatprep.mubr.bf16.mxu0 0
      %1103 = vmatmul.mubr.bf16.gmra.mrb[0].mxu0 %v1049
      %v1104 = vpop.f32.mrb[0].mxu0
      %v1105 = vadd.f32 0.0, %v1104
      %v1106 = vpop.f32.mrb[0].mxu0
      %v1107 = vpop.f32.mrb[0].mxu0
      %v1108 = vadd.f32 0.0, %v1107
      %v1109 = vpop.f32.mrb[0].mxu0
      %1110 = vmatprep.mubr.bf16.mxu0 0
      %1111 = vmatmul.mubr.bf16.gmra.mrb[0].mxu0 %v1052
      %v1112 = vpop.f32.mrb[0].mxu0
      %v1113 = vadd.f32 0.0, %v1112
      %v1114 = vpop.f32.mrb[0].mxu0
      %v1115 = vpop.f32.mrb[0].mxu0
      %v1116 = vadd.f32 0.0, %v1115
      %v1117 = vpop.f32.mrb[0].mxu0
      %1118 = vdwg.mxu0
      %v1119 = vadd.f32 %v959, %v1089
      %v1120 = vadd.f32 %v962, %v1092
      %v1121 = vadd.f32 %v967, %v1097
      %v1122 = vadd.f32 %v970, %v1100
      %v1123 = vadd.f32 %v975, %v1105
      %v1124 = vadd.f32 %v978, %v1108
      %v1125 = vadd.f32 %v983, %v1113
      %v1126 = vadd.f32 %v986, %v1116
      %s1127 = scalar_lea.vmem %s1, 160
      %v1128 = vld [vmem:[%s1127] sm:$0xf]
      %v1129 = vld [vmem:[%s1127 + $0x4] sm:$0xf]
      %v1130 = vld [vmem:[%s1127 + $0x8] sm:$0xf]
      %v1131 = vld [vmem:[%s1127 + $0xc] sm:$0xf]
      %v1132 = vld [vmem:[%s1127 + $0x10] sm:$0xf]
      %v1133 = vld [vmem:[%s1127 + $0x14] sm:$0xf]
      %v1134 = vld [vmem:[%s1127 + $0x18] sm:$0xf]
      %v1135 = vld [vmem:[%s1127 + $0x1c] sm:$0xf]
      %v1136 = vunpack.c.l.b16 %v396
      %v1137 = vunpack.c.l.b16 %v410
      %v1138 = vunpack.c.l.b16 %v424
      %v1139 = vunpack.c.l.b16 %v438
      %v1140 = vunpack.c.l.b16 %v452
      %v1141 = vunpack.c.l.b16 %v466
      %v1142 = vunpack.c.l.b16 %v480
      %v1143 = vunpack.c.l.b16 %v494
      %v1144 = vpack.c.b16 %v1137, %v1136
      %v1145 = vpack.c.b16 %v1139, %v1138
      %v1146 = vpack.c.b16 %v1141, %v1140
      %v1147 = vpack.c.b16 %v1143, %v1142
      %v1156 = vunpack.c.l.b16 %v1128
      %v1157 = vunpack.c.l.b16 %v1129
      %v1158 = vunpack.c.l.b16 %v1130
      %v1159 = vunpack.c.l.b16 %v1131
      %v1160 = vunpack.c.l.b16 %v1132
      %v1161 = vunpack.c.l.b16 %v1133
      %v1162 = vunpack.c.l.b16 %v1134
      %v1163 = vunpack.c.l.b16 %v1135
      %v1164 = vpack.c.b16 %v1157, %v1156
      %v1165 = vpack.c.b16 %v1159, %v1158
      %v1166 = vpack.c.b16 %v1161, %v1160
      %v1167 = vpack.c.b16 %v1163, %v1162
      %v1173 = vsel %vm790, %v1144, 0
      %v1176 = vsel %vm790, %v1145, 0
      %v1179 = vsel %vm790, %v1146, 0
      %v1182 = vsel %vm790, %v1147, 0
      %1184 = vmatprep.subr.bf16.mxu0 0
      %1185 = vmatpush1.bf16.msra.mxu0 %v1164
      %1186 = vmatprep.subr.bf16.mxu0 0
      %1187 = vmatpush1.bf16.msra.mxu0 %v1165
      %1188 = vmatprep.subr.bf16.mxu0 0
      %1189 = vmatpush1.bf16.msra.mxu0 %v1166
      %1190 = vmatprep.subr.bf16.mxu0 0
      %1191 = vmatpush1.bf16.msra.mxu0 %v1167
      %1192 = vmatprep.subr.bf16.mxu0 0
      %1193 = vmatpush1.bf16.msra.mxu0 0
      %1194 = vmatprep.subr.bf16.mxu0 0
      %1195 = vmatpush1.bf16.msra.mxu0 0
      %1196 = vmatprep.subr.bf16.mxu0 0
      %1197 = vmatpush1.bf16.msra.mxu0 0
      %1198 = vmatprep.subr.bf16.mxu0 0
      %1199 = vmatpush1.bf16.msra.mxu0 0
      %1200 = vmatprep.subr.bf16.mxu0 0
      %1201 = vmatpush1.bf16.msra.mxu0 0
      %1202 = vmatprep.subr.bf16.mxu0 0
      %1203 = vmatpush1.bf16.msra.mxu0 0
      %1204 = vmatprep.subr.bf16.mxu0 0
      %1205 = vmatpush1.bf16.msra.mxu0 0
      %1206 = vmatprep.subr.bf16.mxu0 0
      %1207 = vmatpush1.bf16.msra.mxu0 0
      %1208 = vmatprep.subr.bf16.mxu0 0
      %1209 = vmatpush1.bf16.msra.mxu0 0
      %1210 = vmatprep.subr.bf16.mxu0 0
      %1211 = vmatpush1.bf16.msra.mxu0 0
      %1212 = vmatprep.subr.bf16.mxu0 0
      %1213 = vmatpush1.bf16.msra.mxu0 0
      %1214 = vmatprep.subr.bf16.mxu0 0
      %1215 = vmatpush1.bf16.msra.mxu0 0
      %1216 = vmatprep.mubr.bf16.mxu0 0
      %1217 = vmatmul.mubr.bf16.gmra.mrb[0].mxu0 %v1173
      %v1218 = vpop.f32.mrb[0].mxu0
      %v1219 = vadd.f32 0.0, %v1218
      %v1220 = vpop.f32.mrb[0].mxu0
      %v1221 = vpop.f32.mrb[0].mxu0
      %v1222 = vadd.f32 0.0, %v1221
      %v1223 = vpop.f32.mrb[0].mxu0
      %1224 = vmatprep.mubr.bf16.mxu0 0
      %1225 = vmatmul.mubr.bf16.gmra.mrb[0].mxu0 %v1176
      %v1226 = vpop.f32.mrb[0].mxu0
      %v1227 = vadd.f32 0.0, %v1226
      %v1228 = vpop.f32.mrb[0].mxu0
      %v1229 = vpop.f32.mrb[0].mxu0
      %v1230 = vadd.f32 0.0, %v1229
      %v1231 = vpop.f32.mrb[0].mxu0
      %1232 = vmatprep.mubr.bf16.mxu0 0
      %1233 = vmatmul.mubr.bf16.gmra.mrb[0].mxu0 %v1179
      %v1234 = vpop.f32.mrb[0].mxu0
      %v1235 = vadd.f32 0.0, %v1234
      %v1236 = vpop.f32.mrb[0].mxu0
      %v1237 = vpop.f32.mrb[0].mxu0
      %v1238 = vadd.f32 0.0, %v1237
      %v1239 = vpop.f32.mrb[0].mxu0
      %1240 = vmatprep.mubr.bf16.mxu0 0
      %1241 = vmatmul.mubr.bf16.gmra.mrb[0].mxu0 %v1182
      %v1242 = vpop.f32.mrb[0].mxu0
      %v1243 = vadd.f32 0.0, %v1242
      %v1244 = vpop.f32.mrb[0].mxu0
      %v1245 = vpop.f32.mrb[0].mxu0
      %v1246 = vadd.f32 0.0, %v1245
      %v1247 = vpop.f32.mrb[0].mxu0
      %1248 = vdwg.mxu0
      %v1249 = vadd.f32 %v1119, %v1219
      %v1250 = vadd.f32 %v1120, %v1222
      %v1251 = vadd.f32 %v1121, %v1227
      %v1252 = vadd.f32 %v1122, %v1230
      %v1253 = vadd.f32 %v1123, %v1235
      %v1254 = vadd.f32 %v1124, %v1238
      %v1255 = vadd.f32 %v1125, %v1243
      %v1256 = vadd.f32 %v1126, %v1246
      %v1258 = vlaneseq
      %v1259 = vshrl.u32 %v1258, 7
      %v1260 = vsub.s32 0, %v1259
      %v1261 = vrot.slane %v175, %v1260
      %v1263 = vadd.f32 %v1249, %v1261
      %v1264 = vadd.f32 %v1250, %v1261
      %v1265 = vadd.f32 %v1251, %v1261
      %v1266 = vadd.f32 %v1252, %v1261
      %v1267 = vadd.f32 %v1253, %v1261
      %v1268 = vadd.f32 %v1254, %v1261
      %v1269 = vadd.f32 %v1255, %v1261
      %v1270 = vadd.f32 %v1256, %v1261
      %v1271 = vxor.u32 %v1263, 2147483648
      %v1272 = vxor.u32 %v1264, 2147483648
      %v1273 = vxor.u32 %v1265, 2147483648
      %v1274 = vxor.u32 %v1266, 2147483648
      %v1275 = vxor.u32 %v1267, 2147483648
      %v1276 = vxor.u32 %v1268, 2147483648
      %v1277 = vxor.u32 %v1269, 2147483648
      %v1278 = vxor.u32 %v1270, 2147483648
      %v1279 = vmul.f32 %v1271, 1.442695
      %v1280 = vpow.pop %v1279
      %v1281 = vmul.f32 %v1272, 1.442695
      %v1282 = vpow.pop %v1281
      %v1283 = vmul.f32 %v1273, 1.442695
      %v1284 = vpow.pop %v1283
      %v1285 = vmul.f32 %v1274, 1.442695
      %v1286 = vpow.pop %v1285
      %v1287 = vmul.f32 %v1275, 1.442695
      %v1288 = vpow.pop %v1287
      %v1289 = vmul.f32 %v1276, 1.442695
      %v1290 = vpow.pop %v1289
      %v1291 = vmul.f32 %v1277, 1.442695
      %v1292 = vpow.pop %v1291
      %v1293 = vmul.f32 %v1278, 1.442695
      %v1294 = vpow.pop %v1293
      %v1295 = vadd.f32 %v1280, 1.0
      %v1296 = vadd.f32 %v1282, 1.0
      %v1297 = vadd.f32 %v1284, 1.0
      %v1298 = vadd.f32 %v1286, 1.0
      %v1299 = vadd.f32 %v1288, 1.0
      %v1300 = vadd.f32 %v1290, 1.0
      %v1301 = vadd.f32 %v1292, 1.0
      %v1302 = vadd.f32 %v1294, 1.0
      %v1303 = vrcp.pop %v1295
      %v1304 = vmul.f32 1.0, %v1303
      %v1305 = vrcp.pop %v1296
      %v1306 = vmul.f32 1.0, %v1305
      %v1307 = vrcp.pop %v1297
      %v1308 = vmul.f32 1.0, %v1307
      %v1309 = vrcp.pop %v1298
      %v1310 = vmul.f32 1.0, %v1309
      %v1311 = vrcp.pop %v1299
      %v1312 = vmul.f32 1.0, %v1311
      %v1313 = vrcp.pop %v1300
      %v1314 = vmul.f32 1.0, %v1313
      %v1315 = vrcp.pop %v1301
      %v1316 = vmul.f32 1.0, %v1315
      %v1317 = vrcp.pop %v1302
      %v1318 = vmul.f32 1.0, %v1317
      %1319 = vst [vmem:[%s172] sm:$0xff] %v1304
      %1320 = vst [vmem:[%s172 + $0x20] sm:$0xff] %v1306
      %1321 = vst [vmem:[%s172 + $0x40] sm:$0xff] %v1308
      %1322 = vst [vmem:[%s172 + $0x60] sm:$0xff] %v1310
      %1323 = vst [vmem:[%s172 + $0x80] sm:$0xff] %v1312
      %1324 = vst [vmem:[%s172 + $0xa0] sm:$0xff] %v1314
      %1325 = vst [vmem:[%s172 + $0xc0] sm:$0xff] %v1316
      %1326 = vst [vmem:[%s172 + $0xe0] sm:$0xff] %v1318
      %s1327 = scalar_lea.vmem %s1, 448
      %v1328 = vld [vmem:[%s1327] sm:$0xf]
      %v1329 = vld [vmem:[%s1327 + $0x4] sm:$0xf]
      %v1330 = vld [vmem:[%s1327 + $0x8] sm:$0xf]
      %v1331 = vld [vmem:[%s1327 + $0xc] sm:$0xf]
      %v1332 = vld [vmem:[%s1327 + $0x10] sm:$0xf]
      %v1333 = vld [vmem:[%s1327 + $0x14] sm:$0xf]
      %v1334 = vld [vmem:[%s1327 + $0x18] sm:$0xf]
      %v1335 = vld [vmem:[%s1327 + $0x1c] sm:$0xf]
      %s1336 = scalar_lea.vmem %s1, 384
      %v1337 = vld [vmem:[%s1336] sm:$0xf]
      %v1338 = vld [vmem:[%s1336 + $0x4] sm:$0xf]
      %v1339 = vld [vmem:[%s1336 + $0x8] sm:$0xf]
      %v1340 = vld [vmem:[%s1336 + $0xc] sm:$0xf]
      %v1341 = vld [vmem:[%s1336 + $0x10] sm:$0xf]
      %v1342 = vld [vmem:[%s1336 + $0x14] sm:$0xf]
      %v1343 = vld [vmem:[%s1336 + $0x18] sm:$0xf]
      %v1344 = vld [vmem:[%s1336 + $0x1c] sm:$0xf]
      %v1345 = vunpack.c.l.b16 %v337
      %v1346 = vunpack.c.l.b16 %v341
      %v1347 = vunpack.c.l.b16 %v345
      %v1348 = vunpack.c.l.b16 %v349
      %v1349 = vunpack.c.l.b16 %v353
      %v1350 = vunpack.c.l.b16 %v357
      %v1351 = vunpack.c.l.b16 %v361
      %v1352 = vunpack.c.l.b16 %v365
      %v1353 = vpack.c.b16 %v1346, %v1345
      %v1354 = vpack.c.b16 %v1348, %v1347
      %v1355 = vpack.c.b16 %v1350, %v1349
      %v1356 = vpack.c.b16 %v1352, %v1351
      %v1365 = vunpack.c.l.b16 %v1337
      %v1366 = vunpack.c.l.b16 %v1338
      %v1367 = vunpack.c.l.b16 %v1339
      %v1368 = vunpack.c.l.b16 %v1340
      %v1369 = vunpack.c.l.b16 %v1341
      %v1370 = vunpack.c.l.b16 %v1342
      %v1371 = vunpack.c.l.b16 %v1343
      %v1372 = vunpack.c.l.b16 %v1344
      %v1373 = vpack.c.b16 %v1366, %v1365
      %v1374 = vpack.c.b16 %v1368, %v1367
      %v1375 = vpack.c.b16 %v1370, %v1369
      %v1376 = vpack.c.b16 %v1372, %v1371
      %v1382 = vsel %vm790, %v1353, 0
      %v1385 = vsel %vm790, %v1354, 0
      %v1388 = vsel %vm790, %v1355, 0
      %v1391 = vsel %vm790, %v1356, 0
      %1393 = vmatprep.subr.bf16.mxu0 0
      %1394 = vmatpush1.bf16.msra.mxu0 %v1373
      %1395 = vmatprep.subr.bf16.mxu0 0
      %1396 = vmatpush1.bf16.msra.mxu0 %v1374
      %1397 = vmatprep.subr.bf16.mxu0 0
      %1398 = vmatpush1.bf16.msra.mxu0 %v1375
      %1399 = vmatprep.subr.bf16.mxu0 0
      %1400 = vmatpush1.bf16.msra.mxu0 %v1376
      %1401 = vmatprep.subr.bf16.mxu0 0
      %1402 = vmatpush1.bf16.msra.mxu0 0
      %1403 = vmatprep.subr.bf16.mxu0 0
      %1404 = vmatpush1.bf16.msra.mxu0 0
      %1405 = vmatprep.subr.bf16.mxu0 0
      %1406 = vmatpush1.bf16.msra.mxu0 0
      %1407 = vmatprep.subr.bf16.mxu0 0
      %1408 = vmatpush1.bf16.msra.mxu0 0
      %1409 = vmatprep.subr.bf16.mxu0 0
      %1410 = vmatpush1.bf16.msra.mxu0 0
      %1411 = vmatprep.subr.bf16.mxu0 0
      %1412 = vmatpush1.bf16.msra.mxu0 0
      %1413 = vmatprep.subr.bf16.mxu0 0
      %1414 = vmatpush1.bf16.msra.mxu0 0
      %1415 = vmatprep.subr.bf16.mxu0 0
      %1416 = vmatpush1.bf16.msra.mxu0 0
      %1417 = vmatprep.subr.bf16.mxu0 0
      %1418 = vmatpush1.bf16.msra.mxu0 0
      %1419 = vmatprep.subr.bf16.mxu0 0
      %1420 = vmatpush1.bf16.msra.mxu0 0
      %1421 = vmatprep.subr.bf16.mxu0 0
      %1422 = vmatpush1.bf16.msra.mxu0 0
      %1423 = vmatprep.subr.bf16.mxu0 0
      %1424 = vmatpush1.bf16.msra.mxu0 0
      %1425 = vmatprep.mubr.bf16.mxu0 0
      %1426 = vmatmul.mubr.bf16.gmra.mrb[0].mxu0 %v1382
      %v1427 = vpop.f32.mrb[0].mxu0
      %v1428 = vadd.f32 0.0, %v1427
      %v1429 = vpop.f32.mrb[0].mxu0
      %v1430 = vpop.f32.mrb[0].mxu0
      %v1431 = vadd.f32 0.0, %v1430
      %v1432 = vpop.f32.mrb[0].mxu0
      %1433 = vmatprep.mubr.bf16.mxu0 0
      %1434 = vmatmul.mubr.bf16.gmra.mrb[0].mxu0 %v1385
      %v1435 = vpop.f32.mrb[0].mxu0
      %v1436 = vadd.f32 0.0, %v1435
      %v1437 = vpop.f32.mrb[0].mxu0
      %v1438 = vpop.f32.mrb[0].mxu0
      %v1439 = vadd.f32 0.0, %v1438
      %v1440 = vpop.f32.mrb[0].mxu0
      %1441 = vmatprep.mubr.bf16.mxu0 0
      %1442 = vmatmul.mubr.bf16.gmra.mrb[0].mxu0 %v1388
      %v1443 = vpop.f32.mrb[0].mxu0
      %v1444 = vadd.f32 0.0, %v1443
      %v1445 = vpop.f32.mrb[0].mxu0
      %v1446 = vpop.f32.mrb[0].mxu0
      %v1447 = vadd.f32 0.0, %v1446
      %v1448 = vpop.f32.mrb[0].mxu0
      %1449 = vmatprep.mubr.bf16.mxu0 0
      %1450 = vmatmul.mubr.bf16.gmra.mrb[0].mxu0 %v1391
      %v1451 = vpop.f32.mrb[0].mxu0
      %v1452 = vadd.f32 0.0, %v1451
      %v1453 = vpop.f32.mrb[0].mxu0
      %v1454 = vpop.f32.mrb[0].mxu0
      %v1455 = vadd.f32 0.0, %v1454
      %v1456 = vpop.f32.mrb[0].mxu0
      %1457 = vdwg.mxu0
      %v1466 = vunpack.c.l.b16 %v1328
      %v1467 = vunpack.c.l.b16 %v1329
      %v1468 = vunpack.c.l.b16 %v1330
      %v1469 = vunpack.c.l.b16 %v1331
      %v1470 = vunpack.c.l.b16 %v1332
      %v1471 = vunpack.c.l.b16 %v1333
      %v1472 = vunpack.c.l.b16 %v1334
      %v1473 = vunpack.c.l.b16 %v1335
      %v1474 = vpack.c.b16 %v1467, %v1466
      %v1475 = vpack.c.b16 %v1469, %v1468
      %v1476 = vpack.c.b16 %v1471, %v1470
      %v1477 = vpack.c.b16 %v1473, %v1472
      %1482 = vmatprep.subr.bf16.mxu0 0
      %1483 = vmatpush1.bf16.msra.mxu0 %v1474
      %1484 = vmatprep.subr.bf16.mxu0 0
      %1485 = vmatpush1.bf16.msra.mxu0 %v1475
      %1486 = vmatprep.subr.bf16.mxu0 0
      %1487 = vmatpush1.bf16.msra.mxu0 %v1476
      %1488 = vmatprep.subr.bf16.mxu0 0
      %1489 = vmatpush1.bf16.msra.mxu0 %v1477
      %1490 = vmatprep.subr.bf16.mxu0 0
      %1491 = vmatpush1.bf16.msra.mxu0 0
      %1492 = vmatprep.subr.bf16.mxu0 0
      %1493 = vmatpush1.bf16.msra.mxu0 0
      %1494 = vmatprep.subr.bf16.mxu0 0
      %1495 = vmatpush1.bf16.msra.mxu0 0
      %1496 = vmatprep.subr.bf16.mxu0 0
      %1497 = vmatpush1.bf16.msra.mxu0 0
      %1498 = vmatprep.subr.bf16.mxu0 0
      %1499 = vmatpush1.bf16.msra.mxu0 0
      %1500 = vmatprep.subr.bf16.mxu0 0
      %1501 = vmatpush1.bf16.msra.mxu0 0
      %1502 = vmatprep.subr.bf16.mxu0 0
      %1503 = vmatpush1.bf16.msra.mxu0 0
      %1504 = vmatprep.subr.bf16.mxu0 0
      %1505 = vmatpush1.bf16.msra.mxu0 0
      %1506 = vmatprep.subr.bf16.mxu0 0
      %1507 = vmatpush1.bf16.msra.mxu0 0
      %1508 = vmatprep.subr.bf16.mxu0 0
      %1509 = vmatpush1.bf16.msra.mxu0 0
      %1510 = vmatprep.subr.bf16.mxu0 0
      %1511 = vmatpush1.bf16.msra.mxu0 0
      %1512 = vmatprep.subr.bf16.mxu0 0
      %1513 = vmatpush1.bf16.msra.mxu0 0
      %1514 = vmatprep.mubr.bf16.mxu0 0
      %1515 = vmatmul.mubr.bf16.gmra.mrb[0].mxu0 %v792
      %v1516 = vpop.f32.mrb[0].mxu0
      %v1517 = vadd.f32 %v1428, %v1516
      %v1518 = vpop.f32.mrb[0].mxu0
      %v1519 = vpop.f32.mrb[0].mxu0
      %v1520 = vadd.f32 %v1431, %v1519
      %v1521 = vpop.f32.mrb[0].mxu0
      %1522 = vmatprep.mubr.bf16.mxu0 0
      %1523 = vmatmul.mubr.bf16.gmra.mrb[0].mxu0 %v795
      %v1524 = vpop.f32.mrb[0].mxu0
      %v1525 = vadd.f32 %v1436, %v1524
      %v1526 = vpop.f32.mrb[0].mxu0
      %v1527 = vpop.f32.mrb[0].mxu0
      %v1528 = vadd.f32 %v1439, %v1527
      %v1529 = vpop.f32.mrb[0].mxu0
      %1530 = vmatprep.mubr.bf16.mxu0 0
      %1531 = vmatmul.mubr.bf16.gmra.mrb[0].mxu0 %v798
      %v1532 = vpop.f32.mrb[0].mxu0
      %v1533 = vadd.f32 %v1444, %v1532
      %v1534 = vpop.f32.mrb[0].mxu0
      %v1535 = vpop.f32.mrb[0].mxu0
      %v1536 = vadd.f32 %v1447, %v1535
      %v1537 = vpop.f32.mrb[0].mxu0
      %1538 = vmatprep.mubr.bf16.mxu0 0
      %1539 = vmatmul.mubr.bf16.gmra.mrb[0].mxu0 %v801
      %v1540 = vpop.f32.mrb[0].mxu0
      %v1541 = vadd.f32 %v1452, %v1540
      %v1542 = vpop.f32.mrb[0].mxu0
      %v1543 = vpop.f32.mrb[0].mxu0
      %v1544 = vadd.f32 %v1455, %v1543
      %v1545 = vpop.f32.mrb[0].mxu0
      %1546 = vdwg.mxu0
      %s1547 = scalar_lea.vmem %s1, 192
      %v1548 = vld [vmem:[%s1547] sm:$0xf]
      %v1549 = vld [vmem:[%s1547 + $0x4] sm:$0xf]
      %v1550 = vld [vmem:[%s1547 + $0x8] sm:$0xf]
      %v1551 = vld [vmem:[%s1547 + $0xc] sm:$0xf]
      %v1552 = vld [vmem:[%s1547 + $0x10] sm:$0xf]
      %v1553 = vld [vmem:[%s1547 + $0x14] sm:$0xf]
      %v1554 = vld [vmem:[%s1547 + $0x18] sm:$0xf]
      %v1555 = vld [vmem:[%s1547 + $0x1c] sm:$0xf]
      %v1564 = vunpack.c.l.b16 %v1548
      %v1565 = vunpack.c.l.b16 %v1549
      %v1566 = vunpack.c.l.b16 %v1550
      %v1567 = vunpack.c.l.b16 %v1551
      %v1568 = vunpack.c.l.b16 %v1552
      %v1569 = vunpack.c.l.b16 %v1553
      %v1570 = vunpack.c.l.b16 %v1554
      %v1571 = vunpack.c.l.b16 %v1555
      %v1572 = vpack.c.b16 %v1565, %v1564
      %v1573 = vpack.c.b16 %v1567, %v1566
      %v1574 = vpack.c.b16 %v1569, %v1568
      %v1575 = vpack.c.b16 %v1571, %v1570
      %1580 = vmatprep.subr.bf16.mxu0 0
      %1581 = vmatpush1.bf16.msra.mxu0 %v1572
      %1582 = vmatprep.subr.bf16.mxu0 0
      %1583 = vmatpush1.bf16.msra.mxu0 %v1573
      %1584 = vmatprep.subr.bf16.mxu0 0
      %1585 = vmatpush1.bf16.msra.mxu0 %v1574
      %1586 = vmatprep.subr.bf16.mxu0 0
      %1587 = vmatpush1.bf16.msra.mxu0 %v1575
      %1588 = vmatprep.subr.bf16.mxu0 0
      %1589 = vmatpush1.bf16.msra.mxu0 0
      %1590 = vmatprep.subr.bf16.mxu0 0
      %1591 = vmatpush1.bf16.msra.mxu0 0
      %1592 = vmatprep.subr.bf16.mxu0 0
      %1593 = vmatpush1.bf16.msra.mxu0 0
      %1594 = vmatprep.subr.bf16.mxu0 0
      %1595 = vmatpush1.bf16.msra.mxu0 0
      %1596 = vmatprep.subr.bf16.mxu0 0
      %1597 = vmatpush1.bf16.msra.mxu0 0
      %1598 = vmatprep.subr.bf16.mxu0 0
      %1599 = vmatpush1.bf16.msra.mxu0 0
      %1600 = vmatprep.subr.bf16.mxu0 0
      %1601 = vmatpush1.bf16.msra.mxu0 0
      %1602 = vmatprep.subr.bf16.mxu0 0
      %1603 = vmatpush1.bf16.msra.mxu0 0
      %1604 = vmatprep.subr.bf16.mxu0 0
      %1605 = vmatpush1.bf16.msra.mxu0 0
      %1606 = vmatprep.subr.bf16.mxu0 0
      %1607 = vmatpush1.bf16.msra.mxu0 0
      %1608 = vmatprep.subr.bf16.mxu0 0
      %1609 = vmatpush1.bf16.msra.mxu0 0
      %1610 = vmatprep.subr.bf16.mxu0 0
      %1611 = vmatpush1.bf16.msra.mxu0 0
      %1612 = vmatprep.mubr.bf16.mxu0 0
      %1613 = vmatmul.mubr.bf16.gmra.mrb[0].mxu0 %v1173
      %v1614 = vpop.f32.mrb[0].mxu0
      %v1615 = vadd.f32 0.0, %v1614
      %v1616 = vpop.f32.mrb[0].mxu0
      %v1617 = vpop.f32.mrb[0].mxu0
      %v1618 = vadd.f32 0.0, %v1617
      %v1619 = vpop.f32.mrb[0].mxu0
      %1620 = vmatprep.mubr.bf16.mxu0 0
      %1621 = vmatmul.mubr.bf16.gmra.mrb[0].mxu0 %v1176
      %v1622 = vpop.f32.mrb[0].mxu0
      %v1623 = vadd.f32 0.0, %v1622
      %v1624 = vpop.f32.mrb[0].mxu0
      %v1625 = vpop.f32.mrb[0].mxu0
      %v1626 = vadd.f32 0.0, %v1625
      %v1627 = vpop.f32.mrb[0].mxu0
      %1628 = vmatprep.mubr.bf16.mxu0 0
      %1629 = vmatmul.mubr.bf16.gmra.mrb[0].mxu0 %v1179
      %v1630 = vpop.f32.mrb[0].mxu0
      %v1631 = vadd.f32 0.0, %v1630
      %v1632 = vpop.f32.mrb[0].mxu0
      %v1633 = vpop.f32.mrb[0].mxu0
      %v1634 = vadd.f32 0.0, %v1633
      %v1635 = vpop.f32.mrb[0].mxu0
      %1636 = vmatprep.mubr.bf16.mxu0 0
      %1637 = vmatmul.mubr.bf16.gmra.mrb[0].mxu0 %v1182
      %v1638 = vpop.f32.mrb[0].mxu0
      %v1639 = vadd.f32 0.0, %v1638
      %v1640 = vpop.f32.mrb[0].mxu0
      %v1641 = vpop.f32.mrb[0].mxu0
      %v1642 = vadd.f32 0.0, %v1641
      %v1643 = vpop.f32.mrb[0].mxu0
      %1644 = vdwg.mxu0
      %v1645 = vadd.f32 %v1517, %v1615
      %v1646 = vadd.f32 %v1520, %v1618
      %v1647 = vadd.f32 %v1525, %v1623
      %v1648 = vadd.f32 %v1528, %v1626
      %v1649 = vadd.f32 %v1533, %v1631
      %v1650 = vadd.f32 %v1536, %v1634
      %v1651 = vadd.f32 %v1541, %v1639
      %v1652 = vadd.f32 %v1544, %v1642
      %s1653 = scalar_lea.vmem %s1, 128
      %v1654 = vld [vmem:[%s1653] sm:$0xf]
      %v1655 = vld [vmem:[%s1653 + $0x4] sm:$0xf]
      %v1656 = vld [vmem:[%s1653 + $0x8] sm:$0xf]
      %v1657 = vld [vmem:[%s1653 + $0xc] sm:$0xf]
      %v1658 = vld [vmem:[%s1653 + $0x10] sm:$0xf]
      %v1659 = vld [vmem:[%s1653 + $0x14] sm:$0xf]
      %v1660 = vld [vmem:[%s1653 + $0x18] sm:$0xf]
      %v1661 = vld [vmem:[%s1653 + $0x1c] sm:$0xf]
      %v1662 = vunpack.c.l.b16 %v522
      %v1663 = vunpack.c.l.b16 %v526
      %v1664 = vunpack.c.l.b16 %v530
      %v1665 = vunpack.c.l.b16 %v534
      %v1666 = vunpack.c.l.b16 %v538
      %v1667 = vunpack.c.l.b16 %v542
      %v1668 = vunpack.c.l.b16 %v546
      %v1669 = vunpack.c.l.b16 %v550
      %v1670 = vpack.c.b16 %v1663, %v1662
      %v1671 = vpack.c.b16 %v1665, %v1664
      %v1672 = vpack.c.b16 %v1667, %v1666
      %v1673 = vpack.c.b16 %v1669, %v1668
      %v1682 = vunpack.c.l.b16 %v1654
      %v1683 = vunpack.c.l.b16 %v1655
      %v1684 = vunpack.c.l.b16 %v1656
      %v1685 = vunpack.c.l.b16 %v1657
      %v1686 = vunpack.c.l.b16 %v1658
      %v1687 = vunpack.c.l.b16 %v1659
      %v1688 = vunpack.c.l.b16 %v1660
      %v1689 = vunpack.c.l.b16 %v1661
      %v1690 = vpack.c.b16 %v1683, %v1682
      %v1691 = vpack.c.b16 %v1685, %v1684
      %v1692 = vpack.c.b16 %v1687, %v1686
      %v1693 = vpack.c.b16 %v1689, %v1688
      %v1699 = vsel %vm790, %v1670, 0
      %v1702 = vsel %vm790, %v1671, 0
      %v1705 = vsel %vm790, %v1672, 0
      %v1708 = vsel %vm790, %v1673, 0
      %1710 = vmatprep.subr.bf16.mxu0 0
      %1711 = vmatpush1.bf16.msra.mxu0 %v1690
      %1712 = vmatprep.subr.bf16.mxu0 0
      %1713 = vmatpush1.bf16.msra.mxu0 %v1691
      %1714 = vmatprep.subr.bf16.mxu0 0
      %1715 = vmatpush1.bf16.msra.mxu0 %v1692
      %1716 = vmatprep.subr.bf16.mxu0 0
      %1717 = vmatpush1.bf16.msra.mxu0 %v1693
      %1718 = vmatprep.subr.bf16.mxu0 0
      %1719 = vmatpush1.bf16.msra.mxu0 0
      %1720 = vmatprep.subr.bf16.mxu0 0
      %1721 = vmatpush1.bf16.msra.mxu0 0
      %1722 = vmatprep.subr.bf16.mxu0 0
      %1723 = vmatpush1.bf16.msra.mxu0 0
      %1724 = vmatprep.subr.bf16.mxu0 0
      %1725 = vmatpush1.bf16.msra.mxu0 0
      %1726 = vmatprep.subr.bf16.mxu0 0
      %1727 = vmatpush1.bf16.msra.mxu0 0
      %1728 = vmatprep.subr.bf16.mxu0 0
      %1729 = vmatpush1.bf16.msra.mxu0 0
      %1730 = vmatprep.subr.bf16.mxu0 0
      %1731 = vmatpush1.bf16.msra.mxu0 0
      %1732 = vmatprep.subr.bf16.mxu0 0
      %1733 = vmatpush1.bf16.msra.mxu0 0
      %1734 = vmatprep.subr.bf16.mxu0 0
      %1735 = vmatpush1.bf16.msra.mxu0 0
      %1736 = vmatprep.subr.bf16.mxu0 0
      %1737 = vmatpush1.bf16.msra.mxu0 0
      %1738 = vmatprep.subr.bf16.mxu0 0
      %1739 = vmatpush1.bf16.msra.mxu0 0
      %1740 = vmatprep.subr.bf16.mxu0 0
      %1741 = vmatpush1.bf16.msra.mxu0 0
      %1742 = vmatprep.mubr.bf16.mxu0 0
      %1743 = vmatmul.mubr.bf16.gmra.mrb[0].mxu0 %v1699
      %v1744 = vpop.f32.mrb[0].mxu0
      %v1745 = vadd.f32 0.0, %v1744
      %v1746 = vpop.f32.mrb[0].mxu0
      %v1747 = vpop.f32.mrb[0].mxu0
      %v1748 = vadd.f32 0.0, %v1747
      %v1749 = vpop.f32.mrb[0].mxu0
      %1750 = vmatprep.mubr.bf16.mxu0 0
      %1751 = vmatmul.mubr.bf16.gmra.mrb[0].mxu0 %v1702
      %v1752 = vpop.f32.mrb[0].mxu0
      %v1753 = vadd.f32 0.0, %v1752
      %v1754 = vpop.f32.mrb[0].mxu0
      %v1755 = vpop.f32.mrb[0].mxu0
      %v1756 = vadd.f32 0.0, %v1755
      %v1757 = vpop.f32.mrb[0].mxu0
      %1758 = vmatprep.mubr.bf16.mxu0 0
      %1759 = vmatmul.mubr.bf16.gmra.mrb[0].mxu0 %v1705
      %v1760 = vpop.f32.mrb[0].mxu0
      %v1761 = vadd.f32 0.0, %v1760
      %v1762 = vpop.f32.mrb[0].mxu0
      %v1763 = vpop.f32.mrb[0].mxu0
      %v1764 = vadd.f32 0.0, %v1763
      %v1765 = vpop.f32.mrb[0].mxu0
      %1766 = vmatprep.mubr.bf16.mxu0 0
      %1767 = vmatmul.mubr.bf16.gmra.mrb[0].mxu0 %v1708
      %v1768 = vpop.f32.mrb[0].mxu0
      %v1769 = vadd.f32 0.0, %v1768
      %v1770 = vpop.f32.mrb[0].mxu0
      %v1771 = vpop.f32.mrb[0].mxu0
      %v1772 = vadd.f32 0.0, %v1771
      %v1773 = vpop.f32.mrb[0].mxu0
      %1774 = vdwg.mxu0
      %v1775 = vadd.f32 %v1645, %v1745
      %v1776 = vadd.f32 %v1646, %v1748
      %v1777 = vadd.f32 %v1647, %v1753
      %v1778 = vadd.f32 %v1648, %v1756
      %v1779 = vadd.f32 %v1649, %v1761
      %v1780 = vadd.f32 %v1650, %v1764
      %v1781 = vadd.f32 %v1651, %v1769
      %v1782 = vadd.f32 %v1652, %v1772
      %v1783 = vadd.f32 %v1775, %v1261
      %v1784 = vadd.f32 %v1776, %v1261
      %v1785 = vadd.f32 %v1777, %v1261
      %v1786 = vadd.f32 %v1778, %v1261
      %v1787 = vadd.f32 %v1779, %v1261
      %v1788 = vadd.f32 %v1780, %v1261
      %v1789 = vadd.f32 %v1781, %v1261
      %v1790 = vadd.f32 %v1782, %v1261
      %v1791 = vxor.u32 %v1783, 2147483648
      %v1792 = vxor.u32 %v1784, 2147483648
      %v1793 = vxor.u32 %v1785, 2147483648
      %v1794 = vxor.u32 %v1786, 2147483648
      %v1795 = vxor.u32 %v1787, 2147483648
      %v1796 = vxor.u32 %v1788, 2147483648
      %v1797 = vxor.u32 %v1789, 2147483648
      %v1798 = vxor.u32 %v1790, 2147483648
      %v1799 = vmul.f32 %v1791, 1.442695
      %v1800 = vpow.pop %v1799
      %v1801 = vmul.f32 %v1792, 1.442695
      %v1802 = vpow.pop %v1801
      %v1803 = vmul.f32 %v1793, 1.442695
      %v1804 = vpow.pop %v1803
      %v1805 = vmul.f32 %v1794, 1.442695
      %v1806 = vpow.pop %v1805
      %v1807 = vmul.f32 %v1795, 1.442695
      %v1808 = vpow.pop %v1807
      %v1809 = vmul.f32 %v1796, 1.442695
      %v1810 = vpow.pop %v1809
      %v1811 = vmul.f32 %v1797, 1.442695
      %v1812 = vpow.pop %v1811
      %v1813 = vmul.f32 %v1798, 1.442695
      %v1814 = vpow.pop %v1813
      %v1815 = vadd.f32 %v1800, 1.0
      %v1816 = vadd.f32 %v1802, 1.0
      %v1817 = vadd.f32 %v1804, 1.0
      %v1818 = vadd.f32 %v1806, 1.0
      %v1819 = vadd.f32 %v1808, 1.0
      %v1820 = vadd.f32 %v1810, 1.0
      %v1821 = vadd.f32 %v1812, 1.0
      %v1822 = vadd.f32 %v1814, 1.0
      %v1823 = vrcp.pop %v1815
      %v1824 = vmul.f32 1.0, %v1823
      %v1825 = vrcp.pop %v1816
      %v1826 = vmul.f32 1.0, %v1825
      %v1827 = vrcp.pop %v1817
      %v1828 = vmul.f32 1.0, %v1827
      %v1829 = vrcp.pop %v1818
      %v1830 = vmul.f32 1.0, %v1829
      %v1831 = vrcp.pop %v1819
      %v1832 = vmul.f32 1.0, %v1831
      %v1833 = vrcp.pop %v1820
      %v1834 = vmul.f32 1.0, %v1833
      %v1835 = vrcp.pop %v1821
      %v1836 = vmul.f32 1.0, %v1835
      %v1837 = vrcp.pop %v1822
      %v1838 = vmul.f32 1.0, %v1837
      %1839 = vst [vmem:[%s172 + $0x8] sm:$0xff] %v1824
      %1840 = vst [vmem:[%s172 + $0x28] sm:$0xff] %v1826
      %1841 = vst [vmem:[%s172 + $0x48] sm:$0xff] %v1828
      %1842 = vst [vmem:[%s172 + $0x68] sm:$0xff] %v1830
      %1843 = vst [vmem:[%s172 + $0x88] sm:$0xff] %v1832
      %1844 = vst [vmem:[%s172 + $0xa8] sm:$0xff] %v1834
      %1845 = vst [vmem:[%s172 + $0xc8] sm:$0xff] %v1836
      %1846 = vst [vmem:[%s172 + $0xe8] sm:$0xff] %v1838
      %s1847 = scalar_lea.vmem %s1, 352
      %v1848 = vld [vmem:[%s1847] sm:$0xf]
      %v1849 = vld [vmem:[%s1847 + $0x4] sm:$0xf]
      %v1850 = vld [vmem:[%s1847 + $0x8] sm:$0xf]
      %v1851 = vld [vmem:[%s1847 + $0xc] sm:$0xf]
      %v1852 = vld [vmem:[%s1847 + $0x10] sm:$0xf]
      %v1853 = vld [vmem:[%s1847 + $0x14] sm:$0xf]
      %v1854 = vld [vmem:[%s1847 + $0x18] sm:$0xf]
      %v1855 = vld [vmem:[%s1847 + $0x1c] sm:$0xf]
      %s1856 = scalar_lea.vmem %s1, 288
      %v1857 = vld [vmem:[%s1856] sm:$0xf]
      %v1858 = vld [vmem:[%s1856 + $0x4] sm:$0xf]
      %v1859 = vld [vmem:[%s1856 + $0x8] sm:$0xf]
      %v1860 = vld [vmem:[%s1856 + $0xc] sm:$0xf]
      %v1861 = vld [vmem:[%s1856 + $0x10] sm:$0xf]
      %v1862 = vld [vmem:[%s1856 + $0x14] sm:$0xf]
      %v1863 = vld [vmem:[%s1856 + $0x18] sm:$0xf]
      %v1864 = vld [vmem:[%s1856 + $0x1c] sm:$0xf]
      %v1873 = vunpack.c.l.b16 %v1857
      %v1874 = vunpack.c.l.b16 %v1858
      %v1875 = vunpack.c.l.b16 %v1859
      %v1876 = vunpack.c.l.b16 %v1860
      %v1877 = vunpack.c.l.b16 %v1861
      %v1878 = vunpack.c.l.b16 %v1862
      %v1879 = vunpack.c.l.b16 %v1863
      %v1880 = vunpack.c.l.b16 %v1864
      %v1881 = vpack.c.b16 %v1874, %v1873
      %v1882 = vpack.c.b16 %v1876, %v1875
      %v1883 = vpack.c.b16 %v1878, %v1877
      %v1884 = vpack.c.b16 %v1880, %v1879
      %1889 = vmatprep.subr.bf16.mxu0 0
      %1890 = vmatpush1.bf16.msra.mxu0 %v1881
      %1891 = vmatprep.subr.bf16.mxu0 0
      %1892 = vmatpush1.bf16.msra.mxu0 %v1882
      %1893 = vmatprep.subr.bf16.mxu0 0
      %1894 = vmatpush1.bf16.msra.mxu0 %v1883
      %1895 = vmatprep.subr.bf16.mxu0 0
      %1896 = vmatpush1.bf16.msra.mxu0 %v1884
      %1897 = vmatprep.subr.bf16.mxu0 0
      %1898 = vmatpush1.bf16.msra.mxu0 0
      %1899 = vmatprep.subr.bf16.mxu0 0
      %1900 = vmatpush1.bf16.msra.mxu0 0
      %1901 = vmatprep.subr.bf16.mxu0 0
      %1902 = vmatpush1.bf16.msra.mxu0 0
      %1903 = vmatprep.subr.bf16.mxu0 0
      %1904 = vmatpush1.bf16.msra.mxu0 0
      %1905 = vmatprep.subr.bf16.mxu0 0
      %1906 = vmatpush1.bf16.msra.mxu0 0
      %1907 = vmatprep.subr.bf16.mxu0 0
      %1908 = vmatpush1.bf16.msra.mxu0 0
      %1909 = vmatprep.subr.bf16.mxu0 0
      %1910 = vmatpush1.bf16.msra.mxu0 0
      %1911 = vmatprep.subr.bf16.mxu0 0
      %1912 = vmatpush1.bf16.msra.mxu0 0
      %1913 = vmatprep.subr.bf16.mxu0 0
      %1914 = vmatpush1.bf16.msra.mxu0 0
      %1915 = vmatprep.subr.bf16.mxu0 0
      %1916 = vmatpush1.bf16.msra.mxu0 0
      %1917 = vmatprep.subr.bf16.mxu0 0
      %1918 = vmatpush1.bf16.msra.mxu0 0
      %1919 = vmatprep.subr.bf16.mxu0 0
      %1920 = vmatpush1.bf16.msra.mxu0 0
      %1921 = vmatprep.mubr.bf16.mxu0 0
      %1922 = vmatmul.mubr.bf16.gmra.mrb[0].mxu0 %v1173
      %v1923 = vpop.f32.mrb[0].mxu0
      %v1924 = vadd.f32 0.0, %v1923
      %v1925 = vpop.f32.mrb[0].mxu0
      %v1926 = vpop.f32.mrb[0].mxu0
      %v1927 = vadd.f32 0.0, %v1926
      %v1928 = vpop.f32.mrb[0].mxu0
      %1929 = vmatprep.mubr.bf16.mxu0 0
      %1930 = vmatmul.mubr.bf16.gmra.mrb[0].mxu0 %v1176
      %v1931 = vpop.f32.mrb[0].mxu0
      %v1932 = vadd.f32 0.0, %v1931
      %v1933 = vpop.f32.mrb[0].mxu0
      %v1934 = vpop.f32.mrb[0].mxu0
      %v1935 = vadd.f32 0.0, %v1934
      %v1936 = vpop.f32.mrb[0].mxu0
      %1937 = vmatprep.mubr.bf16.mxu0 0
      %1938 = vmatmul.mubr.bf16.gmra.mrb[0].mxu0 %v1179
      %v1939 = vpop.f32.mrb[0].mxu0
      %v1940 = vadd.f32 0.0, %v1939
      %v1941 = vpop.f32.mrb[0].mxu0
      %v1942 = vpop.f32.mrb[0].mxu0
      %v1943 = vadd.f32 0.0, %v1942
      %v1944 = vpop.f32.mrb[0].mxu0
      %1945 = vmatprep.mubr.bf16.mxu0 0
      %1946 = vmatmul.mubr.bf16.gmra.mrb[0].mxu0 %v1182
      %v1947 = vpop.f32.mrb[0].mxu0
      %v1948 = vadd.f32 0.0, %v1947
      %v1949 = vpop.f32.mrb[0].mxu0
      %v1950 = vpop.f32.mrb[0].mxu0
      %v1951 = vadd.f32 0.0, %v1950
      %v1952 = vpop.f32.mrb[0].mxu0
      %1953 = vdwg.mxu0
      %v1962 = vunpack.c.l.b16 %v1848
      %v1963 = vunpack.c.l.b16 %v1849
      %v1964 = vunpack.c.l.b16 %v1850
      %v1965 = vunpack.c.l.b16 %v1851
      %v1966 = vunpack.c.l.b16 %v1852
      %v1967 = vunpack.c.l.b16 %v1853
      %v1968 = vunpack.c.l.b16 %v1854
      %v1969 = vunpack.c.l.b16 %v1855
      %v1970 = vpack.c.b16 %v1963, %v1962
      %v1971 = vpack.c.b16 %v1965, %v1964
      %v1972 = vpack.c.b16 %v1967, %v1966
      %v1973 = vpack.c.b16 %v1969, %v1968
      %1978 = vmatprep.subr.bf16.mxu0 0
      %1979 = vmatpush1.bf16.msra.mxu0 %v1970
      %1980 = vmatprep.subr.bf16.mxu0 0
      %1981 = vmatpush1.bf16.msra.mxu0 %v1971
      %1982 = vmatprep.subr.bf16.mxu0 0
      %1983 = vmatpush1.bf16.msra.mxu0 %v1972
      %1984 = vmatprep.subr.bf16.mxu0 0
      %1985 = vmatpush1.bf16.msra.mxu0 %v1973
      %1986 = vmatprep.subr.bf16.mxu0 0
      %1987 = vmatpush1.bf16.msra.mxu0 0
      %1988 = vmatprep.subr.bf16.mxu0 0
      %1989 = vmatpush1.bf16.msra.mxu0 0
      %1990 = vmatprep.subr.bf16.mxu0 0
      %1991 = vmatpush1.bf16.msra.mxu0 0
      %1992 = vmatprep.subr.bf16.mxu0 0
      %1993 = vmatpush1.bf16.msra.mxu0 0
      %1994 = vmatprep.subr.bf16.mxu0 0
      %1995 = vmatpush1.bf16.msra.mxu0 0
      %1996 = vmatprep.subr.bf16.mxu0 0
      %1997 = vmatpush1.bf16.msra.mxu0 0
      %1998 = vmatprep.subr.bf16.mxu0 0
      %1999 = vmatpush1.bf16.msra.mxu0 0
      %2000 = vmatprep.subr.bf16.mxu0 0
      %2001 = vmatpush1.bf16.msra.mxu0 0
      %2002 = vmatprep.subr.bf16.mxu0 0
      %2003 = vmatpush1.bf16.msra.mxu0 0
      %2004 = vmatprep.subr.bf16.mxu0 0
      %2005 = vmatpush1.bf16.msra.mxu0 0
      %2006 = vmatprep.subr.bf16.mxu0 0
      %2007 = vmatpush1.bf16.msra.mxu0 0
      %2008 = vmatprep.subr.bf16.mxu0 0
      %2009 = vmatpush1.bf16.msra.mxu0 0
      %2010 = vmatprep.mubr.bf16.mxu0 0
      %2011 = vmatmul.mubr.bf16.gmra.mrb[0].mxu0 %v1043
      %v2012 = vpop.f32.mrb[0].mxu0
      %v2013 = vadd.f32 %v1924, %v2012
      %v2014 = vpop.f32.mrb[0].mxu0
      %v2015 = vpop.f32.mrb[0].mxu0
      %v2016 = vadd.f32 %v1927, %v2015
      %v2017 = vpop.f32.mrb[0].mxu0
      %2018 = vmatprep.mubr.bf16.mxu0 0
      %2019 = vmatmul.mubr.bf16.gmra.mrb[0].mxu0 %v1046
      %v2020 = vpop.f32.mrb[0].mxu0
      %v2021 = vadd.f32 %v1932, %v2020
      %v2022 = vpop.f32.mrb[0].mxu0
      %v2023 = vpop.f32.mrb[0].mxu0
      %v2024 = vadd.f32 %v1935, %v2023
      %v2025 = vpop.f32.mrb[0].mxu0
      %2026 = vmatprep.mubr.bf16.mxu0 0
      %2027 = vmatmul.mubr.bf16.gmra.mrb[0].mxu0 %v1049
      %v2028 = vpop.f32.mrb[0].mxu0
      %v2029 = vadd.f32 %v1940, %v2028
      %v2030 = vpop.f32.mrb[0].mxu0
      %v2031 = vpop.f32.mrb[0].mxu0
      %v2032 = vadd.f32 %v1943, %v2031
      %v2033 = vpop.f32.mrb[0].mxu0
      %2034 = vmatprep.mubr.bf16.mxu0 0
      %2035 = vmatmul.mubr.bf16.gmra.mrb[0].mxu0 %v1052
      %v2036 = vpop.f32.mrb[0].mxu0
      %v2037 = vadd.f32 %v1948, %v2036
      %v2038 = vpop.f32.mrb[0].mxu0
      %v2039 = vpop.f32.mrb[0].mxu0
      %v2040 = vadd.f32 %v1951, %v2039
      %v2041 = vpop.f32.mrb[0].mxu0
      %2042 = vdwg.mxu0
      %s2043 = scalar_lea.vmem %s1, 96
      %v2044 = vld [vmem:[%s2043] sm:$0xf]
      %v2045 = vld [vmem:[%s2043 + $0x4] sm:$0xf]
      %v2046 = vld [vmem:[%s2043 + $0x8] sm:$0xf]
      %v2047 = vld [vmem:[%s2043 + $0xc] sm:$0xf]
      %v2048 = vld [vmem:[%s2043 + $0x10] sm:$0xf]
      %v2049 = vld [vmem:[%s2043 + $0x14] sm:$0xf]
      %v2050 = vld [vmem:[%s2043 + $0x18] sm:$0xf]
      %v2051 = vld [vmem:[%s2043 + $0x1c] sm:$0xf]
      %v2060 = vunpack.c.l.b16 %v552
      %v2061 = vunpack.c.l.b16 %v553
      %v2062 = vunpack.c.l.b16 %v554
      %v2063 = vunpack.c.l.b16 %v555
      %v2064 = vunpack.c.l.b16 %v556
      %v2065 = vunpack.c.l.b16 %v557
      %v2066 = vunpack.c.l.b16 %v558
      %v2067 = vunpack.c.l.b16 %v559
      %v2068 = vpack.c.b16 %v2061, %v2060
      %v2069 = vpack.c.b16 %v2063, %v2062
      %v2070 = vpack.c.b16 %v2065, %v2064
      %v2071 = vpack.c.b16 %v2067, %v2066
      %v2080 = vunpack.c.l.b16 %v2044
      %v2081 = vunpack.c.l.b16 %v2045
      %v2082 = vunpack.c.l.b16 %v2046
      %v2083 = vunpack.c.l.b16 %v2047
      %v2084 = vunpack.c.l.b16 %v2048
      %v2085 = vunpack.c.l.b16 %v2049
      %v2086 = vunpack.c.l.b16 %v2050
      %v2087 = vunpack.c.l.b16 %v2051
      %v2088 = vpack.c.b16 %v2081, %v2080
      %v2089 = vpack.c.b16 %v2083, %v2082
      %v2090 = vpack.c.b16 %v2085, %v2084
      %v2091 = vpack.c.b16 %v2087, %v2086
      %v2097 = vsel %vm790, %v2068, 0
      %v2100 = vsel %vm790, %v2069, 0
      %v2103 = vsel %vm790, %v2070, 0
      %v2106 = vsel %vm790, %v2071, 0
      %2108 = vmatprep.subr.bf16.mxu0 0
      %2109 = vmatpush1.bf16.msra.mxu0 %v2088
      %2110 = vmatprep.subr.bf16.mxu0 0
      %2111 = vmatpush1.bf16.msra.mxu0 %v2089
      %2112 = vmatprep.subr.bf16.mxu0 0
      %2113 = vmatpush1.bf16.msra.mxu0 %v2090
      %2114 = vmatprep.subr.bf16.mxu0 0
      %2115 = vmatpush1.bf16.msra.mxu0 %v2091
      %2116 = vmatprep.subr.bf16.mxu0 0
      %2117 = vmatpush1.bf16.msra.mxu0 0
      %2118 = vmatprep.subr.bf16.mxu0 0
      %2119 = vmatpush1.bf16.msra.mxu0 0
      %2120 = vmatprep.subr.bf16.mxu0 0
      %2121 = vmatpush1.bf16.msra.mxu0 0
      %2122 = vmatprep.subr.bf16.mxu0 0
      %2123 = vmatpush1.bf16.msra.mxu0 0
      %2124 = vmatprep.subr.bf16.mxu0 0
      %2125 = vmatpush1.bf16.msra.mxu0 0
      %2126 = vmatprep.subr.bf16.mxu0 0
      %2127 = vmatpush1.bf16.msra.mxu0 0
      %2128 = vmatprep.subr.bf16.mxu0 0
      %2129 = vmatpush1.bf16.msra.mxu0 0
      %2130 = vmatprep.subr.bf16.mxu0 0
      %2131 = vmatpush1.bf16.msra.mxu0 0
      %2132 = vmatprep.subr.bf16.mxu0 0
      %2133 = vmatpush1.bf16.msra.mxu0 0
      %2134 = vmatprep.subr.bf16.mxu0 0
      %2135 = vmatpush1.bf16.msra.mxu0 0
      %2136 = vmatprep.subr.bf16.mxu0 0
      %2137 = vmatpush1.bf16.msra.mxu0 0
      %2138 = vmatprep.subr.bf16.mxu0 0
      %2139 = vmatpush1.bf16.msra.mxu0 0
      %2140 = vmatprep.mubr.bf16.mxu0 0
      %2141 = vmatmul.mubr.bf16.gmra.mrb[0].mxu0 %v2097
      %v2142 = vpop.f32.mrb[0].mxu0
      %v2143 = vadd.f32 0.0, %v2142
      %v2144 = vpop.f32.mrb[0].mxu0
      %v2145 = vpop.f32.mrb[0].mxu0
      %v2146 = vadd.f32 0.0, %v2145
      %v2147 = vpop.f32.mrb[0].mxu0
      %2148 = vmatprep.mubr.bf16.mxu0 0
      %2149 = vmatmul.mubr.bf16.gmra.mrb[0].mxu0 %v2100
      %v2150 = vpop.f32.mrb[0].mxu0
      %v2151 = vadd.f32 0.0, %v2150
      %v2152 = vpop.f32.mrb[0].mxu0
      %v2153 = vpop.f32.mrb[0].mxu0
      %v2154 = vadd.f32 0.0, %v2153
      %v2155 = vpop.f32.mrb[0].mxu0
      %2156 = vmatprep.mubr.bf16.mxu0 0
      %2157 = vmatmul.mubr.bf16.gmra.mrb[0].mxu0 %v2103
      %v2158 = vpop.f32.mrb[0].mxu0
      %v2159 = vadd.f32 0.0, %v2158
      %v2160 = vpop.f32.mrb[0].mxu0
      %v2161 = vpop.f32.mrb[0].mxu0
      %v2162 = vadd.f32 0.0, %v2161
      %v2163 = vpop.f32.mrb[0].mxu0
      %2164 = vmatprep.mubr.bf16.mxu0 0
      %2165 = vmatmul.mubr.bf16.gmra.mrb[0].mxu0 %v2106
      %v2166 = vpop.f32.mrb[0].mxu0
      %v2167 = vadd.f32 0.0, %v2166
      %v2168 = vpop.f32.mrb[0].mxu0
      %v2169 = vpop.f32.mrb[0].mxu0
      %v2170 = vadd.f32 0.0, %v2169
      %v2171 = vpop.f32.mrb[0].mxu0
      %2172 = vdwg.mxu0
      %v2173 = vadd.f32 %v2013, %v2143
      %v2174 = vadd.f32 %v2016, %v2146
      %v2175 = vadd.f32 %v2021, %v2151
      %v2176 = vadd.f32 %v2024, %v2154
      %v2177 = vadd.f32 %v2029, %v2159
      %v2178 = vadd.f32 %v2032, %v2162
      %v2179 = vadd.f32 %v2037, %v2167
      %v2180 = vadd.f32 %v2040, %v2170
      %s2181 = scalar_lea.vmem %s1, 32
      %v2182 = vld [vmem:[%s2181] sm:$0xf]
      %v2183 = vld [vmem:[%s2181 + $0x4] sm:$0xf]
      %v2184 = vld [vmem:[%s2181 + $0x8] sm:$0xf]
      %v2185 = vld [vmem:[%s2181 + $0xc] sm:$0xf]
      %v2186 = vld [vmem:[%s2181 + $0x10] sm:$0xf]
      %v2187 = vld [vmem:[%s2181 + $0x14] sm:$0xf]
      %v2188 = vld [vmem:[%s2181 + $0x18] sm:$0xf]
      %v2189 = vld [vmem:[%s2181 + $0x1c] sm:$0xf]
      %v2190 = vunpack.c.l.b16 %v581
      %v2191 = vunpack.c.l.b16 %v595
      %v2192 = vunpack.c.l.b16 %v609
      %v2193 = vunpack.c.l.b16 %v623
      %v2194 = vunpack.c.l.b16 %v637
      %v2195 = vunpack.c.l.b16 %v651
      %v2196 = vunpack.c.l.b16 %v665
      %v2197 = vunpack.c.l.b16 %v679
      %v2198 = vpack.c.b16 %v2191, %v2190
      %v2199 = vpack.c.b16 %v2193, %v2192
      %v2200 = vpack.c.b16 %v2195, %v2194
      %v2201 = vpack.c.b16 %v2197, %v2196
      %v2210 = vunpack.c.l.b16 %v2182
      %v2211 = vunpack.c.l.b16 %v2183
      %v2212 = vunpack.c.l.b16 %v2184
      %v2213 = vunpack.c.l.b16 %v2185
      %v2214 = vunpack.c.l.b16 %v2186
      %v2215 = vunpack.c.l.b16 %v2187
      %v2216 = vunpack.c.l.b16 %v2188
      %v2217 = vunpack.c.l.b16 %v2189
      %v2218 = vpack.c.b16 %v2211, %v2210
      %v2219 = vpack.c.b16 %v2213, %v2212
      %v2220 = vpack.c.b16 %v2215, %v2214
      %v2221 = vpack.c.b16 %v2217, %v2216
      %v2227 = vsel %vm790, %v2198, 0
      %v2230 = vsel %vm790, %v2199, 0
      %v2233 = vsel %vm790, %v2200, 0
      %v2236 = vsel %vm790, %v2201, 0
      %2238 = vmatprep.subr.bf16.mxu0 0
      %2239 = vmatpush1.bf16.msra.mxu0 %v2218
      %2240 = vmatprep.subr.bf16.mxu0 0
      %2241 = vmatpush1.bf16.msra.mxu0 %v2219
      %2242 = vmatprep.subr.bf16.mxu0 0
      %2243 = vmatpush1.bf16.msra.mxu0 %v2220
      %2244 = vmatprep.subr.bf16.mxu0 0
      %2245 = vmatpush1.bf16.msra.mxu0 %v2221
      %2246 = vmatprep.subr.bf16.mxu0 0
      %2247 = vmatpush1.bf16.msra.mxu0 0
      %2248 = vmatprep.subr.bf16.mxu0 0
      %2249 = vmatpush1.bf16.msra.mxu0 0
      %2250 = vmatprep.subr.bf16.mxu0 0
      %2251 = vmatpush1.bf16.msra.mxu0 0
      %2252 = vmatprep.subr.bf16.mxu0 0
      %2253 = vmatpush1.bf16.msra.mxu0 0
      %2254 = vmatprep.subr.bf16.mxu0 0
      %2255 = vmatpush1.bf16.msra.mxu0 0
      %2256 = vmatprep.subr.bf16.mxu0 0
      %2257 = vmatpush1.bf16.msra.mxu0 0
      %2258 = vmatprep.subr.bf16.mxu0 0
      %2259 = vmatpush1.bf16.msra.mxu0 0
      %2260 = vmatprep.subr.bf16.mxu0 0
      %2261 = vmatpush1.bf16.msra.mxu0 0
      %2262 = vmatprep.subr.bf16.mxu0 0
      %2263 = vmatpush1.bf16.msra.mxu0 0
      %2264 = vmatprep.subr.bf16.mxu0 0
      %2265 = vmatpush1.bf16.msra.mxu0 0
      %2266 = vmatprep.subr.bf16.mxu0 0
      %2267 = vmatpush1.bf16.msra.mxu0 0
      %2268 = vmatprep.subr.bf16.mxu0 0
      %2269 = vmatpush1.bf16.msra.mxu0 0
      %2270 = vmatprep.mubr.bf16.mxu0 0
      %2271 = vmatmul.mubr.bf16.gmra.mrb[0].mxu0 %v2227
      %v2272 = vpop.f32.mrb[0].mxu0
      %v2273 = vadd.f32 0.0, %v2272
      %v2274 = vpop.f32.mrb[0].mxu0
      %v2275 = vpop.f32.mrb[0].mxu0
      %v2276 = vadd.f32 0.0, %v2275
      %v2277 = vpop.f32.mrb[0].mxu0
      %2278 = vmatprep.mubr.bf16.mxu0 0
      %2279 = vmatmul.mubr.bf16.gmra.mrb[0].mxu0 %v2230
      %v2280 = vpop.f32.mrb[0].mxu0
      %v2281 = vadd.f32 0.0, %v2280
      %v2282 = vpop.f32.mrb[0].mxu0
      %v2283 = vpop.f32.mrb[0].mxu0
      %v2284 = vadd.f32 0.0, %v2283
      %v2285 = vpop.f32.mrb[0].mxu0
      %2286 = vmatprep.mubr.bf16.mxu0 0
      %2287 = vmatmul.mubr.bf16.gmra.mrb[0].mxu0 %v2233
      %v2288 = vpop.f32.mrb[0].mxu0
      %v2289 = vadd.f32 0.0, %v2288
      %v2290 = vpop.f32.mrb[0].mxu0
      %v2291 = vpop.f32.mrb[0].mxu0
      %v2292 = vadd.f32 0.0, %v2291
      %v2293 = vpop.f32.mrb[0].mxu0
      %2294 = vmatprep.mubr.bf16.mxu0 0
      %2295 = vmatmul.mubr.bf16.gmra.mrb[0].mxu0 %v2236
      %v2296 = vpop.f32.mrb[0].mxu0
      %v2297 = vadd.f32 0.0, %v2296
      %v2298 = vpop.f32.mrb[0].mxu0
      %v2299 = vpop.f32.mrb[0].mxu0
      %v2300 = vadd.f32 0.0, %v2299
      %v2301 = vpop.f32.mrb[0].mxu0
      %2302 = vdwg.mxu0
      %v2303 = vadd.f32 %v2173, %v2273
      %v2304 = vadd.f32 %v2174, %v2276
      %v2305 = vadd.f32 %v2175, %v2281
      %v2306 = vadd.f32 %v2176, %v2284
      %v2307 = vadd.f32 %v2177, %v2289
      %v2308 = vadd.f32 %v2178, %v2292
      %v2309 = vadd.f32 %v2179, %v2297
      %v2310 = vadd.f32 %v2180, %v2300
      %v2311 = vadd.f32 %v2303, %v1261
      %v2312 = vadd.f32 %v2304, %v1261
      %v2313 = vadd.f32 %v2305, %v1261
      %v2314 = vadd.f32 %v2306, %v1261
      %v2315 = vadd.f32 %v2307, %v1261
      %v2316 = vadd.f32 %v2308, %v1261
      %v2317 = vadd.f32 %v2309, %v1261
      %v2318 = vadd.f32 %v2310, %v1261
      %v2319 = vxor.u32 %v2311, 2147483648
      %v2320 = vxor.u32 %v2312, 2147483648
      %v2321 = vxor.u32 %v2313, 2147483648
      %v2322 = vxor.u32 %v2314, 2147483648
      %v2323 = vxor.u32 %v2315, 2147483648
      %v2324 = vxor.u32 %v2316, 2147483648
      %v2325 = vxor.u32 %v2317, 2147483648
      %v2326 = vxor.u32 %v2318, 2147483648
      %v2327 = vmul.f32 %v2319, 1.442695
      %v2328 = vpow.pop %v2327
      %v2329 = vmul.f32 %v2320, 1.442695
      %v2330 = vpow.pop %v2329
      %v2331 = vmul.f32 %v2321, 1.442695
      %v2332 = vpow.pop %v2331
      %v2333 = vmul.f32 %v2322, 1.442695
      %v2334 = vpow.pop %v2333
      %v2335 = vmul.f32 %v2323, 1.442695
      %v2336 = vpow.pop %v2335
      %v2337 = vmul.f32 %v2324, 1.442695
      %v2338 = vpow.pop %v2337
      %v2339 = vmul.f32 %v2325, 1.442695
      %v2340 = vpow.pop %v2339
      %v2341 = vmul.f32 %v2326, 1.442695
      %v2342 = vpow.pop %v2341
      %v2343 = vadd.f32 %v2328, 1.0
      %v2344 = vadd.f32 %v2330, 1.0
      %v2345 = vadd.f32 %v2332, 1.0
      %v2346 = vadd.f32 %v2334, 1.0
      %v2347 = vadd.f32 %v2336, 1.0
      %v2348 = vadd.f32 %v2338, 1.0
      %v2349 = vadd.f32 %v2340, 1.0
      %v2350 = vadd.f32 %v2342, 1.0
      %v2351 = vrcp.pop %v2343
      %v2352 = vmul.f32 1.0, %v2351
      %v2353 = vrcp.pop %v2344
      %v2354 = vmul.f32 1.0, %v2353
      %v2355 = vrcp.pop %v2345
      %v2356 = vmul.f32 1.0, %v2355
      %v2357 = vrcp.pop %v2346
      %v2358 = vmul.f32 1.0, %v2357
      %v2359 = vrcp.pop %v2347
      %v2360 = vmul.f32 1.0, %v2359
      %v2361 = vrcp.pop %v2348
      %v2362 = vmul.f32 1.0, %v2361
      %v2363 = vrcp.pop %v2349
      %v2364 = vmul.f32 1.0, %v2363
      %v2365 = vrcp.pop %v2350
      %v2366 = vmul.f32 1.0, %v2365
      %2367 = vst [vmem:[%s172 + $0x10] sm:$0xff] %v2352
      %2368 = vst [vmem:[%s172 + $0x30] sm:$0xff] %v2354
      %2369 = vst [vmem:[%s172 + $0x50] sm:$0xff] %v2356
      %2370 = vst [vmem:[%s172 + $0x70] sm:$0xff] %v2358
      %2371 = vst [vmem:[%s172 + $0x90] sm:$0xff] %v2360
      %2372 = vst [vmem:[%s172 + $0xb0] sm:$0xff] %v2362
      %2373 = vst [vmem:[%s172 + $0xd0] sm:$0xff] %v2364
      %2374 = vst [vmem:[%s172 + $0xf0] sm:$0xff] %v2366
      %s2375 = scalar_lea.vmem %s1, 320
      %v2376 = vld [vmem:[%s2375] sm:$0xf]
      %v2377 = vld [vmem:[%s2375 + $0x4] sm:$0xf]
      %v2378 = vld [vmem:[%s2375 + $0x8] sm:$0xf]
      %v2379 = vld [vmem:[%s2375 + $0xc] sm:$0xf]
      %v2380 = vld [vmem:[%s2375 + $0x10] sm:$0xf]
      %v2381 = vld [vmem:[%s2375 + $0x14] sm:$0xf]
      %v2382 = vld [vmem:[%s2375 + $0x18] sm:$0xf]
      %v2383 = vld [vmem:[%s2375 + $0x1c] sm:$0xf]
      %s2384 = scalar_lea.vmem %s1, 256
      %v2385 = vld [vmem:[%s2384] sm:$0xf]
      %v2386 = vld [vmem:[%s2384 + $0x4] sm:$0xf]
      %v2387 = vld [vmem:[%s2384 + $0x8] sm:$0xf]
      %v2388 = vld [vmem:[%s2384 + $0xc] sm:$0xf]
      %v2389 = vld [vmem:[%s2384 + $0x10] sm:$0xf]
      %v2390 = vld [vmem:[%s2384 + $0x14] sm:$0xf]
      %v2391 = vld [vmem:[%s2384 + $0x18] sm:$0xf]
      %v2392 = vld [vmem:[%s2384 + $0x1c] sm:$0xf]
      %v2401 = vunpack.c.l.b16 %v2385
      %v2402 = vunpack.c.l.b16 %v2386
      %v2403 = vunpack.c.l.b16 %v2387
      %v2404 = vunpack.c.l.b16 %v2388
      %v2405 = vunpack.c.l.b16 %v2389
      %v2406 = vunpack.c.l.b16 %v2390
      %v2407 = vunpack.c.l.b16 %v2391
      %v2408 = vunpack.c.l.b16 %v2392
      %v2409 = vpack.c.b16 %v2402, %v2401
      %v2410 = vpack.c.b16 %v2404, %v2403
      %v2411 = vpack.c.b16 %v2406, %v2405
      %v2412 = vpack.c.b16 %v2408, %v2407
      %2417 = vmatprep.subr.bf16.mxu0 0
      %2418 = vmatpush1.bf16.msra.mxu0 %v2409
      %2419 = vmatprep.subr.bf16.mxu0 0
      %2420 = vmatpush1.bf16.msra.mxu0 %v2410
      %2421 = vmatprep.subr.bf16.mxu0 0
      %2422 = vmatpush1.bf16.msra.mxu0 %v2411
      %2423 = vmatprep.subr.bf16.mxu0 0
      %2424 = vmatpush1.bf16.msra.mxu0 %v2412
      %2425 = vmatprep.subr.bf16.mxu0 0
      %2426 = vmatpush1.bf16.msra.mxu0 0
      %2427 = vmatprep.subr.bf16.mxu0 0
      %2428 = vmatpush1.bf16.msra.mxu0 0
      %2429 = vmatprep.subr.bf16.mxu0 0
      %2430 = vmatpush1.bf16.msra.mxu0 0
      %2431 = vmatprep.subr.bf16.mxu0 0
      %2432 = vmatpush1.bf16.msra.mxu0 0
      %2433 = vmatprep.subr.bf16.mxu0 0
      %2434 = vmatpush1.bf16.msra.mxu0 0
      %2435 = vmatprep.subr.bf16.mxu0 0
      %2436 = vmatpush1.bf16.msra.mxu0 0
      %2437 = vmatprep.subr.bf16.mxu0 0
      %2438 = vmatpush1.bf16.msra.mxu0 0
      %2439 = vmatprep.subr.bf16.mxu0 0
      %2440 = vmatpush1.bf16.msra.mxu0 0
      %2441 = vmatprep.subr.bf16.mxu0 0
      %2442 = vmatpush1.bf16.msra.mxu0 0
      %2443 = vmatprep.subr.bf16.mxu0 0
      %2444 = vmatpush1.bf16.msra.mxu0 0
      %2445 = vmatprep.subr.bf16.mxu0 0
      %2446 = vmatpush1.bf16.msra.mxu0 0
      %2447 = vmatprep.subr.bf16.mxu0 0
      %2448 = vmatpush1.bf16.msra.mxu0 0
      %2449 = vmatprep.mubr.bf16.mxu0 0
      %2450 = vmatmul.mubr.bf16.gmra.mrb[0].mxu0 %v1699
      %v2451 = vpop.f32.mrb[0].mxu0
      %v2452 = vadd.f32 0.0, %v2451
      %v2453 = vpop.f32.mrb[0].mxu0
      %v2454 = vpop.f32.mrb[0].mxu0
      %v2455 = vadd.f32 0.0, %v2454
      %v2456 = vpop.f32.mrb[0].mxu0
      %2457 = vmatprep.mubr.bf16.mxu0 0
      %2458 = vmatmul.mubr.bf16.gmra.mrb[0].mxu0 %v1702
      %v2459 = vpop.f32.mrb[0].mxu0
      %v2460 = vadd.f32 0.0, %v2459
      %v2461 = vpop.f32.mrb[0].mxu0
      %v2462 = vpop.f32.mrb[0].mxu0
      %v2463 = vadd.f32 0.0, %v2462
      %v2464 = vpop.f32.mrb[0].mxu0
      %2465 = vmatprep.mubr.bf16.mxu0 0
      %2466 = vmatmul.mubr.bf16.gmra.mrb[0].mxu0 %v1705
      %v2467 = vpop.f32.mrb[0].mxu0
      %v2468 = vadd.f32 0.0, %v2467
      %v2469 = vpop.f32.mrb[0].mxu0
      %v2470 = vpop.f32.mrb[0].mxu0
      %v2471 = vadd.f32 0.0, %v2470
      %v2472 = vpop.f32.mrb[0].mxu0
      %2473 = vmatprep.mubr.bf16.mxu0 0
      %2474 = vmatmul.mubr.bf16.gmra.mrb[0].mxu0 %v1708
      %v2475 = vpop.f32.mrb[0].mxu0
      %v2476 = vadd.f32 0.0, %v2475
      %v2477 = vpop.f32.mrb[0].mxu0
      %v2478 = vpop.f32.mrb[0].mxu0
      %v2479 = vadd.f32 0.0, %v2478
      %v2480 = vpop.f32.mrb[0].mxu0
      %2481 = vdwg.mxu0
      %v2490 = vunpack.c.l.b16 %v2376
      %v2491 = vunpack.c.l.b16 %v2377
      %v2492 = vunpack.c.l.b16 %v2378
      %v2493 = vunpack.c.l.b16 %v2379
      %v2494 = vunpack.c.l.b16 %v2380
      %v2495 = vunpack.c.l.b16 %v2381
      %v2496 = vunpack.c.l.b16 %v2382
      %v2497 = vunpack.c.l.b16 %v2383
      %v2498 = vpack.c.b16 %v2491, %v2490
      %v2499 = vpack.c.b16 %v2493, %v2492
      %v2500 = vpack.c.b16 %v2495, %v2494
      %v2501 = vpack.c.b16 %v2497, %v2496
      %2506 = vmatprep.subr.bf16.mxu0 0
      %2507 = vmatpush1.bf16.msra.mxu0 %v2498
      %2508 = vmatprep.subr.bf16.mxu0 0
      %2509 = vmatpush1.bf16.msra.mxu0 %v2499
      %2510 = vmatprep.subr.bf16.mxu0 0
      %2511 = vmatpush1.bf16.msra.mxu0 %v2500
      %2512 = vmatprep.subr.bf16.mxu0 0
      %2513 = vmatpush1.bf16.msra.mxu0 %v2501
      %2514 = vmatprep.subr.bf16.mxu0 0
      %2515 = vmatpush1.bf16.msra.mxu0 0
      %2516 = vmatprep.subr.bf16.mxu0 0
      %2517 = vmatpush1.bf16.msra.mxu0 0
      %2518 = vmatprep.subr.bf16.mxu0 0
      %2519 = vmatpush1.bf16.msra.mxu0 0
      %2520 = vmatprep.subr.bf16.mxu0 0
      %2521 = vmatpush1.bf16.msra.mxu0 0
      %2522 = vmatprep.subr.bf16.mxu0 0
      %2523 = vmatpush1.bf16.msra.mxu0 0
      %2524 = vmatprep.subr.bf16.mxu0 0
      %2525 = vmatpush1.bf16.msra.mxu0 0
      %2526 = vmatprep.subr.bf16.mxu0 0
      %2527 = vmatpush1.bf16.msra.mxu0 0
      %2528 = vmatprep.subr.bf16.mxu0 0
      %2529 = vmatpush1.bf16.msra.mxu0 0
      %2530 = vmatprep.subr.bf16.mxu0 0
      %2531 = vmatpush1.bf16.msra.mxu0 0
      %2532 = vmatprep.subr.bf16.mxu0 0
      %2533 = vmatpush1.bf16.msra.mxu0 0
      %2534 = vmatprep.subr.bf16.mxu0 0
      %2535 = vmatpush1.bf16.msra.mxu0 0
      %2536 = vmatprep.subr.bf16.mxu0 0
      %2537 = vmatpush1.bf16.msra.mxu0 0
      %2538 = vmatprep.mubr.bf16.mxu0 0
      %2539 = vmatmul.mubr.bf16.gmra.mrb[0].mxu0 %v1173
      %v2540 = vpop.f32.mrb[0].mxu0
      %v2541 = vadd.f32 %v2452, %v2540
      %v2542 = vpop.f32.mrb[0].mxu0
      %v2543 = vpop.f32.mrb[0].mxu0
      %v2544 = vadd.f32 %v2455, %v2543
      %v2545 = vpop.f32.mrb[0].mxu0
      %2546 = vmatprep.mubr.bf16.mxu0 0
      %2547 = vmatmul.mubr.bf16.gmra.mrb[0].mxu0 %v1176
      %v2548 = vpop.f32.mrb[0].mxu0
      %v2549 = vadd.f32 %v2460, %v2548
      %v2550 = vpop.f32.mrb[0].mxu0
      %v2551 = vpop.f32.mrb[0].mxu0
      %v2552 = vadd.f32 %v2463, %v2551
      %v2553 = vpop.f32.mrb[0].mxu0
      %2554 = vmatprep.mubr.bf16.mxu0 0
      %2555 = vmatmul.mubr.bf16.gmra.mrb[0].mxu0 %v1179
      %v2556 = vpop.f32.mrb[0].mxu0
      %v2557 = vadd.f32 %v2468, %v2556
      %v2558 = vpop.f32.mrb[0].mxu0
      %v2559 = vpop.f32.mrb[0].mxu0
      %v2560 = vadd.f32 %v2471, %v2559
      %v2561 = vpop.f32.mrb[0].mxu0
      %2562 = vmatprep.mubr.bf16.mxu0 0
      %2563 = vmatmul.mubr.bf16.gmra.mrb[0].mxu0 %v1182
      %v2564 = vpop.f32.mrb[0].mxu0
      %v2565 = vadd.f32 %v2476, %v2564
      %v2566 = vpop.f32.mrb[0].mxu0
      %v2567 = vpop.f32.mrb[0].mxu0
      %v2568 = vadd.f32 %v2479, %v2567
      %v2569 = vpop.f32.mrb[0].mxu0
      %2570 = vdwg.mxu0
      %s2571 = scalar_lea.vmem %s1, 64
      %v2572 = vld [vmem:[%s2571] sm:$0xf]
      %v2573 = vld [vmem:[%s2571 + $0x4] sm:$0xf]
      %v2574 = vld [vmem:[%s2571 + $0x8] sm:$0xf]
      %v2575 = vld [vmem:[%s2571 + $0xc] sm:$0xf]
      %v2576 = vld [vmem:[%s2571 + $0x10] sm:$0xf]
      %v2577 = vld [vmem:[%s2571 + $0x14] sm:$0xf]
      %v2578 = vld [vmem:[%s2571 + $0x18] sm:$0xf]
      %v2579 = vld [vmem:[%s2571 + $0x1c] sm:$0xf]
      %v2588 = vunpack.c.l.b16 %v2572
      %v2589 = vunpack.c.l.b16 %v2573
      %v2590 = vunpack.c.l.b16 %v2574
      %v2591 = vunpack.c.l.b16 %v2575
      %v2592 = vunpack.c.l.b16 %v2576
      %v2593 = vunpack.c.l.b16 %v2577
      %v2594 = vunpack.c.l.b16 %v2578
      %v2595 = vunpack.c.l.b16 %v2579
      %v2596 = vpack.c.b16 %v2589, %v2588
      %v2597 = vpack.c.b16 %v2591, %v2590
      %v2598 = vpack.c.b16 %v2593, %v2592
      %v2599 = vpack.c.b16 %v2595, %v2594
      %2604 = vmatprep.subr.bf16.mxu0 0
      %2605 = vmatpush1.bf16.msra.mxu0 %v2596
      %2606 = vmatprep.subr.bf16.mxu0 0
      %2607 = vmatpush1.bf16.msra.mxu0 %v2597
      %2608 = vmatprep.subr.bf16.mxu0 0
      %2609 = vmatpush1.bf16.msra.mxu0 %v2598
      %2610 = vmatprep.subr.bf16.mxu0 0
      %2611 = vmatpush1.bf16.msra.mxu0 %v2599
      %2612 = vmatprep.subr.bf16.mxu0 0
      %2613 = vmatpush1.bf16.msra.mxu0 0
      %2614 = vmatprep.subr.bf16.mxu0 0
      %2615 = vmatpush1.bf16.msra.mxu0 0
      %2616 = vmatprep.subr.bf16.mxu0 0
      %2617 = vmatpush1.bf16.msra.mxu0 0
      %2618 = vmatprep.subr.bf16.mxu0 0
      %2619 = vmatpush1.bf16.msra.mxu0 0
      %2620 = vmatprep.subr.bf16.mxu0 0
      %2621 = vmatpush1.bf16.msra.mxu0 0
      %2622 = vmatprep.subr.bf16.mxu0 0
      %2623 = vmatpush1.bf16.msra.mxu0 0
      %2624 = vmatprep.subr.bf16.mxu0 0
      %2625 = vmatpush1.bf16.msra.mxu0 0
      %2626 = vmatprep.subr.bf16.mxu0 0
      %2627 = vmatpush1.bf16.msra.mxu0 0
      %2628 = vmatprep.subr.bf16.mxu0 0
      %2629 = vmatpush1.bf16.msra.mxu0 0
      %2630 = vmatprep.subr.bf16.mxu0 0
      %2631 = vmatpush1.bf16.msra.mxu0 0
      %2632 = vmatprep.subr.bf16.mxu0 0
      %2633 = vmatpush1.bf16.msra.mxu0 0
      %2634 = vmatprep.subr.bf16.mxu0 0
      %2635 = vmatpush1.bf16.msra.mxu0 0
      %2636 = vmatprep.mubr.bf16.mxu0 0
      %2637 = vmatmul.mubr.bf16.gmra.mrb[0].mxu0 %v2227
      %v2638 = vpop.f32.mrb[0].mxu0
      %v2639 = vadd.f32 0.0, %v2638
      %v2640 = vpop.f32.mrb[0].mxu0
      %v2641 = vpop.f32.mrb[0].mxu0
      %v2642 = vadd.f32 0.0, %v2641
      %v2643 = vpop.f32.mrb[0].mxu0
      %2644 = vmatprep.mubr.bf16.mxu0 0
      %2645 = vmatmul.mubr.bf16.gmra.mrb[0].mxu0 %v2230
      %v2646 = vpop.f32.mrb[0].mxu0
      %v2647 = vadd.f32 0.0, %v2646
      %v2648 = vpop.f32.mrb[0].mxu0
      %v2649 = vpop.f32.mrb[0].mxu0
      %v2650 = vadd.f32 0.0, %v2649
      %v2651 = vpop.f32.mrb[0].mxu0
      %2652 = vmatprep.mubr.bf16.mxu0 0
      %2653 = vmatmul.mubr.bf16.gmra.mrb[0].mxu0 %v2233
      %v2654 = vpop.f32.mrb[0].mxu0
      %v2655 = vadd.f32 0.0, %v2654
      %v2656 = vpop.f32.mrb[0].mxu0
      %v2657 = vpop.f32.mrb[0].mxu0
      %v2658 = vadd.f32 0.0, %v2657
      %v2659 = vpop.f32.mrb[0].mxu0
      %2660 = vmatprep.mubr.bf16.mxu0 0
      %2661 = vmatmul.mubr.bf16.gmra.mrb[0].mxu0 %v2236
      %v2662 = vpop.f32.mrb[0].mxu0
      %v2663 = vadd.f32 0.0, %v2662
      %v2664 = vpop.f32.mrb[0].mxu0
      %v2665 = vpop.f32.mrb[0].mxu0
      %v2666 = vadd.f32 0.0, %v2665
      %v2667 = vpop.f32.mrb[0].mxu0
      %2668 = vdwg.mxu0
      %v2669 = vadd.f32 %v2541, %v2639
      %v2670 = vadd.f32 %v2544, %v2642
      %v2671 = vadd.f32 %v2549, %v2647
      %v2672 = vadd.f32 %v2552, %v2650
      %v2673 = vadd.f32 %v2557, %v2655
      %v2674 = vadd.f32 %v2560, %v2658
      %v2675 = vadd.f32 %v2565, %v2663
      %v2676 = vadd.f32 %v2568, %v2666
      %v2677 = vld [vmem:[%s1] sm:$0xf]
      %v2678 = vld [vmem:[%s1 + $0x4] sm:$0xf]
      %v2679 = vld [vmem:[%s1 + $0x8] sm:$0xf]
      %v2680 = vld [vmem:[%s1 + $0xc] sm:$0xf]
      %v2681 = vld [vmem:[%s1 + $0x10] sm:$0xf]
      %v2682 = vld [vmem:[%s1 + $0x14] sm:$0xf]
      %v2683 = vld [vmem:[%s1 + $0x18] sm:$0xf]
      %v2684 = vld [vmem:[%s1 + $0x1c] sm:$0xf]
      %v2685 = vunpack.c.l.b16 %v707
      %v2686 = vunpack.c.l.b16 %v711
      %v2687 = vunpack.c.l.b16 %v715
      %v2688 = vunpack.c.l.b16 %v719
      %v2689 = vunpack.c.l.b16 %v723
      %v2690 = vunpack.c.l.b16 %v727
      %v2691 = vunpack.c.l.b16 %v731
      %v2692 = vunpack.c.l.b16 %v735
      %v2693 = vpack.c.b16 %v2686, %v2685
      %v2694 = vpack.c.b16 %v2688, %v2687
      %v2695 = vpack.c.b16 %v2690, %v2689
      %v2696 = vpack.c.b16 %v2692, %v2691
      %v2705 = vunpack.c.l.b16 %v2677
      %v2706 = vunpack.c.l.b16 %v2678
      %v2707 = vunpack.c.l.b16 %v2679
      %v2708 = vunpack.c.l.b16 %v2680
      %v2709 = vunpack.c.l.b16 %v2681
      %v2710 = vunpack.c.l.b16 %v2682
      %v2711 = vunpack.c.l.b16 %v2683
      %v2712 = vunpack.c.l.b16 %v2684
      %v2713 = vpack.c.b16 %v2706, %v2705
      %v2714 = vpack.c.b16 %v2708, %v2707
      %v2715 = vpack.c.b16 %v2710, %v2709
      %v2716 = vpack.c.b16 %v2712, %v2711
      %v2722 = vsel %vm790, %v2693, 0
      %v2725 = vsel %vm790, %v2694, 0
      %v2728 = vsel %vm790, %v2695, 0
      %v2731 = vsel %vm790, %v2696, 0
      %2733 = vmatprep.subr.bf16.mxu0 0
      %2734 = vmatpush1.bf16.msra.mxu0 %v2713
      %2735 = vmatprep.subr.bf16.mxu0 0
      %2736 = vmatpush1.bf16.msra.mxu0 %v2714
      %2737 = vmatprep.subr.bf16.mxu0 0
      %2738 = vmatpush1.bf16.msra.mxu0 %v2715
      %2739 = vmatprep.subr.bf16.mxu0 0
      %2740 = vmatpush1.bf16.msra.mxu0 %v2716
      %2741 = vmatprep.subr.bf16.mxu0 0
      %2742 = vmatpush1.bf16.msra.mxu0 0
      %2743 = vmatprep.subr.bf16.mxu0 0
      %2744 = vmatpush1.bf16.msra.mxu0 0
      %2745 = vmatprep.subr.bf16.mxu0 0
      %2746 = vmatpush1.bf16.msra.mxu0 0
      %2747 = vmatprep.subr.bf16.mxu0 0
      %2748 = vmatpush1.bf16.msra.mxu0 0
      %2749 = vmatprep.subr.bf16.mxu0 0
      %2750 = vmatpush1.bf16.msra.mxu0 0
      %2751 = vmatprep.subr.bf16.mxu0 0
      %2752 = vmatpush1.bf16.msra.mxu0 0
      %2753 = vmatprep.subr.bf16.mxu0 0
      %2754 = vmatpush1.bf16.msra.mxu0 0
      %2755 = vmatprep.subr.bf16.mxu0 0
      %2756 = vmatpush1.bf16.msra.mxu0 0
      %2757 = vmatprep.subr.bf16.mxu0 0
      %2758 = vmatpush1.bf16.msra.mxu0 0
      %2759 = vmatprep.subr.bf16.mxu0 0
      %2760 = vmatpush1.bf16.msra.mxu0 0
      %2761 = vmatprep.subr.bf16.mxu0 0
      %2762 = vmatpush1.bf16.msra.mxu0 0
      %2763 = vmatprep.subr.bf16.mxu0 0
      %2764 = vmatpush1.bf16.msra.mxu0 0
      %2765 = vmatprep.mubr.bf16.mxu0 0
      %2766 = vmatmul.mubr.bf16.gmra.mrb[0].mxu0 %v2722
      %v2767 = vpop.f32.mrb[0].mxu0
      %v2768 = vadd.f32 0.0, %v2767
      %v2769 = vpop.f32.mrb[0].mxu0
      %v2770 = vpop.f32.mrb[0].mxu0
      %v2771 = vadd.f32 0.0, %v2770
      %v2772 = vpop.f32.mrb[0].mxu0
      %2773 = vmatprep.mubr.bf16.mxu0 0
      %2774 = vmatmul.mubr.bf16.gmra.mrb[0].mxu0 %v2725
      %v2775 = vpop.f32.mrb[0].mxu0
      %v2776 = vadd.f32 0.0, %v2775
      %v2777 = vpop.f32.mrb[0].mxu0
      %v2778 = vpop.f32.mrb[0].mxu0
      %v2779 = vadd.f32 0.0, %v2778
      %v2780 = vpop.f32.mrb[0].mxu0
      %2781 = vmatprep.mubr.bf16.mxu0 0
      %2782 = vmatmul.mubr.bf16.gmra.mrb[0].mxu0 %v2728
      %v2783 = vpop.f32.mrb[0].mxu0
      %v2784 = vadd.f32 0.0, %v2783
      %v2785 = vpop.f32.mrb[0].mxu0
      %v2786 = vpop.f32.mrb[0].mxu0
      %v2787 = vadd.f32 0.0, %v2786
      %v2788 = vpop.f32.mrb[0].mxu0
      %2789 = vmatprep.mubr.bf16.mxu0 0
      %2790 = vmatmul.mubr.bf16.gmra.mrb[0].mxu0 %v2731
      %v2791 = vpop.f32.mrb[0].mxu0
      %v2792 = vadd.f32 0.0, %v2791
      %v2793 = vpop.f32.mrb[0].mxu0
      %v2794 = vpop.f32.mrb[0].mxu0
      %v2795 = vadd.f32 0.0, %v2794
      %v2796 = vpop.f32.mrb[0].mxu0
      %2797 = vdwg.mxu0
      %v2798 = vadd.f32 %v2669, %v2768
      %v2799 = vadd.f32 %v2670, %v2771
      %v2800 = vadd.f32 %v2671, %v2776
      %v2801 = vadd.f32 %v2672, %v2779
      %v2802 = vadd.f32 %v2673, %v2784
      %v2803 = vadd.f32 %v2674, %v2787
      %v2804 = vadd.f32 %v2675, %v2792
      %v2805 = vadd.f32 %v2676, %v2795
      %v2806 = vadd.f32 %v2798, %v1261
      %v2807 = vadd.f32 %v2799, %v1261
      %v2808 = vadd.f32 %v2800, %v1261
      %v2809 = vadd.f32 %v2801, %v1261
      %v2810 = vadd.f32 %v2802, %v1261
      %v2811 = vadd.f32 %v2803, %v1261
      %v2812 = vadd.f32 %v2804, %v1261
      %v2813 = vadd.f32 %v2805, %v1261
      %v2814 = vxor.u32 %v2806, 2147483648
      %v2815 = vxor.u32 %v2807, 2147483648
      %v2816 = vxor.u32 %v2808, 2147483648
      %v2817 = vxor.u32 %v2809, 2147483648
      %v2818 = vxor.u32 %v2810, 2147483648
      %v2819 = vxor.u32 %v2811, 2147483648
      %v2820 = vxor.u32 %v2812, 2147483648
      %v2821 = vxor.u32 %v2813, 2147483648
      %v2822 = vmul.f32 %v2814, 1.442695
      %v2823 = vpow.pop %v2822
      %v2824 = vmul.f32 %v2815, 1.442695
      %v2825 = vpow.pop %v2824
      %v2826 = vmul.f32 %v2816, 1.442695
      %v2827 = vpow.pop %v2826
      %v2828 = vmul.f32 %v2817, 1.442695
      %v2829 = vpow.pop %v2828
      %v2830 = vmul.f32 %v2818, 1.442695
      %v2831 = vpow.pop %v2830
      %v2832 = vmul.f32 %v2819, 1.442695
      %v2833 = vpow.pop %v2832
      %v2834 = vmul.f32 %v2820, 1.442695
      %v2835 = vpow.pop %v2834
      %v2836 = vmul.f32 %v2821, 1.442695
      %v2837 = vpow.pop %v2836
      %v2838 = vadd.f32 %v2823, 1.0
      %v2839 = vadd.f32 %v2825, 1.0
      %v2840 = vadd.f32 %v2827, 1.0
      %v2841 = vadd.f32 %v2829, 1.0
      %v2842 = vadd.f32 %v2831, 1.0
      %v2843 = vadd.f32 %v2833, 1.0
      %v2844 = vadd.f32 %v2835, 1.0
      %v2845 = vadd.f32 %v2837, 1.0
      %v2846 = vrcp.pop %v2838
      %v2847 = vmul.f32 1.0, %v2846
      %v2848 = vrcp.pop %v2839
      %v2849 = vmul.f32 1.0, %v2848
      %v2850 = vrcp.pop %v2840
      %v2851 = vmul.f32 1.0, %v2850
      %v2852 = vrcp.pop %v2841
      %v2853 = vmul.f32 1.0, %v2852
      %v2854 = vrcp.pop %v2842
      %v2855 = vmul.f32 1.0, %v2854
      %v2856 = vrcp.pop %v2843
      %v2857 = vmul.f32 1.0, %v2856
      %v2858 = vrcp.pop %v2844
      %v2859 = vmul.f32 1.0, %v2858
      %v2860 = vrcp.pop %v2845
      %v2861 = vmul.f32 1.0, %v2860
      %2862 = vst [vmem:[%s172 + $0x18] sm:$0xff] %v2847
      %2863 = vst [vmem:[%s172 + $0x38] sm:$0xff] %v2849
      %2864 = vst [vmem:[%s172 + $0x58] sm:$0xff] %v2851
      %2865 = vst [vmem:[%s172 + $0x78] sm:$0xff] %v2853
      %2866 = vst [vmem:[%s172 + $0x98] sm:$0xff] %v2855
      %2867 = vst [vmem:[%s172 + $0xb8] sm:$0xff] %v2857
      %2868 = vst [vmem:[%s172 + $0xd8] sm:$0xff] %v2859
      %2869 = vst [vmem:[%s172 + $0xf8] sm:$0xff] %v2861
      %s2870 = smul.u32 8, %s14
      %p2871 = scmp.lt.s32.totalorder %s2870, 15
      %s2872 = scalar_select %p2871, %s2870, 15
      %s2873 = smul.addr %s2872, 4
      %s2874 = smul.addr %s2873, 8
      %s2875 = scalar_lea.vmem %s3, %s2874
      // Predicated region
      $region33: #{netg_forward.5} parent=31 // pred_check
        %p2876 = pneg %p100
      $region34: #{netg_forward.5} parent=31 // pred_check_branch
        %2878 = sbr.rel (%p2876) target = $region36
      $region35: #{netg_forward.5} parent=31 // pred_region
        %s2879 = smul.u32 8, %s14
      $region36: #{netg_forward.5} parent=31 // pred_fallthru
        _
    $region32: #{netg_forward.5} parent=5 // pred_fallthru
      _
    %p2880 = scmp.le.s32.totalorder 2, %s9
    // Predicated region
    $region37: #{netg_forward.5} parent=5 // pred_check
      %p2881 = pneg %p2880
    $region38: #{netg_forward.5} parent=5 // pred_check_branch
      %2883 = sbr.rel (%p2881) target = $region40
    $region39: #{netg_forward.5} parent=5 // pred_region
      %s2884 = ssub.s32 %s9, 2
      // Predicated region
      $region41: #{netg_forward.5} parent=39 // pred_check
        %p2885 = pneg %p106
      $region42: #{netg_forward.5} parent=39 // pred_check_branch
        %2887 = sbr.rel (%p2885) target = $region44
      $region43: #{netg_forward.5} parent=39 // pred_region
        %s2888 = smul.u32 8, %s15
        %p2889 = scmp.lt.s32.totalorder %s2888, 15
        %s2890 = scalar_select %p2889, %s2888, 15
        %s2891 = smul.addr %s2890, 4
        %s2892 = smul.addr %s2891, 8
        %s2893 = scalar_lea.vmem %s3, %s2892
      $region44: #{netg_forward.5} parent=39 // pred_fallthru
        _
    $region40: #{netg_forward.5} parent=5 // pred_fallthru
      _
  $region6: #{netg_forward.5} parent=0 // loop_footer
    %s13 = sadd.s32 1, %s9
  $region7: #{netg_forward.5} parent=0 // loop_footer_branch
    %8 = sbr.rel target = $region3
  $region8: #{netg_forward.5} parent=0 // loop_exit
    _

</llo_original>
